<compile_context>
chip_gen: v7x
topology: tpu7x:2x2x1
jax: 0.10.0
libtpu: 0.0.40
codegen_flags: <defaults>
</compile_context>

<pallas_src>
import jax
import jax.numpy as jnp
from jax.experimental import pallas as pl
from jax.experimental.pallas import tpu as pltpu


MLP_DIMS = (64, 128, 512, 1024, 2048)
LANE = 128
MAX_BM = 256          # batch rows per block (keeps MXU M-dim full, VMEM bounded)


def _round_up(x, m):
    return (x + m - 1) // m * m


# ----------------------------------------------------------------------------
# Pallas kernel: one batch block, all weights VMEM-resident.
# ----------------------------------------------------------------------------
def hypernet_kernel(x_ref,
                    w1, b1, w2, b2, w3, b3, w4, b4,
                    w5, b5, wo, bo,
                    o_ref):
    h = x_ref[...].astype(jnp.bfloat16)

    def lin_relu(h, w_ref, b_ref):
        y = jnp.dot(h, w_ref[...], preferred_element_type=jnp.float32)
        y = jnp.maximum(y + b_ref[...], 0.0)          # plain ReLU (per module)
        return y.astype(jnp.bfloat16)

    h = lin_relu(h, w1, b1)
    h = lin_relu(h, w2, b2)
    h = lin_relu(h, w3, b3)
    h = lin_relu(h, w4, b4)

    # Layer 5: Linear(1024, 2048), no activation.
    h5 = jnp.dot(h, w5[...], preferred_element_type=jnp.float32) + b5[...]
    h5 = h5.astype(jnp.bfloat16)

    # Fused output heads: concat of all head Linears == one matmul.
    o_ref[...] = jnp.dot(h5, wo[...], preferred_element_type=jnp.float32) + bo[...]


# ----------------------------------------------------------------------------
# Wrapper
# ----------------------------------------------------------------------------
def hypernet_forward(x, params):
    (w1, b1, w2, b2, w3, b3, w4, b4, w5, b5) = params["mlp"]
    wo, bo = params["heads"]          # zero-padded to a lane multiple (bf16/f32)
    out_dim = params["out_dim"]       # true (unpadded) fused head width

    B, in_dim = x.shape
    H5 = w5.shape[1]                  # 2048
    P = wo.shape[1]                   # padded head width (multiple of 128)

    # Batch tiling: bounded block size, padded batch (padded rows sliced off).
    if B <= MAX_BM:
        bm = _round_up(B, 16)         # multiple of 16 for bf16 sublane packing
        b_pad = bm
    else:
        bm = MAX_BM
        b_pad = _round_up(B, bm)
    nb = b_pad // bm
    if b_pad != B:
        x = jnp.pad(x, ((0, b_pad - B), (0, 0)))

    const = lambda i: (0, 0)          # weights: resident, fetched once

    in_specs = [
        pl.BlockSpec((bm, in_dim), lambda i: (i, 0)),               # x
        pl.BlockSpec(w1.shape, const), pl.BlockSpec(b1.shape, const),
        pl.BlockSpec(w2.shape, const), pl.BlockSpec(b2.shape, const),
        pl.BlockSpec(w3.shape, const), pl.BlockSpec(b3.shape, const),
        pl.BlockSpec(w4.shape, const), pl.BlockSpec(b4.shape, const),
        pl.BlockSpec(w5.shape, const), pl.BlockSpec(b5.shape, const),
        pl.BlockSpec(wo.shape, const), pl.BlockSpec(bo.shape, const),
    ]
    out_spec = pl.BlockSpec((bm, P), lambda i: (i, 0))

    args = (x, w1, b1, w2, b2, w3, b3, w4, b4, w5, b5, wo, bo)
    weight_bytes = int(sum(a.size * a.dtype.itemsize for a in args[1:]))
    flops = 2 * b_pad * (in_dim * 64 + 64 * 128 + 128 * 512 + 512 * 1024
                         + 1024 * H5 + H5 * P)
    # Weights are fetched exactly once (constant index maps); x in, out written.
    bytes_accessed = weight_bytes + x.size * x.dtype.itemsize + b_pad * P * 4

    out = pl.pallas_call(
        hypernet_kernel,
        out_shape=jax.ShapeDtypeStruct((b_pad, P), jnp.float32),
        grid=(nb,),
        in_specs=in_specs,
        out_specs=out_spec,
        compiler_params=pltpu.CompilerParams(
            dimension_semantics=("parallel",),
            vmem_limit_bytes=32 * 1024 * 1024,   # safe on v5e / v6e / v7x
        ),
        cost_estimate=pl.CostEstimate(
            flops=flops, transcendentals=0, bytes_accessed=bytes_accessed),
    )(*args)

    return out[:B, :out_dim]


# ----------------------------------------------------------------------------
# Deterministic parameter construction (synthetic init, matches module shapes).
# ----------------------------------------------------------------------------
def make_params(key, config):
    input_size = config["input_size"]
    use_bias = config["use_bias"]
    t_out_ch = [3] + list(config["target_network_layer_out_channels"]) + [3]
    t_use_bias = int(config["target_network_use_bias"])

    mlp_dims = [input_size] + list(MLP_DIMS)

    def init_linear(k, fan_in, fan_out, with_bias):
        kw, kb = jax.random.split(k)
        bound = 1.0 / jnp.sqrt(jnp.float32(fan_in))
        w = jax.random.uniform(kw, (fan_in, fan_out), jnp.float32, -bound, bound)
        if with_bias:
            b = jax.random.uniform(kb, (1, fan_out), jnp.float32, -bound, bound)
        else:
            b = jnp.zeros((1, fan_out), jnp.float32)
        return w, b

    n_heads = len(t_out_ch) - 1
    keys = jax.random.split(key, 5 + n_heads)

    mlp = []
    for i in range(5):
        w, b = init_linear(keys[i], mlp_dims[i], mlp_dims[i + 1], use_bias)
        # Weights stored/streamed as bf16 (halves the weight fetch); biases f32.
        mlp.extend([w.astype(jnp.bfloat16), b])

    # Output heads: Linear(2048, (in_ch + t_use_bias) * out_ch, bias=True).
    # torch.cat of head outputs along dim 1 == one matmul with concatenated W/b.
    head_ws, head_bs = [], []
    for li in range(1, len(t_out_ch)):
        d = (t_out_ch[li - 1] + t_use_bias) * t_out_ch[li]
        w, b = init_linear(keys[5 + li - 1], mlp_dims[-1], d, True)
        head_ws.append(w)
        head_bs.append(b)
    wo = jnp.concatenate(head_ws, axis=1)
    bo = jnp.concatenate(head_bs, axis=1)
    out_dim = wo.shape[1]

    # Pad fused head width to a lane multiple (lane-dense stores); zero columns
    # contribute nothing and are sliced off in the wrapper.
    P = _round_up(out_dim, LANE)
    wo = jnp.pad(wo, ((0, 0), (0, P - out_dim)))
    bo = jnp.pad(bo, ((0, 0), (0, P - out_dim)))

    return {
        "mlp": tuple(mlp),
        "heads": (wo.astype(jnp.bfloat16), bo),
        "out_dim": out_dim,
    }


# ----------------------------------------------------------------------------
# Pure-JAX reference (same bf16 weight/activation rounding, f32 accumulation).
# ----------------------------------------------------------------------------
def reference_forward(x, params):
    (w1, b1, w2, b2, w3, b3, w4, b4, w5, b5) = params["mlp"]
    wo, bo = params["heads"]
    out_dim = params["out_dim"]

    h = x.astype(jnp.bfloat16).astype(jnp.float32)
    for w, b in ((w1, b1), (w2, b2), (w3, b3), (w4, b4)):
        h = jnp.maximum(h @ w.astype(jnp.float32) + b, 0.0)
        h = h.astype(jnp.bfloat16).astype(jnp.float32)
    h = h @ w5.astype(jnp.float32) + b5
    h = h.astype(jnp.bfloat16).astype(jnp.float32)
    out = h @ wo.astype(jnp.float32) + bo
    return out[:, :out_dim]


if __name__ == "__main__":
    config = {
        "input_size": 32,
        "use_bias": True,
        "relu_slope": 0.2,  # stored by the torch module but unused (nn.ReLU)
        "target_network_layer_out_channels": [8, 16],
        "target_network_use_bias": True,
        "target_network_freeze_layers_learning": False,
    }

    key = jax.random.PRNGKey(0)
    kx, kx2, kp = jax.random.split(key, 3)
    params = make_params(kp, config)

    # Small batch (single block, DMA-bound path).
    B = 2
    x = jax.random.normal(kx, (B, config["input_size"]), jnp.float32)
    out = jax.block_until_ready(hypernet_forward(x, params))
    ref = reference_forward(x, params)
    assert out.shape == ref.shape, (out.shape, ref.shape)
    max_err = float(jnp.max(jnp.abs(out - ref)))
    assert jnp.allclose(out, ref, atol=2e-3, rtol=2e-3), max_err

    # Ragged larger batch (multi-block + padding path).
    B2 = 300
    x2 = jax.random.normal(kx2, (B2, config["input_size"]), jnp.float32)
    out2 = jax.block_until_ready(hypernet_forward(x2, params))
    ref2 = reference_forward(x2, params)
    assert out2.shape == ref2.shape, (out2.shape, ref2.shape)
    max_err2 = float(jnp.max(jnp.abs(out2 - ref2)))
    assert jnp.allclose(out2, ref2, atol=2e-3, rtol=2e-3), max_err2

    print("KERNEL_OK")
</pallas_src>

<mosaic_0001>
module attributes {stable_mosaic.version = 11 : i64} {
  func.func @hypernet_kernel(%arg0: i32, %arg1: memref<16x32xf32, #tpu.memory_space<vmem>>, %arg2: memref<32x64xbf16, #tpu.memory_space<vmem>>, %arg3: memref<1x64xf32, #tpu.memory_space<vmem>>, %arg4: memref<64x128xbf16, #tpu.memory_space<vmem>>, %arg5: memref<1x128xf32, #tpu.memory_space<vmem>>, %arg6: memref<128x512xbf16, #tpu.memory_space<vmem>>, %arg7: memref<1x512xf32, #tpu.memory_space<vmem>>, %arg8: memref<512x1024xbf16, #tpu.memory_space<vmem>>, %arg9: memref<1x1024xf32, #tpu.memory_space<vmem>>, %arg10: memref<1024x2048xbf16, #tpu.memory_space<vmem>>, %arg11: memref<1x2048xf32, #tpu.memory_space<vmem>>, %arg12: memref<2048x256xbf16, #tpu.memory_space<vmem>>, %arg13: memref<1x256xf32, #tpu.memory_space<vmem>>, %arg14: memref<16x256xf32, #tpu.memory_space<vmem>>) attributes {dimension_semantics = [#tpu.dimension_semantics<parallel>], iteration_bounds = array<i64: 1>, scalar_prefetch = 0 : i64, scratch_operands = 0 : i64, tpu.core_type = #tpu.core_type<tc>, window_params = [{transform_indices = @transform_0, window_bounds = array<i64: 16, 32>}, {pipeline_mode = #tpu.pipeline_mode<synchronous>, transform_indices = @transform_1, window_bounds = array<i64: 32, 64>}, {pipeline_mode = #tpu.pipeline_mode<synchronous>, transform_indices = @transform_2, window_bounds = array<i64: 1, 64>}, {pipeline_mode = #tpu.pipeline_mode<synchronous>, transform_indices = @transform_3, window_bounds = array<i64: 64, 128>}, {pipeline_mode = #tpu.pipeline_mode<synchronous>, transform_indices = @transform_4, window_bounds = array<i64: 1, 128>}, {pipeline_mode = #tpu.pipeline_mode<synchronous>, transform_indices = @transform_5, window_bounds = array<i64: 128, 512>}, {pipeline_mode = #tpu.pipeline_mode<synchronous>, transform_indices = @transform_6, window_bounds = array<i64: 1, 512>}, {pipeline_mode = #tpu.pipeline_mode<synchronous>, transform_indices = @transform_7, window_bounds = array<i64: 512, 1024>}, {pipeline_mode = #tpu.pipeline_mode<synchronous>, transform_indices = @transform_8, window_bounds = array<i64: 1, 1024>}, {pipeline_mode = #tpu.pipeline_mode<synchronous>, transform_indices = @transform_9, window_bounds = array<i64: 1024, 2048>}, {pipeline_mode = #tpu.pipeline_mode<synchronous>, transform_indices = @transform_10, window_bounds = array<i64: 1, 2048>}, {pipeline_mode = #tpu.pipeline_mode<synchronous>, transform_indices = @transform_11, window_bounds = array<i64: 2048, 256>}, {pipeline_mode = #tpu.pipeline_mode<synchronous>, transform_indices = @transform_12, window_bounds = array<i64: 1, 256>}, {transform_indices = @transform_13, window_bounds = array<i64: 16, 256>}]} {
    %c0 = arith.constant 0 : index
    %c0_0 = arith.constant 0 : index
    %0 = vector.load %arg1[%c0, %c0_0] : memref<16x32xf32, #tpu.memory_space<vmem>>, vector<16x32xf32>
    %1 = arith.truncf %0 : vector<16x32xf32> to vector<16x32xbf16>
    %c0_1 = arith.constant 0 : index
    %c0_2 = arith.constant 0 : index
    %2 = vector.load %arg2[%c0_1, %c0_2] : memref<32x64xbf16, #tpu.memory_space<vmem>>, vector<32x64xbf16>
    %cst = arith.constant dense<0.000000e+00> : vector<16x64xf32>
    %3 = tpu.matmul %1, %2, %cst {dimension_numbers = #tpu.dot_dimension_numbers<[1], [0], [0], [1], [0, 0, 1, 1], [], []>} : vector<16x32xbf16>, vector<32x64xbf16>, vector<16x64xf32> -> vector<16x64xf32>
    %c0_3 = arith.constant 0 : index
    %c0_4 = arith.constant 0 : index
    %4 = vector.load %arg3[%c0_3, %c0_4] : memref<1x64xf32, #tpu.memory_space<vmem>>, vector<1x64xf32>
    %5 = vector.broadcast %4 : vector<1x64xf32> to vector<16x64xf32>
    %6 = arith.addf %3, %5 : vector<16x64xf32>
    %cst_5 = arith.constant 0.000000e+00 : f32
    %7 = vector.broadcast %cst_5 : f32 to vector<16x64xf32>
    %8 = arith.maximumf %6, %7 : vector<16x64xf32>
    %9 = arith.truncf %8 : vector<16x64xf32> to vector<16x64xbf16>
    %c0_6 = arith.constant 0 : index
    %c0_7 = arith.constant 0 : index
    %10 = vector.load %arg4[%c0_6, %c0_7] : memref<64x128xbf16, #tpu.memory_space<vmem>>, vector<64x128xbf16>
    %cst_8 = arith.constant dense<0.000000e+00> : vector<16x128xf32>
    %11 = tpu.matmul %9, %10, %cst_8 {dimension_numbers = #tpu.dot_dimension_numbers<[1], [0], [0], [1], [0, 0, 1, 1], [], []>} : vector<16x64xbf16>, vector<64x128xbf16>, vector<16x128xf32> -> vector<16x128xf32>
    %c0_9 = arith.constant 0 : index
    %c0_10 = arith.constant 0 : index
    %12 = vector.load %arg5[%c0_9, %c0_10] : memref<1x128xf32, #tpu.memory_space<vmem>>, vector<1x128xf32>
    %13 = vector.broadcast %12 : vector<1x128xf32> to vector<16x128xf32>
    %14 = arith.addf %11, %13 : vector<16x128xf32>
    %cst_11 = arith.constant 0.000000e+00 : f32
    %15 = vector.broadcast %cst_11 : f32 to vector<16x128xf32>
    %16 = arith.maximumf %14, %15 : vector<16x128xf32>
    %17 = arith.truncf %16 : vector<16x128xf32> to vector<16x128xbf16>
    %c0_12 = arith.constant 0 : index
    %c0_13 = arith.constant 0 : index
    %18 = vector.load %arg6[%c0_12, %c0_13] : memref<128x512xbf16, #tpu.memory_space<vmem>>, vector<128x512xbf16>
    %cst_14 = arith.constant dense<0.000000e+00> : vector<16x512xf32>
    %19 = tpu.matmul %17, %18, %cst_14 {dimension_numbers = #tpu.dot_dimension_numbers<[1], [0], [0], [1], [0, 0, 1, 1], [], []>} : vector<16x128xbf16>, vector<128x512xbf16>, vector<16x512xf32> -> vector<16x512xf32>
    %c0_15 = arith.constant 0 : index
    %c0_16 = arith.constant 0 : index
    %20 = vector.load %arg7[%c0_15, %c0_16] : memref<1x512xf32, #tpu.memory_space<vmem>>, vector<1x512xf32>
    %21 = vector.broadcast %20 : vector<1x512xf32> to vector<16x512xf32>
    %22 = arith.addf %19, %21 : vector<16x512xf32>
    %cst_17 = arith.constant 0.000000e+00 : f32
    %23 = vector.broadcast %cst_17 : f32 to vector<16x512xf32>
    %24 = arith.maximumf %22, %23 : vector<16x512xf32>
    %25 = arith.truncf %24 : vector<16x512xf32> to vector<16x512xbf16>
    %c0_18 = arith.constant 0 : index
    %c0_19 = arith.constant 0 : index
    %26 = vector.load %arg8[%c0_18, %c0_19] : memref<512x1024xbf16, #tpu.memory_space<vmem>>, vector<512x1024xbf16>
    %cst_20 = arith.constant dense<0.000000e+00> : vector<16x1024xf32>
    %27 = tpu.matmul %25, %26, %cst_20 {dimension_numbers = #tpu.dot_dimension_numbers<[1], [0], [0], [1], [0, 0, 1, 1], [], []>} : vector<16x512xbf16>, vector<512x1024xbf16>, vector<16x1024xf32> -> vector<16x1024xf32>
    %c0_21 = arith.constant 0 : index
    %c0_22 = arith.constant 0 : index
    %28 = vector.load %arg9[%c0_21, %c0_22] : memref<1x1024xf32, #tpu.memory_space<vmem>>, vector<1x1024xf32>
    %29 = vector.broadcast %28 : vector<1x1024xf32> to vector<16x1024xf32>
    %30 = arith.addf %27, %29 : vector<16x1024xf32>
    %cst_23 = arith.constant 0.000000e+00 : f32
    %31 = vector.broadcast %cst_23 : f32 to vector<16x1024xf32>
    %32 = arith.maximumf %30, %31 : vector<16x1024xf32>
    %33 = arith.truncf %32 : vector<16x1024xf32> to vector<16x1024xbf16>
    %c0_24 = arith.constant 0 : index
    %c0_25 = arith.constant 0 : index
    %34 = vector.load %arg10[%c0_24, %c0_25] : memref<1024x2048xbf16, #tpu.memory_space<vmem>>, vector<1024x2048xbf16>
    %cst_26 = arith.constant dense<0.000000e+00> : vector<16x2048xf32>
    %35 = tpu.matmul %33, %34, %cst_26 {dimension_numbers = #tpu.dot_dimension_numbers<[1], [0], [0], [1], [0, 0, 1, 1], [], []>} : vector<16x1024xbf16>, vector<1024x2048xbf16>, vector<16x2048xf32> -> vector<16x2048xf32>
    %c0_27 = arith.constant 0 : index
    %c0_28 = arith.constant 0 : index
    %36 = vector.load %arg11[%c0_27, %c0_28] : memref<1x2048xf32, #tpu.memory_space<vmem>>, vector<1x2048xf32>
    %37 = vector.broadcast %36 : vector<1x2048xf32> to vector<16x2048xf32>
    %38 = arith.addf %35, %37 : vector<16x2048xf32>
    %39 = arith.truncf %38 : vector<16x2048xf32> to vector<16x2048xbf16>
    %c0_29 = arith.constant 0 : index
    %c0_30 = arith.constant 0 : index
    %40 = vector.load %arg12[%c0_29, %c0_30] : memref<2048x256xbf16, #tpu.memory_space<vmem>>, vector<2048x256xbf16>
    %cst_31 = arith.constant dense<0.000000e+00> : vector<16x256xf32>
    %41 = tpu.matmul %39, %40, %cst_31 {dimension_numbers = #tpu.dot_dimension_numbers<[1], [0], [0], [1], [0, 0, 1, 1], [], []>} : vector<16x2048xbf16>, vector<2048x256xbf16>, vector<16x256xf32> -> vector<16x256xf32>
    %c0_32 = arith.constant 0 : index
    %c0_33 = arith.constant 0 : index
    %42 = vector.load %arg13[%c0_32, %c0_33] : memref<1x256xf32, #tpu.memory_space<vmem>>, vector<1x256xf32>
    %43 = vector.broadcast %42 : vector<1x256xf32> to vector<16x256xf32>
    %44 = arith.addf %41, %43 : vector<16x256xf32>
    %c0_34 = arith.constant 0 : index
    %c0_35 = arith.constant 0 : index
    %45 = vector.load %arg14[%c0_34, %c0_35] : memref<16x256xf32, #tpu.memory_space<vmem>>, vector<16x256xf32>
    tpu.vector_store %arg14[%c0_34, %c0_35], %44 {strides = array<i32>} : memref<16x256xf32, #tpu.memory_space<vmem>>, vector<16x256xf32>,
    return
  }
  func.func @transform_0(%arg0: i32) -> (i32, i32) {
    %c0_i32 = arith.constant 0 : i32
    %c0_i32_0 = arith.constant 0 : i32
    return %arg0, %c0_i32 : i32, i32
  }
  func.func @transform_1(%arg0: i32) -> (i32, i32) {
    %c0_i32 = arith.constant 0 : i32
    %c0_i32_0 = arith.constant 0 : i32
    %c0_i32_1 = arith.constant 0 : i32
    return %c0_i32, %c0_i32_0 : i32, i32
  }
  func.func @transform_2(%arg0: i32) -> (i32, i32) {
    %c0_i32 = arith.constant 0 : i32
    %c0_i32_0 = arith.constant 0 : i32
    %c0_i32_1 = arith.constant 0 : i32
    return %c0_i32, %c0_i32_0 : i32, i32
  }
  func.func @transform_3(%arg0: i32) -> (i32, i32) {
    %c0_i32 = arith.constant 0 : i32
    %c0_i32_0 = arith.constant 0 : i32
    %c0_i32_1 = arith.constant 0 : i32
    return %c0_i32, %c0_i32_0 : i32, i32
  }
  func.func @transform_4(%arg0: i32) -> (i32, i32) {
    %c0_i32 = arith.constant 0 : i32
    %c0_i32_0 = arith.constant 0 : i32
    %c0_i32_1 = arith.constant 0 : i32
    return %c0_i32, %c0_i32_0 : i32, i32
  }
  func.func @transform_5(%arg0: i32) -> (i32, i32) {
    %c0_i32 = arith.constant 0 : i32
    %c0_i32_0 = arith.constant 0 : i32
    %c0_i32_1 = arith.constant 0 : i32
    return %c0_i32, %c0_i32_0 : i32, i32
  }
  func.func @transform_6(%arg0: i32) -> (i32, i32) {
    %c0_i32 = arith.constant 0 : i32
    %c0_i32_0 = arith.constant 0 : i32
    %c0_i32_1 = arith.constant 0 : i32
    return %c0_i32, %c0_i32_0 : i32, i32
  }
  func.func @transform_7(%arg0: i32) -> (i32, i32) {
    %c0_i32 = arith.constant 0 : i32
    %c0_i32_0 = arith.constant 0 : i32
    %c0_i32_1 = arith.constant 0 : i32
    return %c0_i32, %c0_i32_0 : i32, i32
  }
  func.func @transform_8(%arg0: i32) -> (i32, i32) {
    %c0_i32 = arith.constant 0 : i32
    %c0_i32_0 = arith.constant 0 : i32
    %c0_i32_1 = arith.constant 0 : i32
    return %c0_i32, %c0_i32_0 : i32, i32
  }
  func.func @transform_9(%arg0: i32) -> (i32, i32) {
    %c0_i32 = arith.constant 0 : i32
    %c0_i32_0 = arith.constant 0 : i32
    %c0_i32_1 = arith.constant 0 : i32
    return %c0_i32, %c0_i32_0 : i32, i32
  }
  func.func @transform_10(%arg0: i32) -> (i32, i32) {
    %c0_i32 = arith.constant 0 : i32
    %c0_i32_0 = arith.constant 0 : i32
    %c0_i32_1 = arith.constant 0 : i32
    return %c0_i32, %c0_i32_0 : i32, i32
  }
  func.func @transform_11(%arg0: i32) -> (i32, i32) {
    %c0_i32 = arith.constant 0 : i32
    %c0_i32_0 = arith.constant 0 : i32
    %c0_i32_1 = arith.constant 0 : i32
    return %c0_i32, %c0_i32_0 : i32, i32
  }
  func.func @transform_12(%arg0: i32) -> (i32, i32) {
    %c0_i32 = arith.constant 0 : i32
    %c0_i32_0 = arith.constant 0 : i32
    %c0_i32_1 = arith.constant 0 : i32
    return %c0_i32, %c0_i32_0 : i32, i32
  }
  func.func @transform_13(%arg0: i32) -> (i32, i32) {
    %c0_i32 = arith.constant 0 : i32
    %c0_i32_0 = arith.constant 0 : i32
    return %arg0, %c0_i32 : i32, i32
  }
}

</mosaic_0001>

<llo_original>
// kernel: tpu_custom_call.1
$region0: #{tpu_custom_call.1}
  #allocation0 [shape = 'u32[]', space=smem, size = 0x4, offset = 0x4, fixed_abs, tag = 'smem constant byte address 0x4 - core index']
  #allocation1 [shape = 'u32[144,128]{1,0:T(1,128)}', space=vmem, size = 0x12000, scoped, tag = 'internal scratch']
  %s0 = inlined_call_operand.hbm [shape: f32[16,32], index: 0, kind: input, shape index: {}]
  %s1 = inlined_call_operand.hbm [shape: bf16[32,64], index: 1, kind: input, shape index: {}]
  %s2 = inlined_call_operand.hbm [shape: f32[1,64], index: 2, kind: input, shape index: {}]
  %s3 = inlined_call_operand.hbm [shape: bf16[64,128], index: 3, kind: input, shape index: {}]
  %s4 = inlined_call_operand.hbm [shape: f32[1,128], index: 4, kind: input, shape index: {}]
  %s5 = inlined_call_operand.hbm [shape: bf16[128,512], index: 5, kind: input, shape index: {}]
  %s6 = inlined_call_operand.hbm [shape: f32[1,512], index: 6, kind: input, shape index: {}]
  %s7 = inlined_call_operand.hbm [shape: bf16[512,1024], index: 7, kind: input, shape index: {}]
  %s8 = inlined_call_operand.hbm [shape: f32[1,1024], index: 8, kind: input, shape index: {}]
  %s9 = inlined_call_operand.hbm [shape: bf16[1024,2048], index: 9, kind: input, shape index: {}]
  %s10 = inlined_call_operand.hbm [shape: f32[1,2048], index: 10, kind: input, shape index: {}]
  %s11 = inlined_call_operand.hbm [shape: bf16[2048,256], index: 11, kind: input, shape index: {}]
  %s12 = inlined_call_operand.hbm [shape: f32[1,256], index: 12, kind: input, shape index: {}]
  %s13 = inlined_call_operand.hbm [shape: f32[16,256], index: 13, kind: output, shape index: {}]
  %s14 = sld [smem:[#allocation0]]
  $region114: #{tpu_custom_call.1} parent=0
    _
  %s16 = ssub.s32 1, %s14
  %s17 = scalar_select 0, %s16, %s14
  $region1: #{tpu_custom_call.1} parent=0
    #allocation2 [shape = 'u8[8192]{0}', space=vmem, size = 0x2000, scoped, tag = 'input window, operand 0, single buffered']
    #allocation3 [shape = 's32[1]{0}', space=sflag, size = 0x4, scoped, tag = 'scoped memory for tpu_custom_call.1']
    #allocation4 [shape = 's32[1]{0}', space=sflag, size = 0x4, scoped, tag = 'scoped memory for tpu_custom_call.1']
    #allocation5 [shape = 'u8[8192]{0}', space=vmem, size = 0x2000, scoped, tag = 'input window, operand 1, single buffered']
    #allocation6 [shape = 's32[1]{0}', space=sflag, size = 0x4, scoped, tag = 'scoped memory for tpu_custom_call.1']
    #allocation7 [shape = 'u8[512]{0}', space=vmem, size = 0x400, scoped, tag = 'input window, operand 2, single buffered']
    #allocation8 [shape = 'u8[16384]{0}', space=vmem, size = 0x4000, scoped, tag = 'input window, operand 3, single buffered']
    #allocation9 [shape = 's32[1]{0}', space=sflag, size = 0x4, scoped, tag = 'scoped memory for tpu_custom_call.1']
    #allocation10 [shape = 'u8[512]{0}', space=vmem, size = 0x400, scoped, tag = 'input window, operand 4, single buffered']
    #allocation11 [shape = 'u8[131072]{0}', space=vmem, size = 0x20000, scoped, tag = 'input window, operand 5, single buffered']
    #allocation12 [shape = 's32[1]{0}', space=sflag, size = 0x4, scoped, tag = 'scoped memory for tpu_custom_call.1']
    #allocation13 [shape = 'u8[2048]{0}', space=vmem, size = 0x800, scoped, tag = 'input window, operand 6, single buffered']
    #allocation14 [shape = 'u8[1048576]{0}', space=vmem, size = 0x100000, scoped, tag = 'input window, operand 7, single buffered']
    #allocation15 [shape = 's32[1]{0}', space=sflag, size = 0x4, scoped, tag = 'scoped memory for tpu_custom_call.1']
    #allocation16 [shape = 'u8[4096]{0}', space=vmem, size = 0x1000, scoped, tag = 'input window, operand 8, single buffered']
    #allocation17 [shape = 'u8[4194304]{0}', space=vmem, size = 0x400000, scoped, tag = 'input window, operand 9, single buffered']
    #allocation18 [shape = 's32[1]{0}', space=sflag, size = 0x4, scoped, tag = 'scoped memory for tpu_custom_call.1']
    #allocation19 [shape = 'u8[8192]{0}', space=vmem, size = 0x2000, scoped, tag = 'input window, operand 10, single buffered']
    #allocation20 [shape = 'u8[1048576]{0}', space=vmem, size = 0x100000, scoped, tag = 'input window, operand 11, single buffered']
    #allocation21 [shape = 's32[1]{0}', space=sflag, size = 0x4, scoped, tag = 'scoped memory for tpu_custom_call.1']
    #allocation22 [shape = 'u8[1024]{0}', space=vmem, size = 0x400, scoped, tag = 'input window, operand 12, single buffered']
    #allocation23 [shape = 'u8[16384]{0}', space=vmem, size = 0x4000, scoped, tag = 'output window, operand 0, single buffered']
    %18 = vsyncpa [#allocation3], 0
    %19 = vsyncpa [#allocation6], 0
    %20 = vsyncpa [#allocation9], 0
    %21 = vsyncpa [#allocation12], 0
    %22 = vsyncpa [#allocation15], 0
    %23 = vsyncpa [#allocation18], 0
    %24 = vsyncpa [#allocation21], 0
    %25 = vsyncpa [#allocation4], 0
    // Predicated region
    $region2: #{tpu_custom_call.1} parent=1 // pred_check
      _
    $region3: #{tpu_custom_call.1} parent=1 // pred_check_branch
      %27 = sbr.rel (0) target = $region5
    $region4: #{tpu_custom_call.1} parent=1 // pred_region
      %s29 = ssub.s32 256, 256
      %30 = vsyncadd [#allocation3], %s29
      %s31 = sshll.u32 [#allocation2], 4
      %s32 = int_to_ptr.vmem [resolvable:$true] %s31
      %37 = dma.hbm_to_vmem [thread:$0]  %s0, 256, %s32, [#allocation3], 128, 128, 8
    $region5: #{tpu_custom_call.1} parent=1 // pred_fallthru
      _
    // Predicated region
    $region6: #{tpu_custom_call.1} parent=1 // pred_check
      _
    $region7: #{tpu_custom_call.1} parent=1 // pred_check_branch
      %39 = sbr.rel (0) target = $region9
    $region8: #{tpu_custom_call.1} parent=1 // pred_region
      %s41 = ssub.s32 256, 256
      %42 = vsyncadd [#allocation6], %s41
      %s43 = sshll.u32 [#allocation5], 4
      %s44 = int_to_ptr.vmem [resolvable:$true] %s43
      %49 = dma.hbm_to_vmem [thread:$0]  %s1, 256, %s44, [#allocation6], 64, 64, 4
    $region9: #{tpu_custom_call.1} parent=1 // pred_fallthru
      _
    // Predicated region
    $region10: #{tpu_custom_call.1} parent=1 // pred_check
      _
    $region11: #{tpu_custom_call.1} parent=1 // pred_check_branch
      %51 = sbr.rel (0) target = $region13
    $region12: #{tpu_custom_call.1} parent=1 // pred_region
      %s53 = ssub.s32 16, 16
      %54 = vsyncadd [#allocation6], %s53
      %s56 = sshll.u32 [#allocation7], 4
      %s57 = int_to_ptr.vmem [resolvable:$true] %s56
      %59 = dma.hbm_to_vmem [thread:$0]  %s2, 16, %s57, [#allocation6]
    $region13: #{tpu_custom_call.1} parent=1 // pred_fallthru
      _
    // Predicated region
    $region14: #{tpu_custom_call.1} parent=1 // pred_check
      _
    $region15: #{tpu_custom_call.1} parent=1 // pred_check_branch
      %61 = sbr.rel (0) target = $region17
    $region16: #{tpu_custom_call.1} parent=1 // pred_region
      %s63 = ssub.s32 512, 512
      %64 = vsyncadd [#allocation9], %s63
      %s65 = sshll.u32 [#allocation8], 4
      %s66 = int_to_ptr.vmem [resolvable:$true] %s65
      %71 = dma.hbm_to_vmem [thread:$0]  %s3, 512, %s66, [#allocation9], 64, 64, 4
    $region17: #{tpu_custom_call.1} parent=1 // pred_fallthru
      _
    // Predicated region
    $region18: #{tpu_custom_call.1} parent=1 // pred_check
      _
    $region19: #{tpu_custom_call.1} parent=1 // pred_check_branch
      %73 = sbr.rel (0) target = $region21
    $region20: #{tpu_custom_call.1} parent=1 // pred_region
      %s75 = ssub.s32 16, 16
      %76 = vsyncadd [#allocation9], %s75
      %s78 = sshll.u32 [#allocation10], 4
      %s79 = int_to_ptr.vmem [resolvable:$true] %s78
      %81 = dma.hbm_to_vmem [thread:$0]  %s4, 16, %s79, [#allocation9]
    $region21: #{tpu_custom_call.1} parent=1 // pred_fallthru
      _
    // Predicated region
    $region22: #{tpu_custom_call.1} parent=1 // pred_check
      _
    $region23: #{tpu_custom_call.1} parent=1 // pred_check_branch
      %83 = sbr.rel (0) target = $region25
    $region24: #{tpu_custom_call.1} parent=1 // pred_region
      %s85 = ssub.s32 4096, 4096
      %86 = vsyncadd [#allocation12], %s85
      %s87 = sshll.u32 [#allocation11], 4
      %s88 = int_to_ptr.vmem [resolvable:$true] %s87
      %93 = dma.hbm_to_vmem [thread:$0]  %s5, 4096, %s88, [#allocation12], 256, 256, 16
    $region25: #{tpu_custom_call.1} parent=1 // pred_fallthru
      _
    // Predicated region
    $region26: #{tpu_custom_call.1} parent=1 // pred_check
      _
    $region27: #{tpu_custom_call.1} parent=1 // pred_check_branch
      %95 = sbr.rel (0) target = $region29
    $region28: #{tpu_custom_call.1} parent=1 // pred_region
      %s97 = ssub.s32 64, 64
      %98 = vsyncadd [#allocation12], %s97
      %s100 = sshll.u32 [#allocation13], 4
      %s101 = int_to_ptr.vmem [resolvable:$true] %s100
      %103 = dma.hbm_to_vmem [thread:$0]  %s6, 64, %s101, [#allocation12]
    $region29: #{tpu_custom_call.1} parent=1 // pred_fallthru
      _
    // Predicated region
    $region30: #{tpu_custom_call.1} parent=1 // pred_check
      _
    $region31: #{tpu_custom_call.1} parent=1 // pred_check_branch
      %105 = sbr.rel (0) target = $region33
    $region32: #{tpu_custom_call.1} parent=1 // pred_region
      %s107 = ssub.s32 32768, 32768
      %108 = vsyncadd [#allocation15], %s107
      %s109 = sshll.u32 [#allocation14], 4
      %s110 = int_to_ptr.vmem [resolvable:$true] %s109
      %115 = dma.hbm_to_vmem [thread:$0]  %s7, 32768, %s110, [#allocation15], 512, 512, 32
    $region33: #{tpu_custom_call.1} parent=1 // pred_fallthru
      _
    // Predicated region
    $region34: #{tpu_custom_call.1} parent=1 // pred_check
      _
    $region35: #{tpu_custom_call.1} parent=1 // pred_check_branch
      %117 = sbr.rel (0) target = $region37
    $region36: #{tpu_custom_call.1} parent=1 // pred_region
      %s119 = ssub.s32 128, 128
      %120 = vsyncadd [#allocation15], %s119
      %s122 = sshll.u32 [#allocation16], 4
      %s123 = int_to_ptr.vmem [resolvable:$true] %s122
      %125 = dma.hbm_to_vmem [thread:$0]  %s8, 128, %s123, [#allocation15]
    $region37: #{tpu_custom_call.1} parent=1 // pred_fallthru
      _
    // Predicated region
    $region38: #{tpu_custom_call.1} parent=1 // pred_check
      _
    $region39: #{tpu_custom_call.1} parent=1 // pred_check_branch
      %127 = sbr.rel (0) target = $region41
    $region40: #{tpu_custom_call.1} parent=1 // pred_region
      %s129 = ssub.s32 131072, 131072
      %130 = vsyncadd [#allocation18], %s129
      %s131 = sshll.u32 [#allocation17], 4
      %s132 = int_to_ptr.vmem [resolvable:$true] %s131
      %137 = dma.hbm_to_vmem [thread:$0]  %s9, 131072, %s132, [#allocation18], 1024, 1024, 64
    $region41: #{tpu_custom_call.1} parent=1 // pred_fallthru
      _
    // Predicated region
    $region42: #{tpu_custom_call.1} parent=1 // pred_check
      _
    $region43: #{tpu_custom_call.1} parent=1 // pred_check_branch
      %139 = sbr.rel (0) target = $region45
    $region44: #{tpu_custom_call.1} parent=1 // pred_region
      %s141 = ssub.s32 256, 256
      %142 = vsyncadd [#allocation18], %s141
      %s144 = sshll.u32 [#allocation19], 4
      %s145 = int_to_ptr.vmem [resolvable:$true] %s144
      %147 = dma.hbm_to_vmem [thread:$0]  %s10, 256, %s145, [#allocation18]
    $region45: #{tpu_custom_call.1} parent=1 // pred_fallthru
      _
    // Predicated region
    $region46: #{tpu_custom_call.1} parent=1 // pred_check
      _
    $region47: #{tpu_custom_call.1} parent=1 // pred_check_branch
      %149 = sbr.rel (0) target = $region49
    $region48: #{tpu_custom_call.1} parent=1 // pred_region
      %s151 = ssub.s32 32768, 32768
      %152 = vsyncadd [#allocation21], %s151
      %s153 = sshll.u32 [#allocation20], 4
      %s154 = int_to_ptr.vmem [resolvable:$true] %s153
      %159 = dma.hbm_to_vmem [thread:$0]  %s11, 32768, %s154, [#allocation21], 128, 128, 8
    $region49: #{tpu_custom_call.1} parent=1 // pred_fallthru
      _
    // Predicated region
    $region50: #{tpu_custom_call.1} parent=1 // pred_check
      _
    $region51: #{tpu_custom_call.1} parent=1 // pred_check_branch
      %161 = sbr.rel (0) target = $region53
    $region52: #{tpu_custom_call.1} parent=1 // pred_region
      %s163 = ssub.s32 32, 32
      %164 = vsyncadd [#allocation21], %s163
      %s166 = sshll.u32 [#allocation22], 4
      %s167 = int_to_ptr.vmem [resolvable:$true] %s166
      %169 = dma.hbm_to_vmem [thread:$0]  %s12, 32, %s167, [#allocation21]
    $region53: #{tpu_custom_call.1} parent=1 // pred_fallthru
      _
    // Predicated region
    $region54: #{tpu_custom_call.1} parent=1 // pred_check
      _
    $region55: #{tpu_custom_call.1} parent=1 // pred_check_branch
      %171 = sbr.rel (0) target = $region57
    $region56: #{tpu_custom_call.1} parent=1 // pred_region
      %172 = dma.done [#allocation3], 256
    $region57: #{tpu_custom_call.1} parent=1 // pred_fallthru
      _
    // Predicated region
    $region58: #{tpu_custom_call.1} parent=1 // pred_check
      _
    $region59: #{tpu_custom_call.1} parent=1 // pred_check_branch
      %174 = sbr.rel (0) target = $region61
    $region60: #{tpu_custom_call.1} parent=1 // pred_region
      %175 = dma.done [#allocation6], 256
    $region61: #{tpu_custom_call.1} parent=1 // pred_fallthru
      _
    // Predicated region
    $region62: #{tpu_custom_call.1} parent=1 // pred_check
      _
    $region63: #{tpu_custom_call.1} parent=1 // pred_check_branch
      %177 = sbr.rel (0) target = $region65
    $region64: #{tpu_custom_call.1} parent=1 // pred_region
      %178 = dma.done [#allocation6], 16
    $region65: #{tpu_custom_call.1} parent=1 // pred_fallthru
      _
    // Predicated region
    $region66: #{tpu_custom_call.1} parent=1 // pred_check
      _
    $region67: #{tpu_custom_call.1} parent=1 // pred_check_branch
      %180 = sbr.rel (0) target = $region69
    $region68: #{tpu_custom_call.1} parent=1 // pred_region
      %181 = dma.done [#allocation9], 512
    $region69: #{tpu_custom_call.1} parent=1 // pred_fallthru
      _
    // Predicated region
    $region70: #{tpu_custom_call.1} parent=1 // pred_check
      _
    $region71: #{tpu_custom_call.1} parent=1 // pred_check_branch
      %183 = sbr.rel (0) target = $region73
    $region72: #{tpu_custom_call.1} parent=1 // pred_region
      %184 = dma.done [#allocation9], 16
    $region73: #{tpu_custom_call.1} parent=1 // pred_fallthru
      _
    // Predicated region
    $region74: #{tpu_custom_call.1} parent=1 // pred_check
      _
    $region75: #{tpu_custom_call.1} parent=1 // pred_check_branch
      %186 = sbr.rel (0) target = $region77
    $region76: #{tpu_custom_call.1} parent=1 // pred_region
      %187 = dma.done [#allocation12], 4096
    $region77: #{tpu_custom_call.1} parent=1 // pred_fallthru
      _
    // Predicated region
    $region78: #{tpu_custom_call.1} parent=1 // pred_check
      _
    $region79: #{tpu_custom_call.1} parent=1 // pred_check_branch
      %189 = sbr.rel (0) target = $region81
    $region80: #{tpu_custom_call.1} parent=1 // pred_region
      %190 = dma.done [#allocation12], 64
    $region81: #{tpu_custom_call.1} parent=1 // pred_fallthru
      _
    // Predicated region
    $region82: #{tpu_custom_call.1} parent=1 // pred_check
      _
    $region83: #{tpu_custom_call.1} parent=1 // pred_check_branch
      %192 = sbr.rel (0) target = $region85
    $region84: #{tpu_custom_call.1} parent=1 // pred_region
      %193 = dma.done [#allocation15], 32768
    $region85: #{tpu_custom_call.1} parent=1 // pred_fallthru
      _
    // Predicated region
    $region86: #{tpu_custom_call.1} parent=1 // pred_check
      _
    $region87: #{tpu_custom_call.1} parent=1 // pred_check_branch
      %195 = sbr.rel (0) target = $region89
    $region88: #{tpu_custom_call.1} parent=1 // pred_region
      %196 = dma.done [#allocation15], 128
    $region89: #{tpu_custom_call.1} parent=1 // pred_fallthru
      _
    // Predicated region
    $region90: #{tpu_custom_call.1} parent=1 // pred_check
      _
    $region91: #{tpu_custom_call.1} parent=1 // pred_check_branch
      %198 = sbr.rel (0) target = $region93
    $region92: #{tpu_custom_call.1} parent=1 // pred_region
      %199 = dma.done [#allocation18], 131072
    $region93: #{tpu_custom_call.1} parent=1 // pred_fallthru
      _
    // Predicated region
    $region94: #{tpu_custom_call.1} parent=1 // pred_check
      _
    $region95: #{tpu_custom_call.1} parent=1 // pred_check_branch
      %201 = sbr.rel (0) target = $region97
    $region96: #{tpu_custom_call.1} parent=1 // pred_region
      %202 = dma.done [#allocation18], 256
    $region97: #{tpu_custom_call.1} parent=1 // pred_fallthru
      _
    // Predicated region
    $region98: #{tpu_custom_call.1} parent=1 // pred_check
      _
    $region99: #{tpu_custom_call.1} parent=1 // pred_check_branch
      %204 = sbr.rel (0) target = $region101
    $region100: #{tpu_custom_call.1} parent=1 // pred_region
      %205 = dma.done [#allocation21], 32768
    $region101: #{tpu_custom_call.1} parent=1 // pred_fallthru
      _
    // Predicated region
    $region102: #{tpu_custom_call.1} parent=1 // pred_check
      _
    $region103: #{tpu_custom_call.1} parent=1 // pred_check_branch
      %207 = sbr.rel (0) target = $region105
    $region104: #{tpu_custom_call.1} parent=1 // pred_region
      %208 = dma.done [#allocation21], 32
    $region105: #{tpu_custom_call.1} parent=1 // pred_fallthru
      _
    %v210 = vld [vmem:[#allocation2] sm:$0xff]
    %v211 = vld [vmem:[#allocation2 + $0x8] sm:$0xff]
    %v212 = vpack.c.bf16 %v211, %v210
    %v213 = vld [vmem:[#allocation5] sm:$0xf]
    %v214 = vld [vmem:[#allocation5 + $0x4] sm:$0xf]
    %v215 = vld [vmem:[#allocation5 + $0x8] sm:$0xf]
    %v216 = vld [vmem:[#allocation5 + $0xc] sm:$0xf]
    %v217 = vld [vmem:[#allocation7] sm:$0x1]
    %v219 = vlaneseq
    %v220 = vshrl.u32 %v219, 7
    %v221 = vsub.s32 0, %v220
    %v222 = vrot.slane %v217, %v221
    %v228 = vunpack.c.l.b16 %v213
    %v229 = vunpack.c.l.b16 %v214
    %v230 = vunpack.c.l.b16 %v215
    %v231 = vunpack.c.l.b16 %v216
    %v232 = vpack.c.b16 %v229, %v228
    %v233 = vpack.c.b16 %v231, %v230
    %vm236 = vcmask 261120
    %v238 = vsel %vm236, %v212, 0
    %240 = vmatprep.subr.bf16.mxu0 0
    %241 = vmatpush1.bf16.msra.mxu0 %v232
    %242 = vmatprep.subr.bf16.mxu0 0
    %243 = vmatpush1.bf16.msra.mxu0 %v233
    %244 = vmatprep.subr.bf16.mxu0 0
    %245 = vmatpush1.bf16.msra.mxu0 0
    %246 = vmatprep.subr.bf16.mxu0 0
    %247 = vmatpush1.bf16.msra.mxu0 0
    %248 = vmatprep.subr.bf16.mxu0 0
    %249 = vmatpush1.bf16.msra.mxu0 0
    %250 = vmatprep.subr.bf16.mxu0 0
    %251 = vmatpush1.bf16.msra.mxu0 0
    %252 = vmatprep.subr.bf16.mxu0 0
    %253 = vmatpush1.bf16.msra.mxu0 0
    %254 = vmatprep.subr.bf16.mxu0 0
    %255 = vmatpush1.bf16.msra.mxu0 0
    %256 = vmatprep.subr.bf16.mxu0 0
    %257 = vmatpush1.bf16.msra.mxu0 0
    %258 = vmatprep.subr.bf16.mxu0 0
    %259 = vmatpush1.bf16.msra.mxu0 0
    %260 = vmatprep.subr.bf16.mxu0 0
    %261 = vmatpush1.bf16.msra.mxu0 0
    %262 = vmatprep.subr.bf16.mxu0 0
    %263 = vmatpush1.bf16.msra.mxu0 0
    %264 = vmatprep.subr.bf16.mxu0 0
    %265 = vmatpush1.bf16.msra.mxu0 0
    %266 = vmatprep.subr.bf16.mxu0 0
    %267 = vmatpush1.bf16.msra.mxu0 0
    %268 = vmatprep.subr.bf16.mxu0 0
    %269 = vmatpush1.bf16.msra.mxu0 0
    %270 = vmatprep.subr.bf16.mxu0 0
    %271 = vmatpush1.bf16.msra.mxu0 0
    %272 = vmatprep.mubr.bf16.mxu0 0
    %273 = vmatmul.mubr.bf16.gmra.mrb[0].mxu0 %v238
    %v274 = vpop.f32.mrb[0].mxu0
    %v275 = vadd.f32 %v222, %v274
    %v276 = vpop.f32.mrb[0].mxu0
    %v277 = vpop.f32.mrb[0].mxu0
    %v278 = vadd.f32 %v222, %v277
    %v279 = vpop.f32.mrb[0].mxu0
    %280 = vdwg.mxu0
    %v281 = vmax.f32 %v275, 0.0
    %v282 = vmax.f32 %v278, 0.0
    %v283 = vpack.c.bf16 %v282, %v281
    %v284 = vld [vmem:[#allocation8] sm:$0xf]
    %v285 = vld [vmem:[#allocation8 + $0x4] sm:$0xf]
    %v286 = vld [vmem:[#allocation8 + $0x8] sm:$0xf]
    %v287 = vld [vmem:[#allocation8 + $0xc] sm:$0xf]
    %v288 = vld [vmem:[#allocation8 + $0x10] sm:$0xf]
    %v289 = vld [vmem:[#allocation8 + $0x14] sm:$0xf]
    %v290 = vld [vmem:[#allocation8 + $0x18] sm:$0xf]
    %v291 = vld [vmem:[#allocation8 + $0x1c] sm:$0xf]
    %v292 = vld [vmem:[#allocation10] sm:$0x1]
    %v294 = vlaneseq
    %v295 = vshrl.u32 %v294, 7
    %v296 = vsub.s32 0, %v295
    %v297 = vrot.slane %v292, %v296
    %v307 = vunpack.c.l.b16 %v284
    %v308 = vunpack.c.l.b16 %v285
    %v309 = vunpack.c.l.b16 %v286
    %v310 = vunpack.c.l.b16 %v287
    %v311 = vunpack.c.l.b16 %v288
    %v312 = vunpack.c.l.b16 %v289
    %v313 = vunpack.c.l.b16 %v290
    %v314 = vunpack.c.l.b16 %v291
    %v315 = vpack.c.b16 %v308, %v307
    %v316 = vpack.c.b16 %v310, %v309
    %v317 = vpack.c.b16 %v312, %v311
    %v318 = vpack.c.b16 %v314, %v313
    %vm323 = vcmask 523264
    %v325 = vsel %vm323, %v283, 0
    %327 = vmatprep.subr.bf16.mxu0 0
    %328 = vmatpush1.bf16.msra.mxu0 %v315
    %329 = vmatprep.subr.bf16.mxu0 0
    %330 = vmatpush1.bf16.msra.mxu0 %v316
    %331 = vmatprep.subr.bf16.mxu0 0
    %332 = vmatpush1.bf16.msra.mxu0 %v317
    %333 = vmatprep.subr.bf16.mxu0 0
    %334 = vmatpush1.bf16.msra.mxu0 %v318
    %335 = vmatprep.subr.bf16.mxu0 0
    %336 = vmatpush1.bf16.msra.mxu0 0
    %337 = vmatprep.subr.bf16.mxu0 0
    %338 = vmatpush1.bf16.msra.mxu0 0
    %339 = vmatprep.subr.bf16.mxu0 0
    %340 = vmatpush1.bf16.msra.mxu0 0
    %341 = vmatprep.subr.bf16.mxu0 0
    %342 = vmatpush1.bf16.msra.mxu0 0
    %343 = vmatprep.subr.bf16.mxu0 0
    %344 = vmatpush1.bf16.msra.mxu0 0
    %345 = vmatprep.subr.bf16.mxu0 0
    %346 = vmatpush1.bf16.msra.mxu0 0
    %347 = vmatprep.subr.bf16.mxu0 0
    %348 = vmatpush1.bf16.msra.mxu0 0
    %349 = vmatprep.subr.bf16.mxu0 0
    %350 = vmatpush1.bf16.msra.mxu0 0
    %351 = vmatprep.subr.bf16.mxu0 0
    %352 = vmatpush1.bf16.msra.mxu0 0
    %353 = vmatprep.subr.bf16.mxu0 0
    %354 = vmatpush1.bf16.msra.mxu0 0
    %355 = vmatprep.subr.bf16.mxu0 0
    %356 = vmatpush1.bf16.msra.mxu0 0
    %357 = vmatprep.subr.bf16.mxu0 0
    %358 = vmatpush1.bf16.msra.mxu0 0
    %359 = vmatprep.mubr.bf16.mxu0 0
    %360 = vmatmul.mubr.bf16.gmra.mrb[0].mxu0 %v325
    %v361 = vpop.f32.mrb[0].mxu0
    %v362 = vadd.f32 %v297, %v361
    %v363 = vpop.f32.mrb[0].mxu0
    %v364 = vpop.f32.mrb[0].mxu0
    %v365 = vadd.f32 %v297, %v364
    %v366 = vpop.f32.mrb[0].mxu0
    %367 = vdwg.mxu0
    %v368 = vmax.f32 %v362, 0.0
    %v369 = vmax.f32 %v365, 0.0
    %v370 = vpack.c.bf16 %v369, %v368
    %v371 = vld [vmem:[#allocation11] sm:$0xff]
    %v372 = vld [vmem:[#allocation11 + $0x8] sm:$0xff]
    %v373 = vld [vmem:[#allocation11 + $0x10] sm:$0xff]
    %v374 = vld [vmem:[#allocation11 + $0x18] sm:$0xff]
    %v375 = vld [vmem:[#allocation11 + $0x20] sm:$0xff]
    %v376 = vld [vmem:[#allocation11 + $0x28] sm:$0xff]
    %v377 = vld [vmem:[#allocation11 + $0x30] sm:$0xff]
    %v378 = vld [vmem:[#allocation11 + $0x38] sm:$0xff]
    %v379 = vld [vmem:[#allocation11 + $0x40] sm:$0xff]
    %v380 = vld [vmem:[#allocation11 + $0x48] sm:$0xff]
    %v381 = vld [vmem:[#allocation11 + $0x50] sm:$0xff]
    %v382 = vld [vmem:[#allocation11 + $0x58] sm:$0xff]
    %v383 = vld [vmem:[#allocation11 + $0x60] sm:$0xff]
    %v384 = vld [vmem:[#allocation11 + $0x68] sm:$0xff]
    %v385 = vld [vmem:[#allocation11 + $0x70] sm:$0xff]
    %v386 = vld [vmem:[#allocation11 + $0x78] sm:$0xff]
    %v387 = vld [vmem:[#allocation11 + $0x80] sm:$0xff]
    %v388 = vld [vmem:[#allocation11 + $0x88] sm:$0xff]
    %v389 = vld [vmem:[#allocation11 + $0x90] sm:$0xff]
    %v390 = vld [vmem:[#allocation11 + $0x98] sm:$0xff]
    %v391 = vld [vmem:[#allocation11 + $0xa0] sm:$0xff]
    %v392 = vld [vmem:[#allocation11 + $0xa8] sm:$0xff]
    %v393 = vld [vmem:[#allocation11 + $0xb0] sm:$0xff]
    %v394 = vld [vmem:[#allocation11 + $0xb8] sm:$0xff]
    %v395 = vld [vmem:[#allocation11 + $0xc0] sm:$0xff]
    %v396 = vld [vmem:[#allocation11 + $0xc8] sm:$0xff]
    %v397 = vld [vmem:[#allocation11 + $0xd0] sm:$0xff]
    %v398 = vld [vmem:[#allocation11 + $0xd8] sm:$0xff]
    %v399 = vld [vmem:[#allocation11 + $0xe0] sm:$0xff]
    %v400 = vld [vmem:[#allocation11 + $0xe8] sm:$0xff]
    %v401 = vld [vmem:[#allocation11 + $0xf0] sm:$0xff]
    %v402 = vld [vmem:[#allocation11 + $0xf8] sm:$0xff]
    %v403 = vld [vmem:[#allocation13] sm:$0xf]
    %v405 = vlaneseq
    %v406 = vshrl.u32 %v405, 7
    %v407 = vsub.s32 0, %v406
    %v408 = vrot.slane %v403, %v407
    %v409 = vlaneseq
    %v410 = vshrl.u32 %v409, 7
    %v411 = vsub.s32 1, %v410
    %v412 = vrot.slane %v403, %v411
    %v413 = vlaneseq
    %v414 = vshrl.u32 %v413, 7
    %v415 = vsub.s32 2, %v414
    %v416 = vrot.slane %v403, %v415
    %v417 = vlaneseq
    %v418 = vshrl.u32 %v417, 7
    %v419 = vsub.s32 3, %v418
    %v420 = vrot.slane %v403, %v419
    %v457 = vunpack.c.l.b16 %v371
    %v458 = vunpack.c.h.b16 %v371
    %v459 = vunpack.c.l.b16 %v372
    %v460 = vunpack.c.h.b16 %v372
    %v461 = vunpack.c.l.b16 %v373
    %v462 = vunpack.c.h.b16 %v373
    %v463 = vunpack.c.l.b16 %v374
    %v464 = vunpack.c.h.b16 %v374
    %v465 = vunpack.c.l.b16 %v375
    %v466 = vunpack.c.h.b16 %v375
    %v467 = vunpack.c.l.b16 %v376
    %v468 = vunpack.c.h.b16 %v376
    %v469 = vunpack.c.l.b16 %v377
    %v470 = vunpack.c.h.b16 %v377
    %v471 = vunpack.c.l.b16 %v378
    %v472 = vunpack.c.h.b16 %v378
    %v473 = vunpack.c.l.b16 %v379
    %v474 = vunpack.c.h.b16 %v379
    %v475 = vunpack.c.l.b16 %v380
    %v476 = vunpack.c.h.b16 %v380
    %v477 = vunpack.c.l.b16 %v381
    %v478 = vunpack.c.h.b16 %v381
    %v479 = vunpack.c.l.b16 %v382
    %v480 = vunpack.c.h.b16 %v382
    %v481 = vunpack.c.l.b16 %v383
    %v482 = vunpack.c.h.b16 %v383
    %v483 = vunpack.c.l.b16 %v384
    %v484 = vunpack.c.h.b16 %v384
    %v485 = vunpack.c.l.b16 %v385
    %v486 = vunpack.c.h.b16 %v385
    %v487 = vunpack.c.l.b16 %v386
    %v488 = vunpack.c.h.b16 %v386
    %v489 = vunpack.c.l.b16 %v387
    %v490 = vunpack.c.h.b16 %v387
    %v491 = vunpack.c.l.b16 %v388
    %v492 = vunpack.c.h.b16 %v388
    %v493 = vunpack.c.l.b16 %v389
    %v494 = vunpack.c.h.b16 %v389
    %v495 = vunpack.c.l.b16 %v390
    %v496 = vunpack.c.h.b16 %v390
    %v497 = vunpack.c.l.b16 %v391
    %v498 = vunpack.c.h.b16 %v391
    %v499 = vunpack.c.l.b16 %v392
    %v500 = vunpack.c.h.b16 %v392
    %v501 = vunpack.c.l.b16 %v393
    %v502 = vunpack.c.h.b16 %v393
    %v503 = vunpack.c.l.b16 %v394
    %v504 = vunpack.c.h.b16 %v394
    %v505 = vunpack.c.l.b16 %v395
    %v506 = vunpack.c.h.b16 %v395
    %v507 = vunpack.c.l.b16 %v396
    %v508 = vunpack.c.h.b16 %v396
    %v509 = vunpack.c.l.b16 %v397
    %v510 = vunpack.c.h.b16 %v397
    %v511 = vunpack.c.l.b16 %v398
    %v512 = vunpack.c.h.b16 %v398
    %v513 = vunpack.c.l.b16 %v399
    %v514 = vunpack.c.h.b16 %v399
    %v515 = vunpack.c.l.b16 %v400
    %v516 = vunpack.c.h.b16 %v400
    %v517 = vunpack.c.l.b16 %v401
    %v518 = vunpack.c.h.b16 %v401
    %v519 = vunpack.c.l.b16 %v402
    %v520 = vunpack.c.h.b16 %v402
    %v521 = vpack.c.b16 %v461, %v457
    %v522 = vpack.c.b16 %v462, %v458
    %v523 = vpack.c.b16 %v463, %v459
    %v524 = vpack.c.b16 %v464, %v460
    %v525 = vpack.c.b16 %v469, %v465
    %v526 = vpack.c.b16 %v470, %v466
    %v527 = vpack.c.b16 %v471, %v467
    %v528 = vpack.c.b16 %v472, %v468
    %v529 = vpack.c.b16 %v477, %v473
    %v530 = vpack.c.b16 %v478, %v474
    %v531 = vpack.c.b16 %v479, %v475
    %v532 = vpack.c.b16 %v480, %v476
    %v533 = vpack.c.b16 %v485, %v481
    %v534 = vpack.c.b16 %v486, %v482
    %v535 = vpack.c.b16 %v487, %v483
    %v536 = vpack.c.b16 %v488, %v484
    %v537 = vpack.c.b16 %v493, %v489
    %v538 = vpack.c.b16 %v494, %v490
    %v539 = vpack.c.b16 %v495, %v491
    %v540 = vpack.c.b16 %v496, %v492
    %v541 = vpack.c.b16 %v501, %v497
    %v542 = vpack.c.b16 %v502, %v498
    %v543 = vpack.c.b16 %v503, %v499
    %v544 = vpack.c.b16 %v504, %v500
    %v545 = vpack.c.b16 %v509, %v505
    %v546 = vpack.c.b16 %v510, %v506
    %v547 = vpack.c.b16 %v511, %v507
    %v548 = vpack.c.b16 %v512, %v508
    %v549 = vpack.c.b16 %v517, %v513
    %v550 = vpack.c.b16 %v518, %v514
    %v551 = vpack.c.b16 %v519, %v515
    %v552 = vpack.c.b16 %v520, %v516
    %585 = vmatprep.subr.bf16.mxu0 %v522
    %586 = vmatpush1.bf16.msra.mxu0 %v521
    %587 = vmatprep.subr.bf16.mxu0 %v526
    %588 = vmatpush1.bf16.msra.mxu0 %v525
    %589 = vmatprep.subr.bf16.mxu0 %v530
    %590 = vmatpush1.bf16.msra.mxu0 %v529
    %591 = vmatprep.subr.bf16.mxu0 %v534
    %592 = vmatpush1.bf16.msra.mxu0 %v533
    %593 = vmatprep.subr.bf16.mxu0 %v538
    %594 = vmatpush1.bf16.msra.mxu0 %v537
    %595 = vmatprep.subr.bf16.mxu0 %v542
    %596 = vmatpush1.bf16.msra.mxu0 %v541
    %597 = vmatprep.subr.bf16.mxu0 %v546
    %598 = vmatpush1.bf16.msra.mxu0 %v545
    %599 = vmatprep.subr.bf16.mxu0 %v550
    %600 = vmatpush1.bf16.msra.mxu0 %v549
    %601 = vmatprep.subr.bf16.mxu0 0
    %602 = vmatpush1.bf16.msra.mxu0 0
    %603 = vmatprep.subr.bf16.mxu0 0
    %604 = vmatpush1.bf16.msra.mxu0 0
    %605 = vmatprep.subr.bf16.mxu0 0
    %606 = vmatpush1.bf16.msra.mxu0 0
    %607 = vmatprep.subr.bf16.mxu0 0
    %608 = vmatpush1.bf16.msra.mxu0 0
    %609 = vmatprep.subr.bf16.mxu0 0
    %610 = vmatpush1.bf16.msra.mxu0 0
    %611 = vmatprep.subr.bf16.mxu0 0
    %612 = vmatpush1.bf16.msra.mxu0 0
    %613 = vmatprep.subr.bf16.mxu0 0
    %614 = vmatpush1.bf16.msra.mxu0 0
    %615 = vmatprep.subr.bf16.mxu0 0
    %616 = vmatpush1.bf16.msra.mxu0 0
    %617 = vmatprep.mubr.bf16.mxu0 0
    %618 = vmatmul.mubr.bf16.gmra.mrb[0].mxu0 %v370
    %v619 = vpop.f32.mrb[0].mxu0
    %v620 = vadd.f32 %v408, %v619
    %v621 = vpop.f32.mrb[0].mxu0
    %v622 = vadd.f32 %v412, %v621
    %v623 = vpop.f32.mrb[0].mxu0
    %v624 = vadd.f32 %v408, %v623
    %v625 = vpop.f32.mrb[0].mxu0
    %v626 = vadd.f32 %v412, %v625
    %627 = vdwg.mxu0
    %628 = vmatprep.subr.bf16.mxu0 %v524
    %629 = vmatpush1.bf16.msra.mxu0 %v523
    %630 = vmatprep.subr.bf16.mxu0 %v528
    %631 = vmatpush1.bf16.msra.mxu0 %v527
    %632 = vmatprep.subr.bf16.mxu0 %v532
    %633 = vmatpush1.bf16.msra.mxu0 %v531
    %634 = vmatprep.subr.bf16.mxu0 %v536
    %635 = vmatpush1.bf16.msra.mxu0 %v535
    %636 = vmatprep.subr.bf16.mxu0 %v540
    %637 = vmatpush1.bf16.msra.mxu0 %v539
    %638 = vmatprep.subr.bf16.mxu0 %v544
    %639 = vmatpush1.bf16.msra.mxu0 %v543
    %640 = vmatprep.subr.bf16.mxu0 %v548
    %641 = vmatpush1.bf16.msra.mxu0 %v547
    %642 = vmatprep.subr.bf16.mxu0 %v552
    %643 = vmatpush1.bf16.msra.mxu0 %v551
    %644 = vmatprep.subr.bf16.mxu0 0
    %645 = vmatpush1.bf16.msra.mxu0 0
    %646 = vmatprep.subr.bf16.mxu0 0
    %647 = vmatpush1.bf16.msra.mxu0 0
    %648 = vmatprep.subr.bf16.mxu0 0
    %649 = vmatpush1.bf16.msra.mxu0 0
    %650 = vmatprep.subr.bf16.mxu0 0
    %651 = vmatpush1.bf16.msra.mxu0 0
    %652 = vmatprep.subr.bf16.mxu0 0
    %653 = vmatpush1.bf16.msra.mxu0 0
    %654 = vmatprep.subr.bf16.mxu0 0
    %655 = vmatpush1.bf16.msra.mxu0 0
    %656 = vmatprep.subr.bf16.mxu0 0
    %657 = vmatpush1.bf16.msra.mxu0 0
    %658 = vmatprep.subr.bf16.mxu0 0
    %659 = vmatpush1.bf16.msra.mxu0 0
    %660 = vmatprep.mubr.bf16.mxu0 0
    %661 = vmatmul.mubr.bf16.gmra.mrb[0].mxu0 %v370
    %v662 = vpop.f32.mrb[0].mxu0
    %v663 = vadd.f32 %v416, %v662
    %v664 = vpop.f32.mrb[0].mxu0
    %v665 = vadd.f32 %v420, %v664
    %v666 = vpop.f32.mrb[0].mxu0
    %v667 = vadd.f32 %v416, %v666
    %v668 = vpop.f32.mrb[0].mxu0
    %v669 = vadd.f32 %v420, %v668
    %670 = vdwg.mxu0
    %v671 = vmax.f32 %v620, 0.0
    %v672 = vmax.f32 %v622, 0.0
    %v673 = vmax.f32 %v663, 0.0
    %v674 = vmax.f32 %v665, 0.0
    %v675 = vmax.f32 %v624, 0.0
    %v676 = vmax.f32 %v626, 0.0
    %v677 = vmax.f32 %v667, 0.0
    %v678 = vmax.f32 %v669, 0.0
    %v679 = vpack.c.bf16 %v675, %v671
    %v680 = vpack.c.bf16 %v676, %v672
    %v681 = vpack.c.bf16 %v677, %v673
    %v682 = vpack.c.bf16 %v678, %v674
    %v683 = vld [vmem:[#allocation14] sm:$0xff]
    %v684 = vld [vmem:[#allocation14 + $0x8] sm:$0xff]
    %v685 = vld [vmem:[#allocation14 + $0x10] sm:$0xff]
    %v686 = vld [vmem:[#allocation14 + $0x18] sm:$0xff]
    %v687 = vld [vmem:[#allocation14 + $0x20] sm:$0xff]
    %v688 = vld [vmem:[#allocation14 + $0x28] sm:$0xff]
    %v689 = vld [vmem:[#allocation14 + $0x30] sm:$0xff]
    %v690 = vld [vmem:[#allocation14 + $0x38] sm:$0xff]
    %v691 = vld [vmem:[#allocation14 + $0x40] sm:$0xff]
    %v692 = vld [vmem:[#allocation14 + $0x48] sm:$0xff]
    %v693 = vld [vmem:[#allocation14 + $0x50] sm:$0xff]
    %v694 = vld [vmem:[#allocation14 + $0x58] sm:$0xff]
    %v695 = vld [vmem:[#allocation14 + $0x60] sm:$0xff]
    %v696 = vld [vmem:[#allocation14 + $0x68] sm:$0xff]
    %v697 = vld [vmem:[#allocation14 + $0x70] sm:$0xff]
    %v698 = vld [vmem:[#allocation14 + $0x78] sm:$0xff]
    %v699 = vld [vmem:[#allocation14 + $0x80] sm:$0xff]
    %v700 = vld [vmem:[#allocation14 + $0x88] sm:$0xff]
    %v701 = vld [vmem:[#allocation14 + $0x90] sm:$0xff]
    %v702 = vld [vmem:[#allocation14 + $0x98] sm:$0xff]
    %v703 = vld [vmem:[#allocation14 + $0xa0] sm:$0xff]
    %v704 = vld [vmem:[#allocation14 + $0xa8] sm:$0xff]
    %v705 = vld [vmem:[#allocation14 + $0xb0] sm:$0xff]
    %v706 = vld [vmem:[#allocation14 + $0xb8] sm:$0xff]
    %v707 = vld [vmem:[#allocation14 + $0xc0] sm:$0xff]
    %v708 = vld [vmem:[#allocation14 + $0xc8] sm:$0xff]
    %v709 = vld [vmem:[#allocation14 + $0xd0] sm:$0xff]
    %v710 = vld [vmem:[#allocation14 + $0xd8] sm:$0xff]
    %v711 = vld [vmem:[#allocation14 + $0xe0] sm:$0xff]
    %v712 = vld [vmem:[#allocation14 + $0xe8] sm:$0xff]
    %v713 = vld [vmem:[#allocation14 + $0xf0] sm:$0xff]
    %v714 = vld [vmem:[#allocation14 + $0xf8] sm:$0xff]
    %v715 = vld [vmem:[#allocation14 + $0x100] sm:$0xff]
    %v716 = vld [vmem:[#allocation14 + $0x108] sm:$0xff]
    %v717 = vld [vmem:[#allocation14 + $0x110] sm:$0xff]
    %v718 = vld [vmem:[#allocation14 + $0x118] sm:$0xff]
    %v719 = vld [vmem:[#allocation14 + $0x120] sm:$0xff]
    %v720 = vld [vmem:[#allocation14 + $0x128] sm:$0xff]
    %v721 = vld [vmem:[#allocation14 + $0x130] sm:$0xff]
    %v722 = vld [vmem:[#allocation14 + $0x138] sm:$0xff]
    %v723 = vld [vmem:[#allocation14 + $0x140] sm:$0xff]
    %v724 = vld [vmem:[#allocation14 + $0x148] sm:$0xff]
    %v725 = vld [vmem:[#allocation14 + $0x150] sm:$0xff]
    %v726 = vld [vmem:[#allocation14 + $0x158] sm:$0xff]
    %v727 = vld [vmem:[#allocation14 + $0x160] sm:$0xff]
    %v728 = vld [vmem:[#allocation14 + $0x168] sm:$0xff]
    %v729 = vld [vmem:[#allocation14 + $0x170] sm:$0xff]
    %v730 = vld [vmem:[#allocation14 + $0x178] sm:$0xff]
    %v731 = vld [vmem:[#allocation14 + $0x180] sm:$0xff]
    %v732 = vld [vmem:[#allocation14 + $0x188] sm:$0xff]
    %v733 = vld [vmem:[#allocation14 + $0x190] sm:$0xff]
    %v734 = vld [vmem:[#allocation14 + $0x198] sm:$0xff]
    %v735 = vld [vmem:[#allocation14 + $0x1a0] sm:$0xff]
    %v736 = vld [vmem:[#allocation14 + $0x1a8] sm:$0xff]
    %v737 = vld [vmem:[#allocation14 + $0x1b0] sm:$0xff]
    %v738 = vld [vmem:[#allocation14 + $0x1b8] sm:$0xff]
    %v739 = vld [vmem:[#allocation14 + $0x1c0] sm:$0xff]
    %v740 = vld [vmem:[#allocation14 + $0x1c8] sm:$0xff]
    %v741 = vld [vmem:[#allocation14 + $0x1d0] sm:$0xff]
    %v742 = vld [vmem:[#allocation14 + $0x1d8] sm:$0xff]
    %v743 = vld [vmem:[#allocation14 + $0x1e0] sm:$0xff]
    %v744 = vld [vmem:[#allocation14 + $0x1e8] sm:$0xff]
    %v745 = vld [vmem:[#allocation14 + $0x1f0] sm:$0xff]
    %v746 = vld [vmem:[#allocation14 + $0x1f8] sm:$0xff]
    %v747 = vld [vmem:[#allocation14 + $0x200] sm:$0xff]
    %v748 = vld [vmem:[#allocation14 + $0x208] sm:$0xff]
    %v749 = vld [vmem:[#allocation14 + $0x210] sm:$0xff]
    %v750 = vld [vmem:[#allocation14 + $0x218] sm:$0xff]
    %v751 = vld [vmem:[#allocation14 + $0x220] sm:$0xff]
    %v752 = vld [vmem:[#allocation14 + $0x228] sm:$0xff]
    %v753 = vld [vmem:[#allocation14 + $0x230] sm:$0xff]
    %v754 = vld [vmem:[#allocation14 + $0x238] sm:$0xff]
    %v755 = vld [vmem:[#allocation14 + $0x240] sm:$0xff]
    %v756 = vld [vmem:[#allocation14 + $0x248] sm:$0xff]
    %v757 = vld [vmem:[#allocation14 + $0x250] sm:$0xff]
    %v758 = vld [vmem:[#allocation14 + $0x258] sm:$0xff]
    %v759 = vld [vmem:[#allocation14 + $0x260] sm:$0xff]
    %v760 = vld [vmem:[#allocation14 + $0x268] sm:$0xff]
    %v761 = vld [vmem:[#allocation14 + $0x270] sm:$0xff]
    %v762 = vld [vmem:[#allocation14 + $0x278] sm:$0xff]
    %v763 = vld [vmem:[#allocation14 + $0x280] sm:$0xff]
    %v764 = vld [vmem:[#allocation14 + $0x288] sm:$0xff]
    %v765 = vld [vmem:[#allocation14 + $0x290] sm:$0xff]
    %v766 = vld [vmem:[#allocation14 + $0x298] sm:$0xff]
    %v767 = vld [vmem:[#allocation14 + $0x2a0] sm:$0xff]
    %v768 = vld [vmem:[#allocation14 + $0x2a8] sm:$0xff]
    %v769 = vld [vmem:[#allocation14 + $0x2b0] sm:$0xff]
    %v770 = vld [vmem:[#allocation14 + $0x2b8] sm:$0xff]
    %v771 = vld [vmem:[#allocation14 + $0x2c0] sm:$0xff]
    %v772 = vld [vmem:[#allocation14 + $0x2c8] sm:$0xff]
    %v773 = vld [vmem:[#allocation14 + $0x2d0] sm:$0xff]
    %v774 = vld [vmem:[#allocation14 + $0x2d8] sm:$0xff]
    %v775 = vld [vmem:[#allocation14 + $0x2e0] sm:$0xff]
    %v776 = vld [vmem:[#allocation14 + $0x2e8] sm:$0xff]
    %v777 = vld [vmem:[#allocation14 + $0x2f0] sm:$0xff]
    %v778 = vld [vmem:[#allocation14 + $0x2f8] sm:$0xff]
    %v779 = vld [vmem:[#allocation14 + $0x300] sm:$0xff]
    %v780 = vld [vmem:[#allocation14 + $0x308] sm:$0xff]
    %v781 = vld [vmem:[#allocation14 + $0x310] sm:$0xff]
    %v782 = vld [vmem:[#allocation14 + $0x318] sm:$0xff]
    %v783 = vld [vmem:[#allocation14 + $0x320] sm:$0xff]
    %v784 = vld [vmem:[#allocation14 + $0x328] sm:$0xff]
    %v785 = vld [vmem:[#allocation14 + $0x330] sm:$0xff]
    %v786 = vld [vmem:[#allocation14 + $0x338] sm:$0xff]
    %v787 = vld [vmem:[#allocation14 + $0x340] sm:$0xff]
    %v788 = vld [vmem:[#allocation14 + $0x348] sm:$0xff]
    %v789 = vld [vmem:[#allocation14 + $0x350] sm:$0xff]
    %v790 = vld [vmem:[#allocation14 + $0x358] sm:$0xff]
    %v791 = vld [vmem:[#allocation14 + $0x360] sm:$0xff]
    %v792 = vld [vmem:[#allocation14 + $0x368] sm:$0xff]
    %v793 = vld [vmem:[#allocation14 + $0x370] sm:$0xff]
    %v794 = vld [vmem:[#allocation14 + $0x378] sm:$0xff]
    %v795 = vld [vmem:[#allocation14 + $0x380] sm:$0xff]
    %v796 = vld [vmem:[#allocation14 + $0x388] sm:$0xff]
    %v797 = vld [vmem:[#allocation14 + $0x390] sm:$0xff]
    %v798 = vld [vmem:[#allocation14 + $0x398] sm:$0xff]
    %v799 = vld [vmem:[#allocation14 + $0x3a0] sm:$0xff]
    %v800 = vld [vmem:[#allocation14 + $0x3a8] sm:$0xff]
    %v801 = vld [vmem:[#allocation14 + $0x3b0] sm:$0xff]
    %v802 = vld [vmem:[#allocation14 + $0x3b8] sm:$0xff]
    %v803 = vld [vmem:[#allocation14 + $0x3c0] sm:$0xff]
    %v804 = vld [vmem:[#allocation14 + $0x3c8] sm:$0xff]
    %v805 = vld [vmem:[#allocation14 + $0x3d0] sm:$0xff]
    %v806 = vld [vmem:[#allocation14 + $0x3d8] sm:$0xff]
    %v807 = vld [vmem:[#allocation14 + $0x3e0] sm:$0xff]
    %v808 = vld [vmem:[#allocation14 + $0x3e8] sm:$0xff]
    %v809 = vld [vmem:[#allocation14 + $0x3f0] sm:$0xff]
    %v810 = vld [vmem:[#allocation14 + $0x3f8] sm:$0xff]
    %v811 = vld [vmem:[#allocation14 + $0x400] sm:$0xff]
    %v812 = vld [vmem:[#allocation14 + $0x408] sm:$0xff]
    %v813 = vld [vmem:[#allocation14 + $0x410] sm:$0xff]
    %v814 = vld [vmem:[#allocation14 + $0x418] sm:$0xff]
    %v815 = vld [vmem:[#allocation14 + $0x420] sm:$0xff]
    %v816 = vld [vmem:[#allocation14 + $0x428] sm:$0xff]
    %v817 = vld [vmem:[#allocation14 + $0x430] sm:$0xff]
    %v818 = vld [vmem:[#allocation14 + $0x438] sm:$0xff]
    %v819 = vld [vmem:[#allocation14 + $0x440] sm:$0xff]
    %v820 = vld [vmem:[#allocation14 + $0x448] sm:$0xff]
    %v821 = vld [vmem:[#allocation14 + $0x450] sm:$0xff]
    %v822 = vld [vmem:[#allocation14 + $0x458] sm:$0xff]
    %v823 = vld [vmem:[#allocation14 + $0x460] sm:$0xff]
    %v824 = vld [vmem:[#allocation14 + $0x468] sm:$0xff]
    %v825 = vld [vmem:[#allocation14 + $0x470] sm:$0xff]
    %v826 = vld [vmem:[#allocation14 + $0x478] sm:$0xff]
    %v827 = vld [vmem:[#allocation14 + $0x480] sm:$0xff]
    %v828 = vld [vmem:[#allocation14 + $0x488] sm:$0xff]
    %v829 = vld [vmem:[#allocation14 + $0x490] sm:$0xff]
    %v830 = vld [vmem:[#allocation14 + $0x498] sm:$0xff]
    %v831 = vld [vmem:[#allocation14 + $0x4a0] sm:$0xff]
    %v832 = vld [vmem:[#allocation14 + $0x4a8] sm:$0xff]
    %v833 = vld [vmem:[#allocation14 + $0x4b0] sm:$0xff]
    %v834 = vld [vmem:[#allocation14 + $0x4b8] sm:$0xff]
    %v835 = vld [vmem:[#allocation14 + $0x4c0] sm:$0xff]
    %v836 = vld [vmem:[#allocation14 + $0x4c8] sm:$0xff]
    %v837 = vld [vmem:[#allocation14 + $0x4d0] sm:$0xff]
    %v838 = vld [vmem:[#allocation14 + $0x4d8] sm:$0xff]
    %v839 = vld [vmem:[#allocation14 + $0x4e0] sm:$0xff]
    %v840 = vld [vmem:[#allocation14 + $0x4e8] sm:$0xff]
    %v841 = vld [vmem:[#allocation14 + $0x4f0] sm:$0xff]
    %v842 = vld [vmem:[#allocation14 + $0x4f8] sm:$0xff]
    %v843 = vld [vmem:[#allocation14 + $0x500] sm:$0xff]
    %v844 = vld [vmem:[#allocation14 + $0x508] sm:$0xff]
    %v845 = vld [vmem:[#allocation14 + $0x510] sm:$0xff]
    %v846 = vld [vmem:[#allocation14 + $0x518] sm:$0xff]
    %v847 = vld [vmem:[#allocation14 + $0x520] sm:$0xff]
    %v848 = vld [vmem:[#allocation14 + $0x528] sm:$0xff]
    %v849 = vld [vmem:[#allocation14 + $0x530] sm:$0xff]
    %v850 = vld [vmem:[#allocation14 + $0x538] sm:$0xff]
    %v851 = vld [vmem:[#allocation14 + $0x540] sm:$0xff]
    %v852 = vld [vmem:[#allocation14 + $0x548] sm:$0xff]
    %v853 = vld [vmem:[#allocation14 + $0x550] sm:$0xff]
    %v854 = vld [vmem:[#allocation14 + $0x558] sm:$0xff]
    %v855 = vld [vmem:[#allocation14 + $0x560] sm:$0xff]
    %v856 = vld [vmem:[#allocation14 + $0x568] sm:$0xff]
    %v857 = vld [vmem:[#allocation14 + $0x570] sm:$0xff]
    %v858 = vld [vmem:[#allocation14 + $0x578] sm:$0xff]
    %v859 = vld [vmem:[#allocation14 + $0x580] sm:$0xff]
    %v860 = vld [vmem:[#allocation14 + $0x588] sm:$0xff]
    %v861 = vld [vmem:[#allocation14 + $0x590] sm:$0xff]
    %v862 = vld [vmem:[#allocation14 + $0x598] sm:$0xff]
    %v863 = vld [vmem:[#allocation14 + $0x5a0] sm:$0xff]
    %v864 = vld [vmem:[#allocation14 + $0x5a8] sm:$0xff]
    %v865 = vld [vmem:[#allocation14 + $0x5b0] sm:$0xff]
    %v866 = vld [vmem:[#allocation14 + $0x5b8] sm:$0xff]
    %v867 = vld [vmem:[#allocation14 + $0x5c0] sm:$0xff]
    %v868 = vld [vmem:[#allocation14 + $0x5c8] sm:$0xff]
    %v869 = vld [vmem:[#allocation14 + $0x5d0] sm:$0xff]
    %v870 = vld [vmem:[#allocation14 + $0x5d8] sm:$0xff]
    %v871 = vld [vmem:[#allocation14 + $0x5e0] sm:$0xff]
    %v872 = vld [vmem:[#allocation14 + $0x5e8] sm:$0xff]
    %v873 = vld [vmem:[#allocation14 + $0x5f0] sm:$0xff]
    %v874 = vld [vmem:[#allocation14 + $0x5f8] sm:$0xff]
    %v875 = vld [vmem:[#allocation14 + $0x600] sm:$0xff]
    %v876 = vld [vmem:[#allocation14 + $0x608] sm:$0xff]
    %v877 = vld [vmem:[#allocation14 + $0x610] sm:$0xff]
    %v878 = vld [vmem:[#allocation14 + $0x618] sm:$0xff]
    %v879 = vld [vmem:[#allocation14 + $0x620] sm:$0xff]
    %v880 = vld [vmem:[#allocation14 + $0x628] sm:$0xff]
    %v881 = vld [vmem:[#allocation14 + $0x630] sm:$0xff]
    %v882 = vld [vmem:[#allocation14 + $0x638] sm:$0xff]
    %v883 = vld [vmem:[#allocation14 + $0x640] sm:$0xff]
    %v884 = vld [vmem:[#allocation14 + $0x648] sm:$0xff]
    %v885 = vld [vmem:[#allocation14 + $0x650] sm:$0xff]
    %v886 = vld [vmem:[#allocation14 + $0x658] sm:$0xff]
    %v887 = vld [vmem:[#allocation14 + $0x660] sm:$0xff]
    %v888 = vld [vmem:[#allocation14 + $0x668] sm:$0xff]
    %v889 = vld [vmem:[#allocation14 + $0x670] sm:$0xff]
    %v890 = vld [vmem:[#allocation14 + $0x678] sm:$0xff]
    %v891 = vld [vmem:[#allocation14 + $0x680] sm:$0xff]
    %v892 = vld [vmem:[#allocation14 + $0x688] sm:$0xff]
    %v893 = vld [vmem:[#allocation14 + $0x690] sm:$0xff]
    %v894 = vld [vmem:[#allocation14 + $0x698] sm:$0xff]
    %v895 = vld [vmem:[#allocation14 + $0x6a0] sm:$0xff]
    %v896 = vld [vmem:[#allocation14 + $0x6a8] sm:$0xff]
    %v897 = vld [vmem:[#allocation14 + $0x6b0] sm:$0xff]
    %v898 = vld [vmem:[#allocation14 + $0x6b8] sm:$0xff]
    %v899 = vld [vmem:[#allocation14 + $0x6c0] sm:$0xff]
    %v900 = vld [vmem:[#allocation14 + $0x6c8] sm:$0xff]
    %v901 = vld [vmem:[#allocation14 + $0x6d0] sm:$0xff]
    %v902 = vld [vmem:[#allocation14 + $0x6d8] sm:$0xff]
    %v903 = vld [vmem:[#allocation14 + $0x6e0] sm:$0xff]
    %v904 = vld [vmem:[#allocation14 + $0x6e8] sm:$0xff]
    %v905 = vld [vmem:[#allocation14 + $0x6f0] sm:$0xff]
    %v906 = vld [vmem:[#allocation14 + $0x6f8] sm:$0xff]
    %v907 = vld [vmem:[#allocation14 + $0x700] sm:$0xff]
    %v908 = vld [vmem:[#allocation14 + $0x708] sm:$0xff]
    %v909 = vld [vmem:[#allocation14 + $0x710] sm:$0xff]
    %v910 = vld [vmem:[#allocation14 + $0x718] sm:$0xff]
    %v911 = vld [vmem:[#allocation14 + $0x720] sm:$0xff]
    %v912 = vld [vmem:[#allocation14 + $0x728] sm:$0xff]
    %v913 = vld [vmem:[#allocation14 + $0x730] sm:$0xff]
    %v914 = vld [vmem:[#allocation14 + $0x738] sm:$0xff]
    %v915 = vld [vmem:[#allocation14 + $0x740] sm:$0xff]
    %v916 = vld [vmem:[#allocation14 + $0x748] sm:$0xff]
    %v917 = vld [vmem:[#allocation14 + $0x750] sm:$0xff]
    %v918 = vld [vmem:[#allocation14 + $0x758] sm:$0xff]
    %v919 = vld [vmem:[#allocation14 + $0x760] sm:$0xff]
    %v920 = vld [vmem:[#allocation14 + $0x768] sm:$0xff]
    %v921 = vld [vmem:[#allocation14 + $0x770] sm:$0xff]
    %v922 = vld [vmem:[#allocation14 + $0x778] sm:$0xff]
    %v923 = vld [vmem:[#allocation14 + $0x780] sm:$0xff]
    %v924 = vld [vmem:[#allocation14 + $0x788] sm:$0xff]
    %v925 = vld [vmem:[#allocation14 + $0x790] sm:$0xff]
    %v926 = vld [vmem:[#allocation14 + $0x798] sm:$0xff]
    %v927 = vld [vmem:[#allocation14 + $0x7a0] sm:$0xff]
    %v928 = vld [vmem:[#allocation14 + $0x7a8] sm:$0xff]
    %v929 = vld [vmem:[#allocation14 + $0x7b0] sm:$0xff]
    %v930 = vld [vmem:[#allocation14 + $0x7b8] sm:$0xff]
    %v931 = vld [vmem:[#allocation14 + $0x7c0] sm:$0xff]
    %v932 = vld [vmem:[#allocation14 + $0x7c8] sm:$0xff]
    %v933 = vld [vmem:[#allocation14 + $0x7d0] sm:$0xff]
    %v934 = vld [vmem:[#allocation14 + $0x7d8] sm:$0xff]
    %v935 = vld [vmem:[#allocation14 + $0x7e0] sm:$0xff]
    %v936 = vld [vmem:[#allocation14 + $0x7e8] sm:$0xff]
    %v937 = vld [vmem:[#allocation14 + $0x7f0] sm:$0xff]
    %v938 = vld [vmem:[#allocation14 + $0x7f8] sm:$0xff]
    %v939 = vld [vmem:[#allocation16] sm:$0xff]
    %v941 = vlaneseq
    %v942 = vshrl.u32 %v941, 7
    %v943 = vsub.s32 0, %v942
    %v944 = vrot.slane %v939, %v943
    %v945 = vlaneseq
    %v946 = vshrl.u32 %v945, 7
    %v947 = vsub.s32 1, %v946
    %v948 = vrot.slane %v939, %v947
    %v949 = vlaneseq
    %v950 = vshrl.u32 %v949, 7
    %v951 = vsub.s32 2, %v950
    %v952 = vrot.slane %v939, %v951
    %v953 = vlaneseq
    %v954 = vshrl.u32 %v953, 7
    %v955 = vsub.s32 3, %v954
    %v956 = vrot.slane %v939, %v955
    %v957 = vlaneseq
    %v958 = vshrl.u32 %v957, 7
    %v959 = vsub.s32 4, %v958
    %v960 = vrot.slane %v939, %v959
    %v961 = vlaneseq
    %v962 = vshrl.u32 %v961, 7
    %v963 = vsub.s32 5, %v962
    %v964 = vrot.slane %v939, %v963
    %v965 = vlaneseq
    %v966 = vshrl.u32 %v965, 7
    %v967 = vsub.s32 6, %v966
    %v968 = vrot.slane %v939, %v967
    %v969 = vlaneseq
    %v970 = vshrl.u32 %v969, 7
    %v971 = vsub.s32 7, %v970
    %v972 = vrot.slane %v939, %v971
    %v1237 = vunpack.c.l.b16 %v683
    %v1238 = vunpack.c.h.b16 %v683
    %v1239 = vunpack.c.l.b16 %v684
    %v1240 = vunpack.c.h.b16 %v684
    %v1241 = vunpack.c.l.b16 %v685
    %v1242 = vunpack.c.h.b16 %v685
    %v1243 = vunpack.c.l.b16 %v686
    %v1244 = vunpack.c.h.b16 %v686
    %v1245 = vunpack.c.l.b16 %v687
    %v1246 = vunpack.c.h.b16 %v687
    %v1247 = vunpack.c.l.b16 %v688
    %v1248 = vunpack.c.h.b16 %v688
    %v1249 = vunpack.c.l.b16 %v689
    %v1250 = vunpack.c.h.b16 %v689
    %v1251 = vunpack.c.l.b16 %v690
    %v1252 = vunpack.c.h.b16 %v690
    %v1253 = vunpack.c.l.b16 %v691
    %v1254 = vunpack.c.h.b16 %v691
    %v1255 = vunpack.c.l.b16 %v692
    %v1256 = vunpack.c.h.b16 %v692
    %v1257 = vunpack.c.l.b16 %v693
    %v1258 = vunpack.c.h.b16 %v693
    %v1259 = vunpack.c.l.b16 %v694
    %v1260 = vunpack.c.h.b16 %v694
    %v1261 = vunpack.c.l.b16 %v695
    %v1262 = vunpack.c.h.b16 %v695
    %v1263 = vunpack.c.l.b16 %v696
    %v1264 = vunpack.c.h.b16 %v696
    %v1265 = vunpack.c.l.b16 %v697
    %v1266 = vunpack.c.h.b16 %v697
    %v1267 = vunpack.c.l.b16 %v698
    %v1268 = vunpack.c.h.b16 %v698
    %v1269 = vunpack.c.l.b16 %v699
    %v1270 = vunpack.c.h.b16 %v699
    %v1271 = vunpack.c.l.b16 %v700
    %v1272 = vunpack.c.h.b16 %v700
    %v1273 = vunpack.c.l.b16 %v701
    %v1274 = vunpack.c.h.b16 %v701
    %v1275 = vunpack.c.l.b16 %v702
    %v1276 = vunpack.c.h.b16 %v702
    %v1277 = vunpack.c.l.b16 %v703
    %v1278 = vunpack.c.h.b16 %v703
    %v1279 = vunpack.c.l.b16 %v704
    %v1280 = vunpack.c.h.b16 %v704
    %v1281 = vunpack.c.l.b16 %v705
    %v1282 = vunpack.c.h.b16 %v705
    %v1283 = vunpack.c.l.b16 %v706
    %v1284 = vunpack.c.h.b16 %v706
    %v1285 = vunpack.c.l.b16 %v707
    %v1286 = vunpack.c.h.b16 %v707
    %v1287 = vunpack.c.l.b16 %v708
    %v1288 = vunpack.c.h.b16 %v708
    %v1289 = vunpack.c.l.b16 %v709
    %v1290 = vunpack.c.h.b16 %v709
    %v1291 = vunpack.c.l.b16 %v710
    %v1292 = vunpack.c.h.b16 %v710
    %v1293 = vunpack.c.l.b16 %v711
    %v1294 = vunpack.c.h.b16 %v711
    %v1295 = vunpack.c.l.b16 %v712
    %v1296 = vunpack.c.h.b16 %v712
    %v1297 = vunpack.c.l.b16 %v713
    %v1298 = vunpack.c.h.b16 %v713
    %v1299 = vunpack.c.l.b16 %v714
    %v1300 = vunpack.c.h.b16 %v714
    %v1301 = vunpack.c.l.b16 %v715
    %v1302 = vunpack.c.h.b16 %v715
    %v1303 = vunpack.c.l.b16 %v716
    %v1304 = vunpack.c.h.b16 %v716
    %v1305 = vunpack.c.l.b16 %v717
    %v1306 = vunpack.c.h.b16 %v717
    %v1307 = vunpack.c.l.b16 %v718
    %v1308 = vunpack.c.h.b16 %v718
    %v1309 = vunpack.c.l.b16 %v719
    %v1310 = vunpack.c.h.b16 %v719
    %v1311 = vunpack.c.l.b16 %v720
    %v1312 = vunpack.c.h.b16 %v720
    %v1313 = vunpack.c.l.b16 %v721
    %v1314 = vunpack.c.h.b16 %v721
    %v1315 = vunpack.c.l.b16 %v722
    %v1316 = vunpack.c.h.b16 %v722
    %v1317 = vunpack.c.l.b16 %v723
    %v1318 = vunpack.c.h.b16 %v723
    %v1319 = vunpack.c.l.b16 %v724
    %v1320 = vunpack.c.h.b16 %v724
    %v1321 = vunpack.c.l.b16 %v725
    %v1322 = vunpack.c.h.b16 %v725
    %v1323 = vunpack.c.l.b16 %v726
    %v1324 = vunpack.c.h.b16 %v726
    %v1325 = vunpack.c.l.b16 %v727
    %v1326 = vunpack.c.h.b16 %v727
    %v1327 = vunpack.c.l.b16 %v728
    %v1328 = vunpack.c.h.b16 %v728
    %v1329 = vunpack.c.l.b16 %v729
    %v1330 = vunpack.c.h.b16 %v729
    %v1331 = vunpack.c.l.b16 %v730
    %v1332 = vunpack.c.h.b16 %v730
    %v1333 = vunpack.c.l.b16 %v731
    %v1334 = vunpack.c.h.b16 %v731
    %v1335 = vunpack.c.l.b16 %v732
    %v1336 = vunpack.c.h.b16 %v732
    %v1337 = vunpack.c.l.b16 %v733
    %v1338 = vunpack.c.h.b16 %v733
    %v1339 = vunpack.c.l.b16 %v734
    %v1340 = vunpack.c.h.b16 %v734
    %v1341 = vunpack.c.l.b16 %v735
    %v1342 = vunpack.c.h.b16 %v735
    %v1343 = vunpack.c.l.b16 %v736
    %v1344 = vunpack.c.h.b16 %v736
    %v1345 = vunpack.c.l.b16 %v737
    %v1346 = vunpack.c.h.b16 %v737
    %v1347 = vunpack.c.l.b16 %v738
    %v1348 = vunpack.c.h.b16 %v738
    %v1349 = vunpack.c.l.b16 %v739
    %v1350 = vunpack.c.h.b16 %v739
    %v1351 = vunpack.c.l.b16 %v740
    %v1352 = vunpack.c.h.b16 %v740
    %v1353 = vunpack.c.l.b16 %v741
    %v1354 = vunpack.c.h.b16 %v741
    %v1355 = vunpack.c.l.b16 %v742
    %v1356 = vunpack.c.h.b16 %v742
    %v1357 = vunpack.c.l.b16 %v743
    %v1358 = vunpack.c.h.b16 %v743
    %v1359 = vunpack.c.l.b16 %v744
    %v1360 = vunpack.c.h.b16 %v744
    %v1361 = vunpack.c.l.b16 %v745
    %v1362 = vunpack.c.h.b16 %v745
    %v1363 = vunpack.c.l.b16 %v746
    %v1364 = vunpack.c.h.b16 %v746
    %v1365 = vunpack.c.l.b16 %v747
    %v1366 = vunpack.c.h.b16 %v747
    %v1367 = vunpack.c.l.b16 %v748
    %v1368 = vunpack.c.h.b16 %v748
    %v1369 = vunpack.c.l.b16 %v749
    %v1370 = vunpack.c.h.b16 %v749
    %v1371 = vunpack.c.l.b16 %v750
    %v1372 = vunpack.c.h.b16 %v750
    %v1373 = vunpack.c.l.b16 %v751
    %v1374 = vunpack.c.h.b16 %v751
    %v1375 = vunpack.c.l.b16 %v752
    %v1376 = vunpack.c.h.b16 %v752
    %v1377 = vunpack.c.l.b16 %v753
    %v1378 = vunpack.c.h.b16 %v753
    %v1379 = vunpack.c.l.b16 %v754
    %v1380 = vunpack.c.h.b16 %v754
    %v1381 = vunpack.c.l.b16 %v755
    %v1382 = vunpack.c.h.b16 %v755
    %v1383 = vunpack.c.l.b16 %v756
    %v1384 = vunpack.c.h.b16 %v756
    %v1385 = vunpack.c.l.b16 %v757
    %v1386 = vunpack.c.h.b16 %v757
    %v1387 = vunpack.c.l.b16 %v758
    %v1388 = vunpack.c.h.b16 %v758
    %v1389 = vunpack.c.l.b16 %v759
    %v1390 = vunpack.c.h.b16 %v759
    %v1391 = vunpack.c.l.b16 %v760
    %v1392 = vunpack.c.h.b16 %v760
    %v1393 = vunpack.c.l.b16 %v761
    %v1394 = vunpack.c.h.b16 %v761
    %v1395 = vunpack.c.l.b16 %v762
    %v1396 = vunpack.c.h.b16 %v762
    %v1397 = vunpack.c.l.b16 %v763
    %v1398 = vunpack.c.h.b16 %v763
    %v1399 = vunpack.c.l.b16 %v764
    %v1400 = vunpack.c.h.b16 %v764
    %v1401 = vunpack.c.l.b16 %v765
    %v1402 = vunpack.c.h.b16 %v765
    %v1403 = vunpack.c.l.b16 %v766
    %v1404 = vunpack.c.h.b16 %v766
    %v1405 = vunpack.c.l.b16 %v767
    %v1406 = vunpack.c.h.b16 %v767
    %v1407 = vunpack.c.l.b16 %v768
    %v1408 = vunpack.c.h.b16 %v768
    %v1409 = vunpack.c.l.b16 %v769
    %v1410 = vunpack.c.h.b16 %v769
    %v1411 = vunpack.c.l.b16 %v770
    %v1412 = vunpack.c.h.b16 %v770
    %v1413 = vunpack.c.l.b16 %v771
    %v1414 = vunpack.c.h.b16 %v771
    %v1415 = vunpack.c.l.b16 %v772
    %v1416 = vunpack.c.h.b16 %v772
    %v1417 = vunpack.c.l.b16 %v773
    %v1418 = vunpack.c.h.b16 %v773
    %v1419 = vunpack.c.l.b16 %v774
    %v1420 = vunpack.c.h.b16 %v774
    %v1421 = vunpack.c.l.b16 %v775
    %v1422 = vunpack.c.h.b16 %v775
    %v1423 = vunpack.c.l.b16 %v776
    %v1424 = vunpack.c.h.b16 %v776
    %v1425 = vunpack.c.l.b16 %v777
    %v1426 = vunpack.c.h.b16 %v777
    %v1427 = vunpack.c.l.b16 %v778
    %v1428 = vunpack.c.h.b16 %v778
    %v1429 = vunpack.c.l.b16 %v779
    %v1430 = vunpack.c.h.b16 %v779
    %v1431 = vunpack.c.l.b16 %v780
    %v1432 = vunpack.c.h.b16 %v780
    %v1433 = vunpack.c.l.b16 %v781
    %v1434 = vunpack.c.h.b16 %v781
    %v1435 = vunpack.c.l.b16 %v782
    %v1436 = vunpack.c.h.b16 %v782
    %v1437 = vunpack.c.l.b16 %v783
    %v1438 = vunpack.c.h.b16 %v783
    %v1439 = vunpack.c.l.b16 %v784
    %v1440 = vunpack.c.h.b16 %v784
    %v1441 = vunpack.c.l.b16 %v785
    %v1442 = vunpack.c.h.b16 %v785
    %v1443 = vunpack.c.l.b16 %v786
    %v1444 = vunpack.c.h.b16 %v786
    %v1445 = vunpack.c.l.b16 %v787
    %v1446 = vunpack.c.h.b16 %v787
    %v1447 = vunpack.c.l.b16 %v788
    %v1448 = vunpack.c.h.b16 %v788
    %v1449 = vunpack.c.l.b16 %v789
    %v1450 = vunpack.c.h.b16 %v789
    %v1451 = vunpack.c.l.b16 %v790
    %v1452 = vunpack.c.h.b16 %v790
    %v1453 = vunpack.c.l.b16 %v791
    %v1454 = vunpack.c.h.b16 %v791
    %v1455 = vunpack.c.l.b16 %v792
    %v1456 = vunpack.c.h.b16 %v792
    %v1457 = vunpack.c.l.b16 %v793
    %v1458 = vunpack.c.h.b16 %v793
    %v1459 = vunpack.c.l.b16 %v794
    %v1460 = vunpack.c.h.b16 %v794
    %v1461 = vunpack.c.l.b16 %v795
    %v1462 = vunpack.c.h.b16 %v795
    %v1463 = vunpack.c.l.b16 %v796
    %v1464 = vunpack.c.h.b16 %v796
    %v1465 = vunpack.c.l.b16 %v797
    %v1466 = vunpack.c.h.b16 %v797
    %v1467 = vunpack.c.l.b16 %v798
    %v1468 = vunpack.c.h.b16 %v798
    %v1469 = vunpack.c.l.b16 %v799
    %v1470 = vunpack.c.h.b16 %v799
    %v1471 = vunpack.c.l.b16 %v800
    %v1472 = vunpack.c.h.b16 %v800
    %v1473 = vunpack.c.l.b16 %v801
    %v1474 = vunpack.c.h.b16 %v801
    %v1475 = vunpack.c.l.b16 %v802
    %v1476 = vunpack.c.h.b16 %v802
    %v1477 = vunpack.c.l.b16 %v803
    %v1478 = vunpack.c.h.b16 %v803
    %v1479 = vunpack.c.l.b16 %v804
    %v1480 = vunpack.c.h.b16 %v804
    %v1481 = vunpack.c.l.b16 %v805
    %v1482 = vunpack.c.h.b16 %v805
    %v1483 = vunpack.c.l.b16 %v806
    %v1484 = vunpack.c.h.b16 %v806
    %v1485 = vunpack.c.l.b16 %v807
    %v1486 = vunpack.c.h.b16 %v807
    %v1487 = vunpack.c.l.b16 %v808
    %v1488 = vunpack.c.h.b16 %v808
    %v1489 = vunpack.c.l.b16 %v809
    %v1490 = vunpack.c.h.b16 %v809
    %v1491 = vunpack.c.l.b16 %v810
    %v1492 = vunpack.c.h.b16 %v810
    %v1493 = vunpack.c.l.b16 %v811
    %v1494 = vunpack.c.h.b16 %v811
    %v1495 = vunpack.c.l.b16 %v812
    %v1496 = vunpack.c.h.b16 %v812
    %v1497 = vunpack.c.l.b16 %v813
    %v1498 = vunpack.c.h.b16 %v813
    %v1499 = vunpack.c.l.b16 %v814
    %v1500 = vunpack.c.h.b16 %v814
    %v1501 = vunpack.c.l.b16 %v815
    %v1502 = vunpack.c.h.b16 %v815
    %v1503 = vunpack.c.l.b16 %v816
    %v1504 = vunpack.c.h.b16 %v816
    %v1505 = vunpack.c.l.b16 %v817
    %v1506 = vunpack.c.h.b16 %v817
    %v1507 = vunpack.c.l.b16 %v818
    %v1508 = vunpack.c.h.b16 %v818
    %v1509 = vunpack.c.l.b16 %v819
    %v1510 = vunpack.c.h.b16 %v819
    %v1511 = vunpack.c.l.b16 %v820
    %v1512 = vunpack.c.h.b16 %v820
    %v1513 = vunpack.c.l.b16 %v821
    %v1514 = vunpack.c.h.b16 %v821
    %v1515 = vunpack.c.l.b16 %v822
    %v1516 = vunpack.c.h.b16 %v822
    %v1517 = vunpack.c.l.b16 %v823
    %v1518 = vunpack.c.h.b16 %v823
    %v1519 = vunpack.c.l.b16 %v824
    %v1520 = vunpack.c.h.b16 %v824
    %v1521 = vunpack.c.l.b16 %v825
    %v1522 = vunpack.c.h.b16 %v825
    %v1523 = vunpack.c.l.b16 %v826
    %v1524 = vunpack.c.h.b16 %v826
    %v1525 = vunpack.c.l.b16 %v827
    %v1526 = vunpack.c.h.b16 %v827
    %v1527 = vunpack.c.l.b16 %v828
    %v1528 = vunpack.c.h.b16 %v828
    %v1529 = vunpack.c.l.b16 %v829
    %v1530 = vunpack.c.h.b16 %v829
    %v1531 = vunpack.c.l.b16 %v830
    %v1532 = vunpack.c.h.b16 %v830
    %v1533 = vunpack.c.l.b16 %v831
    %v1534 = vunpack.c.h.b16 %v831
    %v1535 = vunpack.c.l.b16 %v832
    %v1536 = vunpack.c.h.b16 %v832
    %v1537 = vunpack.c.l.b16 %v833
    %v1538 = vunpack.c.h.b16 %v833
    %v1539 = vunpack.c.l.b16 %v834
    %v1540 = vunpack.c.h.b16 %v834
    %v1541 = vunpack.c.l.b16 %v835
    %v1542 = vunpack.c.h.b16 %v835
    %v1543 = vunpack.c.l.b16 %v836
    %v1544 = vunpack.c.h.b16 %v836
    %v1545 = vunpack.c.l.b16 %v837
    %v1546 = vunpack.c.h.b16 %v837
    %v1547 = vunpack.c.l.b16 %v838
    %v1548 = vunpack.c.h.b16 %v838
    %v1549 = vunpack.c.l.b16 %v839
    %v1550 = vunpack.c.h.b16 %v839
    %v1551 = vunpack.c.l.b16 %v840
    %v1552 = vunpack.c.h.b16 %v840
    %v1553 = vunpack.c.l.b16 %v841
    %v1554 = vunpack.c.h.b16 %v841
    %v1555 = vunpack.c.l.b16 %v842
    %v1556 = vunpack.c.h.b16 %v842
    %v1557 = vunpack.c.l.b16 %v843
    %v1558 = vunpack.c.h.b16 %v843
    %v1559 = vunpack.c.l.b16 %v844
    %v1560 = vunpack.c.h.b16 %v844
    %v1561 = vunpack.c.l.b16 %v845
    %v1562 = vunpack.c.h.b16 %v845
    %v1563 = vunpack.c.l.b16 %v846
    %v1564 = vunpack.c.h.b16 %v846
    %v1565 = vunpack.c.l.b16 %v847
    %v1566 = vunpack.c.h.b16 %v847
    %v1567 = vunpack.c.l.b16 %v848
    %v1568 = vunpack.c.h.b16 %v848
    %v1569 = vunpack.c.l.b16 %v849
    %v1570 = vunpack.c.h.b16 %v849
    %v1571 = vunpack.c.l.b16 %v850
    %v1572 = vunpack.c.h.b16 %v850
    %v1573 = vunpack.c.l.b16 %v851
    %v1574 = vunpack.c.h.b16 %v851
    %v1575 = vunpack.c.l.b16 %v852
    %v1576 = vunpack.c.h.b16 %v852
    %v1577 = vunpack.c.l.b16 %v853
    %v1578 = vunpack.c.h.b16 %v853
    %v1579 = vunpack.c.l.b16 %v854
    %v1580 = vunpack.c.h.b16 %v854
    %v1581 = vunpack.c.l.b16 %v855
    %v1582 = vunpack.c.h.b16 %v855
    %v1583 = vunpack.c.l.b16 %v856
    %v1584 = vunpack.c.h.b16 %v856
    %v1585 = vunpack.c.l.b16 %v857
    %v1586 = vunpack.c.h.b16 %v857
    %v1587 = vunpack.c.l.b16 %v858
    %v1588 = vunpack.c.h.b16 %v858
    %v1589 = vunpack.c.l.b16 %v859
    %v1590 = vunpack.c.h.b16 %v859
    %v1591 = vunpack.c.l.b16 %v860
    %v1592 = vunpack.c.h.b16 %v860
    %v1593 = vunpack.c.l.b16 %v861
    %v1594 = vunpack.c.h.b16 %v861
    %v1595 = vunpack.c.l.b16 %v862
    %v1596 = vunpack.c.h.b16 %v862
    %v1597 = vunpack.c.l.b16 %v863
    %v1598 = vunpack.c.h.b16 %v863
    %v1599 = vunpack.c.l.b16 %v864
    %v1600 = vunpack.c.h.b16 %v864
    %v1601 = vunpack.c.l.b16 %v865
    %v1602 = vunpack.c.h.b16 %v865
    %v1603 = vunpack.c.l.b16 %v866
    %v1604 = vunpack.c.h.b16 %v866
    %v1605 = vunpack.c.l.b16 %v867
    %v1606 = vunpack.c.h.b16 %v867
    %v1607 = vunpack.c.l.b16 %v868
    %v1608 = vunpack.c.h.b16 %v868
    %v1609 = vunpack.c.l.b16 %v869
    %v1610 = vunpack.c.h.b16 %v869
    %v1611 = vunpack.c.l.b16 %v870
    %v1612 = vunpack.c.h.b16 %v870
    %v1613 = vunpack.c.l.b16 %v871
    %v1614 = vunpack.c.h.b16 %v871
    %v1615 = vunpack.c.l.b16 %v872
    %v1616 = vunpack.c.h.b16 %v872
    %v1617 = vunpack.c.l.b16 %v873
    %v1618 = vunpack.c.h.b16 %v873
    %v1619 = vunpack.c.l.b16 %v874
    %v1620 = vunpack.c.h.b16 %v874
    %v1621 = vunpack.c.l.b16 %v875
    %v1622 = vunpack.c.h.b16 %v875
    %v1623 = vunpack.c.l.b16 %v876
    %v1624 = vunpack.c.h.b16 %v876
    %v1625 = vunpack.c.l.b16 %v877
    %v1626 = vunpack.c.h.b16 %v877
    %v1627 = vunpack.c.l.b16 %v878
    %v1628 = vunpack.c.h.b16 %v878
    %v1629 = vunpack.c.l.b16 %v879
    %v1630 = vunpack.c.h.b16 %v879
    %v1631 = vunpack.c.l.b16 %v880
    %v1632 = vunpack.c.h.b16 %v880
    %v1633 = vunpack.c.l.b16 %v881
    %v1634 = vunpack.c.h.b16 %v881
    %v1635 = vunpack.c.l.b16 %v882
    %v1636 = vunpack.c.h.b16 %v882
    %v1637 = vunpack.c.l.b16 %v883
    %v1638 = vunpack.c.h.b16 %v883
    %v1639 = vunpack.c.l.b16 %v884
    %v1640 = vunpack.c.h.b16 %v884
    %v1641 = vunpack.c.l.b16 %v885
    %v1642 = vunpack.c.h.b16 %v885
    %v1643 = vunpack.c.l.b16 %v886
    %v1644 = vunpack.c.h.b16 %v886
    %v1645 = vunpack.c.l.b16 %v887
    %v1646 = vunpack.c.h.b16 %v887
    %v1647 = vunpack.c.l.b16 %v888
    %v1648 = vunpack.c.h.b16 %v888
    %v1649 = vunpack.c.l.b16 %v889
    %v1650 = vunpack.c.h.b16 %v889
    %v1651 = vunpack.c.l.b16 %v890
    %v1652 = vunpack.c.h.b16 %v890
    %v1653 = vunpack.c.l.b16 %v891
    %v1654 = vunpack.c.h.b16 %v891
    %v1655 = vunpack.c.l.b16 %v892
    %v1656 = vunpack.c.h.b16 %v892
    %v1657 = vunpack.c.l.b16 %v893
    %v1658 = vunpack.c.h.b16 %v893
    %v1659 = vunpack.c.l.b16 %v894
    %v1660 = vunpack.c.h.b16 %v894
    %v1661 = vunpack.c.l.b16 %v895
    %v1662 = vunpack.c.h.b16 %v895
    %v1663 = vunpack.c.l.b16 %v896
    %v1664 = vunpack.c.h.b16 %v896
    %v1665 = vunpack.c.l.b16 %v897
    %v1666 = vunpack.c.h.b16 %v897
    %v1667 = vunpack.c.l.b16 %v898
    %v1668 = vunpack.c.h.b16 %v898
    %v1669 = vunpack.c.l.b16 %v899
    %v1670 = vunpack.c.h.b16 %v899
    %v1671 = vunpack.c.l.b16 %v900
    %v1672 = vunpack.c.h.b16 %v900
    %v1673 = vunpack.c.l.b16 %v901
    %v1674 = vunpack.c.h.b16 %v901
    %v1675 = vunpack.c.l.b16 %v902
    %v1676 = vunpack.c.h.b16 %v902
    %v1677 = vunpack.c.l.b16 %v903
    %v1678 = vunpack.c.h.b16 %v903
    %v1679 = vunpack.c.l.b16 %v904
    %v1680 = vunpack.c.h.b16 %v904
    %v1681 = vunpack.c.l.b16 %v905
    %v1682 = vunpack.c.h.b16 %v905
    %v1683 = vunpack.c.l.b16 %v906
    %v1684 = vunpack.c.h.b16 %v906
    %v1685 = vunpack.c.l.b16 %v907
    %v1686 = vunpack.c.h.b16 %v907
    %v1687 = vunpack.c.l.b16 %v908
    %v1688 = vunpack.c.h.b16 %v908
    %v1689 = vunpack.c.l.b16 %v909
    %v1690 = vunpack.c.h.b16 %v909
    %v1691 = vunpack.c.l.b16 %v910
    %v1692 = vunpack.c.h.b16 %v910
    %v1693 = vunpack.c.l.b16 %v911
    %v1694 = vunpack.c.h.b16 %v911
    %v1695 = vunpack.c.l.b16 %v912
    %v1696 = vunpack.c.h.b16 %v912
    %v1697 = vunpack.c.l.b16 %v913
    %v1698 = vunpack.c.h.b16 %v913
    %v1699 = vunpack.c.l.b16 %v914
    %v1700 = vunpack.c.h.b16 %v914
    %v1701 = vunpack.c.l.b16 %v915
    %v1702 = vunpack.c.h.b16 %v915
    %v1703 = vunpack.c.l.b16 %v916
    %v1704 = vunpack.c.h.b16 %v916
    %v1705 = vunpack.c.l.b16 %v917
    %v1706 = vunpack.c.h.b16 %v917
    %v1707 = vunpack.c.l.b16 %v918
    %v1708 = vunpack.c.h.b16 %v918
    %v1709 = vunpack.c.l.b16 %v919
    %v1710 = vunpack.c.h.b16 %v919
    %v1711 = vunpack.c.l.b16 %v920
    %v1712 = vunpack.c.h.b16 %v920
    %v1713 = vunpack.c.l.b16 %v921
    %v1714 = vunpack.c.h.b16 %v921
    %v1715 = vunpack.c.l.b16 %v922
    %v1716 = vunpack.c.h.b16 %v922
    %v1717 = vunpack.c.l.b16 %v923
    %v1718 = vunpack.c.h.b16 %v923
    %v1719 = vunpack.c.l.b16 %v924
    %v1720 = vunpack.c.h.b16 %v924
    %v1721 = vunpack.c.l.b16 %v925
    %v1722 = vunpack.c.h.b16 %v925
    %v1723 = vunpack.c.l.b16 %v926
    %v1724 = vunpack.c.h.b16 %v926
    %v1725 = vunpack.c.l.b16 %v927
    %v1726 = vunpack.c.h.b16 %v927
    %v1727 = vunpack.c.l.b16 %v928
    %v1728 = vunpack.c.h.b16 %v928
    %v1729 = vunpack.c.l.b16 %v929
    %v1730 = vunpack.c.h.b16 %v929
    %v1731 = vunpack.c.l.b16 %v930
    %v1732 = vunpack.c.h.b16 %v930
    %v1733 = vunpack.c.l.b16 %v931
    %v1734 = vunpack.c.h.b16 %v931
    %v1735 = vunpack.c.l.b16 %v932
    %v1736 = vunpack.c.h.b16 %v932
    %v1737 = vunpack.c.l.b16 %v933
    %v1738 = vunpack.c.h.b16 %v933
    %v1739 = vunpack.c.l.b16 %v934
    %v1740 = vunpack.c.h.b16 %v934
    %v1741 = vunpack.c.l.b16 %v935
    %v1742 = vunpack.c.h.b16 %v935
    %v1743 = vunpack.c.l.b16 %v936
    %v1744 = vunpack.c.h.b16 %v936
    %v1745 = vunpack.c.l.b16 %v937
    %v1746 = vunpack.c.h.b16 %v937
    %v1747 = vunpack.c.l.b16 %v938
    %v1748 = vunpack.c.h.b16 %v938
    %v1749 = vpack.c.b16 %v1245, %v1237
    %v1750 = vpack.c.b16 %v1246, %v1238
    %v1751 = vpack.c.b16 %v1247, %v1239
    %v1752 = vpack.c.b16 %v1248, %v1240
    %v1753 = vpack.c.b16 %v1249, %v1241
    %v1754 = vpack.c.b16 %v1250, %v1242
    %v1755 = vpack.c.b16 %v1251, %v1243
    %v1756 = vpack.c.b16 %v1252, %v1244
    %v1757 = vpack.c.b16 %v1261, %v1253
    %v1758 = vpack.c.b16 %v1262, %v1254
    %v1759 = vpack.c.b16 %v1263, %v1255
    %v1760 = vpack.c.b16 %v1264, %v1256
    %v1761 = vpack.c.b16 %v1265, %v1257
    %v1762 = vpack.c.b16 %v1266, %v1258
    %v1763 = vpack.c.b16 %v1267, %v1259
    %v1764 = vpack.c.b16 %v1268, %v1260
    %v1765 = vpack.c.b16 %v1277, %v1269
    %v1766 = vpack.c.b16 %v1278, %v1270
    %v1767 = vpack.c.b16 %v1279, %v1271
    %v1768 = vpack.c.b16 %v1280, %v1272
    %v1769 = vpack.c.b16 %v1281, %v1273
    %v1770 = vpack.c.b16 %v1282, %v1274
    %v1771 = vpack.c.b16 %v1283, %v1275
    %v1772 = vpack.c.b16 %v1284, %v1276
    %v1773 = vpack.c.b16 %v1293, %v1285
    %v1774 = vpack.c.b16 %v1294, %v1286
    %v1775 = vpack.c.b16 %v1295, %v1287
    %v1776 = vpack.c.b16 %v1296, %v1288
    %v1777 = vpack.c.b16 %v1297, %v1289
    %v1778 = vpack.c.b16 %v1298, %v1290
    %v1779 = vpack.c.b16 %v1299, %v1291
    %v1780 = vpack.c.b16 %v1300, %v1292
    %v1781 = vpack.c.b16 %v1309, %v1301
    %v1782 = vpack.c.b16 %v1310, %v1302
    %v1783 = vpack.c.b16 %v1311, %v1303
    %v1784 = vpack.c.b16 %v1312, %v1304
    %v1785 = vpack.c.b16 %v1313, %v1305
    %v1786 = vpack.c.b16 %v1314, %v1306
    %v1787 = vpack.c.b16 %v1315, %v1307
    %v1788 = vpack.c.b16 %v1316, %v1308
    %v1789 = vpack.c.b16 %v1325, %v1317
    %v1790 = vpack.c.b16 %v1326, %v1318
    %v1791 = vpack.c.b16 %v1327, %v1319
    %v1792 = vpack.c.b16 %v1328, %v1320
    %v1793 = vpack.c.b16 %v1329, %v1321
    %v1794 = vpack.c.b16 %v1330, %v1322
    %v1795 = vpack.c.b16 %v1331, %v1323
    %v1796 = vpack.c.b16 %v1332, %v1324
    %v1797 = vpack.c.b16 %v1341, %v1333
    %v1798 = vpack.c.b16 %v1342, %v1334
    %v1799 = vpack.c.b16 %v1343, %v1335
    %v1800 = vpack.c.b16 %v1344, %v1336
    %v1801 = vpack.c.b16 %v1345, %v1337
    %v1802 = vpack.c.b16 %v1346, %v1338
    %v1803 = vpack.c.b16 %v1347, %v1339
    %v1804 = vpack.c.b16 %v1348, %v1340
    %v1805 = vpack.c.b16 %v1357, %v1349
    %v1806 = vpack.c.b16 %v1358, %v1350
    %v1807 = vpack.c.b16 %v1359, %v1351
    %v1808 = vpack.c.b16 %v1360, %v1352
    %v1809 = vpack.c.b16 %v1361, %v1353
    %v1810 = vpack.c.b16 %v1362, %v1354
    %v1811 = vpack.c.b16 %v1363, %v1355
    %v1812 = vpack.c.b16 %v1364, %v1356
    %v1813 = vpack.c.b16 %v1373, %v1365
    %v1814 = vpack.c.b16 %v1374, %v1366
    %v1815 = vpack.c.b16 %v1375, %v1367
    %v1816 = vpack.c.b16 %v1376, %v1368
    %v1817 = vpack.c.b16 %v1377, %v1369
    %v1818 = vpack.c.b16 %v1378, %v1370
    %v1819 = vpack.c.b16 %v1379, %v1371
    %v1820 = vpack.c.b16 %v1380, %v1372
    %v1821 = vpack.c.b16 %v1389, %v1381
    %v1822 = vpack.c.b16 %v1390, %v1382
    %v1823 = vpack.c.b16 %v1391, %v1383
    %v1824 = vpack.c.b16 %v1392, %v1384
    %v1825 = vpack.c.b16 %v1393, %v1385
    %v1826 = vpack.c.b16 %v1394, %v1386
    %v1827 = vpack.c.b16 %v1395, %v1387
    %v1828 = vpack.c.b16 %v1396, %v1388
    %v1829 = vpack.c.b16 %v1405, %v1397
    %v1830 = vpack.c.b16 %v1406, %v1398
    %v1831 = vpack.c.b16 %v1407, %v1399
    %v1832 = vpack.c.b16 %v1408, %v1400
    %v1833 = vpack.c.b16 %v1409, %v1401
    %v1834 = vpack.c.b16 %v1410, %v1402
    %v1835 = vpack.c.b16 %v1411, %v1403
    %v1836 = vpack.c.b16 %v1412, %v1404
    %v1837 = vpack.c.b16 %v1421, %v1413
    %v1838 = vpack.c.b16 %v1422, %v1414
    %v1839 = vpack.c.b16 %v1423, %v1415
    %v1840 = vpack.c.b16 %v1424, %v1416
    %v1841 = vpack.c.b16 %v1425, %v1417
    %v1842 = vpack.c.b16 %v1426, %v1418
    %v1843 = vpack.c.b16 %v1427, %v1419
    %v1844 = vpack.c.b16 %v1428, %v1420
    %v1845 = vpack.c.b16 %v1437, %v1429
    %v1846 = vpack.c.b16 %v1438, %v1430
    %v1847 = vpack.c.b16 %v1439, %v1431
    %v1848 = vpack.c.b16 %v1440, %v1432
    %v1849 = vpack.c.b16 %v1441, %v1433
    %v1850 = vpack.c.b16 %v1442, %v1434
    %v1851 = vpack.c.b16 %v1443, %v1435
    %v1852 = vpack.c.b16 %v1444, %v1436
    %v1853 = vpack.c.b16 %v1453, %v1445
    %v1854 = vpack.c.b16 %v1454, %v1446
    %v1855 = vpack.c.b16 %v1455, %v1447
    %v1856 = vpack.c.b16 %v1456, %v1448
    %v1857 = vpack.c.b16 %v1457, %v1449
    %v1858 = vpack.c.b16 %v1458, %v1450
    %v1859 = vpack.c.b16 %v1459, %v1451
    %v1860 = vpack.c.b16 %v1460, %v1452
    %v1861 = vpack.c.b16 %v1469, %v1461
    %v1862 = vpack.c.b16 %v1470, %v1462
    %v1863 = vpack.c.b16 %v1471, %v1463
    %v1864 = vpack.c.b16 %v1472, %v1464
    %v1865 = vpack.c.b16 %v1473, %v1465
    %v1866 = vpack.c.b16 %v1474, %v1466
    %v1867 = vpack.c.b16 %v1475, %v1467
    %v1868 = vpack.c.b16 %v1476, %v1468
    %v1869 = vpack.c.b16 %v1485, %v1477
    %v1870 = vpack.c.b16 %v1486, %v1478
    %v1871 = vpack.c.b16 %v1487, %v1479
    %v1872 = vpack.c.b16 %v1488, %v1480
    %v1873 = vpack.c.b16 %v1489, %v1481
    %v1874 = vpack.c.b16 %v1490, %v1482
    %v1875 = vpack.c.b16 %v1491, %v1483
    %v1876 = vpack.c.b16 %v1492, %v1484
    %v1877 = vpack.c.b16 %v1501, %v1493
    %v1878 = vpack.c.b16 %v1502, %v1494
    %v1879 = vpack.c.b16 %v1503, %v1495
    %v1880 = vpack.c.b16 %v1504, %v1496
    %v1881 = vpack.c.b16 %v1505, %v1497
    %v1882 = vpack.c.b16 %v1506, %v1498
    %v1883 = vpack.c.b16 %v1507, %v1499
    %v1884 = vpack.c.b16 %v1508, %v1500
    %v1885 = vpack.c.b16 %v1517, %v1509
    %v1886 = vpack.c.b16 %v1518, %v1510
    %v1887 = vpack.c.b16 %v1519, %v1511
    %v1888 = vpack.c.b16 %v1520, %v1512
    %v1889 = vpack.c.b16 %v1521, %v1513
    %v1890 = vpack.c.b16 %v1522, %v1514
    %v1891 = vpack.c.b16 %v1523, %v1515
    %v1892 = vpack.c.b16 %v1524, %v1516
    %v1893 = vpack.c.b16 %v1533, %v1525
    %v1894 = vpack.c.b16 %v1534, %v1526
    %v1895 = vpack.c.b16 %v1535, %v1527
    %v1896 = vpack.c.b16 %v1536, %v1528
    %v1897 = vpack.c.b16 %v1537, %v1529
    %v1898 = vpack.c.b16 %v1538, %v1530
    %v1899 = vpack.c.b16 %v1539, %v1531
    %v1900 = vpack.c.b16 %v1540, %v1532
    %v1901 = vpack.c.b16 %v1549, %v1541
    %v1902 = vpack.c.b16 %v1550, %v1542
    %v1903 = vpack.c.b16 %v1551, %v1543
    %v1904 = vpack.c.b16 %v1552, %v1544
    %v1905 = vpack.c.b16 %v1553, %v1545
    %v1906 = vpack.c.b16 %v1554, %v1546
    %v1907 = vpack.c.b16 %v1555, %v1547
    %v1908 = vpack.c.b16 %v1556, %v1548
    %v1909 = vpack.c.b16 %v1565, %v1557
    %v1910 = vpack.c.b16 %v1566, %v1558
    %v1911 = vpack.c.b16 %v1567, %v1559
    %v1912 = vpack.c.b16 %v1568, %v1560
    %v1913 = vpack.c.b16 %v1569, %v1561
    %v1914 = vpack.c.b16 %v1570, %v1562
    %v1915 = vpack.c.b16 %v1571, %v1563
    %v1916 = vpack.c.b16 %v1572, %v1564
    %v1917 = vpack.c.b16 %v1581, %v1573
    %v1918 = vpack.c.b16 %v1582, %v1574
    %v1919 = vpack.c.b16 %v1583, %v1575
    %v1920 = vpack.c.b16 %v1584, %v1576
    %v1921 = vpack.c.b16 %v1585, %v1577
    %v1922 = vpack.c.b16 %v1586, %v1578
    %v1923 = vpack.c.b16 %v1587, %v1579
    %v1924 = vpack.c.b16 %v1588, %v1580
    %v1925 = vpack.c.b16 %v1597, %v1589
    %v1926 = vpack.c.b16 %v1598, %v1590
    %v1927 = vpack.c.b16 %v1599, %v1591
    %v1928 = vpack.c.b16 %v1600, %v1592
    %v1929 = vpack.c.b16 %v1601, %v1593
    %v1930 = vpack.c.b16 %v1602, %v1594
    %v1931 = vpack.c.b16 %v1603, %v1595
    %v1932 = vpack.c.b16 %v1604, %v1596
    %v1933 = vpack.c.b16 %v1613, %v1605
    %v1934 = vpack.c.b16 %v1614, %v1606
    %v1935 = vpack.c.b16 %v1615, %v1607
    %v1936 = vpack.c.b16 %v1616, %v1608
    %v1937 = vpack.c.b16 %v1617, %v1609
    %v1938 = vpack.c.b16 %v1618, %v1610
    %v1939 = vpack.c.b16 %v1619, %v1611
    %v1940 = vpack.c.b16 %v1620, %v1612
    %v1941 = vpack.c.b16 %v1629, %v1621
    %v1942 = vpack.c.b16 %v1630, %v1622
    %v1943 = vpack.c.b16 %v1631, %v1623
    %v1944 = vpack.c.b16 %v1632, %v1624
    %v1945 = vpack.c.b16 %v1633, %v1625
    %v1946 = vpack.c.b16 %v1634, %v1626
    %v1947 = vpack.c.b16 %v1635, %v1627
    %v1948 = vpack.c.b16 %v1636, %v1628
    %v1949 = vpack.c.b16 %v1645, %v1637
    %v1950 = vpack.c.b16 %v1646, %v1638
    %v1951 = vpack.c.b16 %v1647, %v1639
    %v1952 = vpack.c.b16 %v1648, %v1640
    %v1953 = vpack.c.b16 %v1649, %v1641
    %v1954 = vpack.c.b16 %v1650, %v1642
    %v1955 = vpack.c.b16 %v1651, %v1643
    %v1956 = vpack.c.b16 %v1652, %v1644
    %v1957 = vpack.c.b16 %v1661, %v1653
    %v1958 = vpack.c.b16 %v1662, %v1654
    %v1959 = vpack.c.b16 %v1663, %v1655
    %v1960 = vpack.c.b16 %v1664, %v1656
    %v1961 = vpack.c.b16 %v1665, %v1657
    %v1962 = vpack.c.b16 %v1666, %v1658
    %v1963 = vpack.c.b16 %v1667, %v1659
    %v1964 = vpack.c.b16 %v1668, %v1660
    %v1965 = vpack.c.b16 %v1677, %v1669
    %v1966 = vpack.c.b16 %v1678, %v1670
    %v1967 = vpack.c.b16 %v1679, %v1671
    %v1968 = vpack.c.b16 %v1680, %v1672
    %v1969 = vpack.c.b16 %v1681, %v1673
    %v1970 = vpack.c.b16 %v1682, %v1674
    %v1971 = vpack.c.b16 %v1683, %v1675
    %v1972 = vpack.c.b16 %v1684, %v1676
    %v1973 = vpack.c.b16 %v1693, %v1685
    %v1974 = vpack.c.b16 %v1694, %v1686
    %v1975 = vpack.c.b16 %v1695, %v1687
    %v1976 = vpack.c.b16 %v1696, %v1688
    %v1977 = vpack.c.b16 %v1697, %v1689
    %v1978 = vpack.c.b16 %v1698, %v1690
    %v1979 = vpack.c.b16 %v1699, %v1691
    %v1980 = vpack.c.b16 %v1700, %v1692
    %v1981 = vpack.c.b16 %v1709, %v1701
    %v1982 = vpack.c.b16 %v1710, %v1702
    %v1983 = vpack.c.b16 %v1711, %v1703
    %v1984 = vpack.c.b16 %v1712, %v1704
    %v1985 = vpack.c.b16 %v1713, %v1705
    %v1986 = vpack.c.b16 %v1714, %v1706
    %v1987 = vpack.c.b16 %v1715, %v1707
    %v1988 = vpack.c.b16 %v1716, %v1708
    %v1989 = vpack.c.b16 %v1725, %v1717
    %v1990 = vpack.c.b16 %v1726, %v1718
    %v1991 = vpack.c.b16 %v1727, %v1719
    %v1992 = vpack.c.b16 %v1728, %v1720
    %v1993 = vpack.c.b16 %v1729, %v1721
    %v1994 = vpack.c.b16 %v1730, %v1722
    %v1995 = vpack.c.b16 %v1731, %v1723
    %v1996 = vpack.c.b16 %v1732, %v1724
    %v1997 = vpack.c.b16 %v1741, %v1733
    %v1998 = vpack.c.b16 %v1742, %v1734
    %v1999 = vpack.c.b16 %v1743, %v1735
    %v2000 = vpack.c.b16 %v1744, %v1736
    %v2001 = vpack.c.b16 %v1745, %v1737
    %v2002 = vpack.c.b16 %v1746, %v1738
    %v2003 = vpack.c.b16 %v1747, %v1739
    %v2004 = vpack.c.b16 %v1748, %v1740
    %2261 = vmatprep.subr.bf16.mxu0 %v1750
    %2262 = vmatpush1.bf16.msra.mxu0 %v1749
    %2263 = vmatprep.subr.bf16.mxu0 %v1758
    %2264 = vmatpush1.bf16.msra.mxu0 %v1757
    %2265 = vmatprep.subr.bf16.mxu0 %v1766
    %2266 = vmatpush1.bf16.msra.mxu0 %v1765
    %2267 = vmatprep.subr.bf16.mxu0 %v1774
    %2268 = vmatpush1.bf16.msra.mxu0 %v1773
    %2269 = vmatprep.subr.bf16.mxu0 %v1782
    %2270 = vmatpush1.bf16.msra.mxu0 %v1781
    %2271 = vmatprep.subr.bf16.mxu0 %v1790
    %2272 = vmatpush1.bf16.msra.mxu0 %v1789
    %2273 = vmatprep.subr.bf16.mxu0 %v1798
    %2274 = vmatpush1.bf16.msra.mxu0 %v1797
    %2275 = vmatprep.subr.bf16.mxu0 %v1806
    %2276 = vmatpush1.bf16.msra.mxu0 %v1805
    %2277 = vmatprep.subr.bf16.mxu0 %v1814
    %2278 = vmatpush1.bf16.msra.mxu0 %v1813
    %2279 = vmatprep.subr.bf16.mxu0 %v1822
    %2280 = vmatpush1.bf16.msra.mxu0 %v1821
    %2281 = vmatprep.subr.bf16.mxu0 %v1830
    %2282 = vmatpush1.bf16.msra.mxu0 %v1829
    %2283 = vmatprep.subr.bf16.mxu0 %v1838
    %2284 = vmatpush1.bf16.msra.mxu0 %v1837
    %2285 = vmatprep.subr.bf16.mxu0 %v1846
    %2286 = vmatpush1.bf16.msra.mxu0 %v1845
    %2287 = vmatprep.subr.bf16.mxu0 %v1854
    %2288 = vmatpush1.bf16.msra.mxu0 %v1853
    %2289 = vmatprep.subr.bf16.mxu0 %v1862
    %2290 = vmatpush1.bf16.msra.mxu0 %v1861
    %2291 = vmatprep.subr.bf16.mxu0 %v1870
    %2292 = vmatpush1.bf16.msra.mxu0 %v1869
    %2293 = vmatprep.mubr.bf16.mxu0 %v680
    %2294 = vmatmul.mubr.bf16.gmra.mrb[0].mxu0 %v679
    %v2295 = vpop.f32.mrb[0].mxu0
    %v2296 = vadd.f32 %v944, %v2295
    %v2297 = vpop.f32.mrb[0].mxu0
    %v2298 = vadd.f32 %v948, %v2297
    %v2299 = vpop.f32.mrb[0].mxu0
    %v2300 = vadd.f32 %v944, %v2299
    %v2301 = vpop.f32.mrb[0].mxu0
    %v2302 = vadd.f32 %v948, %v2301
    %2303 = vdwg.mxu0
    %2304 = vmatprep.subr.bf16.mxu0 %v1878
    %2305 = vmatpush1.bf16.msra.mxu0 %v1877
    %2306 = vmatprep.subr.bf16.mxu0 %v1886
    %2307 = vmatpush1.bf16.msra.mxu0 %v1885
    %2308 = vmatprep.subr.bf16.mxu0 %v1894
    %2309 = vmatpush1.bf16.msra.mxu0 %v1893
    %2310 = vmatprep.subr.bf16.mxu0 %v1902
    %2311 = vmatpush1.bf16.msra.mxu0 %v1901
    %2312 = vmatprep.subr.bf16.mxu0 %v1910
    %2313 = vmatpush1.bf16.msra.mxu0 %v1909
    %2314 = vmatprep.subr.bf16.mxu0 %v1918
    %2315 = vmatpush1.bf16.msra.mxu0 %v1917
    %2316 = vmatprep.subr.bf16.mxu0 %v1926
    %2317 = vmatpush1.bf16.msra.mxu0 %v1925
    %2318 = vmatprep.subr.bf16.mxu0 %v1934
    %2319 = vmatpush1.bf16.msra.mxu0 %v1933
    %2320 = vmatprep.subr.bf16.mxu0 %v1942
    %2321 = vmatpush1.bf16.msra.mxu0 %v1941
    %2322 = vmatprep.subr.bf16.mxu0 %v1950
    %2323 = vmatpush1.bf16.msra.mxu0 %v1949
    %2324 = vmatprep.subr.bf16.mxu0 %v1958
    %2325 = vmatpush1.bf16.msra.mxu0 %v1957
    %2326 = vmatprep.subr.bf16.mxu0 %v1966
    %2327 = vmatpush1.bf16.msra.mxu0 %v1965
    %2328 = vmatprep.subr.bf16.mxu0 %v1974
    %2329 = vmatpush1.bf16.msra.mxu0 %v1973
    %2330 = vmatprep.subr.bf16.mxu0 %v1982
    %2331 = vmatpush1.bf16.msra.mxu0 %v1981
    %2332 = vmatprep.subr.bf16.mxu0 %v1990
    %2333 = vmatpush1.bf16.msra.mxu0 %v1989
    %2334 = vmatprep.subr.bf16.mxu0 %v1998
    %2335 = vmatpush1.bf16.msra.mxu0 %v1997
    %2336 = vmatprep.mubr.bf16.mxu0 %v682
    %2337 = vmatmul.mubr.bf16.gmra.mrb[0].mxu0 %v681
    %v2338 = vpop.f32.mrb[0].mxu0
    %v2339 = vadd.f32 %v2296, %v2338
    %v2340 = vpop.f32.mrb[0].mxu0
    %v2341 = vadd.f32 %v2298, %v2340
    %v2342 = vpop.f32.mrb[0].mxu0
    %v2343 = vadd.f32 %v2300, %v2342
    %v2344 = vpop.f32.mrb[0].mxu0
    %v2345 = vadd.f32 %v2302, %v2344
    %2346 = vdwg.mxu0
    %2347 = vmatprep.subr.bf16.mxu0 %v1752
    %2348 = vmatpush1.bf16.msra.mxu0 %v1751
    %2349 = vmatprep.subr.bf16.mxu0 %v1760
    %2350 = vmatpush1.bf16.msra.mxu0 %v1759
    %2351 = vmatprep.subr.bf16.mxu0 %v1768
    %2352 = vmatpush1.bf16.msra.mxu0 %v1767
    %2353 = vmatprep.subr.bf16.mxu0 %v1776
    %2354 = vmatpush1.bf16.msra.mxu0 %v1775
    %2355 = vmatprep.subr.bf16.mxu0 %v1784
    %2356 = vmatpush1.bf16.msra.mxu0 %v1783
    %2357 = vmatprep.subr.bf16.mxu0 %v1792
    %2358 = vmatpush1.bf16.msra.mxu0 %v1791
    %2359 = vmatprep.subr.bf16.mxu0 %v1800
    %2360 = vmatpush1.bf16.msra.mxu0 %v1799
    %2361 = vmatprep.subr.bf16.mxu0 %v1808
    %2362 = vmatpush1.bf16.msra.mxu0 %v1807
    %2363 = vmatprep.subr.bf16.mxu0 %v1816
    %2364 = vmatpush1.bf16.msra.mxu0 %v1815
    %2365 = vmatprep.subr.bf16.mxu0 %v1824
    %2366 = vmatpush1.bf16.msra.mxu0 %v1823
    %2367 = vmatprep.subr.bf16.mxu0 %v1832
    %2368 = vmatpush1.bf16.msra.mxu0 %v1831
    %2369 = vmatprep.subr.bf16.mxu0 %v1840
    %2370 = vmatpush1.bf16.msra.mxu0 %v1839
    %2371 = vmatprep.subr.bf16.mxu0 %v1848
    %2372 = vmatpush1.bf16.msra.mxu0 %v1847
    %2373 = vmatprep.subr.bf16.mxu0 %v1856
    %2374 = vmatpush1.bf16.msra.mxu0 %v1855
    %2375 = vmatprep.subr.bf16.mxu0 %v1864
    %2376 = vmatpush1.bf16.msra.mxu0 %v1863
    %2377 = vmatprep.subr.bf16.mxu0 %v1872
    %2378 = vmatpush1.bf16.msra.mxu0 %v1871
    %2379 = vmatprep.mubr.bf16.mxu0 %v680
    %2380 = vmatmul.mubr.bf16.gmra.mrb[0].mxu0 %v679
    %v2381 = vpop.f32.mrb[0].mxu0
    %v2382 = vadd.f32 %v952, %v2381
    %v2383 = vpop.f32.mrb[0].mxu0
    %v2384 = vadd.f32 %v956, %v2383
    %v2385 = vpop.f32.mrb[0].mxu0
    %v2386 = vadd.f32 %v952, %v2385
    %v2387 = vpop.f32.mrb[0].mxu0
    %v2388 = vadd.f32 %v956, %v2387
    %2389 = vdwg.mxu0
    %2390 = vmatprep.subr.bf16.mxu0 %v1880
    %2391 = vmatpush1.bf16.msra.mxu0 %v1879
    %2392 = vmatprep.subr.bf16.mxu0 %v1888
    %2393 = vmatpush1.bf16.msra.mxu0 %v1887
    %2394 = vmatprep.subr.bf16.mxu0 %v1896
    %2395 = vmatpush1.bf16.msra.mxu0 %v1895
    %2396 = vmatprep.subr.bf16.mxu0 %v1904
    %2397 = vmatpush1.bf16.msra.mxu0 %v1903
    %2398 = vmatprep.subr.bf16.mxu0 %v1912
    %2399 = vmatpush1.bf16.msra.mxu0 %v1911
    %2400 = vmatprep.subr.bf16.mxu0 %v1920
    %2401 = vmatpush1.bf16.msra.mxu0 %v1919
    %2402 = vmatprep.subr.bf16.mxu0 %v1928
    %2403 = vmatpush1.bf16.msra.mxu0 %v1927
    %2404 = vmatprep.subr.bf16.mxu0 %v1936
    %2405 = vmatpush1.bf16.msra.mxu0 %v1935
    %2406 = vmatprep.subr.bf16.mxu0 %v1944
    %2407 = vmatpush1.bf16.msra.mxu0 %v1943
    %2408 = vmatprep.subr.bf16.mxu0 %v1952
    %2409 = vmatpush1.bf16.msra.mxu0 %v1951
    %2410 = vmatprep.subr.bf16.mxu0 %v1960
    %2411 = vmatpush1.bf16.msra.mxu0 %v1959
    %2412 = vmatprep.subr.bf16.mxu0 %v1968
    %2413 = vmatpush1.bf16.msra.mxu0 %v1967
    %2414 = vmatprep.subr.bf16.mxu0 %v1976
    %2415 = vmatpush1.bf16.msra.mxu0 %v1975
    %2416 = vmatprep.subr.bf16.mxu0 %v1984
    %2417 = vmatpush1.bf16.msra.mxu0 %v1983
    %2418 = vmatprep.subr.bf16.mxu0 %v1992
    %2419 = vmatpush1.bf16.msra.mxu0 %v1991
    %2420 = vmatprep.subr.bf16.mxu0 %v2000
    %2421 = vmatpush1.bf16.msra.mxu0 %v1999
    %2422 = vmatprep.mubr.bf16.mxu0 %v682
    %2423 = vmatmul.mubr.bf16.gmra.mrb[0].mxu0 %v681
    %v2424 = vpop.f32.mrb[0].mxu0
    %v2425 = vadd.f32 %v2382, %v2424
    %v2426 = vpop.f32.mrb[0].mxu0
    %v2427 = vadd.f32 %v2384, %v2426
    %v2428 = vpop.f32.mrb[0].mxu0
    %v2429 = vadd.f32 %v2386, %v2428
    %v2430 = vpop.f32.mrb[0].mxu0
    %v2431 = vadd.f32 %v2388, %v2430
    %2432 = vdwg.mxu0
    %2433 = vmatprep.subr.bf16.mxu0 %v1754
    %2434 = vmatpush1.bf16.msra.mxu0 %v1753
    %2435 = vmatprep.subr.bf16.mxu0 %v1762
    %2436 = vmatpush1.bf16.msra.mxu0 %v1761
    %2437 = vmatprep.subr.bf16.mxu0 %v1770
    %2438 = vmatpush1.bf16.msra.mxu0 %v1769
    %2439 = vmatprep.subr.bf16.mxu0 %v1778
    %2440 = vmatpush1.bf16.msra.mxu0 %v1777
    %2441 = vmatprep.subr.bf16.mxu0 %v1786
    %2442 = vmatpush1.bf16.msra.mxu0 %v1785
    %2443 = vmatprep.subr.bf16.mxu0 %v1794
    %2444 = vmatpush1.bf16.msra.mxu0 %v1793
    %2445 = vmatprep.subr.bf16.mxu0 %v1802
    %2446 = vmatpush1.bf16.msra.mxu0 %v1801
    %2447 = vmatprep.subr.bf16.mxu0 %v1810
    %2448 = vmatpush1.bf16.msra.mxu0 %v1809
    %2449 = vmatprep.subr.bf16.mxu0 %v1818
    %2450 = vmatpush1.bf16.msra.mxu0 %v1817
    %2451 = vmatprep.subr.bf16.mxu0 %v1826
    %2452 = vmatpush1.bf16.msra.mxu0 %v1825
    %2453 = vmatprep.subr.bf16.mxu0 %v1834
    %2454 = vmatpush1.bf16.msra.mxu0 %v1833
    %2455 = vmatprep.subr.bf16.mxu0 %v1842
    %2456 = vmatpush1.bf16.msra.mxu0 %v1841
    %2457 = vmatprep.subr.bf16.mxu0 %v1850
    %2458 = vmatpush1.bf16.msra.mxu0 %v1849
    %2459 = vmatprep.subr.bf16.mxu0 %v1858
    %2460 = vmatpush1.bf16.msra.mxu0 %v1857
    %2461 = vmatprep.subr.bf16.mxu0 %v1866
    %2462 = vmatpush1.bf16.msra.mxu0 %v1865
    %2463 = vmatprep.subr.bf16.mxu0 %v1874
    %2464 = vmatpush1.bf16.msra.mxu0 %v1873
    %2465 = vmatprep.mubr.bf16.mxu0 %v680
    %2466 = vmatmul.mubr.bf16.gmra.mrb[0].mxu0 %v679
    %v2467 = vpop.f32.mrb[0].mxu0
    %v2468 = vadd.f32 %v960, %v2467
    %v2469 = vpop.f32.mrb[0].mxu0
    %v2470 = vadd.f32 %v964, %v2469
    %v2471 = vpop.f32.mrb[0].mxu0
    %v2472 = vadd.f32 %v960, %v2471
    %v2473 = vpop.f32.mrb[0].mxu0
    %v2474 = vadd.f32 %v964, %v2473
    %2475 = vdwg.mxu0
    %2476 = vmatprep.subr.bf16.mxu0 %v1882
    %2477 = vmatpush1.bf16.msra.mxu0 %v1881
    %2478 = vmatprep.subr.bf16.mxu0 %v1890
    %2479 = vmatpush1.bf16.msra.mxu0 %v1889
    %2480 = vmatprep.subr.bf16.mxu0 %v1898
    %2481 = vmatpush1.bf16.msra.mxu0 %v1897
    %2482 = vmatprep.subr.bf16.mxu0 %v1906
    %2483 = vmatpush1.bf16.msra.mxu0 %v1905
    %2484 = vmatprep.subr.bf16.mxu0 %v1914
    %2485 = vmatpush1.bf16.msra.mxu0 %v1913
    %2486 = vmatprep.subr.bf16.mxu0 %v1922
    %2487 = vmatpush1.bf16.msra.mxu0 %v1921
    %2488 = vmatprep.subr.bf16.mxu0 %v1930
    %2489 = vmatpush1.bf16.msra.mxu0 %v1929
    %2490 = vmatprep.subr.bf16.mxu0 %v1938
    %2491 = vmatpush1.bf16.msra.mxu0 %v1937
    %2492 = vmatprep.subr.bf16.mxu0 %v1946
    %2493 = vmatpush1.bf16.msra.mxu0 %v1945
    %2494 = vmatprep.subr.bf16.mxu0 %v1954
    %2495 = vmatpush1.bf16.msra.mxu0 %v1953
    %2496 = vmatprep.subr.bf16.mxu0 %v1962
    %2497 = vmatpush1.bf16.msra.mxu0 %v1961
    %2498 = vmatprep.subr.bf16.mxu0 %v1970
    %2499 = vmatpush1.bf16.msra.mxu0 %v1969
    %2500 = vmatprep.subr.bf16.mxu0 %v1978
    %2501 = vmatpush1.bf16.msra.mxu0 %v1977
    %2502 = vmatprep.subr.bf16.mxu0 %v1986
    %2503 = vmatpush1.bf16.msra.mxu0 %v1985
    %2504 = vmatprep.subr.bf16.mxu0 %v1994
    %2505 = vmatpush1.bf16.msra.mxu0 %v1993
    %2506 = vmatprep.subr.bf16.mxu0 %v2002
    %2507 = vmatpush1.bf16.msra.mxu0 %v2001
    %2508 = vmatprep.mubr.bf16.mxu0 %v682
    %2509 = vmatmul.mubr.bf16.gmra.mrb[0].mxu0 %v681
    %v2510 = vpop.f32.mrb[0].mxu0
    %v2511 = vadd.f32 %v2468, %v2510
    %v2512 = vpop.f32.mrb[0].mxu0
    %v2513 = vadd.f32 %v2470, %v2512
    %v2514 = vpop.f32.mrb[0].mxu0
    %v2515 = vadd.f32 %v2472, %v2514
    %v2516 = vpop.f32.mrb[0].mxu0
    %v2517 = vadd.f32 %v2474, %v2516
    %2518 = vdwg.mxu0
    %2519 = vmatprep.subr.bf16.mxu0 %v1756
    %2520 = vmatpush1.bf16.msra.mxu0 %v1755
    %2521 = vmatprep.subr.bf16.mxu0 %v1764
    %2522 = vmatpush1.bf16.msra.mxu0 %v1763
    %2523 = vmatprep.subr.bf16.mxu0 %v1772
    %2524 = vmatpush1.bf16.msra.mxu0 %v1771
    %2525 = vmatprep.subr.bf16.mxu0 %v1780
    %2526 = vmatpush1.bf16.msra.mxu0 %v1779
    %2527 = vmatprep.subr.bf16.mxu0 %v1788
    %2528 = vmatpush1.bf16.msra.mxu0 %v1787
    %2529 = vmatprep.subr.bf16.mxu0 %v1796
    %2530 = vmatpush1.bf16.msra.mxu0 %v1795
    %2531 = vmatprep.subr.bf16.mxu0 %v1804
    %2532 = vmatpush1.bf16.msra.mxu0 %v1803
    %2533 = vmatprep.subr.bf16.mxu0 %v1812
    %2534 = vmatpush1.bf16.msra.mxu0 %v1811
    %2535 = vmatprep.subr.bf16.mxu0 %v1820
    %2536 = vmatpush1.bf16.msra.mxu0 %v1819
    %2537 = vmatprep.subr.bf16.mxu0 %v1828
    %2538 = vmatpush1.bf16.msra.mxu0 %v1827
    %2539 = vmatprep.subr.bf16.mxu0 %v1836
    %2540 = vmatpush1.bf16.msra.mxu0 %v1835
    %2541 = vmatprep.subr.bf16.mxu0 %v1844
    %2542 = vmatpush1.bf16.msra.mxu0 %v1843
    %2543 = vmatprep.subr.bf16.mxu0 %v1852
    %2544 = vmatpush1.bf16.msra.mxu0 %v1851
    %2545 = vmatprep.subr.bf16.mxu0 %v1860
    %2546 = vmatpush1.bf16.msra.mxu0 %v1859
    %2547 = vmatprep.subr.bf16.mxu0 %v1868
    %2548 = vmatpush1.bf16.msra.mxu0 %v1867
    %2549 = vmatprep.subr.bf16.mxu0 %v1876
    %2550 = vmatpush1.bf16.msra.mxu0 %v1875
    %2551 = vmatprep.mubr.bf16.mxu0 %v680
    %2552 = vmatmul.mubr.bf16.gmra.mrb[0].mxu0 %v679
    %v2553 = vpop.f32.mrb[0].mxu0
    %v2554 = vadd.f32 %v968, %v2553
    %v2555 = vpop.f32.mrb[0].mxu0
    %v2556 = vadd.f32 %v972, %v2555
    %v2557 = vpop.f32.mrb[0].mxu0
    %v2558 = vadd.f32 %v968, %v2557
    %v2559 = vpop.f32.mrb[0].mxu0
    %v2560 = vadd.f32 %v972, %v2559
    %2561 = vdwg.mxu0
    %2562 = vmatprep.subr.bf16.mxu0 %v1884
    %2563 = vmatpush1.bf16.msra.mxu0 %v1883
    %2564 = vmatprep.subr.bf16.mxu0 %v1892
    %2565 = vmatpush1.bf16.msra.mxu0 %v1891
    %2566 = vmatprep.subr.bf16.mxu0 %v1900
    %2567 = vmatpush1.bf16.msra.mxu0 %v1899
    %2568 = vmatprep.subr.bf16.mxu0 %v1908
    %2569 = vmatpush1.bf16.msra.mxu0 %v1907
    %2570 = vmatprep.subr.bf16.mxu0 %v1916
    %2571 = vmatpush1.bf16.msra.mxu0 %v1915
    %2572 = vmatprep.subr.bf16.mxu0 %v1924
    %2573 = vmatpush1.bf16.msra.mxu0 %v1923
    %2574 = vmatprep.subr.bf16.mxu0 %v1932
    %2575 = vmatpush1.bf16.msra.mxu0 %v1931
    %2576 = vmatprep.subr.bf16.mxu0 %v1940
    %2577 = vmatpush1.bf16.msra.mxu0 %v1939
    %2578 = vmatprep.subr.bf16.mxu0 %v1948
    %2579 = vmatpush1.bf16.msra.mxu0 %v1947
    %2580 = vmatprep.subr.bf16.mxu0 %v1956
    %2581 = vmatpush1.bf16.msra.mxu0 %v1955
    %2582 = vmatprep.subr.bf16.mxu0 %v1964
    %2583 = vmatpush1.bf16.msra.mxu0 %v1963
    %2584 = vmatprep.subr.bf16.mxu0 %v1972
    %2585 = vmatpush1.bf16.msra.mxu0 %v1971
    %2586 = vmatprep.subr.bf16.mxu0 %v1980
    %2587 = vmatpush1.bf16.msra.mxu0 %v1979
    %2588 = vmatprep.subr.bf16.mxu0 %v1988
    %2589 = vmatpush1.bf16.msra.mxu0 %v1987
    %2590 = vmatprep.subr.bf16.mxu0 %v1996
    %2591 = vmatpush1.bf16.msra.mxu0 %v1995
    %2592 = vmatprep.subr.bf16.mxu0 %v2004
    %2593 = vmatpush1.bf16.msra.mxu0 %v2003
    %2594 = vmatprep.mubr.bf16.mxu0 %v682
    %2595 = vmatmul.mubr.bf16.gmra.mrb[0].mxu0 %v681
    %v2596 = vpop.f32.mrb[0].mxu0
    %v2597 = vadd.f32 %v2554, %v2596
    %v2598 = vpop.f32.mrb[0].mxu0
    %v2599 = vadd.f32 %v2556, %v2598
    %v2600 = vpop.f32.mrb[0].mxu0
    %v2601 = vadd.f32 %v2558, %v2600
    %v2602 = vpop.f32.mrb[0].mxu0
    %v2603 = vadd.f32 %v2560, %v2602
    %2604 = vdwg.mxu0
    %v2605 = vmax.f32 %v2339, 0.0
    %v2606 = vmax.f32 %v2341, 0.0
    %v2607 = vmax.f32 %v2425, 0.0
    %v2608 = vmax.f32 %v2427, 0.0
    %v2609 = vmax.f32 %v2511, 0.0
    %v2610 = vmax.f32 %v2513, 0.0
    %v2611 = vmax.f32 %v2597, 0.0
    %v2612 = vmax.f32 %v2599, 0.0
    %v2613 = vmax.f32 %v2343, 0.0
    %v2614 = vmax.f32 %v2345, 0.0
    %v2615 = vmax.f32 %v2429, 0.0
    %v2616 = vmax.f32 %v2431, 0.0
    %v2617 = vmax.f32 %v2515, 0.0
    %v2618 = vmax.f32 %v2517, 0.0
    %v2619 = vmax.f32 %v2601, 0.0
    %v2620 = vmax.f32 %v2603, 0.0
    %v2621 = vpack.c.bf16 %v2613, %v2605
    %v2622 = vpack.c.bf16 %v2614, %v2606
    %v2623 = vpack.c.bf16 %v2615, %v2607
    %v2624 = vpack.c.bf16 %v2616, %v2608
    %v2625 = vpack.c.bf16 %v2617, %v2609
    %v2626 = vpack.c.bf16 %v2618, %v2610
    %v2627 = vpack.c.bf16 %v2619, %v2611
    %v2628 = vpack.c.bf16 %v2620, %v2612
    %v2629 = vld [vmem:[#allocation17] sm:$0xff]
    %v2630 = vld [vmem:[#allocation17 + $0x8] sm:$0xff]
    %v2631 = vld [vmem:[#allocation17 + $0x10] sm:$0xff]
    %v2632 = vld [vmem:[#allocation17 + $0x18] sm:$0xff]
    %v2633 = vld [vmem:[#allocation17 + $0x20] sm:$0xff]
    %v2634 = vld [vmem:[#allocation17 + $0x28] sm:$0xff]
    %v2635 = vld [vmem:[#allocation17 + $0x30] sm:$0xff]
    %v2636 = vld [vmem:[#allocation17 + $0x38] sm:$0xff]
    %v2637 = vld [vmem:[#allocation17 + $0x40] sm:$0xff]
    %v2638 = vld [vmem:[#allocation17 + $0x48] sm:$0xff]
    %v2639 = vld [vmem:[#allocation17 + $0x50] sm:$0xff]
    %v2640 = vld [vmem:[#allocation17 + $0x58] sm:$0xff]
    %v2641 = vld [vmem:[#allocation17 + $0x60] sm:$0xff]
    %v2642 = vld [vmem:[#allocation17 + $0x68] sm:$0xff]
    %v2643 = vld [vmem:[#allocation17 + $0x70] sm:$0xff]
    %v2644 = vld [vmem:[#allocation17 + $0x78] sm:$0xff]
    %v2645 = vld [vmem:[#allocation17 + $0x80] sm:$0xff]
    %v2646 = vld [vmem:[#allocation17 + $0x88] sm:$0xff]
    %v2647 = vld [vmem:[#allocation17 + $0x90] sm:$0xff]
    %v2648 = vld [vmem:[#allocation17 + $0x98] sm:$0xff]
    %v2649 = vld [vmem:[#allocation17 + $0xa0] sm:$0xff]
    %v2650 = vld [vmem:[#allocation17 + $0xa8] sm:$0xff]
    %v2651 = vld [vmem:[#allocation17 + $0xb0] sm:$0xff]
    %v2652 = vld [vmem:[#allocation17 + $0xb8] sm:$0xff]
    %v2653 = vld [vmem:[#allocation17 + $0xc0] sm:$0xff]
    %v2654 = vld [vmem:[#allocation17 + $0xc8] sm:$0xff]
    %v2655 = vld [vmem:[#allocation17 + $0xd0] sm:$0xff]
    %v2656 = vld [vmem:[#allocation17 + $0xd8] sm:$0xff]
    %v2657 = vld [vmem:[#allocation17 + $0xe0] sm:$0xff]
    %v2658 = vld [vmem:[#allocation17 + $0xe8] sm:$0xff]
    %v2659 = vld [vmem:[#allocation17 + $0xf0] sm:$0xff]
    %v2660 = vld [vmem:[#allocation17 + $0xf8] sm:$0xff]
    %v2661 = vld [vmem:[#allocation17 + $0x100] sm:$0xff]
    %v2662 = vld [vmem:[#allocation17 + $0x108] sm:$0xff]
    %v2663 = vld [vmem:[#allocation17 + $0x110] sm:$0xff]
    %v2664 = vld [vmem:[#allocation17 + $0x118] sm:$0xff]
    %v2665 = vld [vmem:[#allocation17 + $0x120] sm:$0xff]
    %v2666 = vld [vmem:[#allocation17 + $0x128] sm:$0xff]
    %v2667 = vld [vmem:[#allocation17 + $0x130] sm:$0xff]
    %v2668 = vld [vmem:[#allocation17 + $0x138] sm:$0xff]
    %v2669 = vld [vmem:[#allocation17 + $0x140] sm:$0xff]
    %v2670 = vld [vmem:[#allocation17 + $0x148] sm:$0xff]
    %v2671 = vld [vmem:[#allocation17 + $0x150] sm:$0xff]
    %v2672 = vld [vmem:[#allocation17 + $0x158] sm:$0xff]
    %v2673 = vld [vmem:[#allocation17 + $0x160] sm:$0xff]
    %v2674 = vld [vmem:[#allocation17 + $0x168] sm:$0xff]
    %v2675 = vld [vmem:[#allocation17 + $0x170] sm:$0xff]
    %v2676 = vld [vmem:[#allocation17 + $0x178] sm:$0xff]
    %v2677 = vld [vmem:[#allocation17 + $0x180] sm:$0xff]
    %v2678 = vld [vmem:[#allocation17 + $0x188] sm:$0xff]
    %v2679 = vld [vmem:[#allocation17 + $0x190] sm:$0xff]
    %v2680 = vld [vmem:[#allocation17 + $0x198] sm:$0xff]
    %v2681 = vld [vmem:[#allocation17 + $0x1a0] sm:$0xff]
    %v2682 = vld [vmem:[#allocation17 + $0x1a8] sm:$0xff]
    %v2683 = vld [vmem:[#allocation17 + $0x1b0] sm:$0xff]
    %v2684 = vld [vmem:[#allocation17 + $0x1b8] sm:$0xff]
    %v2685 = vld [vmem:[#allocation17 + $0x1c0] sm:$0xff]
    %v2686 = vld [vmem:[#allocation17 + $0x1c8] sm:$0xff]
    %v2687 = vld [vmem:[#allocation17 + $0x1d0] sm:$0xff]
    %v2688 = vld [vmem:[#allocation17 + $0x1d8] sm:$0xff]
    %v2689 = vld [vmem:[#allocation17 + $0x1e0] sm:$0xff]
    %v2690 = vld [vmem:[#allocation17 + $0x1e8] sm:$0xff]
    %v2691 = vld [vmem:[#allocation17 + $0x1f0] sm:$0xff]
    %v2692 = vld [vmem:[#allocation17 + $0x1f8] sm:$0xff]
    %v2693 = vld [vmem:[#allocation17 + $0x200] sm:$0xff]
    %v2694 = vld [vmem:[#allocation17 + $0x208] sm:$0xff]
    %v2695 = vld [vmem:[#allocation17 + $0x210] sm:$0xff]
    %v2696 = vld [vmem:[#allocation17 + $0x218] sm:$0xff]
    %v2697 = vld [vmem:[#allocation17 + $0x220] sm:$0xff]
    %v2698 = vld [vmem:[#allocation17 + $0x228] sm:$0xff]
    %v2699 = vld [vmem:[#allocation17 + $0x230] sm:$0xff]
    %v2700 = vld [vmem:[#allocation17 + $0x238] sm:$0xff]
    %v2701 = vld [vmem:[#allocation17 + $0x240] sm:$0xff]
    %v2702 = vld [vmem:[#allocation17 + $0x248] sm:$0xff]
    %v2703 = vld [vmem:[#allocation17 + $0x250] sm:$0xff]
    %v2704 = vld [vmem:[#allocation17 + $0x258] sm:$0xff]
    %v2705 = vld [vmem:[#allocation17 + $0x260] sm:$0xff]
    %v2706 = vld [vmem:[#allocation17 + $0x268] sm:$0xff]
    %v2707 = vld [vmem:[#allocation17 + $0x270] sm:$0xff]
    %v2708 = vld [vmem:[#allocation17 + $0x278] sm:$0xff]
    %v2709 = vld [vmem:[#allocation17 + $0x280] sm:$0xff]
    %v2710 = vld [vmem:[#allocation17 + $0x288] sm:$0xff]
    %v2711 = vld [vmem:[#allocation17 + $0x290] sm:$0xff]
    %v2712 = vld [vmem:[#allocation17 + $0x298] sm:$0xff]
    %v2713 = vld [vmem:[#allocation17 + $0x2a0] sm:$0xff]
    %v2714 = vld [vmem:[#allocation17 + $0x2a8] sm:$0xff]
    %v2715 = vld [vmem:[#allocation17 + $0x2b0] sm:$0xff]
    %v2716 = vld [vmem:[#allocation17 + $0x2b8] sm:$0xff]
    %v2717 = vld [vmem:[#allocation17 + $0x2c0] sm:$0xff]
    %v2718 = vld [vmem:[#allocation17 + $0x2c8] sm:$0xff]
    %v2719 = vld [vmem:[#allocation17 + $0x2d0] sm:$0xff]
    %v2720 = vld [vmem:[#allocation17 + $0x2d8] sm:$0xff]
    %v2721 = vld [vmem:[#allocation17 + $0x2e0] sm:$0xff]
    %v2722 = vld [vmem:[#allocation17 + $0x2e8] sm:$0xff]
    %v2723 = vld [vmem:[#allocation17 + $0x2f0] sm:$0xff]
    %v2724 = vld [vmem:[#allocation17 + $0x2f8] sm:$0xff]
    %v2725 = vld [vmem:[#allocation17 + $0x300] sm:$0xff]
    %v2726 = vld [vmem:[#allocation17 + $0x308] sm:$0xff]
    %v2727 = vld [vmem:[#allocation17 + $0x310] sm:$0xff]
    %v2728 = vld [vmem:[#allocation17 + $0x318] sm:$0xff]
    %v2729 = vld [vmem:[#allocation17 + $0x320] sm:$0xff]
    %v2730 = vld [vmem:[#allocation17 + $0x328] sm:$0xff]
    %v2731 = vld [vmem:[#allocation17 + $0x330] sm:$0xff]
    %v2732 = vld [vmem:[#allocation17 + $0x338] sm:$0xff]
    %v2733 = vld [vmem:[#allocation17 + $0x340] sm:$0xff]
    %v2734 = vld [vmem:[#allocation17 + $0x348] sm:$0xff]
    %v2735 = vld [vmem:[#allocation17 + $0x350] sm:$0xff]
    %v2736 = vld [vmem:[#allocation17 + $0x358] sm:$0xff]
    %v2737 = vld [vmem:[#allocation17 + $0x360] sm:$0xff]
    %v2738 = vld [vmem:[#allocation17 + $0x368] sm:$0xff]
    %v2739 = vld [vmem:[#allocation17 + $0x370] sm:$0xff]
    %v2740 = vld [vmem:[#allocation17 + $0x378] sm:$0xff]
    %v2741 = vld [vmem:[#allocation17 + $0x380] sm:$0xff]
    %v2742 = vld [vmem:[#allocation17 + $0x388] sm:$0xff]
    %v2743 = vld [vmem:[#allocation17 + $0x390] sm:$0xff]
    %v2744 = vld [vmem:[#allocation17 + $0x398] sm:$0xff]
    %v2745 = vld [vmem:[#allocation17 + $0x3a0] sm:$0xff]
    %v2746 = vld [vmem:[#allocation17 + $0x3a8] sm:$0xff]
    %v2747 = vld [vmem:[#allocation17 + $0x3b0] sm:$0xff]
    %v2748 = vld [vmem:[#allocation17 + $0x3b8] sm:$0xff]
    %v2749 = vld [vmem:[#allocation17 + $0x3c0] sm:$0xff]
    %v2750 = vld [vmem:[#allocation17 + $0x3c8] sm:$0xff]
    %v2751 = vld [vmem:[#allocation17 + $0x3d0] sm:$0xff]
    %v2752 = vld [vmem:[#allocation17 + $0x3d8] sm:$0xff]
    %v2753 = vld [vmem:[#allocation17 + $0x3e0] sm:$0xff]
    %v2754 = vld [vmem:[#allocation17 + $0x3e8] sm:$0xff]
    %v2755 = vld [vmem:[#allocation17 + $0x3f0] sm:$0xff]
    %v2756 = vld [vmem:[#allocation17 + $0x3f8] sm:$0xff]
    %v2757 = vld [vmem:[#allocation17 + $0x400] sm:$0xff]
    %v2758 = vld [vmem:[#allocation17 + $0x408] sm:$0xff]
    %v2759 = vld [vmem:[#allocation17 + $0x410] sm:$0xff]
    %v2760 = vld [vmem:[#allocation17 + $0x418] sm:$0xff]
    %v2761 = vld [vmem:[#allocation17 + $0x420] sm:$0xff]
    %v2762 = vld [vmem:[#allocation17 + $0x428] sm:$0xff]
    %v2763 = vld [vmem:[#allocation17 + $0x430] sm:$0xff]
    %v2764 = vld [vmem:[#allocation17 + $0x438] sm:$0xff]
    %v2765 = vld [vmem:[#allocation17 + $0x440] sm:$0xff]
    %v2766 = vld [vmem:[#allocation17 + $0x448] sm:$0xff]
    %v2767 = vld [vmem:[#allocation17 + $0x450] sm:$0xff]
    %v2768 = vld [vmem:[#allocation17 + $0x458] sm:$0xff]
    %v2769 = vld [vmem:[#allocation17 + $0x460] sm:$0xff]
    %v2770 = vld [vmem:[#allocation17 + $0x468] sm:$0xff]
    %v2771 = vld [vmem:[#allocation17 + $0x470] sm:$0xff]
    %v2772 = vld [vmem:[#allocation17 + $0x478] sm:$0xff]
    %v2773 = vld [vmem:[#allocation17 + $0x480] sm:$0xff]
    %v2774 = vld [vmem:[#allocation17 + $0x488] sm:$0xff]
    %v2775 = vld [vmem:[#allocation17 + $0x490] sm:$0xff]
    %v2776 = vld [vmem:[#allocation17 + $0x498] sm:$0xff]
    %v2777 = vld [vmem:[#allocation17 + $0x4a0] sm:$0xff]
    %v2778 = vld [vmem:[#allocation17 + $0x4a8] sm:$0xff]
    %v2779 = vld [vmem:[#allocation17 + $0x4b0] sm:$0xff]
    %v2780 = vld [vmem:[#allocation17 + $0x4b8] sm:$0xff]
    %v2781 = vld [vmem:[#allocation17 + $0x4c0] sm:$0xff]
    %v2782 = vld [vmem:[#allocation17 + $0x4c8] sm:$0xff]
    %v2783 = vld [vmem:[#allocation17 + $0x4d0] sm:$0xff]
    %v2784 = vld [vmem:[#allocation17 + $0x4d8] sm:$0xff]
    %v2785 = vld [vmem:[#allocation17 + $0x4e0] sm:$0xff]
    %v2786 = vld [vmem:[#allocation17 + $0x4e8] sm:$0xff]
    %v2787 = vld [vmem:[#allocation17 + $0x4f0] sm:$0xff]
    %v2788 = vld [vmem:[#allocation17 + $0x4f8] sm:$0xff]
    %v2789 = vld [vmem:[#allocation17 + $0x500] sm:$0xff]
    %v2790 = vld [vmem:[#allocation17 + $0x508] sm:$0xff]
    %v2791 = vld [vmem:[#allocation17 + $0x510] sm:$0xff]
    %v2792 = vld [vmem:[#allocation17 + $0x518] sm:$0xff]
    %v2793 = vld [vmem:[#allocation17 + $0x520] sm:$0xff]
    %v2794 = vld [vmem:[#allocation17 + $0x528] sm:$0xff]
    %v2795 = vld [vmem:[#allocation17 + $0x530] sm:$0xff]
    %v2796 = vld [vmem:[#allocation17 + $0x538] sm:$0xff]
    %v2797 = vld [vmem:[#allocation17 + $0x540] sm:$0xff]
    %v2798 = vld [vmem:[#allocation17 + $0x548] sm:$0xff]
    %v2799 = vld [vmem:[#allocation17 + $0x550] sm:$0xff]
    %v2800 = vld [vmem:[#allocation17 + $0x558] sm:$0xff]
    %v2801 = vld [vmem:[#allocation17 + $0x560] sm:$0xff]
    %v2802 = vld [vmem:[#allocation17 + $0x568] sm:$0xff]
    %v2803 = vld [vmem:[#allocation17 + $0x570] sm:$0xff]
    %v2804 = vld [vmem:[#allocation17 + $0x578] sm:$0xff]
    %v2805 = vld [vmem:[#allocation17 + $0x580] sm:$0xff]
    %v2806 = vld [vmem:[#allocation17 + $0x588] sm:$0xff]
    %v2807 = vld [vmem:[#allocation17 + $0x590] sm:$0xff]
    %v2808 = vld [vmem:[#allocation17 + $0x598] sm:$0xff]
    %v2809 = vld [vmem:[#allocation17 + $0x5a0] sm:$0xff]
    %v2810 = vld [vmem:[#allocation17 + $0x5a8] sm:$0xff]
    %v2811 = vld [vmem:[#allocation17 + $0x5b0] sm:$0xff]
    %v2812 = vld [vmem:[#allocation17 + $0x5b8] sm:$0xff]
    %v2813 = vld [vmem:[#allocation17 + $0x5c0] sm:$0xff]
    %v2814 = vld [vmem:[#allocation17 + $0x5c8] sm:$0xff]
    %v2815 = vld [vmem:[#allocation17 + $0x5d0] sm:$0xff]
    %v2816 = vld [vmem:[#allocation17 + $0x5d8] sm:$0xff]
    %v2817 = vld [vmem:[#allocation17 + $0x5e0] sm:$0xff]
    %v2818 = vld [vmem:[#allocation17 + $0x5e8] sm:$0xff]
    %v2819 = vld [vmem:[#allocation17 + $0x5f0] sm:$0xff]
    %v2820 = vld [vmem:[#allocation17 + $0x5f8] sm:$0xff]
    %v2821 = vld [vmem:[#allocation17 + $0x600] sm:$0xff]
    %v2822 = vld [vmem:[#allocation17 + $0x608] sm:$0xff]
    %v2823 = vld [vmem:[#allocation17 + $0x610] sm:$0xff]
    %v2824 = vld [vmem:[#allocation17 + $0x618] sm:$0xff]
    %v2825 = vld [vmem:[#allocation17 + $0x620] sm:$0xff]
    %v2826 = vld [vmem:[#allocation17 + $0x628] sm:$0xff]
    %v2827 = vld [vmem:[#allocation17 + $0x630] sm:$0xff]
    %v2828 = vld [vmem:[#allocation17 + $0x638] sm:$0xff]
    %v2829 = vld [vmem:[#allocation17 + $0x640] sm:$0xff]
    %v2830 = vld [vmem:[#allocation17 + $0x648] sm:$0xff]
    %v2831 = vld [vmem:[#allocation17 + $0x650] sm:$0xff]
    %v2832 = vld [vmem:[#allocation17 + $0x658] sm:$0xff]
    %v2833 = vld [vmem:[#allocation17 + $0x660] sm:$0xff]
    %v2834 = vld [vmem:[#allocation17 + $0x668] sm:$0xff]
    %v2835 = vld [vmem:[#allocation17 + $0x670] sm:$0xff]
    %v2836 = vld [vmem:[#allocation17 + $0x678] sm:$0xff]
    %v2837 = vld [vmem:[#allocation17 + $0x680] sm:$0xff]
    %v2838 = vld [vmem:[#allocation17 + $0x688] sm:$0xff]
    %v2839 = vld [vmem:[#allocation17 + $0x690] sm:$0xff]
    %v2840 = vld [vmem:[#allocation17 + $0x698] sm:$0xff]
    %v2841 = vld [vmem:[#allocation17 + $0x6a0] sm:$0xff]
    %v2842 = vld [vmem:[#allocation17 + $0x6a8] sm:$0xff]
    %v2843 = vld [vmem:[#allocation17 + $0x6b0] sm:$0xff]
    %v2844 = vld [vmem:[#allocation17 + $0x6b8] sm:$0xff]
    %v2845 = vld [vmem:[#allocation17 + $0x6c0] sm:$0xff]
    %v2846 = vld [vmem:[#allocation17 + $0x6c8] sm:$0xff]
    %v2847 = vld [vmem:[#allocation17 + $0x6d0] sm:$0xff]
    %v2848 = vld [vmem:[#allocation17 + $0x6d8] sm:$0xff]
    %v2849 = vld [vmem:[#allocation17 + $0x6e0] sm:$0xff]
    %v2850 = vld [vmem:[#allocation17 + $0x6e8] sm:$0xff]
    %v2851 = vld [vmem:[#allocation17 + $0x6f0] sm:$0xff]
    %v2852 = vld [vmem:[#allocation17 + $0x6f8] sm:$0xff]
    %v2853 = vld [vmem:[#allocation17 + $0x700] sm:$0xff]
    %v2854 = vld [vmem:[#allocation17 + $0x708] sm:$0xff]
    %v2855 = vld [vmem:[#allocation17 + $0x710] sm:$0xff]
    %v2856 = vld [vmem:[#allocation17 + $0x718] sm:$0xff]
    %v2857 = vld [vmem:[#allocation17 + $0x720] sm:$0xff]
    %v2858 = vld [vmem:[#allocation17 + $0x728] sm:$0xff]
    %v2859 = vld [vmem:[#allocation17 + $0x730] sm:$0xff]
    %v2860 = vld [vmem:[#allocation17 + $0x738] sm:$0xff]
    %v2861 = vld [vmem:[#allocation17 + $0x740] sm:$0xff]
    %v2862 = vld [vmem:[#allocation17 + $0x748] sm:$0xff]
    %v2863 = vld [vmem:[#allocation17 + $0x750] sm:$0xff]
    %v2864 = vld [vmem:[#allocation17 + $0x758] sm:$0xff]
    %v2865 = vld [vmem:[#allocation17 + $0x760] sm:$0xff]
    %v2866 = vld [vmem:[#allocation17 + $0x768] sm:$0xff]
    %v2867 = vld [vmem:[#allocation17 + $0x770] sm:$0xff]
    %v2868 = vld [vmem:[#allocation17 + $0x778] sm:$0xff]
    %v2869 = vld [vmem:[#allocation17 + $0x780] sm:$0xff]
    %v2870 = vld [vmem:[#allocation17 + $0x788] sm:$0xff]
    %v2871 = vld [vmem:[#allocation17 + $0x790] sm:$0xff]
    %v2872 = vld [vmem:[#allocation17 + $0x798] sm:$0xff]
    %v2873 = vld [vmem:[#allocation17 + $0x7a0] sm:$0xff]
    %v2874 = vld [vmem:[#allocation17 + $0x7a8] sm:$0xff]
    %v2875 = vld [vmem:[#allocation17 + $0x7b0] sm:$0xff]
    %v2876 = vld [vmem:[#allocation17 + $0x7b8] sm:$0xff]
    %v2877 = vld [vmem:[#allocation17 + $0x7c0] sm:$0xff]
    %v2878 = vld [vmem:[#allocation17 + $0x7c8] sm:$0xff]
    %v2879 = vld [vmem:[#allocation17 + $0x7d0] sm:$0xff]
    %v2880 = vld [vmem:[#allocation17 + $0x7d8] sm:$0xff]
    %v2881 = vld [vmem:[#allocation17 + $0x7e0] sm:$0xff]
    %v2882 = vld [vmem:[#allocation17 + $0x7e8] sm:$0xff]
    %v2883 = vld [vmem:[#allocation17 + $0x7f0] sm:$0xff]
    %v2884 = vld [vmem:[#allocation17 + $0x7f8] sm:$0xff]
    %v2885 = vld [vmem:[#allocation17 + $0x800] sm:$0xff]
    %v2886 = vld [vmem:[#allocation17 + $0x808] sm:$0xff]
    %v2887 = vld [vmem:[#allocation17 + $0x810] sm:$0xff]
    %v2888 = vld [vmem:[#allocation17 + $0x818] sm:$0xff]
    %v2889 = vld [vmem:[#allocation17 + $0x820] sm:$0xff]
    %v2890 = vld [vmem:[#allocation17 + $0x828] sm:$0xff]
    %v2891 = vld [vmem:[#allocation17 + $0x830] sm:$0xff]
    %v2892 = vld [vmem:[#allocation17 + $0x838] sm:$0xff]
    %v2893 = vld [vmem:[#allocation17 + $0x840] sm:$0xff]
    %v2894 = vld [vmem:[#allocation17 + $0x848] sm:$0xff]
    %v2895 = vld [vmem:[#allocation17 + $0x850] sm:$0xff]
    %v2896 = vld [vmem:[#allocation17 + $0x858] sm:$0xff]
    %v2897 = vld [vmem:[#allocation17 + $0x860] sm:$0xff]
    %v2898 = vld [vmem:[#allocation17 + $0x868] sm:$0xff]
    %v2899 = vld [vmem:[#allocation17 + $0x870] sm:$0xff]
    %v2900 = vld [vmem:[#allocation17 + $0x878] sm:$0xff]
    %v2901 = vld [vmem:[#allocation17 + $0x880] sm:$0xff]
    %v2902 = vld [vmem:[#allocation17 + $0x888] sm:$0xff]
    %v2903 = vld [vmem:[#allocation17 + $0x890] sm:$0xff]
    %v2904 = vld [vmem:[#allocation17 + $0x898] sm:$0xff]
    %v2905 = vld [vmem:[#allocation17 + $0x8a0] sm:$0xff]
    %v2906 = vld [vmem:[#allocation17 + $0x8a8] sm:$0xff]
    %v2907 = vld [vmem:[#allocation17 + $0x8b0] sm:$0xff]
    %v2908 = vld [vmem:[#allocation17 + $0x8b8] sm:$0xff]
    %v2909 = vld [vmem:[#allocation17 + $0x8c0] sm:$0xff]
    %v2910 = vld [vmem:[#allocation17 + $0x8c8] sm:$0xff]
    %v2911 = vld [vmem:[#allocation17 + $0x8d0] sm:$0xff]
    %v2912 = vld [vmem:[#allocation17 + $0x8d8] sm:$0xff]
    %v2913 = vld [vmem:[#allocation17 + $0x8e0] sm:$0xff]
    %v2914 = vld [vmem:[#allocation17 + $0x8e8] sm:$0xff]
    %v2915 = vld [vmem:[#allocation17 + $0x8f0] sm:$0xff]
    %v2916 = vld [vmem:[#allocation17 + $0x8f8] sm:$0xff]
    %v2917 = vld [vmem:[#allocation17 + $0x900] sm:$0xff]
    %v2918 = vld [vmem:[#allocation17 + $0x908] sm:$0xff]
    %v2919 = vld [vmem:[#allocation17 + $0x910] sm:$0xff]
    %v2920 = vld [vmem:[#allocation17 + $0x918] sm:$0xff]
    %v2921 = vld [vmem:[#allocation17 + $0x920] sm:$0xff]
    %v2922 = vld [vmem:[#allocation17 + $0x928] sm:$0xff]
    %v2923 = vld [vmem:[#allocation17 + $0x930] sm:$0xff]
    %v2924 = vld [vmem:[#allocation17 + $0x938] sm:$0xff]
    %v2925 = vld [vmem:[#allocation17 + $0x940] sm:$0xff]
    %v2926 = vld [vmem:[#allocation17 + $0x948] sm:$0xff]
    %v2927 = vld [vmem:[#allocation17 + $0x950] sm:$0xff]
    %v2928 = vld [vmem:[#allocation17 + $0x958] sm:$0xff]
    %v2929 = vld [vmem:[#allocation17 + $0x960] sm:$0xff]
    %v2930 = vld [vmem:[#allocation17 + $0x968] sm:$0xff]
    %v2931 = vld [vmem:[#allocation17 + $0x970] sm:$0xff]
    %v2932 = vld [vmem:[#allocation17 + $0x978] sm:$0xff]
    %v2933 = vld [vmem:[#allocation17 + $0x980] sm:$0xff]
    %v2934 = vld [vmem:[#allocation17 + $0x988] sm:$0xff]
    %v2935 = vld [vmem:[#allocation17 + $0x990] sm:$0xff]
    %v2936 = vld [vmem:[#allocation17 + $0x998] sm:$0xff]
    %v2937 = vld [vmem:[#allocation17 + $0x9a0] sm:$0xff]
    %v2938 = vld [vmem:[#allocation17 + $0x9a8] sm:$0xff]
    %v2939 = vld [vmem:[#allocation17 + $0x9b0] sm:$0xff]
    %v2940 = vld [vmem:[#allocation17 + $0x9b8] sm:$0xff]
    %v2941 = vld [vmem:[#allocation17 + $0x9c0] sm:$0xff]
    %v2942 = vld [vmem:[#allocation17 + $0x9c8] sm:$0xff]
    %v2943 = vld [vmem:[#allocation17 + $0x9d0] sm:$0xff]
    %v2944 = vld [vmem:[#allocation17 + $0x9d8] sm:$0xff]
    %v2945 = vld [vmem:[#allocation17 + $0x9e0] sm:$0xff]
    %v2946 = vld [vmem:[#allocation17 + $0x9e8] sm:$0xff]
    %v2947 = vld [vmem:[#allocation17 + $0x9f0] sm:$0xff]
    %v2948 = vld [vmem:[#allocation17 + $0x9f8] sm:$0xff]
    %v2949 = vld [vmem:[#allocation17 + $0xa00] sm:$0xff]
    %v2950 = vld [vmem:[#allocation17 + $0xa08] sm:$0xff]
    %v2951 = vld [vmem:[#allocation17 + $0xa10] sm:$0xff]
    %v2952 = vld [vmem:[#allocation17 + $0xa18] sm:$0xff]
    %v2953 = vld [vmem:[#allocation17 + $0xa20] sm:$0xff]
    %v2954 = vld [vmem:[#allocation17 + $0xa28] sm:$0xff]
    %v2955 = vld [vmem:[#allocation17 + $0xa30] sm:$0xff]
    %v2956 = vld [vmem:[#allocation17 + $0xa38] sm:$0xff]
    %v2957 = vld [vmem:[#allocation17 + $0xa40] sm:$0xff]
    %v2958 = vld [vmem:[#allocation17 + $0xa48] sm:$0xff]
    %v2959 = vld [vmem:[#allocation17 + $0xa50] sm:$0xff]
    %v2960 = vld [vmem:[#allocation17 + $0xa58] sm:$0xff]
    %v2961 = vld [vmem:[#allocation17 + $0xa60] sm:$0xff]
    %v2962 = vld [vmem:[#allocation17 + $0xa68] sm:$0xff]
    %v2963 = vld [vmem:[#allocation17 + $0xa70] sm:$0xff]
    %v2964 = vld [vmem:[#allocation17 + $0xa78] sm:$0xff]
    %v2965 = vld [vmem:[#allocation17 + $0xa80] sm:$0xff]
    %v2966 = vld [vmem:[#allocation17 + $0xa88] sm:$0xff]
    %v2967 = vld [vmem:[#allocation17 + $0xa90] sm:$0xff]
    %v2968 = vld [vmem:[#allocation17 + $0xa98] sm:$0xff]
    %v2969 = vld [vmem:[#allocation17 + $0xaa0] sm:$0xff]
    %v2970 = vld [vmem:[#allocation17 + $0xaa8] sm:$0xff]
    %v2971 = vld [vmem:[#allocation17 + $0xab0] sm:$0xff]
    %v2972 = vld [vmem:[#allocation17 + $0xab8] sm:$0xff]
    %v2973 = vld [vmem:[#allocation17 + $0xac0] sm:$0xff]
    %v2974 = vld [vmem:[#allocation17 + $0xac8] sm:$0xff]
    %v2975 = vld [vmem:[#allocation17 + $0xad0] sm:$0xff]
    %v2976 = vld [vmem:[#allocation17 + $0xad8] sm:$0xff]
    %v2977 = vld [vmem:[#allocation17 + $0xae0] sm:$0xff]
    %v2978 = vld [vmem:[#allocation17 + $0xae8] sm:$0xff]
    %v2979 = vld [vmem:[#allocation17 + $0xaf0] sm:$0xff]
    %v2980 = vld [vmem:[#allocation17 + $0xaf8] sm:$0xff]
    %v2981 = vld [vmem:[#allocation17 + $0xb00] sm:$0xff]
    %v2982 = vld [vmem:[#allocation17 + $0xb08] sm:$0xff]
    %v2983 = vld [vmem:[#allocation17 + $0xb10] sm:$0xff]
    %v2984 = vld [vmem:[#allocation17 + $0xb18] sm:$0xff]
    %v2985 = vld [vmem:[#allocation17 + $0xb20] sm:$0xff]
    %v2986 = vld [vmem:[#allocation17 + $0xb28] sm:$0xff]
    %v2987 = vld [vmem:[#allocation17 + $0xb30] sm:$0xff]
    %v2988 = vld [vmem:[#allocation17 + $0xb38] sm:$0xff]
    %v2989 = vld [vmem:[#allocation17 + $0xb40] sm:$0xff]
    %v2990 = vld [vmem:[#allocation17 + $0xb48] sm:$0xff]
    %v2991 = vld [vmem:[#allocation17 + $0xb50] sm:$0xff]
    %v2992 = vld [vmem:[#allocation17 + $0xb58] sm:$0xff]
    %v2993 = vld [vmem:[#allocation17 + $0xb60] sm:$0xff]
    %v2994 = vld [vmem:[#allocation17 + $0xb68] sm:$0xff]
    %v2995 = vld [vmem:[#allocation17 + $0xb70] sm:$0xff]
    %v2996 = vld [vmem:[#allocation17 + $0xb78] sm:$0xff]
    %v2997 = vld [vmem:[#allocation17 + $0xb80] sm:$0xff]
    %v2998 = vld [vmem:[#allocation17 + $0xb88] sm:$0xff]
    %v2999 = vld [vmem:[#allocation17 + $0xb90] sm:$0xff]
    %v3000 = vld [vmem:[#allocation17 + $0xb98] sm:$0xff]
    %v3001 = vld [vmem:[#allocation17 + $0xba0] sm:$0xff]
    %v3002 = vld [vmem:[#allocation17 + $0xba8] sm:$0xff]
    %v3003 = vld [vmem:[#allocation17 + $0xbb0] sm:$0xff]
    %v3004 = vld [vmem:[#allocation17 + $0xbb8] sm:$0xff]
    %v3005 = vld [vmem:[#allocation17 + $0xbc0] sm:$0xff]
    %v3006 = vld [vmem:[#allocation17 + $0xbc8] sm:$0xff]
    %v3007 = vld [vmem:[#allocation17 + $0xbd0] sm:$0xff]
    %v3008 = vld [vmem:[#allocation17 + $0xbd8] sm:$0xff]
    %v3009 = vld [vmem:[#allocation17 + $0xbe0] sm:$0xff]
    %v3010 = vld [vmem:[#allocation17 + $0xbe8] sm:$0xff]
    %v3011 = vld [vmem:[#allocation17 + $0xbf0] sm:$0xff]
    %v3012 = vld [vmem:[#allocation17 + $0xbf8] sm:$0xff]
    %v3013 = vld [vmem:[#allocation17 + $0xc00] sm:$0xff]
    %v3014 = vld [vmem:[#allocation17 + $0xc08] sm:$0xff]
    %v3015 = vld [vmem:[#allocation17 + $0xc10] sm:$0xff]
    %v3016 = vld [vmem:[#allocation17 + $0xc18] sm:$0xff]
    %v3017 = vld [vmem:[#allocation17 + $0xc20] sm:$0xff]
    %v3018 = vld [vmem:[#allocation17 + $0xc28] sm:$0xff]
    %v3019 = vld [vmem:[#allocation17 + $0xc30] sm:$0xff]
    %v3020 = vld [vmem:[#allocation17 + $0xc38] sm:$0xff]
    %v3021 = vld [vmem:[#allocation17 + $0xc40] sm:$0xff]
    %v3022 = vld [vmem:[#allocation17 + $0xc48] sm:$0xff]
    %v3023 = vld [vmem:[#allocation17 + $0xc50] sm:$0xff]
    %v3024 = vld [vmem:[#allocation17 + $0xc58] sm:$0xff]
    %v3025 = vld [vmem:[#allocation17 + $0xc60] sm:$0xff]
    %v3026 = vld [vmem:[#allocation17 + $0xc68] sm:$0xff]
    %v3027 = vld [vmem:[#allocation17 + $0xc70] sm:$0xff]
    %v3028 = vld [vmem:[#allocation17 + $0xc78] sm:$0xff]
    %v3029 = vld [vmem:[#allocation17 + $0xc80] sm:$0xff]
    %v3030 = vld [vmem:[#allocation17 + $0xc88] sm:$0xff]
    %v3031 = vld [vmem:[#allocation17 + $0xc90] sm:$0xff]
    %v3032 = vld [vmem:[#allocation17 + $0xc98] sm:$0xff]
    %v3033 = vld [vmem:[#allocation17 + $0xca0] sm:$0xff]
    %v3034 = vld [vmem:[#allocation17 + $0xca8] sm:$0xff]
    %v3035 = vld [vmem:[#allocation17 + $0xcb0] sm:$0xff]
    %v3036 = vld [vmem:[#allocation17 + $0xcb8] sm:$0xff]
    %v3037 = vld [vmem:[#allocation17 + $0xcc0] sm:$0xff]
    %v3038 = vld [vmem:[#allocation17 + $0xcc8] sm:$0xff]
    %v3039 = vld [vmem:[#allocation17 + $0xcd0] sm:$0xff]
    %v3040 = vld [vmem:[#allocation17 + $0xcd8] sm:$0xff]
    %v3041 = vld [vmem:[#allocation17 + $0xce0] sm:$0xff]
    %v3042 = vld [vmem:[#allocation17 + $0xce8] sm:$0xff]
    %v3043 = vld [vmem:[#allocation17 + $0xcf0] sm:$0xff]
    %v3044 = vld [vmem:[#allocation17 + $0xcf8] sm:$0xff]
    %v3045 = vld [vmem:[#allocation17 + $0xd00] sm:$0xff]
    %v3046 = vld [vmem:[#allocation17 + $0xd08] sm:$0xff]
    %v3047 = vld [vmem:[#allocation17 + $0xd10] sm:$0xff]
    %v3048 = vld [vmem:[#allocation17 + $0xd18] sm:$0xff]
    %v3049 = vld [vmem:[#allocation17 + $0xd20] sm:$0xff]
    %v3050 = vld [vmem:[#allocation17 + $0xd28] sm:$0xff]
    %v3051 = vld [vmem:[#allocation17 + $0xd30] sm:$0xff]
    %v3052 = vld [vmem:[#allocation17 + $0xd38] sm:$0xff]
    %v3053 = vld [vmem:[#allocation17 + $0xd40] sm:$0xff]
    %v3054 = vld [vmem:[#allocation17 + $0xd48] sm:$0xff]
    %v3055 = vld [vmem:[#allocation17 + $0xd50] sm:$0xff]
    %v3056 = vld [vmem:[#allocation17 + $0xd58] sm:$0xff]
    %v3057 = vld [vmem:[#allocation17 + $0xd60] sm:$0xff]
    %v3058 = vld [vmem:[#allocation17 + $0xd68] sm:$0xff]
    %v3059 = vld [vmem:[#allocation17 + $0xd70] sm:$0xff]
    %v3060 = vld [vmem:[#allocation17 + $0xd78] sm:$0xff]
    %v3061 = vld [vmem:[#allocation17 + $0xd80] sm:$0xff]
    %v3062 = vld [vmem:[#allocation17 + $0xd88] sm:$0xff]
    %v3063 = vld [vmem:[#allocation17 + $0xd90] sm:$0xff]
    %v3064 = vld [vmem:[#allocation17 + $0xd98] sm:$0xff]
    %v3065 = vld [vmem:[#allocation17 + $0xda0] sm:$0xff]
    %v3066 = vld [vmem:[#allocation17 + $0xda8] sm:$0xff]
    %v3067 = vld [vmem:[#allocation17 + $0xdb0] sm:$0xff]
    %v3068 = vld [vmem:[#allocation17 + $0xdb8] sm:$0xff]
    %v3069 = vld [vmem:[#allocation17 + $0xdc0] sm:$0xff]
    %v3070 = vld [vmem:[#allocation17 + $0xdc8] sm:$0xff]
    %v3071 = vld [vmem:[#allocation17 + $0xdd0] sm:$0xff]
    %v3072 = vld [vmem:[#allocation17 + $0xdd8] sm:$0xff]
    %v3073 = vld [vmem:[#allocation17 + $0xde0] sm:$0xff]
    %v3074 = vld [vmem:[#allocation17 + $0xde8] sm:$0xff]
    %v3075 = vld [vmem:[#allocation17 + $0xdf0] sm:$0xff]
    %v3076 = vld [vmem:[#allocation17 + $0xdf8] sm:$0xff]
    %v3077 = vld [vmem:[#allocation17 + $0xe00] sm:$0xff]
    %v3078 = vld [vmem:[#allocation17 + $0xe08] sm:$0xff]
    %v3079 = vld [vmem:[#allocation17 + $0xe10] sm:$0xff]
    %v3080 = vld [vmem:[#allocation17 + $0xe18] sm:$0xff]
    %v3081 = vld [vmem:[#allocation17 + $0xe20] sm:$0xff]
    %v3082 = vld [vmem:[#allocation17 + $0xe28] sm:$0xff]
    %v3083 = vld [vmem:[#allocation17 + $0xe30] sm:$0xff]
    %v3084 = vld [vmem:[#allocation17 + $0xe38] sm:$0xff]
    %v3085 = vld [vmem:[#allocation17 + $0xe40] sm:$0xff]
    %v3086 = vld [vmem:[#allocation17 + $0xe48] sm:$0xff]
    %v3087 = vld [vmem:[#allocation17 + $0xe50] sm:$0xff]
    %v3088 = vld [vmem:[#allocation17 + $0xe58] sm:$0xff]
    %v3089 = vld [vmem:[#allocation17 + $0xe60] sm:$0xff]
    %v3090 = vld [vmem:[#allocation17 + $0xe68] sm:$0xff]
    %v3091 = vld [vmem:[#allocation17 + $0xe70] sm:$0xff]
    %v3092 = vld [vmem:[#allocation17 + $0xe78] sm:$0xff]
    %v3093 = vld [vmem:[#allocation17 + $0xe80] sm:$0xff]
    %v3094 = vld [vmem:[#allocation17 + $0xe88] sm:$0xff]
    %v3095 = vld [vmem:[#allocation17 + $0xe90] sm:$0xff]
    %v3096 = vld [vmem:[#allocation17 + $0xe98] sm:$0xff]
    %v3097 = vld [vmem:[#allocation17 + $0xea0] sm:$0xff]
    %v3098 = vld [vmem:[#allocation17 + $0xea8] sm:$0xff]
    %v3099 = vld [vmem:[#allocation17 + $0xeb0] sm:$0xff]
    %v3100 = vld [vmem:[#allocation17 + $0xeb8] sm:$0xff]
    %v3101 = vld [vmem:[#allocation17 + $0xec0] sm:$0xff]
    %v3102 = vld [vmem:[#allocation17 + $0xec8] sm:$0xff]
    %v3103 = vld [vmem:[#allocation17 + $0xed0] sm:$0xff]
    %v3104 = vld [vmem:[#allocation17 + $0xed8] sm:$0xff]
    %v3105 = vld [vmem:[#allocation17 + $0xee0] sm:$0xff]
    %v3106 = vld [vmem:[#allocation17 + $0xee8] sm:$0xff]
    %v3107 = vld [vmem:[#allocation17 + $0xef0] sm:$0xff]
    %v3108 = vld [vmem:[#allocation17 + $0xef8] sm:$0xff]
    %v3109 = vld [vmem:[#allocation17 + $0xf00] sm:$0xff]
    %v3110 = vld [vmem:[#allocation17 + $0xf08] sm:$0xff]
    %v3111 = vld [vmem:[#allocation17 + $0xf10] sm:$0xff]
    %v3112 = vld [vmem:[#allocation17 + $0xf18] sm:$0xff]
    %v3113 = vld [vmem:[#allocation17 + $0xf20] sm:$0xff]
    %v3114 = vld [vmem:[#allocation17 + $0xf28] sm:$0xff]
    %v3115 = vld [vmem:[#allocation17 + $0xf30] sm:$0xff]
    %v3116 = vld [vmem:[#allocation17 + $0xf38] sm:$0xff]
    %v3117 = vld [vmem:[#allocation17 + $0xf40] sm:$0xff]
    %v3118 = vld [vmem:[#allocation17 + $0xf48] sm:$0xff]
    %v3119 = vld [vmem:[#allocation17 + $0xf50] sm:$0xff]
    %v3120 = vld [vmem:[#allocation17 + $0xf58] sm:$0xff]
    %v3121 = vld [vmem:[#allocation17 + $0xf60] sm:$0xff]
    %v3122 = vld [vmem:[#allocation17 + $0xf68] sm:$0xff]
    %v3123 = vld [vmem:[#allocation17 + $0xf70] sm:$0xff]
    %v3124 = vld [vmem:[#allocation17 + $0xf78] sm:$0xff]
    %v3125 = vld [vmem:[#allocation17 + $0xf80] sm:$0xff]
    %v3126 = vld [vmem:[#allocation17 + $0xf88] sm:$0xff]
    %v3127 = vld [vmem:[#allocation17 + $0xf90] sm:$0xff]
    %v3128 = vld [vmem:[#allocation17 + $0xf98] sm:$0xff]
    %v3129 = vld [vmem:[#allocation17 + $0xfa0] sm:$0xff]
    %v3130 = vld [vmem:[#allocation17 + $0xfa8] sm:$0xff]
    %v3131 = vld [vmem:[#allocation17 + $0xfb0] sm:$0xff]
    %v3132 = vld [vmem:[#allocation17 + $0xfb8] sm:$0xff]
    %v3133 = vld [vmem:[#allocation17 + $0xfc0] sm:$0xff]
    %v3134 = vld [vmem:[#allocation17 + $0xfc8] sm:$0xff]
    %v3135 = vld [vmem:[#allocation17 + $0xfd0] sm:$0xff]
    %v3136 = vld [vmem:[#allocation17 + $0xfd8] sm:$0xff]
    %v3137 = vld [vmem:[#allocation17 + $0xfe0] sm:$0xff]
    %v3138 = vld [vmem:[#allocation17 + $0xfe8] sm:$0xff]
    %v3139 = vld [vmem:[#allocation17 + $0xff0] sm:$0xff]
    %v3140 = vld [vmem:[#allocation17 + $0xff8] sm:$0xff]
    %v3141 = vld [vmem:[#allocation17 + $0x1000] sm:$0xff]
    %v3142 = vld [vmem:[#allocation17 + $0x1008] sm:$0xff]
    %v3143 = vld [vmem:[#allocation17 + $0x1010] sm:$0xff]
    %v3144 = vld [vmem:[#allocation17 + $0x1018] sm:$0xff]
    %v3145 = vld [vmem:[#allocation17 + $0x1020] sm:$0xff]
    %v3146 = vld [vmem:[#allocation17 + $0x1028] sm:$0xff]
    %v3147 = vld [vmem:[#allocation17 + $0x1030] sm:$0xff]
    %v3148 = vld [vmem:[#allocation17 + $0x1038] sm:$0xff]
    %v3149 = vld [vmem:[#allocation17 + $0x1040] sm:$0xff]
    %v3150 = vld [vmem:[#allocation17 + $0x1048] sm:$0xff]
    %v3151 = vld [vmem:[#allocation17 + $0x1050] sm:$0xff]
    %v3152 = vld [vmem:[#allocation17 + $0x1058] sm:$0xff]
    %v3153 = vld [vmem:[#allocation17 + $0x1060] sm:$0xff]
    %v3154 = vld [vmem:[#allocation17 + $0x1068] sm:$0xff]
    %v3155 = vld [vmem:[#allocation17 + $0x1070] sm:$0xff]
    %v3156 = vld [vmem:[#allocation17 + $0x1078] sm:$0xff]
    %v3157 = vld [vmem:[#allocation17 + $0x1080] sm:$0xff]
    %v3158 = vld [vmem:[#allocation17 + $0x1088] sm:$0xff]
    %v3159 = vld [vmem:[#allocation17 + $0x1090] sm:$0xff]
    %v3160 = vld [vmem:[#allocation17 + $0x1098] sm:$0xff]
    %v3161 = vld [vmem:[#allocation17 + $0x10a0] sm:$0xff]
    %v3162 = vld [vmem:[#allocation17 + $0x10a8] sm:$0xff]
    %v3163 = vld [vmem:[#allocation17 + $0x10b0] sm:$0xff]
    %v3164 = vld [vmem:[#allocation17 + $0x10b8] sm:$0xff]
    %v3165 = vld [vmem:[#allocation17 + $0x10c0] sm:$0xff]
    %v3166 = vld [vmem:[#allocation17 + $0x10c8] sm:$0xff]
    %v3167 = vld [vmem:[#allocation17 + $0x10d0] sm:$0xff]
    %v3168 = vld [vmem:[#allocation17 + $0x10d8] sm:$0xff]
    %v3169 = vld [vmem:[#allocation17 + $0x10e0] sm:$0xff]
    %v3170 = vld [vmem:[#allocation17 + $0x10e8] sm:$0xff]
    %v3171 = vld [vmem:[#allocation17 + $0x10f0] sm:$0xff]
    %v3172 = vld [vmem:[#allocation17 + $0x10f8] sm:$0xff]
    %v3173 = vld [vmem:[#allocation17 + $0x1100] sm:$0xff]
    %v3174 = vld [vmem:[#allocation17 + $0x1108] sm:$0xff]
    %v3175 = vld [vmem:[#allocation17 + $0x1110] sm:$0xff]
    %v3176 = vld [vmem:[#allocation17 + $0x1118] sm:$0xff]
    %v3177 = vld [vmem:[#allocation17 + $0x1120] sm:$0xff]
    %v3178 = vld [vmem:[#allocation17 + $0x1128] sm:$0xff]
    %v3179 = vld [vmem:[#allocation17 + $0x1130] sm:$0xff]
    %v3180 = vld [vmem:[#allocation17 + $0x1138] sm:$0xff]
    %v3181 = vld [vmem:[#allocation17 + $0x1140] sm:$0xff]
    %v3182 = vld [vmem:[#allocation17 + $0x1148] sm:$0xff]
    %v3183 = vld [vmem:[#allocation17 + $0x1150] sm:$0xff]
    %v3184 = vld [vmem:[#allocation17 + $0x1158] sm:$0xff]
    %v3185 = vld [vmem:[#allocation17 + $0x1160] sm:$0xff]
    %v3186 = vld [vmem:[#allocation17 + $0x1168] sm:$0xff]
    %v3187 = vld [vmem:[#allocation17 + $0x1170] sm:$0xff]
    %v3188 = vld [vmem:[#allocation17 + $0x1178] sm:$0xff]
    %v3189 = vld [vmem:[#allocation17 + $0x1180] sm:$0xff]
    %v3190 = vld [vmem:[#allocation17 + $0x1188] sm:$0xff]
    %v3191 = vld [vmem:[#allocation17 + $0x1190] sm:$0xff]
    %v3192 = vld [vmem:[#allocation17 + $0x1198] sm:$0xff]
    %v3193 = vld [vmem:[#allocation17 + $0x11a0] sm:$0xff]
    %v3194 = vld [vmem:[#allocation17 + $0x11a8] sm:$0xff]
    %v3195 = vld [vmem:[#allocation17 + $0x11b0] sm:$0xff]
    %v3196 = vld [vmem:[#allocation17 + $0x11b8] sm:$0xff]
    %v3197 = vld [vmem:[#allocation17 + $0x11c0] sm:$0xff]
    %v3198 = vld [vmem:[#allocation17 + $0x11c8] sm:$0xff]
    %v3199 = vld [vmem:[#allocation17 + $0x11d0] sm:$0xff]
    %v3200 = vld [vmem:[#allocation17 + $0x11d8] sm:$0xff]
    %v3201 = vld [vmem:[#allocation17 + $0x11e0] sm:$0xff]
    %v3202 = vld [vmem:[#allocation17 + $0x11e8] sm:$0xff]
    %v3203 = vld [vmem:[#allocation17 + $0x11f0] sm:$0xff]
    %v3204 = vld [vmem:[#allocation17 + $0x11f8] sm:$0xff]
    %v3205 = vld [vmem:[#allocation17 + $0x1200] sm:$0xff]
    %v3206 = vld [vmem:[#allocation17 + $0x1208] sm:$0xff]
    %v3207 = vld [vmem:[#allocation17 + $0x1210] sm:$0xff]
    %v3208 = vld [vmem:[#allocation17 + $0x1218] sm:$0xff]
    %v3209 = vld [vmem:[#allocation17 + $0x1220] sm:$0xff]
    %v3210 = vld [vmem:[#allocation17 + $0x1228] sm:$0xff]
    %v3211 = vld [vmem:[#allocation17 + $0x1230] sm:$0xff]
    %v3212 = vld [vmem:[#allocation17 + $0x1238] sm:$0xff]
    %v3213 = vld [vmem:[#allocation17 + $0x1240] sm:$0xff]
    %v3214 = vld [vmem:[#allocation17 + $0x1248] sm:$0xff]
    %v3215 = vld [vmem:[#allocation17 + $0x1250] sm:$0xff]
    %v3216 = vld [vmem:[#allocation17 + $0x1258] sm:$0xff]
    %v3217 = vld [vmem:[#allocation17 + $0x1260] sm:$0xff]
    %v3218 = vld [vmem:[#allocation17 + $0x1268] sm:$0xff]
    %v3219 = vld [vmem:[#allocation17 + $0x1270] sm:$0xff]
    %v3220 = vld [vmem:[#allocation17 + $0x1278] sm:$0xff]
    %v3221 = vld [vmem:[#allocation17 + $0x1280] sm:$0xff]
    %v3222 = vld [vmem:[#allocation17 + $0x1288] sm:$0xff]
    %v3223 = vld [vmem:[#allocation17 + $0x1290] sm:$0xff]
    %v3224 = vld [vmem:[#allocation17 + $0x1298] sm:$0xff]
    %v3225 = vld [vmem:[#allocation17 + $0x12a0] sm:$0xff]
    %v3226 = vld [vmem:[#allocation17 + $0x12a8] sm:$0xff]
    %v3227 = vld [vmem:[#allocation17 + $0x12b0] sm:$0xff]
    %v3228 = vld [vmem:[#allocation17 + $0x12b8] sm:$0xff]
    %v3229 = vld [vmem:[#allocation17 + $0x12c0] sm:$0xff]
    %v3230 = vld [vmem:[#allocation17 + $0x12c8] sm:$0xff]
    %v3231 = vld [vmem:[#allocation17 + $0x12d0] sm:$0xff]
    %v3232 = vld [vmem:[#allocation17 + $0x12d8] sm:$0xff]
    %v3233 = vld [vmem:[#allocation17 + $0x12e0] sm:$0xff]
    %v3234 = vld [vmem:[#allocation17 + $0x12e8] sm:$0xff]
    %v3235 = vld [vmem:[#allocation17 + $0x12f0] sm:$0xff]
    %v3236 = vld [vmem:[#allocation17 + $0x12f8] sm:$0xff]
    %v3237 = vld [vmem:[#allocation17 + $0x1300] sm:$0xff]
    %v3238 = vld [vmem:[#allocation17 + $0x1308] sm:$0xff]
    %v3239 = vld [vmem:[#allocation17 + $0x1310] sm:$0xff]
    %v3240 = vld [vmem:[#allocation17 + $0x1318] sm:$0xff]
    %v3241 = vld [vmem:[#allocation17 + $0x1320] sm:$0xff]
    %v3242 = vld [vmem:[#allocation17 + $0x1328] sm:$0xff]
    %v3243 = vld [vmem:[#allocation17 + $0x1330] sm:$0xff]
    %v3244 = vld [vmem:[#allocation17 + $0x1338] sm:$0xff]
    %v3245 = vld [vmem:[#allocation17 + $0x1340] sm:$0xff]
    %v3246 = vld [vmem:[#allocation17 + $0x1348] sm:$0xff]
    %v3247 = vld [vmem:[#allocation17 + $0x1350] sm:$0xff]
    %v3248 = vld [vmem:[#allocation17 + $0x1358] sm:$0xff]
    %v3249 = vld [vmem:[#allocation17 + $0x1360] sm:$0xff]
    %v3250 = vld [vmem:[#allocation17 + $0x1368] sm:$0xff]
    %v3251 = vld [vmem:[#allocation17 + $0x1370] sm:$0xff]
    %v3252 = vld [vmem:[#allocation17 + $0x1378] sm:$0xff]
    %v3253 = vld [vmem:[#allocation17 + $0x1380] sm:$0xff]
    %v3254 = vld [vmem:[#allocation17 + $0x1388] sm:$0xff]
    %v3255 = vld [vmem:[#allocation17 + $0x1390] sm:$0xff]
    %v3256 = vld [vmem:[#allocation17 + $0x1398] sm:$0xff]
    %v3257 = vld [vmem:[#allocation17 + $0x13a0] sm:$0xff]
    %v3258 = vld [vmem:[#allocation17 + $0x13a8] sm:$0xff]
    %v3259 = vld [vmem:[#allocation17 + $0x13b0] sm:$0xff]
    %v3260 = vld [vmem:[#allocation17 + $0x13b8] sm:$0xff]
    %v3261 = vld [vmem:[#allocation17 + $0x13c0] sm:$0xff]
    %v3262 = vld [vmem:[#allocation17 + $0x13c8] sm:$0xff]
    %v3263 = vld [vmem:[#allocation17 + $0x13d0] sm:$0xff]
    %v3264 = vld [vmem:[#allocation17 + $0x13d8] sm:$0xff]
    %v3265 = vld [vmem:[#allocation17 + $0x13e0] sm:$0xff]
    %v3266 = vld [vmem:[#allocation17 + $0x13e8] sm:$0xff]
    %v3267 = vld [vmem:[#allocation17 + $0x13f0] sm:$0xff]
    %v3268 = vld [vmem:[#allocation17 + $0x13f8] sm:$0xff]
    %v3269 = vld [vmem:[#allocation17 + $0x1400] sm:$0xff]
    %v3270 = vld [vmem:[#allocation17 + $0x1408] sm:$0xff]
    %v3271 = vld [vmem:[#allocation17 + $0x1410] sm:$0xff]
    %v3272 = vld [vmem:[#allocation17 + $0x1418] sm:$0xff]
    %v3273 = vld [vmem:[#allocation17 + $0x1420] sm:$0xff]
    %v3274 = vld [vmem:[#allocation17 + $0x1428] sm:$0xff]
    %v3275 = vld [vmem:[#allocation17 + $0x1430] sm:$0xff]
    %v3276 = vld [vmem:[#allocation17 + $0x1438] sm:$0xff]
    %v3277 = vld [vmem:[#allocation17 + $0x1440] sm:$0xff]
    %v3278 = vld [vmem:[#allocation17 + $0x1448] sm:$0xff]
    %v3279 = vld [vmem:[#allocation17 + $0x1450] sm:$0xff]
    %v3280 = vld [vmem:[#allocation17 + $0x1458] sm:$0xff]
    %v3281 = vld [vmem:[#allocation17 + $0x1460] sm:$0xff]
    %v3282 = vld [vmem:[#allocation17 + $0x1468] sm:$0xff]
    %v3283 = vld [vmem:[#allocation17 + $0x1470] sm:$0xff]
    %v3284 = vld [vmem:[#allocation17 + $0x1478] sm:$0xff]
    %v3285 = vld [vmem:[#allocation17 + $0x1480] sm:$0xff]
    %v3286 = vld [vmem:[#allocation17 + $0x1488] sm:$0xff]
    %v3287 = vld [vmem:[#allocation17 + $0x1490] sm:$0xff]
    %v3288 = vld [vmem:[#allocation17 + $0x1498] sm:$0xff]
    %v3289 = vld [vmem:[#allocation17 + $0x14a0] sm:$0xff]
    %v3290 = vld [vmem:[#allocation17 + $0x14a8] sm:$0xff]
    %v3291 = vld [vmem:[#allocation17 + $0x14b0] sm:$0xff]
    %v3292 = vld [vmem:[#allocation17 + $0x14b8] sm:$0xff]
    %v3293 = vld [vmem:[#allocation17 + $0x14c0] sm:$0xff]
    %v3294 = vld [vmem:[#allocation17 + $0x14c8] sm:$0xff]
    %v3295 = vld [vmem:[#allocation17 + $0x14d0] sm:$0xff]
    %v3296 = vld [vmem:[#allocation17 + $0x14d8] sm:$0xff]
    %v3297 = vld [vmem:[#allocation17 + $0x14e0] sm:$0xff]
    %v3298 = vld [vmem:[#allocation17 + $0x14e8] sm:$0xff]
    %v3299 = vld [vmem:[#allocation17 + $0x14f0] sm:$0xff]
    %v3300 = vld [vmem:[#allocation17 + $0x14f8] sm:$0xff]
    %v3301 = vld [vmem:[#allocation17 + $0x1500] sm:$0xff]
    %v3302 = vld [vmem:[#allocation17 + $0x1508] sm:$0xff]
    %v3303 = vld [vmem:[#allocation17 + $0x1510] sm:$0xff]
    %v3304 = vld [vmem:[#allocation17 + $0x1518] sm:$0xff]
    %v3305 = vld [vmem:[#allocation17 + $0x1520] sm:$0xff]
    %v3306 = vld [vmem:[#allocation17 + $0x1528] sm:$0xff]
    %v3307 = vld [vmem:[#allocation17 + $0x1530] sm:$0xff]
    %v3308 = vld [vmem:[#allocation17 + $0x1538] sm:$0xff]
    %v3309 = vld [vmem:[#allocation17 + $0x1540] sm:$0xff]
    %v3310 = vld [vmem:[#allocation17 + $0x1548] sm:$0xff]
    %v3311 = vld [vmem:[#allocation17 + $0x1550] sm:$0xff]
    %v3312 = vld [vmem:[#allocation17 + $0x1558] sm:$0xff]
    %v3313 = vld [vmem:[#allocation17 + $0x1560] sm:$0xff]
    %v3314 = vld [vmem:[#allocation17 + $0x1568] sm:$0xff]
    %v3315 = vld [vmem:[#allocation17 + $0x1570] sm:$0xff]
    %v3316 = vld [vmem:[#allocation17 + $0x1578] sm:$0xff]
    %v3317 = vld [vmem:[#allocation17 + $0x1580] sm:$0xff]
    %v3318 = vld [vmem:[#allocation17 + $0x1588] sm:$0xff]
    %v3319 = vld [vmem:[#allocation17 + $0x1590] sm:$0xff]
    %v3320 = vld [vmem:[#allocation17 + $0x1598] sm:$0xff]
    %v3321 = vld [vmem:[#allocation17 + $0x15a0] sm:$0xff]
    %v3322 = vld [vmem:[#allocation17 + $0x15a8] sm:$0xff]
    %v3323 = vld [vmem:[#allocation17 + $0x15b0] sm:$0xff]
    %v3324 = vld [vmem:[#allocation17 + $0x15b8] sm:$0xff]
    %v3325 = vld [vmem:[#allocation17 + $0x15c0] sm:$0xff]
    %v3326 = vld [vmem:[#allocation17 + $0x15c8] sm:$0xff]
    %v3327 = vld [vmem:[#allocation17 + $0x15d0] sm:$0xff]
    %v3328 = vld [vmem:[#allocation17 + $0x15d8] sm:$0xff]
    %v3329 = vld [vmem:[#allocation17 + $0x15e0] sm:$0xff]
    %v3330 = vld [vmem:[#allocation17 + $0x15e8] sm:$0xff]
    %v3331 = vld [vmem:[#allocation17 + $0x15f0] sm:$0xff]
    %v3332 = vld [vmem:[#allocation17 + $0x15f8] sm:$0xff]
    %v3333 = vld [vmem:[#allocation17 + $0x1600] sm:$0xff]
    %v3334 = vld [vmem:[#allocation17 + $0x1608] sm:$0xff]
    %v3335 = vld [vmem:[#allocation17 + $0x1610] sm:$0xff]
    %v3336 = vld [vmem:[#allocation17 + $0x1618] sm:$0xff]
    %v3337 = vld [vmem:[#allocation17 + $0x1620] sm:$0xff]
    %v3338 = vld [vmem:[#allocation17 + $0x1628] sm:$0xff]
    %v3339 = vld [vmem:[#allocation17 + $0x1630] sm:$0xff]
    %v3340 = vld [vmem:[#allocation17 + $0x1638] sm:$0xff]
    %v3341 = vld [vmem:[#allocation17 + $0x1640] sm:$0xff]
    %v3342 = vld [vmem:[#allocation17 + $0x1648] sm:$0xff]
    %v3343 = vld [vmem:[#allocation17 + $0x1650] sm:$0xff]
    %v3344 = vld [vmem:[#allocation17 + $0x1658] sm:$0xff]
    %v3345 = vld [vmem:[#allocation17 + $0x1660] sm:$0xff]
    %v3346 = vld [vmem:[#allocation17 + $0x1668] sm:$0xff]
    %v3347 = vld [vmem:[#allocation17 + $0x1670] sm:$0xff]
    %v3348 = vld [vmem:[#allocation17 + $0x1678] sm:$0xff]
    %v3349 = vld [vmem:[#allocation17 + $0x1680] sm:$0xff]
    %v3350 = vld [vmem:[#allocation17 + $0x1688] sm:$0xff]
    %v3351 = vld [vmem:[#allocation17 + $0x1690] sm:$0xff]
    %v3352 = vld [vmem:[#allocation17 + $0x1698] sm:$0xff]
    %v3353 = vld [vmem:[#allocation17 + $0x16a0] sm:$0xff]
    %v3354 = vld [vmem:[#allocation17 + $0x16a8] sm:$0xff]
    %v3355 = vld [vmem:[#allocation17 + $0x16b0] sm:$0xff]
    %v3356 = vld [vmem:[#allocation17 + $0x16b8] sm:$0xff]
    %v3357 = vld [vmem:[#allocation17 + $0x16c0] sm:$0xff]
    %v3358 = vld [vmem:[#allocation17 + $0x16c8] sm:$0xff]
    %v3359 = vld [vmem:[#allocation17 + $0x16d0] sm:$0xff]
    %v3360 = vld [vmem:[#allocation17 + $0x16d8] sm:$0xff]
    %v3361 = vld [vmem:[#allocation17 + $0x16e0] sm:$0xff]
    %v3362 = vld [vmem:[#allocation17 + $0x16e8] sm:$0xff]
    %v3363 = vld [vmem:[#allocation17 + $0x16f0] sm:$0xff]
    %v3364 = vld [vmem:[#allocation17 + $0x16f8] sm:$0xff]
    %v3365 = vld [vmem:[#allocation17 + $0x1700] sm:$0xff]
    %v3366 = vld [vmem:[#allocation17 + $0x1708] sm:$0xff]
    %v3367 = vld [vmem:[#allocation17 + $0x1710] sm:$0xff]
    %v3368 = vld [vmem:[#allocation17 + $0x1718] sm:$0xff]
    %v3369 = vld [vmem:[#allocation17 + $0x1720] sm:$0xff]
    %v3370 = vld [vmem:[#allocation17 + $0x1728] sm:$0xff]
    %v3371 = vld [vmem:[#allocation17 + $0x1730] sm:$0xff]
    %v3372 = vld [vmem:[#allocation17 + $0x1738] sm:$0xff]
    %v3373 = vld [vmem:[#allocation17 + $0x1740] sm:$0xff]
    %v3374 = vld [vmem:[#allocation17 + $0x1748] sm:$0xff]
    %v3375 = vld [vmem:[#allocation17 + $0x1750] sm:$0xff]
    %v3376 = vld [vmem:[#allocation17 + $0x1758] sm:$0xff]
    %v3377 = vld [vmem:[#allocation17 + $0x1760] sm:$0xff]
    %v3378 = vld [vmem:[#allocation17 + $0x1768] sm:$0xff]
    %v3379 = vld [vmem:[#allocation17 + $0x1770] sm:$0xff]
    %v3380 = vld [vmem:[#allocation17 + $0x1778] sm:$0xff]
    %v3381 = vld [vmem:[#allocation17 + $0x1780] sm:$0xff]
    %v3382 = vld [vmem:[#allocation17 + $0x1788] sm:$0xff]
    %v3383 = vld [vmem:[#allocation17 + $0x1790] sm:$0xff]
    %v3384 = vld [vmem:[#allocation17 + $0x1798] sm:$0xff]
    %v3385 = vld [vmem:[#allocation17 + $0x17a0] sm:$0xff]
    %v3386 = vld [vmem:[#allocation17 + $0x17a8] sm:$0xff]
    %v3387 = vld [vmem:[#allocation17 + $0x17b0] sm:$0xff]
    %v3388 = vld [vmem:[#allocation17 + $0x17b8] sm:$0xff]
    %v3389 = vld [vmem:[#allocation17 + $0x17c0] sm:$0xff]
    %v3390 = vld [vmem:[#allocation17 + $0x17c8] sm:$0xff]
    %v3391 = vld [vmem:[#allocation17 + $0x17d0] sm:$0xff]
    %v3392 = vld [vmem:[#allocation17 + $0x17d8] sm:$0xff]
    %v3393 = vld [vmem:[#allocation17 + $0x17e0] sm:$0xff]
    %v3394 = vld [vmem:[#allocation17 + $0x17e8] sm:$0xff]
    %v3395 = vld [vmem:[#allocation17 + $0x17f0] sm:$0xff]
    %v3396 = vld [vmem:[#allocation17 + $0x17f8] sm:$0xff]
    %v3397 = vld [vmem:[#allocation17 + $0x1800] sm:$0xff]
    %v3398 = vld [vmem:[#allocation17 + $0x1808] sm:$0xff]
    %v3399 = vld [vmem:[#allocation17 + $0x1810] sm:$0xff]
    %v3400 = vld [vmem:[#allocation17 + $0x1818] sm:$0xff]
    %v3401 = vld [vmem:[#allocation17 + $0x1820] sm:$0xff]
    %v3402 = vld [vmem:[#allocation17 + $0x1828] sm:$0xff]
    %v3403 = vld [vmem:[#allocation17 + $0x1830] sm:$0xff]
    %v3404 = vld [vmem:[#allocation17 + $0x1838] sm:$0xff]
    %v3405 = vld [vmem:[#allocation17 + $0x1840] sm:$0xff]
    %v3406 = vld [vmem:[#allocation17 + $0x1848] sm:$0xff]
    %v3407 = vld [vmem:[#allocation17 + $0x1850] sm:$0xff]
    %v3408 = vld [vmem:[#allocation17 + $0x1858] sm:$0xff]
    %v3409 = vld [vmem:[#allocation17 + $0x1860] sm:$0xff]
    %v3410 = vld [vmem:[#allocation17 + $0x1868] sm:$0xff]
    %v3411 = vld [vmem:[#allocation17 + $0x1870] sm:$0xff]
    %v3412 = vld [vmem:[#allocation17 + $0x1878] sm:$0xff]
    %v3413 = vld [vmem:[#allocation17 + $0x1880] sm:$0xff]
    %v3414 = vld [vmem:[#allocation17 + $0x1888] sm:$0xff]
    %v3415 = vld [vmem:[#allocation17 + $0x1890] sm:$0xff]
    %v3416 = vld [vmem:[#allocation17 + $0x1898] sm:$0xff]
    %v3417 = vld [vmem:[#allocation17 + $0x18a0] sm:$0xff]
    %v3418 = vld [vmem:[#allocation17 + $0x18a8] sm:$0xff]
    %v3419 = vld [vmem:[#allocation17 + $0x18b0] sm:$0xff]
    %v3420 = vld [vmem:[#allocation17 + $0x18b8] sm:$0xff]
    %v3421 = vld [vmem:[#allocation17 + $0x18c0] sm:$0xff]
    %v3422 = vld [vmem:[#allocation17 + $0x18c8] sm:$0xff]
    %v3423 = vld [vmem:[#allocation17 + $0x18d0] sm:$0xff]
    %v3424 = vld [vmem:[#allocation17 + $0x18d8] sm:$0xff]
    %v3425 = vld [vmem:[#allocation17 + $0x18e0] sm:$0xff]
    %v3426 = vld [vmem:[#allocation17 + $0x18e8] sm:$0xff]
    %v3427 = vld [vmem:[#allocation17 + $0x18f0] sm:$0xff]
    %v3428 = vld [vmem:[#allocation17 + $0x18f8] sm:$0xff]
    %v3429 = vld [vmem:[#allocation17 + $0x1900] sm:$0xff]
    %v3430 = vld [vmem:[#allocation17 + $0x1908] sm:$0xff]
    %v3431 = vld [vmem:[#allocation17 + $0x1910] sm:$0xff]
    %v3432 = vld [vmem:[#allocation17 + $0x1918] sm:$0xff]
    %v3433 = vld [vmem:[#allocation17 + $0x1920] sm:$0xff]
    %v3434 = vld [vmem:[#allocation17 + $0x1928] sm:$0xff]
    %v3435 = vld [vmem:[#allocation17 + $0x1930] sm:$0xff]
    %v3436 = vld [vmem:[#allocation17 + $0x1938] sm:$0xff]
    %v3437 = vld [vmem:[#allocation17 + $0x1940] sm:$0xff]
    %v3438 = vld [vmem:[#allocation17 + $0x1948] sm:$0xff]
    %v3439 = vld [vmem:[#allocation17 + $0x1950] sm:$0xff]
    %v3440 = vld [vmem:[#allocation17 + $0x1958] sm:$0xff]
    %v3441 = vld [vmem:[#allocation17 + $0x1960] sm:$0xff]
    %v3442 = vld [vmem:[#allocation17 + $0x1968] sm:$0xff]
    %v3443 = vld [vmem:[#allocation17 + $0x1970] sm:$0xff]
    %v3444 = vld [vmem:[#allocation17 + $0x1978] sm:$0xff]
    %v3445 = vld [vmem:[#allocation17 + $0x1980] sm:$0xff]
    %v3446 = vld [vmem:[#allocation17 + $0x1988] sm:$0xff]
    %v3447 = vld [vmem:[#allocation17 + $0x1990] sm:$0xff]
    %v3448 = vld [vmem:[#allocation17 + $0x1998] sm:$0xff]
    %v3449 = vld [vmem:[#allocation17 + $0x19a0] sm:$0xff]
    %v3450 = vld [vmem:[#allocation17 + $0x19a8] sm:$0xff]
    %v3451 = vld [vmem:[#allocation17 + $0x19b0] sm:$0xff]
    %v3452 = vld [vmem:[#allocation17 + $0x19b8] sm:$0xff]
    %v3453 = vld [vmem:[#allocation17 + $0x19c0] sm:$0xff]
    %v3454 = vld [vmem:[#allocation17 + $0x19c8] sm:$0xff]
    %v3455 = vld [vmem:[#allocation17 + $0x19d0] sm:$0xff]
    %v3456 = vld [vmem:[#allocation17 + $0x19d8] sm:$0xff]
    %v3457 = vld [vmem:[#allocation17 + $0x19e0] sm:$0xff]
    %v3458 = vld [vmem:[#allocation17 + $0x19e8] sm:$0xff]
    %v3459 = vld [vmem:[#allocation17 + $0x19f0] sm:$0xff]
    %v3460 = vld [vmem:[#allocation17 + $0x19f8] sm:$0xff]
    %v3461 = vld [vmem:[#allocation17 + $0x1a00] sm:$0xff]
    %v3462 = vld [vmem:[#allocation17 + $0x1a08] sm:$0xff]
    %v3463 = vld [vmem:[#allocation17 + $0x1a10] sm:$0xff]
    %v3464 = vld [vmem:[#allocation17 + $0x1a18] sm:$0xff]
    %v3465 = vld [vmem:[#allocation17 + $0x1a20] sm:$0xff]
    %v3466 = vld [vmem:[#allocation17 + $0x1a28] sm:$0xff]
    %v3467 = vld [vmem:[#allocation17 + $0x1a30] sm:$0xff]
    %v3468 = vld [vmem:[#allocation17 + $0x1a38] sm:$0xff]
    %v3469 = vld [vmem:[#allocation17 + $0x1a40] sm:$0xff]
    %v3470 = vld [vmem:[#allocation17 + $0x1a48] sm:$0xff]
    %v3471 = vld [vmem:[#allocation17 + $0x1a50] sm:$0xff]
    %v3472 = vld [vmem:[#allocation17 + $0x1a58] sm:$0xff]
    %v3473 = vld [vmem:[#allocation17 + $0x1a60] sm:$0xff]
    %v3474 = vld [vmem:[#allocation17 + $0x1a68] sm:$0xff]
    %v3475 = vld [vmem:[#allocation17 + $0x1a70] sm:$0xff]
    %v3476 = vld [vmem:[#allocation17 + $0x1a78] sm:$0xff]
    %v3477 = vld [vmem:[#allocation17 + $0x1a80] sm:$0xff]
    %v3478 = vld [vmem:[#allocation17 + $0x1a88] sm:$0xff]
    %v3479 = vld [vmem:[#allocation17 + $0x1a90] sm:$0xff]
    %v3480 = vld [vmem:[#allocation17 + $0x1a98] sm:$0xff]
    %v3481 = vld [vmem:[#allocation17 + $0x1aa0] sm:$0xff]
    %v3482 = vld [vmem:[#allocation17 + $0x1aa8] sm:$0xff]
    %v3483 = vld [vmem:[#allocation17 + $0x1ab0] sm:$0xff]
    %v3484 = vld [vmem:[#allocation17 + $0x1ab8] sm:$0xff]
    %v3485 = vld [vmem:[#allocation17 + $0x1ac0] sm:$0xff]
    %v3486 = vld [vmem:[#allocation17 + $0x1ac8] sm:$0xff]
    %v3487 = vld [vmem:[#allocation17 + $0x1ad0] sm:$0xff]
    %v3488 = vld [vmem:[#allocation17 + $0x1ad8] sm:$0xff]
    %v3489 = vld [vmem:[#allocation17 + $0x1ae0] sm:$0xff]
    %v3490 = vld [vmem:[#allocation17 + $0x1ae8] sm:$0xff]
    %v3491 = vld [vmem:[#allocation17 + $0x1af0] sm:$0xff]
    %v3492 = vld [vmem:[#allocation17 + $0x1af8] sm:$0xff]
    %v3493 = vld [vmem:[#allocation17 + $0x1b00] sm:$0xff]
    %v3494 = vld [vmem:[#allocation17 + $0x1b08] sm:$0xff]
    %v3495 = vld [vmem:[#allocation17 + $0x1b10] sm:$0xff]
    %v3496 = vld [vmem:[#allocation17 + $0x1b18] sm:$0xff]
    %v3497 = vld [vmem:[#allocation17 + $0x1b20] sm:$0xff]
    %v3498 = vld [vmem:[#allocation17 + $0x1b28] sm:$0xff]
    %v3499 = vld [vmem:[#allocation17 + $0x1b30] sm:$0xff]
    %v3500 = vld [vmem:[#allocation17 + $0x1b38] sm:$0xff]
    %v3501 = vld [vmem:[#allocation17 + $0x1b40] sm:$0xff]
    %v3502 = vld [vmem:[#allocation17 + $0x1b48] sm:$0xff]
    %v3503 = vld [vmem:[#allocation17 + $0x1b50] sm:$0xff]
    %v3504 = vld [vmem:[#allocation17 + $0x1b58] sm:$0xff]
    %v3505 = vld [vmem:[#allocation17 + $0x1b60] sm:$0xff]
    %v3506 = vld [vmem:[#allocation17 + $0x1b68] sm:$0xff]
    %v3507 = vld [vmem:[#allocation17 + $0x1b70] sm:$0xff]
    %v3508 = vld [vmem:[#allocation17 + $0x1b78] sm:$0xff]
    %v3509 = vld [vmem:[#allocation17 + $0x1b80] sm:$0xff]
    %v3510 = vld [vmem:[#allocation17 + $0x1b88] sm:$0xff]
    %v3511 = vld [vmem:[#allocation17 + $0x1b90] sm:$0xff]
    %v3512 = vld [vmem:[#allocation17 + $0x1b98] sm:$0xff]
    %v3513 = vld [vmem:[#allocation17 + $0x1ba0] sm:$0xff]
    %v3514 = vld [vmem:[#allocation17 + $0x1ba8] sm:$0xff]
    %v3515 = vld [vmem:[#allocation17 + $0x1bb0] sm:$0xff]
    %v3516 = vld [vmem:[#allocation17 + $0x1bb8] sm:$0xff]
    %v3517 = vld [vmem:[#allocation17 + $0x1bc0] sm:$0xff]
    %v3518 = vld [vmem:[#allocation17 + $0x1bc8] sm:$0xff]
    %v3519 = vld [vmem:[#allocation17 + $0x1bd0] sm:$0xff]
    %v3520 = vld [vmem:[#allocation17 + $0x1bd8] sm:$0xff]
    %v3521 = vld [vmem:[#allocation17 + $0x1be0] sm:$0xff]
    %v3522 = vld [vmem:[#allocation17 + $0x1be8] sm:$0xff]
    %v3523 = vld [vmem:[#allocation17 + $0x1bf0] sm:$0xff]
    %v3524 = vld [vmem:[#allocation17 + $0x1bf8] sm:$0xff]
    %v3525 = vld [vmem:[#allocation17 + $0x1c00] sm:$0xff]
    %v3526 = vld [vmem:[#allocation17 + $0x1c08] sm:$0xff]
    %v3527 = vld [vmem:[#allocation17 + $0x1c10] sm:$0xff]
    %v3528 = vld [vmem:[#allocation17 + $0x1c18] sm:$0xff]
    %v3529 = vld [vmem:[#allocation17 + $0x1c20] sm:$0xff]
    %v3530 = vld [vmem:[#allocation17 + $0x1c28] sm:$0xff]
    %v3531 = vld [vmem:[#allocation17 + $0x1c30] sm:$0xff]
    %v3532 = vld [vmem:[#allocation17 + $0x1c38] sm:$0xff]
    %v3533 = vld [vmem:[#allocation17 + $0x1c40] sm:$0xff]
    %v3534 = vld [vmem:[#allocation17 + $0x1c48] sm:$0xff]
    %v3535 = vld [vmem:[#allocation17 + $0x1c50] sm:$0xff]
    %v3536 = vld [vmem:[#allocation17 + $0x1c58] sm:$0xff]
    %v3537 = vld [vmem:[#allocation17 + $0x1c60] sm:$0xff]
    %v3538 = vld [vmem:[#allocation17 + $0x1c68] sm:$0xff]
    %v3539 = vld [vmem:[#allocation17 + $0x1c70] sm:$0xff]
    %v3540 = vld [vmem:[#allocation17 + $0x1c78] sm:$0xff]
    %v3541 = vld [vmem:[#allocation17 + $0x1c80] sm:$0xff]
    %v3542 = vld [vmem:[#allocation17 + $0x1c88] sm:$0xff]
    %v3543 = vld [vmem:[#allocation17 + $0x1c90] sm:$0xff]
    %v3544 = vld [vmem:[#allocation17 + $0x1c98] sm:$0xff]
    %v3545 = vld [vmem:[#allocation17 + $0x1ca0] sm:$0xff]
    %v3546 = vld [vmem:[#allocation17 + $0x1ca8] sm:$0xff]
    %v3547 = vld [vmem:[#allocation17 + $0x1cb0] sm:$0xff]
    %v3548 = vld [vmem:[#allocation17 + $0x1cb8] sm:$0xff]
    %v3549 = vld [vmem:[#allocation17 + $0x1cc0] sm:$0xff]
    %v3550 = vld [vmem:[#allocation17 + $0x1cc8] sm:$0xff]
    %v3551 = vld [vmem:[#allocation17 + $0x1cd0] sm:$0xff]
    %v3552 = vld [vmem:[#allocation17 + $0x1cd8] sm:$0xff]
    %v3553 = vld [vmem:[#allocation17 + $0x1ce0] sm:$0xff]
    %v3554 = vld [vmem:[#allocation17 + $0x1ce8] sm:$0xff]
    %v3555 = vld [vmem:[#allocation17 + $0x1cf0] sm:$0xff]
    %v3556 = vld [vmem:[#allocation17 + $0x1cf8] sm:$0xff]
    %v3557 = vld [vmem:[#allocation17 + $0x1d00] sm:$0xff]
    %v3558 = vld [vmem:[#allocation17 + $0x1d08] sm:$0xff]
    %v3559 = vld [vmem:[#allocation17 + $0x1d10] sm:$0xff]
    %v3560 = vld [vmem:[#allocation17 + $0x1d18] sm:$0xff]
    %v3561 = vld [vmem:[#allocation17 + $0x1d20] sm:$0xff]
    %v3562 = vld [vmem:[#allocation17 + $0x1d28] sm:$0xff]
    %v3563 = vld [vmem:[#allocation17 + $0x1d30] sm:$0xff]
    %v3564 = vld [vmem:[#allocation17 + $0x1d38] sm:$0xff]
    %v3565 = vld [vmem:[#allocation17 + $0x1d40] sm:$0xff]
    %v3566 = vld [vmem:[#allocation17 + $0x1d48] sm:$0xff]
    %v3567 = vld [vmem:[#allocation17 + $0x1d50] sm:$0xff]
    %v3568 = vld [vmem:[#allocation17 + $0x1d58] sm:$0xff]
    %v3569 = vld [vmem:[#allocation17 + $0x1d60] sm:$0xff]
    %v3570 = vld [vmem:[#allocation17 + $0x1d68] sm:$0xff]
    %v3571 = vld [vmem:[#allocation17 + $0x1d70] sm:$0xff]
    %v3572 = vld [vmem:[#allocation17 + $0x1d78] sm:$0xff]
    %v3573 = vld [vmem:[#allocation17 + $0x1d80] sm:$0xff]
    %v3574 = vld [vmem:[#allocation17 + $0x1d88] sm:$0xff]
    %v3575 = vld [vmem:[#allocation17 + $0x1d90] sm:$0xff]
    %v3576 = vld [vmem:[#allocation17 + $0x1d98] sm:$0xff]
    %v3577 = vld [vmem:[#allocation17 + $0x1da0] sm:$0xff]
    %v3578 = vld [vmem:[#allocation17 + $0x1da8] sm:$0xff]
    %v3579 = vld [vmem:[#allocation17 + $0x1db0] sm:$0xff]
    %v3580 = vld [vmem:[#allocation17 + $0x1db8] sm:$0xff]
    %v3581 = vld [vmem:[#allocation17 + $0x1dc0] sm:$0xff]
    %v3582 = vld [vmem:[#allocation17 + $0x1dc8] sm:$0xff]
    %v3583 = vld [vmem:[#allocation17 + $0x1dd0] sm:$0xff]
    %v3584 = vld [vmem:[#allocation17 + $0x1dd8] sm:$0xff]
    %v3585 = vld [vmem:[#allocation17 + $0x1de0] sm:$0xff]
    %v3586 = vld [vmem:[#allocation17 + $0x1de8] sm:$0xff]
    %v3587 = vld [vmem:[#allocation17 + $0x1df0] sm:$0xff]
    %v3588 = vld [vmem:[#allocation17 + $0x1df8] sm:$0xff]
    %v3589 = vld [vmem:[#allocation17 + $0x1e00] sm:$0xff]
    %v3590 = vld [vmem:[#allocation17 + $0x1e08] sm:$0xff]
    %v3591 = vld [vmem:[#allocation17 + $0x1e10] sm:$0xff]
    %v3592 = vld [vmem:[#allocation17 + $0x1e18] sm:$0xff]
    %v3593 = vld [vmem:[#allocation17 + $0x1e20] sm:$0xff]
    %v3594 = vld [vmem:[#allocation17 + $0x1e28] sm:$0xff]
    %v3595 = vld [vmem:[#allocation17 + $0x1e30] sm:$0xff]
    %v3596 = vld [vmem:[#allocation17 + $0x1e38] sm:$0xff]
    %v3597 = vld [vmem:[#allocation17 + $0x1e40] sm:$0xff]
    %v3598 = vld [vmem:[#allocation17 + $0x1e48] sm:$0xff]
    %v3599 = vld [vmem:[#allocation17 + $0x1e50] sm:$0xff]
    %v3600 = vld [vmem:[#allocation17 + $0x1e58] sm:$0xff]
    %v3601 = vld [vmem:[#allocation17 + $0x1e60] sm:$0xff]
    %v3602 = vld [vmem:[#allocation17 + $0x1e68] sm:$0xff]
    %v3603 = vld [vmem:[#allocation17 + $0x1e70] sm:$0xff]
    %v3604 = vld [vmem:[#allocation17 + $0x1e78] sm:$0xff]
    %v3605 = vld [vmem:[#allocation17 + $0x1e80] sm:$0xff]
    %v3606 = vld [vmem:[#allocation17 + $0x1e88] sm:$0xff]
    %v3607 = vld [vmem:[#allocation17 + $0x1e90] sm:$0xff]
    %v3608 = vld [vmem:[#allocation17 + $0x1e98] sm:$0xff]
    %v3609 = vld [vmem:[#allocation17 + $0x1ea0] sm:$0xff]
    %v3610 = vld [vmem:[#allocation17 + $0x1ea8] sm:$0xff]
    %v3611 = vld [vmem:[#allocation17 + $0x1eb0] sm:$0xff]
    %v3612 = vld [vmem:[#allocation17 + $0x1eb8] sm:$0xff]
    %v3613 = vld [vmem:[#allocation17 + $0x1ec0] sm:$0xff]
    %v3614 = vld [vmem:[#allocation17 + $0x1ec8] sm:$0xff]
    %v3615 = vld [vmem:[#allocation17 + $0x1ed0] sm:$0xff]
    %v3616 = vld [vmem:[#allocation17 + $0x1ed8] sm:$0xff]
    %v3617 = vld [vmem:[#allocation17 + $0x1ee0] sm:$0xff]
    %v3618 = vld [vmem:[#allocation17 + $0x1ee8] sm:$0xff]
    %v3619 = vld [vmem:[#allocation17 + $0x1ef0] sm:$0xff]
    %v3620 = vld [vmem:[#allocation17 + $0x1ef8] sm:$0xff]
    %v3621 = vld [vmem:[#allocation17 + $0x1f00] sm:$0xff]
    %v3622 = vld [vmem:[#allocation17 + $0x1f08] sm:$0xff]
    %v3623 = vld [vmem:[#allocation17 + $0x1f10] sm:$0xff]
    %v3624 = vld [vmem:[#allocation17 + $0x1f18] sm:$0xff]
    %v3625 = vld [vmem:[#allocation17 + $0x1f20] sm:$0xff]
    %v3626 = vld [vmem:[#allocation17 + $0x1f28] sm:$0xff]
    %v3627 = vld [vmem:[#allocation17 + $0x1f30] sm:$0xff]
    %v3628 = vld [vmem:[#allocation17 + $0x1f38] sm:$0xff]
    %v3629 = vld [vmem:[#allocation17 + $0x1f40] sm:$0xff]
    %v3630 = vld [vmem:[#allocation17 + $0x1f48] sm:$0xff]
    %v3631 = vld [vmem:[#allocation17 + $0x1f50] sm:$0xff]
    %v3632 = vld [vmem:[#allocation17 + $0x1f58] sm:$0xff]
    %v3633 = vld [vmem:[#allocation17 + $0x1f60] sm:$0xff]
    %v3634 = vld [vmem:[#allocation17 + $0x1f68] sm:$0xff]
    %v3635 = vld [vmem:[#allocation17 + $0x1f70] sm:$0xff]
    %v3636 = vld [vmem:[#allocation17 + $0x1f78] sm:$0xff]
    %v3637 = vld [vmem:[#allocation17 + $0x1f80] sm:$0xff]
    %v3638 = vld [vmem:[#allocation17 + $0x1f88] sm:$0xff]
    %v3639 = vld [vmem:[#allocation17 + $0x1f90] sm:$0xff]
    %v3640 = vld [vmem:[#allocation17 + $0x1f98] sm:$0xff]
    %v3641 = vld [vmem:[#allocation17 + $0x1fa0] sm:$0xff]
    %v3642 = vld [vmem:[#allocation17 + $0x1fa8] sm:$0xff]
    %v3643 = vld [vmem:[#allocation17 + $0x1fb0] sm:$0xff]
    %v3644 = vld [vmem:[#allocation17 + $0x1fb8] sm:$0xff]
    %v3645 = vld [vmem:[#allocation17 + $0x1fc0] sm:$0xff]
    %v3646 = vld [vmem:[#allocation17 + $0x1fc8] sm:$0xff]
    %v3647 = vld [vmem:[#allocation17 + $0x1fd0] sm:$0xff]
    %v3648 = vld [vmem:[#allocation17 + $0x1fd8] sm:$0xff]
    %v3649 = vld [vmem:[#allocation17 + $0x1fe0] sm:$0xff]
    %v3650 = vld [vmem:[#allocation17 + $0x1fe8] sm:$0xff]
    %v3651 = vld [vmem:[#allocation17 + $0x1ff0] sm:$0xff]
    %v3652 = vld [vmem:[#allocation17 + $0x1ff8] sm:$0xff]
    %v3653 = vld [vmem:[#allocation19] sm:$0xff]
    %v3654 = vld [vmem:[#allocation19 + $0x8] sm:$0xff]
    %v3657 = vlaneseq
    %v3658 = vshrl.u32 %v3657, 7
    %v3659 = vsub.s32 0, %v3658
    %v3660 = vrot.slane %v3653, %v3659
    %v3661 = vlaneseq
    %v3662 = vshrl.u32 %v3661, 7
    %v3663 = vsub.s32 1, %v3662
    %v3664 = vrot.slane %v3653, %v3663
    %v3665 = vlaneseq
    %v3666 = vshrl.u32 %v3665, 7
    %v3667 = vsub.s32 2, %v3666
    %v3668 = vrot.slane %v3653, %v3667
    %v3669 = vlaneseq
    %v3670 = vshrl.u32 %v3669, 7
    %v3671 = vsub.s32 3, %v3670
    %v3672 = vrot.slane %v3653, %v3671
    %v3673 = vlaneseq
    %v3674 = vshrl.u32 %v3673, 7
    %v3675 = vsub.s32 4, %v3674
    %v3676 = vrot.slane %v3653, %v3675
    %v3677 = vlaneseq
    %v3678 = vshrl.u32 %v3677, 7
    %v3679 = vsub.s32 5, %v3678
    %v3680 = vrot.slane %v3653, %v3679
    %v3681 = vlaneseq
    %v3682 = vshrl.u32 %v3681, 7
    %v3683 = vsub.s32 6, %v3682
    %v3684 = vrot.slane %v3653, %v3683
    %v3685 = vlaneseq
    %v3686 = vshrl.u32 %v3685, 7
    %v3687 = vsub.s32 7, %v3686
    %v3688 = vrot.slane %v3653, %v3687
    %v3689 = vlaneseq
    %v3690 = vshrl.u32 %v3689, 7
    %v3691 = vsub.s32 0, %v3690
    %v3692 = vrot.slane %v3654, %v3691
    %v3693 = vlaneseq
    %v3694 = vshrl.u32 %v3693, 7
    %v3695 = vsub.s32 1, %v3694
    %v3696 = vrot.slane %v3654, %v3695
    %v3697 = vlaneseq
    %v3698 = vshrl.u32 %v3697, 7
    %v3699 = vsub.s32 2, %v3698
    %v3700 = vrot.slane %v3654, %v3699
    %v3701 = vlaneseq
    %v3702 = vshrl.u32 %v3701, 7
    %v3703 = vsub.s32 3, %v3702
    %v3704 = vrot.slane %v3654, %v3703
    %v3705 = vlaneseq
    %v3706 = vshrl.u32 %v3705, 7
    %v3707 = vsub.s32 4, %v3706
    %v3708 = vrot.slane %v3654, %v3707
    %v3709 = vlaneseq
    %v3710 = vshrl.u32 %v3709, 7
    %v3711 = vsub.s32 5, %v3710
    %v3712 = vrot.slane %v3654, %v3711
    %v3713 = vlaneseq
    %v3714 = vshrl.u32 %v3713, 7
    %v3715 = vsub.s32 6, %v3714
    %v3716 = vrot.slane %v3654, %v3715
    %v3717 = vlaneseq
    %v3718 = vshrl.u32 %v3717, 7
    %v3719 = vsub.s32 7, %v3718
    %v3720 = vrot.slane %v3654, %v3719
    %v4761 = vunpack.c.l.b16 %v2629
    %v4762 = vunpack.c.h.b16 %v2629
    %v4763 = vunpack.c.l.b16 %v2630
    %v4764 = vunpack.c.h.b16 %v2630
    %v4765 = vunpack.c.l.b16 %v2631
    %v4766 = vunpack.c.h.b16 %v2631
    %v4767 = vunpack.c.l.b16 %v2632
    %v4768 = vunpack.c.h.b16 %v2632
    %v4769 = vunpack.c.l.b16 %v2633
    %v4770 = vunpack.c.h.b16 %v2633
    %v4771 = vunpack.c.l.b16 %v2634
    %v4772 = vunpack.c.h.b16 %v2634
    %v4773 = vunpack.c.l.b16 %v2635
    %v4774 = vunpack.c.h.b16 %v2635
    %v4775 = vunpack.c.l.b16 %v2636
    %v4776 = vunpack.c.h.b16 %v2636
    %v4777 = vunpack.c.l.b16 %v2637
    %v4778 = vunpack.c.h.b16 %v2637
    %v4779 = vunpack.c.l.b16 %v2638
    %v4780 = vunpack.c.h.b16 %v2638
    %v4781 = vunpack.c.l.b16 %v2639
    %v4782 = vunpack.c.h.b16 %v2639
    %v4783 = vunpack.c.l.b16 %v2640
    %v4784 = vunpack.c.h.b16 %v2640
    %v4785 = vunpack.c.l.b16 %v2641
    %v4786 = vunpack.c.h.b16 %v2641
    %v4787 = vunpack.c.l.b16 %v2642
    %v4788 = vunpack.c.h.b16 %v2642
    %v4789 = vunpack.c.l.b16 %v2643
    %v4790 = vunpack.c.h.b16 %v2643
    %v4791 = vunpack.c.l.b16 %v2644
    %v4792 = vunpack.c.h.b16 %v2644
    %v4793 = vunpack.c.l.b16 %v2645
    %v4794 = vunpack.c.h.b16 %v2645
    %v4795 = vunpack.c.l.b16 %v2646
    %v4796 = vunpack.c.h.b16 %v2646
    %v4797 = vunpack.c.l.b16 %v2647
    %v4798 = vunpack.c.h.b16 %v2647
    %v4799 = vunpack.c.l.b16 %v2648
    %v4800 = vunpack.c.h.b16 %v2648
    %v4801 = vunpack.c.l.b16 %v2649
    %v4802 = vunpack.c.h.b16 %v2649
    %v4803 = vunpack.c.l.b16 %v2650
    %v4804 = vunpack.c.h.b16 %v2650
    %v4805 = vunpack.c.l.b16 %v2651
    %v4806 = vunpack.c.h.b16 %v2651
    %v4807 = vunpack.c.l.b16 %v2652
    %v4808 = vunpack.c.h.b16 %v2652
    %v4809 = vunpack.c.l.b16 %v2653
    %v4810 = vunpack.c.h.b16 %v2653
    %v4811 = vunpack.c.l.b16 %v2654
    %v4812 = vunpack.c.h.b16 %v2654
    %v4813 = vunpack.c.l.b16 %v2655
    %v4814 = vunpack.c.h.b16 %v2655
    %v4815 = vunpack.c.l.b16 %v2656
    %v4816 = vunpack.c.h.b16 %v2656
    %v4817 = vunpack.c.l.b16 %v2657
    %v4818 = vunpack.c.h.b16 %v2657
    %v4819 = vunpack.c.l.b16 %v2658
    %v4820 = vunpack.c.h.b16 %v2658
    %v4821 = vunpack.c.l.b16 %v2659
    %v4822 = vunpack.c.h.b16 %v2659
    %v4823 = vunpack.c.l.b16 %v2660
    %v4824 = vunpack.c.h.b16 %v2660
    %v4825 = vunpack.c.l.b16 %v2661
    %v4826 = vunpack.c.h.b16 %v2661
    %v4827 = vunpack.c.l.b16 %v2662
    %v4828 = vunpack.c.h.b16 %v2662
    %v4829 = vunpack.c.l.b16 %v2663
    %v4830 = vunpack.c.h.b16 %v2663
    %v4831 = vunpack.c.l.b16 %v2664
    %v4832 = vunpack.c.h.b16 %v2664
    %v4833 = vunpack.c.l.b16 %v2665
    %v4834 = vunpack.c.h.b16 %v2665
    %v4835 = vunpack.c.l.b16 %v2666
    %v4836 = vunpack.c.h.b16 %v2666
    %v4837 = vunpack.c.l.b16 %v2667
    %v4838 = vunpack.c.h.b16 %v2667
    %v4839 = vunpack.c.l.b16 %v2668
    %v4840 = vunpack.c.h.b16 %v2668
    %v4841 = vunpack.c.l.b16 %v2669
    %v4842 = vunpack.c.h.b16 %v2669
    %v4843 = vunpack.c.l.b16 %v2670
    %v4844 = vunpack.c.h.b16 %v2670
    %v4845 = vunpack.c.l.b16 %v2671
    %v4846 = vunpack.c.h.b16 %v2671
    %v4847 = vunpack.c.l.b16 %v2672
    %v4848 = vunpack.c.h.b16 %v2672
    %v4849 = vunpack.c.l.b16 %v2673
    %v4850 = vunpack.c.h.b16 %v2673
    %v4851 = vunpack.c.l.b16 %v2674
    %v4852 = vunpack.c.h.b16 %v2674
    %v4853 = vunpack.c.l.b16 %v2675
    %v4854 = vunpack.c.h.b16 %v2675
    %v4855 = vunpack.c.l.b16 %v2676
    %v4856 = vunpack.c.h.b16 %v2676
    %v4857 = vunpack.c.l.b16 %v2677
    %v4858 = vunpack.c.h.b16 %v2677
    %v4859 = vunpack.c.l.b16 %v2678
    %v4860 = vunpack.c.h.b16 %v2678
    %v4861 = vunpack.c.l.b16 %v2679
    %v4862 = vunpack.c.h.b16 %v2679
    %v4863 = vunpack.c.l.b16 %v2680
    %v4864 = vunpack.c.h.b16 %v2680
    %v4865 = vunpack.c.l.b16 %v2681
    %v4866 = vunpack.c.h.b16 %v2681
    %v4867 = vunpack.c.l.b16 %v2682
    %v4868 = vunpack.c.h.b16 %v2682
    %v4869 = vunpack.c.l.b16 %v2683
    %v4870 = vunpack.c.h.b16 %v2683
    %v4871 = vunpack.c.l.b16 %v2684
    %v4872 = vunpack.c.h.b16 %v2684
    %v4873 = vunpack.c.l.b16 %v2685
    %v4874 = vunpack.c.h.b16 %v2685
    %v4875 = vunpack.c.l.b16 %v2686
    %v4876 = vunpack.c.h.b16 %v2686
    %v4877 = vunpack.c.l.b16 %v2687
    %v4878 = vunpack.c.h.b16 %v2687
    %v4879 = vunpack.c.l.b16 %v2688
    %v4880 = vunpack.c.h.b16 %v2688
    %v4881 = vunpack.c.l.b16 %v2689
    %v4882 = vunpack.c.h.b16 %v2689
    %v4883 = vunpack.c.l.b16 %v2690
    %v4884 = vunpack.c.h.b16 %v2690
    %v4885 = vunpack.c.l.b16 %v2691
    %v4886 = vunpack.c.h.b16 %v2691
    %v4887 = vunpack.c.l.b16 %v2692
    %v4888 = vunpack.c.h.b16 %v2692
    %v4889 = vunpack.c.l.b16 %v2693
    %v4890 = vunpack.c.h.b16 %v2693
    %v4891 = vunpack.c.l.b16 %v2694
    %v4892 = vunpack.c.h.b16 %v2694
    %v4893 = vunpack.c.l.b16 %v2695
    %v4894 = vunpack.c.h.b16 %v2695
    %v4895 = vunpack.c.l.b16 %v2696
    %v4896 = vunpack.c.h.b16 %v2696
    %v4897 = vunpack.c.l.b16 %v2697
    %v4898 = vunpack.c.h.b16 %v2697
    %v4899 = vunpack.c.l.b16 %v2698
    %v4900 = vunpack.c.h.b16 %v2698
    %v4901 = vunpack.c.l.b16 %v2699
    %v4902 = vunpack.c.h.b16 %v2699
    %v4903 = vunpack.c.l.b16 %v2700
    %v4904 = vunpack.c.h.b16 %v2700
    %v4905 = vunpack.c.l.b16 %v2701
    %v4906 = vunpack.c.h.b16 %v2701
    %v4907 = vunpack.c.l.b16 %v2702
    %v4908 = vunpack.c.h.b16 %v2702
    %v4909 = vunpack.c.l.b16 %v2703
    %v4910 = vunpack.c.h.b16 %v2703
    %v4911 = vunpack.c.l.b16 %v2704
    %v4912 = vunpack.c.h.b16 %v2704
    %v4913 = vunpack.c.l.b16 %v2705
    %v4914 = vunpack.c.h.b16 %v2705
    %v4915 = vunpack.c.l.b16 %v2706
    %v4916 = vunpack.c.h.b16 %v2706
    %v4917 = vunpack.c.l.b16 %v2707
    %v4918 = vunpack.c.h.b16 %v2707
    %v4919 = vunpack.c.l.b16 %v2708
    %v4920 = vunpack.c.h.b16 %v2708
    %v4921 = vunpack.c.l.b16 %v2709
    %v4922 = vunpack.c.h.b16 %v2709
    %v4923 = vunpack.c.l.b16 %v2710
    %v4924 = vunpack.c.h.b16 %v2710
    %v4925 = vunpack.c.l.b16 %v2711
    %v4926 = vunpack.c.h.b16 %v2711
    %v4927 = vunpack.c.l.b16 %v2712
    %v4928 = vunpack.c.h.b16 %v2712
    %v4929 = vunpack.c.l.b16 %v2713
    %v4930 = vunpack.c.h.b16 %v2713
    %v4931 = vunpack.c.l.b16 %v2714
    %v4932 = vunpack.c.h.b16 %v2714
    %v4933 = vunpack.c.l.b16 %v2715
    %v4934 = vunpack.c.h.b16 %v2715
    %v4935 = vunpack.c.l.b16 %v2716
    %v4936 = vunpack.c.h.b16 %v2716
    %v4937 = vunpack.c.l.b16 %v2717
    %v4938 = vunpack.c.h.b16 %v2717
    %v4939 = vunpack.c.l.b16 %v2718
    %v4940 = vunpack.c.h.b16 %v2718
    %v4941 = vunpack.c.l.b16 %v2719
    %v4942 = vunpack.c.h.b16 %v2719
    %v4943 = vunpack.c.l.b16 %v2720
    %v4944 = vunpack.c.h.b16 %v2720
    %v4945 = vunpack.c.l.b16 %v2721
    %v4946 = vunpack.c.h.b16 %v2721
    %v4947 = vunpack.c.l.b16 %v2722
    %v4948 = vunpack.c.h.b16 %v2722
    %v4949 = vunpack.c.l.b16 %v2723
    %v4950 = vunpack.c.h.b16 %v2723
    %v4951 = vunpack.c.l.b16 %v2724
    %v4952 = vunpack.c.h.b16 %v2724
    %v4953 = vunpack.c.l.b16 %v2725
    %v4954 = vunpack.c.h.b16 %v2725
    %v4955 = vunpack.c.l.b16 %v2726
    %v4956 = vunpack.c.h.b16 %v2726
    %v4957 = vunpack.c.l.b16 %v2727
    %v4958 = vunpack.c.h.b16 %v2727
    %v4959 = vunpack.c.l.b16 %v2728
    %v4960 = vunpack.c.h.b16 %v2728
    %v4961 = vunpack.c.l.b16 %v2729
    %v4962 = vunpack.c.h.b16 %v2729
    %v4963 = vunpack.c.l.b16 %v2730
    %v4964 = vunpack.c.h.b16 %v2730
    %v4965 = vunpack.c.l.b16 %v2731
    %v4966 = vunpack.c.h.b16 %v2731
    %v4967 = vunpack.c.l.b16 %v2732
    %v4968 = vunpack.c.h.b16 %v2732
    %v4969 = vunpack.c.l.b16 %v2733
    %v4970 = vunpack.c.h.b16 %v2733
    %v4971 = vunpack.c.l.b16 %v2734
    %v4972 = vunpack.c.h.b16 %v2734
    %v4973 = vunpack.c.l.b16 %v2735
    %v4974 = vunpack.c.h.b16 %v2735
    %v4975 = vunpack.c.l.b16 %v2736
    %v4976 = vunpack.c.h.b16 %v2736
    %v4977 = vunpack.c.l.b16 %v2737
    %v4978 = vunpack.c.h.b16 %v2737
    %v4979 = vunpack.c.l.b16 %v2738
    %v4980 = vunpack.c.h.b16 %v2738
    %v4981 = vunpack.c.l.b16 %v2739
    %v4982 = vunpack.c.h.b16 %v2739
    %v4983 = vunpack.c.l.b16 %v2740
    %v4984 = vunpack.c.h.b16 %v2740
    %v4985 = vunpack.c.l.b16 %v2741
    %v4986 = vunpack.c.h.b16 %v2741
    %v4987 = vunpack.c.l.b16 %v2742
    %v4988 = vunpack.c.h.b16 %v2742
    %v4989 = vunpack.c.l.b16 %v2743
    %v4990 = vunpack.c.h.b16 %v2743
    %v4991 = vunpack.c.l.b16 %v2744
    %v4992 = vunpack.c.h.b16 %v2744
    %v4993 = vunpack.c.l.b16 %v2745
    %v4994 = vunpack.c.h.b16 %v2745
    %v4995 = vunpack.c.l.b16 %v2746
    %v4996 = vunpack.c.h.b16 %v2746
    %v4997 = vunpack.c.l.b16 %v2747
    %v4998 = vunpack.c.h.b16 %v2747
    %v4999 = vunpack.c.l.b16 %v2748
    %v5000 = vunpack.c.h.b16 %v2748
    %v5001 = vunpack.c.l.b16 %v2749
    %v5002 = vunpack.c.h.b16 %v2749
    %v5003 = vunpack.c.l.b16 %v2750
    %v5004 = vunpack.c.h.b16 %v2750
    %v5005 = vunpack.c.l.b16 %v2751
    %v5006 = vunpack.c.h.b16 %v2751
    %v5007 = vunpack.c.l.b16 %v2752
    %v5008 = vunpack.c.h.b16 %v2752
    %v5009 = vunpack.c.l.b16 %v2753
    %v5010 = vunpack.c.h.b16 %v2753
    %v5011 = vunpack.c.l.b16 %v2754
    %v5012 = vunpack.c.h.b16 %v2754
    %v5013 = vunpack.c.l.b16 %v2755
    %v5014 = vunpack.c.h.b16 %v2755
    %v5015 = vunpack.c.l.b16 %v2756
    %v5016 = vunpack.c.h.b16 %v2756
    %v5017 = vunpack.c.l.b16 %v2757
    %v5018 = vunpack.c.h.b16 %v2757
    %v5019 = vunpack.c.l.b16 %v2758
    %v5020 = vunpack.c.h.b16 %v2758
    %v5021 = vunpack.c.l.b16 %v2759
    %v5022 = vunpack.c.h.b16 %v2759
    %v5023 = vunpack.c.l.b16 %v2760
    %v5024 = vunpack.c.h.b16 %v2760
    %v5025 = vunpack.c.l.b16 %v2761
    %v5026 = vunpack.c.h.b16 %v2761
    %v5027 = vunpack.c.l.b16 %v2762
    %v5028 = vunpack.c.h.b16 %v2762
    %v5029 = vunpack.c.l.b16 %v2763
    %v5030 = vunpack.c.h.b16 %v2763
    %v5031 = vunpack.c.l.b16 %v2764
    %v5032 = vunpack.c.h.b16 %v2764
    %v5033 = vunpack.c.l.b16 %v2765
    %v5034 = vunpack.c.h.b16 %v2765
    %v5035 = vunpack.c.l.b16 %v2766
    %v5036 = vunpack.c.h.b16 %v2766
    %v5037 = vunpack.c.l.b16 %v2767
    %v5038 = vunpack.c.h.b16 %v2767
    %v5039 = vunpack.c.l.b16 %v2768
    %v5040 = vunpack.c.h.b16 %v2768
    %v5041 = vunpack.c.l.b16 %v2769
    %v5042 = vunpack.c.h.b16 %v2769
    %v5043 = vunpack.c.l.b16 %v2770
    %v5044 = vunpack.c.h.b16 %v2770
    %v5045 = vunpack.c.l.b16 %v2771
    %v5046 = vunpack.c.h.b16 %v2771
    %v5047 = vunpack.c.l.b16 %v2772
    %v5048 = vunpack.c.h.b16 %v2772
    %v5049 = vunpack.c.l.b16 %v2773
    %v5050 = vunpack.c.h.b16 %v2773
    %v5051 = vunpack.c.l.b16 %v2774
    %v5052 = vunpack.c.h.b16 %v2774
    %v5053 = vunpack.c.l.b16 %v2775
    %v5054 = vunpack.c.h.b16 %v2775
    %v5055 = vunpack.c.l.b16 %v2776
    %v5056 = vunpack.c.h.b16 %v2776
    %v5057 = vunpack.c.l.b16 %v2777
    %v5058 = vunpack.c.h.b16 %v2777
    %v5059 = vunpack.c.l.b16 %v2778
    %v5060 = vunpack.c.h.b16 %v2778
    %v5061 = vunpack.c.l.b16 %v2779
    %v5062 = vunpack.c.h.b16 %v2779
    %v5063 = vunpack.c.l.b16 %v2780
    %v5064 = vunpack.c.h.b16 %v2780
    %v5065 = vunpack.c.l.b16 %v2781
    %v5066 = vunpack.c.h.b16 %v2781
    %v5067 = vunpack.c.l.b16 %v2782
    %v5068 = vunpack.c.h.b16 %v2782
    %v5069 = vunpack.c.l.b16 %v2783
    %v5070 = vunpack.c.h.b16 %v2783
    %v5071 = vunpack.c.l.b16 %v2784
    %v5072 = vunpack.c.h.b16 %v2784
    %v5073 = vunpack.c.l.b16 %v2785
    %v5074 = vunpack.c.h.b16 %v2785
    %v5075 = vunpack.c.l.b16 %v2786
    %v5076 = vunpack.c.h.b16 %v2786
    %v5077 = vunpack.c.l.b16 %v2787
    %v5078 = vunpack.c.h.b16 %v2787
    %v5079 = vunpack.c.l.b16 %v2788
    %v5080 = vunpack.c.h.b16 %v2788
    %v5081 = vunpack.c.l.b16 %v2789
    %v5082 = vunpack.c.h.b16 %v2789
    %v5083 = vunpack.c.l.b16 %v2790
    %v5084 = vunpack.c.h.b16 %v2790
    %v5085 = vunpack.c.l.b16 %v2791
    %v5086 = vunpack.c.h.b16 %v2791
    %v5087 = vunpack.c.l.b16 %v2792
    %v5088 = vunpack.c.h.b16 %v2792
    %v5089 = vunpack.c.l.b16 %v2793
    %v5090 = vunpack.c.h.b16 %v2793
    %v5091 = vunpack.c.l.b16 %v2794
    %v5092 = vunpack.c.h.b16 %v2794
    %v5093 = vunpack.c.l.b16 %v2795
    %v5094 = vunpack.c.h.b16 %v2795
    %v5095 = vunpack.c.l.b16 %v2796
    %v5096 = vunpack.c.h.b16 %v2796
    %v5097 = vunpack.c.l.b16 %v2797
    %v5098 = vunpack.c.h.b16 %v2797
    %v5099 = vunpack.c.l.b16 %v2798
    %v5100 = vunpack.c.h.b16 %v2798
    %v5101 = vunpack.c.l.b16 %v2799
    %v5102 = vunpack.c.h.b16 %v2799
    %v5103 = vunpack.c.l.b16 %v2800
    %v5104 = vunpack.c.h.b16 %v2800
    %v5105 = vunpack.c.l.b16 %v2801
    %v5106 = vunpack.c.h.b16 %v2801
    %v5107 = vunpack.c.l.b16 %v2802
    %v5108 = vunpack.c.h.b16 %v2802
    %v5109 = vunpack.c.l.b16 %v2803
    %v5110 = vunpack.c.h.b16 %v2803
    %v5111 = vunpack.c.l.b16 %v2804
    %v5112 = vunpack.c.h.b16 %v2804
    %v5113 = vunpack.c.l.b16 %v2805
    %v5114 = vunpack.c.h.b16 %v2805
    %v5115 = vunpack.c.l.b16 %v2806
    %v5116 = vunpack.c.h.b16 %v2806
    %v5117 = vunpack.c.l.b16 %v2807
    %v5118 = vunpack.c.h.b16 %v2807
    %v5119 = vunpack.c.l.b16 %v2808
    %v5120 = vunpack.c.h.b16 %v2808
    %v5121 = vunpack.c.l.b16 %v2809
    %v5122 = vunpack.c.h.b16 %v2809
    %v5123 = vunpack.c.l.b16 %v2810
    %v5124 = vunpack.c.h.b16 %v2810
    %v5125 = vunpack.c.l.b16 %v2811
    %v5126 = vunpack.c.h.b16 %v2811
    %v5127 = vunpack.c.l.b16 %v2812
    %v5128 = vunpack.c.h.b16 %v2812
    %v5129 = vunpack.c.l.b16 %v2813
    %v5130 = vunpack.c.h.b16 %v2813
    %v5131 = vunpack.c.l.b16 %v2814
    %v5132 = vunpack.c.h.b16 %v2814
    %v5133 = vunpack.c.l.b16 %v2815
    %v5134 = vunpack.c.h.b16 %v2815
    %v5135 = vunpack.c.l.b16 %v2816
    %v5136 = vunpack.c.h.b16 %v2816
    %v5137 = vunpack.c.l.b16 %v2817
    %v5138 = vunpack.c.h.b16 %v2817
    %v5139 = vunpack.c.l.b16 %v2818
    %v5140 = vunpack.c.h.b16 %v2818
    %v5141 = vunpack.c.l.b16 %v2819
    %v5142 = vunpack.c.h.b16 %v2819
    %v5143 = vunpack.c.l.b16 %v2820
    %v5144 = vunpack.c.h.b16 %v2820
    %v5145 = vunpack.c.l.b16 %v2821
    %v5146 = vunpack.c.h.b16 %v2821
    %v5147 = vunpack.c.l.b16 %v2822
    %v5148 = vunpack.c.h.b16 %v2822
    %v5149 = vunpack.c.l.b16 %v2823
    %v5150 = vunpack.c.h.b16 %v2823
    %v5151 = vunpack.c.l.b16 %v2824
    %v5152 = vunpack.c.h.b16 %v2824
    %v5153 = vunpack.c.l.b16 %v2825
    %v5154 = vunpack.c.h.b16 %v2825
    %v5155 = vunpack.c.l.b16 %v2826
    %v5156 = vunpack.c.h.b16 %v2826
    %v5157 = vunpack.c.l.b16 %v2827
    %v5158 = vunpack.c.h.b16 %v2827
    %v5159 = vunpack.c.l.b16 %v2828
    %v5160 = vunpack.c.h.b16 %v2828
    %v5161 = vunpack.c.l.b16 %v2829
    %v5162 = vunpack.c.h.b16 %v2829
    %v5163 = vunpack.c.l.b16 %v2830
    %v5164 = vunpack.c.h.b16 %v2830
    %v5165 = vunpack.c.l.b16 %v2831
    %v5166 = vunpack.c.h.b16 %v2831
    %v5167 = vunpack.c.l.b16 %v2832
    %v5168 = vunpack.c.h.b16 %v2832
    %v5169 = vunpack.c.l.b16 %v2833
    %v5170 = vunpack.c.h.b16 %v2833
    %v5171 = vunpack.c.l.b16 %v2834
    %v5172 = vunpack.c.h.b16 %v2834
    %v5173 = vunpack.c.l.b16 %v2835
    %v5174 = vunpack.c.h.b16 %v2835
    %v5175 = vunpack.c.l.b16 %v2836
    %v5176 = vunpack.c.h.b16 %v2836
    %v5177 = vunpack.c.l.b16 %v2837
    %v5178 = vunpack.c.h.b16 %v2837
    %v5179 = vunpack.c.l.b16 %v2838
    %v5180 = vunpack.c.h.b16 %v2838
    %v5181 = vunpack.c.l.b16 %v2839
    %v5182 = vunpack.c.h.b16 %v2839
    %v5183 = vunpack.c.l.b16 %v2840
    %v5184 = vunpack.c.h.b16 %v2840
    %v5185 = vunpack.c.l.b16 %v2841
    %v5186 = vunpack.c.h.b16 %v2841
    %v5187 = vunpack.c.l.b16 %v2842
    %v5188 = vunpack.c.h.b16 %v2842
    %v5189 = vunpack.c.l.b16 %v2843
    %v5190 = vunpack.c.h.b16 %v2843
    %v5191 = vunpack.c.l.b16 %v2844
    %v5192 = vunpack.c.h.b16 %v2844
    %v5193 = vunpack.c.l.b16 %v2845
    %v5194 = vunpack.c.h.b16 %v2845
    %v5195 = vunpack.c.l.b16 %v2846
    %v5196 = vunpack.c.h.b16 %v2846
    %v5197 = vunpack.c.l.b16 %v2847
    %v5198 = vunpack.c.h.b16 %v2847
    %v5199 = vunpack.c.l.b16 %v2848
    %v5200 = vunpack.c.h.b16 %v2848
    %v5201 = vunpack.c.l.b16 %v2849
    %v5202 = vunpack.c.h.b16 %v2849
    %v5203 = vunpack.c.l.b16 %v2850
    %v5204 = vunpack.c.h.b16 %v2850
    %v5205 = vunpack.c.l.b16 %v2851
    %v5206 = vunpack.c.h.b16 %v2851
    %v5207 = vunpack.c.l.b16 %v2852
    %v5208 = vunpack.c.h.b16 %v2852
    %v5209 = vunpack.c.l.b16 %v2853
    %v5210 = vunpack.c.h.b16 %v2853
    %v5211 = vunpack.c.l.b16 %v2854
    %v5212 = vunpack.c.h.b16 %v2854
    %v5213 = vunpack.c.l.b16 %v2855
    %v5214 = vunpack.c.h.b16 %v2855
    %v5215 = vunpack.c.l.b16 %v2856
    %v5216 = vunpack.c.h.b16 %v2856
    %v5217 = vunpack.c.l.b16 %v2857
    %v5218 = vunpack.c.h.b16 %v2857
    %v5219 = vunpack.c.l.b16 %v2858
    %v5220 = vunpack.c.h.b16 %v2858
    %v5221 = vunpack.c.l.b16 %v2859
    %v5222 = vunpack.c.h.b16 %v2859
    %v5223 = vunpack.c.l.b16 %v2860
    %v5224 = vunpack.c.h.b16 %v2860
    %v5225 = vunpack.c.l.b16 %v2861
    %v5226 = vunpack.c.h.b16 %v2861
    %v5227 = vunpack.c.l.b16 %v2862
    %v5228 = vunpack.c.h.b16 %v2862
    %v5229 = vunpack.c.l.b16 %v2863
    %v5230 = vunpack.c.h.b16 %v2863
    %v5231 = vunpack.c.l.b16 %v2864
    %v5232 = vunpack.c.h.b16 %v2864
    %v5233 = vunpack.c.l.b16 %v2865
    %v5234 = vunpack.c.h.b16 %v2865
    %v5235 = vunpack.c.l.b16 %v2866
    %v5236 = vunpack.c.h.b16 %v2866
    %v5237 = vunpack.c.l.b16 %v2867
    %v5238 = vunpack.c.h.b16 %v2867
    %v5239 = vunpack.c.l.b16 %v2868
    %v5240 = vunpack.c.h.b16 %v2868
    %v5241 = vunpack.c.l.b16 %v2869
    %v5242 = vunpack.c.h.b16 %v2869
    %v5243 = vunpack.c.l.b16 %v2870
    %v5244 = vunpack.c.h.b16 %v2870
    %v5245 = vunpack.c.l.b16 %v2871
    %v5246 = vunpack.c.h.b16 %v2871
    %v5247 = vunpack.c.l.b16 %v2872
    %v5248 = vunpack.c.h.b16 %v2872
    %v5249 = vunpack.c.l.b16 %v2873
    %v5250 = vunpack.c.h.b16 %v2873
    %v5251 = vunpack.c.l.b16 %v2874
    %v5252 = vunpack.c.h.b16 %v2874
    %v5253 = vunpack.c.l.b16 %v2875
    %v5254 = vunpack.c.h.b16 %v2875
    %v5255 = vunpack.c.l.b16 %v2876
    %v5256 = vunpack.c.h.b16 %v2876
    %v5257 = vunpack.c.l.b16 %v2877
    %v5258 = vunpack.c.h.b16 %v2877
    %v5259 = vunpack.c.l.b16 %v2878
    %v5260 = vunpack.c.h.b16 %v2878
    %v5261 = vunpack.c.l.b16 %v2879
    %v5262 = vunpack.c.h.b16 %v2879
    %v5263 = vunpack.c.l.b16 %v2880
    %v5264 = vunpack.c.h.b16 %v2880
    %v5265 = vunpack.c.l.b16 %v2881
    %v5266 = vunpack.c.h.b16 %v2881
    %v5267 = vunpack.c.l.b16 %v2882
    %v5268 = vunpack.c.h.b16 %v2882
    %v5269 = vunpack.c.l.b16 %v2883
    %v5270 = vunpack.c.h.b16 %v2883
    %v5271 = vunpack.c.l.b16 %v2884
    %v5272 = vunpack.c.h.b16 %v2884
    %v5273 = vunpack.c.l.b16 %v2885
    %v5274 = vunpack.c.h.b16 %v2885
    %v5275 = vunpack.c.l.b16 %v2886
    %v5276 = vunpack.c.h.b16 %v2886
    %v5277 = vunpack.c.l.b16 %v2887
    %v5278 = vunpack.c.h.b16 %v2887
    %v5279 = vunpack.c.l.b16 %v2888
    %v5280 = vunpack.c.h.b16 %v2888
    %v5281 = vunpack.c.l.b16 %v2889
    %v5282 = vunpack.c.h.b16 %v2889
    %v5283 = vunpack.c.l.b16 %v2890
    %v5284 = vunpack.c.h.b16 %v2890
    %v5285 = vunpack.c.l.b16 %v2891
    %v5286 = vunpack.c.h.b16 %v2891
    %v5287 = vunpack.c.l.b16 %v2892
    %v5288 = vunpack.c.h.b16 %v2892
    %v5289 = vunpack.c.l.b16 %v2893
    %v5290 = vunpack.c.h.b16 %v2893
    %v5291 = vunpack.c.l.b16 %v2894
    %v5292 = vunpack.c.h.b16 %v2894
    %v5293 = vunpack.c.l.b16 %v2895
    %v5294 = vunpack.c.h.b16 %v2895
    %v5295 = vunpack.c.l.b16 %v2896
    %v5296 = vunpack.c.h.b16 %v2896
    %v5297 = vunpack.c.l.b16 %v2897
    %v5298 = vunpack.c.h.b16 %v2897
    %v5299 = vunpack.c.l.b16 %v2898
    %v5300 = vunpack.c.h.b16 %v2898
    %v5301 = vunpack.c.l.b16 %v2899
    %v5302 = vunpack.c.h.b16 %v2899
    %v5303 = vunpack.c.l.b16 %v2900
    %v5304 = vunpack.c.h.b16 %v2900
    %v5305 = vunpack.c.l.b16 %v2901
    %v5306 = vunpack.c.h.b16 %v2901
    %v5307 = vunpack.c.l.b16 %v2902
    %v5308 = vunpack.c.h.b16 %v2902
    %v5309 = vunpack.c.l.b16 %v2903
    %v5310 = vunpack.c.h.b16 %v2903
    %v5311 = vunpack.c.l.b16 %v2904
    %v5312 = vunpack.c.h.b16 %v2904
    %v5313 = vunpack.c.l.b16 %v2905
    %v5314 = vunpack.c.h.b16 %v2905
    %v5315 = vunpack.c.l.b16 %v2906
    %v5316 = vunpack.c.h.b16 %v2906
    %v5317 = vunpack.c.l.b16 %v2907
    %v5318 = vunpack.c.h.b16 %v2907
    %v5319 = vunpack.c.l.b16 %v2908
    %v5320 = vunpack.c.h.b16 %v2908
    %v5321 = vunpack.c.l.b16 %v2909
    %v5322 = vunpack.c.h.b16 %v2909
    %v5323 = vunpack.c.l.b16 %v2910
    %v5324 = vunpack.c.h.b16 %v2910
    %v5325 = vunpack.c.l.b16 %v2911
    %v5326 = vunpack.c.h.b16 %v2911
    %v5327 = vunpack.c.l.b16 %v2912
    %v5328 = vunpack.c.h.b16 %v2912
    %v5329 = vunpack.c.l.b16 %v2913
    %v5330 = vunpack.c.h.b16 %v2913
    %v5331 = vunpack.c.l.b16 %v2914
    %v5332 = vunpack.c.h.b16 %v2914
    %v5333 = vunpack.c.l.b16 %v2915
    %v5334 = vunpack.c.h.b16 %v2915
    %v5335 = vunpack.c.l.b16 %v2916
    %v5336 = vunpack.c.h.b16 %v2916
    %v5337 = vunpack.c.l.b16 %v2917
    %v5338 = vunpack.c.h.b16 %v2917
    %v5339 = vunpack.c.l.b16 %v2918
    %v5340 = vunpack.c.h.b16 %v2918
    %v5341 = vunpack.c.l.b16 %v2919
    %v5342 = vunpack.c.h.b16 %v2919
    %v5343 = vunpack.c.l.b16 %v2920
    %v5344 = vunpack.c.h.b16 %v2920
    %v5345 = vunpack.c.l.b16 %v2921
    %v5346 = vunpack.c.h.b16 %v2921
    %v5347 = vunpack.c.l.b16 %v2922
    %v5348 = vunpack.c.h.b16 %v2922
    %v5349 = vunpack.c.l.b16 %v2923
    %v5350 = vunpack.c.h.b16 %v2923
    %v5351 = vunpack.c.l.b16 %v2924
    %v5352 = vunpack.c.h.b16 %v2924
    %v5353 = vunpack.c.l.b16 %v2925
    %v5354 = vunpack.c.h.b16 %v2925
    %v5355 = vunpack.c.l.b16 %v2926
    %v5356 = vunpack.c.h.b16 %v2926
    %v5357 = vunpack.c.l.b16 %v2927
    %v5358 = vunpack.c.h.b16 %v2927
    %v5359 = vunpack.c.l.b16 %v2928
    %v5360 = vunpack.c.h.b16 %v2928
    %v5361 = vunpack.c.l.b16 %v2929
    %v5362 = vunpack.c.h.b16 %v2929
    %v5363 = vunpack.c.l.b16 %v2930
    %v5364 = vunpack.c.h.b16 %v2930
    %v5365 = vunpack.c.l.b16 %v2931
    %v5366 = vunpack.c.h.b16 %v2931
    %v5367 = vunpack.c.l.b16 %v2932
    %v5368 = vunpack.c.h.b16 %v2932
    %v5369 = vunpack.c.l.b16 %v2933
    %v5370 = vunpack.c.h.b16 %v2933
    %v5371 = vunpack.c.l.b16 %v2934
    %v5372 = vunpack.c.h.b16 %v2934
    %v5373 = vunpack.c.l.b16 %v2935
    %v5374 = vunpack.c.h.b16 %v2935
    %v5375 = vunpack.c.l.b16 %v2936
    %v5376 = vunpack.c.h.b16 %v2936
    %v5377 = vunpack.c.l.b16 %v2937
    %v5378 = vunpack.c.h.b16 %v2937
    %v5379 = vunpack.c.l.b16 %v2938
    %v5380 = vunpack.c.h.b16 %v2938
    %v5381 = vunpack.c.l.b16 %v2939
    %v5382 = vunpack.c.h.b16 %v2939
    %v5383 = vunpack.c.l.b16 %v2940
    %v5384 = vunpack.c.h.b16 %v2940
    %v5385 = vunpack.c.l.b16 %v2941
    %v5386 = vunpack.c.h.b16 %v2941
    %v5387 = vunpack.c.l.b16 %v2942
    %v5388 = vunpack.c.h.b16 %v2942
    %v5389 = vunpack.c.l.b16 %v2943
    %v5390 = vunpack.c.h.b16 %v2943
    %v5391 = vunpack.c.l.b16 %v2944
    %v5392 = vunpack.c.h.b16 %v2944
    %v5393 = vunpack.c.l.b16 %v2945
    %v5394 = vunpack.c.h.b16 %v2945
    %v5395 = vunpack.c.l.b16 %v2946
    %v5396 = vunpack.c.h.b16 %v2946
    %v5397 = vunpack.c.l.b16 %v2947
    %v5398 = vunpack.c.h.b16 %v2947
    %v5399 = vunpack.c.l.b16 %v2948
    %v5400 = vunpack.c.h.b16 %v2948
    %v5401 = vunpack.c.l.b16 %v2949
    %v5402 = vunpack.c.h.b16 %v2949
    %v5403 = vunpack.c.l.b16 %v2950
    %v5404 = vunpack.c.h.b16 %v2950
    %v5405 = vunpack.c.l.b16 %v2951
    %v5406 = vunpack.c.h.b16 %v2951
    %v5407 = vunpack.c.l.b16 %v2952
    %v5408 = vunpack.c.h.b16 %v2952
    %v5409 = vunpack.c.l.b16 %v2953
    %v5410 = vunpack.c.h.b16 %v2953
    %v5411 = vunpack.c.l.b16 %v2954
    %v5412 = vunpack.c.h.b16 %v2954
    %v5413 = vunpack.c.l.b16 %v2955
    %v5414 = vunpack.c.h.b16 %v2955
    %v5415 = vunpack.c.l.b16 %v2956
    %v5416 = vunpack.c.h.b16 %v2956
    %v5417 = vunpack.c.l.b16 %v2957
    %v5418 = vunpack.c.h.b16 %v2957
    %v5419 = vunpack.c.l.b16 %v2958
    %v5420 = vunpack.c.h.b16 %v2958
    %v5421 = vunpack.c.l.b16 %v2959
    %v5422 = vunpack.c.h.b16 %v2959
    %v5423 = vunpack.c.l.b16 %v2960
    %v5424 = vunpack.c.h.b16 %v2960
    %v5425 = vunpack.c.l.b16 %v2961
    %v5426 = vunpack.c.h.b16 %v2961
    %v5427 = vunpack.c.l.b16 %v2962
    %v5428 = vunpack.c.h.b16 %v2962
    %v5429 = vunpack.c.l.b16 %v2963
    %v5430 = vunpack.c.h.b16 %v2963
    %v5431 = vunpack.c.l.b16 %v2964
    %v5432 = vunpack.c.h.b16 %v2964
    %v5433 = vunpack.c.l.b16 %v2965
    %v5434 = vunpack.c.h.b16 %v2965
    %v5435 = vunpack.c.l.b16 %v2966
    %v5436 = vunpack.c.h.b16 %v2966
    %v5437 = vunpack.c.l.b16 %v2967
    %v5438 = vunpack.c.h.b16 %v2967
    %v5439 = vunpack.c.l.b16 %v2968
    %v5440 = vunpack.c.h.b16 %v2968
    %v5441 = vunpack.c.l.b16 %v2969
    %v5442 = vunpack.c.h.b16 %v2969
    %v5443 = vunpack.c.l.b16 %v2970
    %v5444 = vunpack.c.h.b16 %v2970
    %v5445 = vunpack.c.l.b16 %v2971
    %v5446 = vunpack.c.h.b16 %v2971
    %v5447 = vunpack.c.l.b16 %v2972
    %v5448 = vunpack.c.h.b16 %v2972
    %v5449 = vunpack.c.l.b16 %v2973
    %v5450 = vunpack.c.h.b16 %v2973
    %v5451 = vunpack.c.l.b16 %v2974
    %v5452 = vunpack.c.h.b16 %v2974
    %v5453 = vunpack.c.l.b16 %v2975
    %v5454 = vunpack.c.h.b16 %v2975
    %v5455 = vunpack.c.l.b16 %v2976
    %v5456 = vunpack.c.h.b16 %v2976
    %v5457 = vunpack.c.l.b16 %v2977
    %v5458 = vunpack.c.h.b16 %v2977
    %v5459 = vunpack.c.l.b16 %v2978
    %v5460 = vunpack.c.h.b16 %v2978
    %v5461 = vunpack.c.l.b16 %v2979
    %v5462 = vunpack.c.h.b16 %v2979
    %v5463 = vunpack.c.l.b16 %v2980
    %v5464 = vunpack.c.h.b16 %v2980
    %v5465 = vunpack.c.l.b16 %v2981
    %v5466 = vunpack.c.h.b16 %v2981
    %v5467 = vunpack.c.l.b16 %v2982
    %v5468 = vunpack.c.h.b16 %v2982
    %v5469 = vunpack.c.l.b16 %v2983
    %v5470 = vunpack.c.h.b16 %v2983
    %v5471 = vunpack.c.l.b16 %v2984
    %v5472 = vunpack.c.h.b16 %v2984
    %v5473 = vunpack.c.l.b16 %v2985
    %v5474 = vunpack.c.h.b16 %v2985
    %v5475 = vunpack.c.l.b16 %v2986
    %v5476 = vunpack.c.h.b16 %v2986
    %v5477 = vunpack.c.l.b16 %v2987
    %v5478 = vunpack.c.h.b16 %v2987
    %v5479 = vunpack.c.l.b16 %v2988
    %v5480 = vunpack.c.h.b16 %v2988
    %v5481 = vunpack.c.l.b16 %v2989
    %v5482 = vunpack.c.h.b16 %v2989
    %v5483 = vunpack.c.l.b16 %v2990
    %v5484 = vunpack.c.h.b16 %v2990
    %v5485 = vunpack.c.l.b16 %v2991
    %v5486 = vunpack.c.h.b16 %v2991
    %v5487 = vunpack.c.l.b16 %v2992
    %v5488 = vunpack.c.h.b16 %v2992
    %v5489 = vunpack.c.l.b16 %v2993
    %v5490 = vunpack.c.h.b16 %v2993
    %v5491 = vunpack.c.l.b16 %v2994
    %v5492 = vunpack.c.h.b16 %v2994
    %v5493 = vunpack.c.l.b16 %v2995
    %v5494 = vunpack.c.h.b16 %v2995
    %v5495 = vunpack.c.l.b16 %v2996
    %v5496 = vunpack.c.h.b16 %v2996
    %v5497 = vunpack.c.l.b16 %v2997
    %v5498 = vunpack.c.h.b16 %v2997
    %v5499 = vunpack.c.l.b16 %v2998
    %v5500 = vunpack.c.h.b16 %v2998
    %v5501 = vunpack.c.l.b16 %v2999
    %v5502 = vunpack.c.h.b16 %v2999
    %v5503 = vunpack.c.l.b16 %v3000
    %v5504 = vunpack.c.h.b16 %v3000
    %v5505 = vunpack.c.l.b16 %v3001
    %v5506 = vunpack.c.h.b16 %v3001
    %v5507 = vunpack.c.l.b16 %v3002
    %v5508 = vunpack.c.h.b16 %v3002
    %v5509 = vunpack.c.l.b16 %v3003
    %v5510 = vunpack.c.h.b16 %v3003
    %v5511 = vunpack.c.l.b16 %v3004
    %v5512 = vunpack.c.h.b16 %v3004
    %v5513 = vunpack.c.l.b16 %v3005
    %v5514 = vunpack.c.h.b16 %v3005
    %v5515 = vunpack.c.l.b16 %v3006
    %v5516 = vunpack.c.h.b16 %v3006
    %v5517 = vunpack.c.l.b16 %v3007
    %v5518 = vunpack.c.h.b16 %v3007
    %v5519 = vunpack.c.l.b16 %v3008
    %v5520 = vunpack.c.h.b16 %v3008
    %v5521 = vunpack.c.l.b16 %v3009
    %v5522 = vunpack.c.h.b16 %v3009
    %v5523 = vunpack.c.l.b16 %v3010
    %v5524 = vunpack.c.h.b16 %v3010
    %v5525 = vunpack.c.l.b16 %v3011
    %v5526 = vunpack.c.h.b16 %v3011
    %v5527 = vunpack.c.l.b16 %v3012
    %v5528 = vunpack.c.h.b16 %v3012
    %v5529 = vunpack.c.l.b16 %v3013
    %v5530 = vunpack.c.h.b16 %v3013
    %v5531 = vunpack.c.l.b16 %v3014
    %v5532 = vunpack.c.h.b16 %v3014
    %v5533 = vunpack.c.l.b16 %v3015
    %v5534 = vunpack.c.h.b16 %v3015
    %v5535 = vunpack.c.l.b16 %v3016
    %v5536 = vunpack.c.h.b16 %v3016
    %v5537 = vunpack.c.l.b16 %v3017
    %v5538 = vunpack.c.h.b16 %v3017
    %v5539 = vunpack.c.l.b16 %v3018
    %v5540 = vunpack.c.h.b16 %v3018
    %v5541 = vunpack.c.l.b16 %v3019
    %v5542 = vunpack.c.h.b16 %v3019
    %v5543 = vunpack.c.l.b16 %v3020
    %v5544 = vunpack.c.h.b16 %v3020
    %v5545 = vunpack.c.l.b16 %v3021
    %v5546 = vunpack.c.h.b16 %v3021
    %v5547 = vunpack.c.l.b16 %v3022
    %v5548 = vunpack.c.h.b16 %v3022
    %v5549 = vunpack.c.l.b16 %v3023
    %v5550 = vunpack.c.h.b16 %v3023
    %v5551 = vunpack.c.l.b16 %v3024
    %v5552 = vunpack.c.h.b16 %v3024
    %v5553 = vunpack.c.l.b16 %v3025
    %v5554 = vunpack.c.h.b16 %v3025
    %v5555 = vunpack.c.l.b16 %v3026
    %v5556 = vunpack.c.h.b16 %v3026
    %v5557 = vunpack.c.l.b16 %v3027
    %v5558 = vunpack.c.h.b16 %v3027
    %v5559 = vunpack.c.l.b16 %v3028
    %v5560 = vunpack.c.h.b16 %v3028
    %v5561 = vunpack.c.l.b16 %v3029
    %v5562 = vunpack.c.h.b16 %v3029
    %v5563 = vunpack.c.l.b16 %v3030
    %v5564 = vunpack.c.h.b16 %v3030
    %v5565 = vunpack.c.l.b16 %v3031
    %v5566 = vunpack.c.h.b16 %v3031
    %v5567 = vunpack.c.l.b16 %v3032
    %v5568 = vunpack.c.h.b16 %v3032
    %v5569 = vunpack.c.l.b16 %v3033
    %v5570 = vunpack.c.h.b16 %v3033
    %v5571 = vunpack.c.l.b16 %v3034
    %v5572 = vunpack.c.h.b16 %v3034
    %v5573 = vunpack.c.l.b16 %v3035
    %v5574 = vunpack.c.h.b16 %v3035
    %v5575 = vunpack.c.l.b16 %v3036
    %v5576 = vunpack.c.h.b16 %v3036
    %v5577 = vunpack.c.l.b16 %v3037
    %v5578 = vunpack.c.h.b16 %v3037
    %v5579 = vunpack.c.l.b16 %v3038
    %v5580 = vunpack.c.h.b16 %v3038
    %v5581 = vunpack.c.l.b16 %v3039
    %v5582 = vunpack.c.h.b16 %v3039
    %v5583 = vunpack.c.l.b16 %v3040
    %v5584 = vunpack.c.h.b16 %v3040
    %v5585 = vunpack.c.l.b16 %v3041
    %v5586 = vunpack.c.h.b16 %v3041
    %v5587 = vunpack.c.l.b16 %v3042
    %v5588 = vunpack.c.h.b16 %v3042
    %v5589 = vunpack.c.l.b16 %v3043
    %v5590 = vunpack.c.h.b16 %v3043
    %v5591 = vunpack.c.l.b16 %v3044
    %v5592 = vunpack.c.h.b16 %v3044
    %v5593 = vunpack.c.l.b16 %v3045
    %v5594 = vunpack.c.h.b16 %v3045
    %v5595 = vunpack.c.l.b16 %v3046
    %v5596 = vunpack.c.h.b16 %v3046
    %v5597 = vunpack.c.l.b16 %v3047
    %v5598 = vunpack.c.h.b16 %v3047
    %v5599 = vunpack.c.l.b16 %v3048
    %v5600 = vunpack.c.h.b16 %v3048
    %v5601 = vunpack.c.l.b16 %v3049
    %v5602 = vunpack.c.h.b16 %v3049
    %v5603 = vunpack.c.l.b16 %v3050
    %v5604 = vunpack.c.h.b16 %v3050
    %v5605 = vunpack.c.l.b16 %v3051
    %v5606 = vunpack.c.h.b16 %v3051
    %v5607 = vunpack.c.l.b16 %v3052
    %v5608 = vunpack.c.h.b16 %v3052
    %v5609 = vunpack.c.l.b16 %v3053
    %v5610 = vunpack.c.h.b16 %v3053
    %v5611 = vunpack.c.l.b16 %v3054
    %v5612 = vunpack.c.h.b16 %v3054
    %v5613 = vunpack.c.l.b16 %v3055
    %v5614 = vunpack.c.h.b16 %v3055
    %v5615 = vunpack.c.l.b16 %v3056
    %v5616 = vunpack.c.h.b16 %v3056
    %v5617 = vunpack.c.l.b16 %v3057
    %v5618 = vunpack.c.h.b16 %v3057
    %v5619 = vunpack.c.l.b16 %v3058
    %v5620 = vunpack.c.h.b16 %v3058
    %v5621 = vunpack.c.l.b16 %v3059
    %v5622 = vunpack.c.h.b16 %v3059
    %v5623 = vunpack.c.l.b16 %v3060
    %v5624 = vunpack.c.h.b16 %v3060
    %v5625 = vunpack.c.l.b16 %v3061
    %v5626 = vunpack.c.h.b16 %v3061
    %v5627 = vunpack.c.l.b16 %v3062
    %v5628 = vunpack.c.h.b16 %v3062
    %v5629 = vunpack.c.l.b16 %v3063
    %v5630 = vunpack.c.h.b16 %v3063
    %v5631 = vunpack.c.l.b16 %v3064
    %v5632 = vunpack.c.h.b16 %v3064
    %v5633 = vunpack.c.l.b16 %v3065
    %v5634 = vunpack.c.h.b16 %v3065
    %v5635 = vunpack.c.l.b16 %v3066
    %v5636 = vunpack.c.h.b16 %v3066
    %v5637 = vunpack.c.l.b16 %v3067
    %v5638 = vunpack.c.h.b16 %v3067
    %v5639 = vunpack.c.l.b16 %v3068
    %v5640 = vunpack.c.h.b16 %v3068
    %v5641 = vunpack.c.l.b16 %v3069
    %v5642 = vunpack.c.h.b16 %v3069
    %v5643 = vunpack.c.l.b16 %v3070
    %v5644 = vunpack.c.h.b16 %v3070
    %v5645 = vunpack.c.l.b16 %v3071
    %v5646 = vunpack.c.h.b16 %v3071
    %v5647 = vunpack.c.l.b16 %v3072
    %v5648 = vunpack.c.h.b16 %v3072
    %v5649 = vunpack.c.l.b16 %v3073
    %v5650 = vunpack.c.h.b16 %v3073
    %v5651 = vunpack.c.l.b16 %v3074
    %v5652 = vunpack.c.h.b16 %v3074
    %v5653 = vunpack.c.l.b16 %v3075
    %v5654 = vunpack.c.h.b16 %v3075
    %v5655 = vunpack.c.l.b16 %v3076
    %v5656 = vunpack.c.h.b16 %v3076
    %v5657 = vunpack.c.l.b16 %v3077
    %v5658 = vunpack.c.h.b16 %v3077
    %v5659 = vunpack.c.l.b16 %v3078
    %v5660 = vunpack.c.h.b16 %v3078
    %v5661 = vunpack.c.l.b16 %v3079
    %v5662 = vunpack.c.h.b16 %v3079
    %v5663 = vunpack.c.l.b16 %v3080
    %v5664 = vunpack.c.h.b16 %v3080
    %v5665 = vunpack.c.l.b16 %v3081
    %v5666 = vunpack.c.h.b16 %v3081
    %v5667 = vunpack.c.l.b16 %v3082
    %v5668 = vunpack.c.h.b16 %v3082
    %v5669 = vunpack.c.l.b16 %v3083
    %v5670 = vunpack.c.h.b16 %v3083
    %v5671 = vunpack.c.l.b16 %v3084
    %v5672 = vunpack.c.h.b16 %v3084
    %v5673 = vunpack.c.l.b16 %v3085
    %v5674 = vunpack.c.h.b16 %v3085
    %v5675 = vunpack.c.l.b16 %v3086
    %v5676 = vunpack.c.h.b16 %v3086
    %v5677 = vunpack.c.l.b16 %v3087
    %v5678 = vunpack.c.h.b16 %v3087
    %v5679 = vunpack.c.l.b16 %v3088
    %v5680 = vunpack.c.h.b16 %v3088
    %v5681 = vunpack.c.l.b16 %v3089
    %v5682 = vunpack.c.h.b16 %v3089
    %v5683 = vunpack.c.l.b16 %v3090
    %v5684 = vunpack.c.h.b16 %v3090
    %v5685 = vunpack.c.l.b16 %v3091
    %v5686 = vunpack.c.h.b16 %v3091
    %v5687 = vunpack.c.l.b16 %v3092
    %v5688 = vunpack.c.h.b16 %v3092
    %v5689 = vunpack.c.l.b16 %v3093
    %v5690 = vunpack.c.h.b16 %v3093
    %v5691 = vunpack.c.l.b16 %v3094
    %v5692 = vunpack.c.h.b16 %v3094
    %v5693 = vunpack.c.l.b16 %v3095
    %v5694 = vunpack.c.h.b16 %v3095
    %v5695 = vunpack.c.l.b16 %v3096
    %v5696 = vunpack.c.h.b16 %v3096
    %v5697 = vunpack.c.l.b16 %v3097
    %v5698 = vunpack.c.h.b16 %v3097
    %v5699 = vunpack.c.l.b16 %v3098
    %v5700 = vunpack.c.h.b16 %v3098
    %v5701 = vunpack.c.l.b16 %v3099
    %v5702 = vunpack.c.h.b16 %v3099
    %v5703 = vunpack.c.l.b16 %v3100
    %v5704 = vunpack.c.h.b16 %v3100
    %v5705 = vunpack.c.l.b16 %v3101
    %v5706 = vunpack.c.h.b16 %v3101
    %v5707 = vunpack.c.l.b16 %v3102
    %v5708 = vunpack.c.h.b16 %v3102
    %v5709 = vunpack.c.l.b16 %v3103
    %v5710 = vunpack.c.h.b16 %v3103
    %v5711 = vunpack.c.l.b16 %v3104
    %v5712 = vunpack.c.h.b16 %v3104
    %v5713 = vunpack.c.l.b16 %v3105
    %v5714 = vunpack.c.h.b16 %v3105
    %v5715 = vunpack.c.l.b16 %v3106
    %v5716 = vunpack.c.h.b16 %v3106
    %v5717 = vunpack.c.l.b16 %v3107
    %v5718 = vunpack.c.h.b16 %v3107
    %v5719 = vunpack.c.l.b16 %v3108
    %v5720 = vunpack.c.h.b16 %v3108
    %v5721 = vunpack.c.l.b16 %v3109
    %v5722 = vunpack.c.h.b16 %v3109
    %v5723 = vunpack.c.l.b16 %v3110
    %v5724 = vunpack.c.h.b16 %v3110
    %v5725 = vunpack.c.l.b16 %v3111
    %v5726 = vunpack.c.h.b16 %v3111
    %v5727 = vunpack.c.l.b16 %v3112
    %v5728 = vunpack.c.h.b16 %v3112
    %v5729 = vunpack.c.l.b16 %v3113
    %v5730 = vunpack.c.h.b16 %v3113
    %v5731 = vunpack.c.l.b16 %v3114
    %v5732 = vunpack.c.h.b16 %v3114
    %v5733 = vunpack.c.l.b16 %v3115
    %v5734 = vunpack.c.h.b16 %v3115
    %v5735 = vunpack.c.l.b16 %v3116
    %v5736 = vunpack.c.h.b16 %v3116
    %v5737 = vunpack.c.l.b16 %v3117
    %v5738 = vunpack.c.h.b16 %v3117
    %v5739 = vunpack.c.l.b16 %v3118
    %v5740 = vunpack.c.h.b16 %v3118
    %v5741 = vunpack.c.l.b16 %v3119
    %v5742 = vunpack.c.h.b16 %v3119
    %v5743 = vunpack.c.l.b16 %v3120
    %v5744 = vunpack.c.h.b16 %v3120
    %v5745 = vunpack.c.l.b16 %v3121
    %v5746 = vunpack.c.h.b16 %v3121
    %v5747 = vunpack.c.l.b16 %v3122
    %v5748 = vunpack.c.h.b16 %v3122
    %v5749 = vunpack.c.l.b16 %v3123
    %v5750 = vunpack.c.h.b16 %v3123
    %v5751 = vunpack.c.l.b16 %v3124
    %v5752 = vunpack.c.h.b16 %v3124
    %v5753 = vunpack.c.l.b16 %v3125
    %v5754 = vunpack.c.h.b16 %v3125
    %v5755 = vunpack.c.l.b16 %v3126
    %v5756 = vunpack.c.h.b16 %v3126
    %v5757 = vunpack.c.l.b16 %v3127
    %v5758 = vunpack.c.h.b16 %v3127
    %v5759 = vunpack.c.l.b16 %v3128
    %v5760 = vunpack.c.h.b16 %v3128
    %v5761 = vunpack.c.l.b16 %v3129
    %v5762 = vunpack.c.h.b16 %v3129
    %v5763 = vunpack.c.l.b16 %v3130
    %v5764 = vunpack.c.h.b16 %v3130
    %v5765 = vunpack.c.l.b16 %v3131
    %v5766 = vunpack.c.h.b16 %v3131
    %v5767 = vunpack.c.l.b16 %v3132
    %v5768 = vunpack.c.h.b16 %v3132
    %v5769 = vunpack.c.l.b16 %v3133
    %v5770 = vunpack.c.h.b16 %v3133
    %v5771 = vunpack.c.l.b16 %v3134
    %v5772 = vunpack.c.h.b16 %v3134
    %v5773 = vunpack.c.l.b16 %v3135
    %v5774 = vunpack.c.h.b16 %v3135
    %v5775 = vunpack.c.l.b16 %v3136
    %v5776 = vunpack.c.h.b16 %v3136
    %v5777 = vunpack.c.l.b16 %v3137
    %v5778 = vunpack.c.h.b16 %v3137
    %v5779 = vunpack.c.l.b16 %v3138
    %v5780 = vunpack.c.h.b16 %v3138
    %v5781 = vunpack.c.l.b16 %v3139
    %v5782 = vunpack.c.h.b16 %v3139
    %v5783 = vunpack.c.l.b16 %v3140
    %v5784 = vunpack.c.h.b16 %v3140
    %v5785 = vunpack.c.l.b16 %v3141
    %v5786 = vunpack.c.h.b16 %v3141
    %v5787 = vunpack.c.l.b16 %v3142
    %v5788 = vunpack.c.h.b16 %v3142
    %v5789 = vunpack.c.l.b16 %v3143
    %v5790 = vunpack.c.h.b16 %v3143
    %v5791 = vunpack.c.l.b16 %v3144
    %v5792 = vunpack.c.h.b16 %v3144
    %v5793 = vunpack.c.l.b16 %v3145
    %v5794 = vunpack.c.h.b16 %v3145
    %v5795 = vunpack.c.l.b16 %v3146
    %v5796 = vunpack.c.h.b16 %v3146
    %v5797 = vunpack.c.l.b16 %v3147
    %v5798 = vunpack.c.h.b16 %v3147
    %v5799 = vunpack.c.l.b16 %v3148
    %v5800 = vunpack.c.h.b16 %v3148
    %v5801 = vunpack.c.l.b16 %v3149
    %v5802 = vunpack.c.h.b16 %v3149
    %v5803 = vunpack.c.l.b16 %v3150
    %v5804 = vunpack.c.h.b16 %v3150
    %v5805 = vunpack.c.l.b16 %v3151
    %v5806 = vunpack.c.h.b16 %v3151
    %v5807 = vunpack.c.l.b16 %v3152
    %v5808 = vunpack.c.h.b16 %v3152
    %v5809 = vunpack.c.l.b16 %v3153
    %v5810 = vunpack.c.h.b16 %v3153
    %v5811 = vunpack.c.l.b16 %v3154
    %v5812 = vunpack.c.h.b16 %v3154
    %v5813 = vunpack.c.l.b16 %v3155
    %v5814 = vunpack.c.h.b16 %v3155
    %v5815 = vunpack.c.l.b16 %v3156
    %v5816 = vunpack.c.h.b16 %v3156
    %v5817 = vunpack.c.l.b16 %v3157
    %v5818 = vunpack.c.h.b16 %v3157
    %v5819 = vunpack.c.l.b16 %v3158
    %v5820 = vunpack.c.h.b16 %v3158
    %v5821 = vunpack.c.l.b16 %v3159
    %v5822 = vunpack.c.h.b16 %v3159
    %v5823 = vunpack.c.l.b16 %v3160
    %v5824 = vunpack.c.h.b16 %v3160
    %v5825 = vunpack.c.l.b16 %v3161
    %v5826 = vunpack.c.h.b16 %v3161
    %v5827 = vunpack.c.l.b16 %v3162
    %v5828 = vunpack.c.h.b16 %v3162
    %v5829 = vunpack.c.l.b16 %v3163
    %v5830 = vunpack.c.h.b16 %v3163
    %v5831 = vunpack.c.l.b16 %v3164
    %v5832 = vunpack.c.h.b16 %v3164
    %v5833 = vunpack.c.l.b16 %v3165
    %v5834 = vunpack.c.h.b16 %v3165
    %v5835 = vunpack.c.l.b16 %v3166
    %v5836 = vunpack.c.h.b16 %v3166
    %v5837 = vunpack.c.l.b16 %v3167
    %v5838 = vunpack.c.h.b16 %v3167
    %v5839 = vunpack.c.l.b16 %v3168
    %v5840 = vunpack.c.h.b16 %v3168
    %v5841 = vunpack.c.l.b16 %v3169
    %v5842 = vunpack.c.h.b16 %v3169
    %v5843 = vunpack.c.l.b16 %v3170
    %v5844 = vunpack.c.h.b16 %v3170
    %v5845 = vunpack.c.l.b16 %v3171
    %v5846 = vunpack.c.h.b16 %v3171
    %v5847 = vunpack.c.l.b16 %v3172
    %v5848 = vunpack.c.h.b16 %v3172
    %v5849 = vunpack.c.l.b16 %v3173
    %v5850 = vunpack.c.h.b16 %v3173
    %v5851 = vunpack.c.l.b16 %v3174
    %v5852 = vunpack.c.h.b16 %v3174
    %v5853 = vunpack.c.l.b16 %v3175
    %v5854 = vunpack.c.h.b16 %v3175
    %v5855 = vunpack.c.l.b16 %v3176
    %v5856 = vunpack.c.h.b16 %v3176
    %v5857 = vunpack.c.l.b16 %v3177
    %v5858 = vunpack.c.h.b16 %v3177
    %v5859 = vunpack.c.l.b16 %v3178
    %v5860 = vunpack.c.h.b16 %v3178
    %v5861 = vunpack.c.l.b16 %v3179
    %v5862 = vunpack.c.h.b16 %v3179
    %v5863 = vunpack.c.l.b16 %v3180
    %v5864 = vunpack.c.h.b16 %v3180
    %v5865 = vunpack.c.l.b16 %v3181
    %v5866 = vunpack.c.h.b16 %v3181
    %v5867 = vunpack.c.l.b16 %v3182
    %v5868 = vunpack.c.h.b16 %v3182
    %v5869 = vunpack.c.l.b16 %v3183
    %v5870 = vunpack.c.h.b16 %v3183
    %v5871 = vunpack.c.l.b16 %v3184
    %v5872 = vunpack.c.h.b16 %v3184
    %v5873 = vunpack.c.l.b16 %v3185
    %v5874 = vunpack.c.h.b16 %v3185
    %v5875 = vunpack.c.l.b16 %v3186
    %v5876 = vunpack.c.h.b16 %v3186
    %v5877 = vunpack.c.l.b16 %v3187
    %v5878 = vunpack.c.h.b16 %v3187
    %v5879 = vunpack.c.l.b16 %v3188
    %v5880 = vunpack.c.h.b16 %v3188
    %v5881 = vunpack.c.l.b16 %v3189
    %v5882 = vunpack.c.h.b16 %v3189
    %v5883 = vunpack.c.l.b16 %v3190
    %v5884 = vunpack.c.h.b16 %v3190
    %v5885 = vunpack.c.l.b16 %v3191
    %v5886 = vunpack.c.h.b16 %v3191
    %v5887 = vunpack.c.l.b16 %v3192
    %v5888 = vunpack.c.h.b16 %v3192
    %v5889 = vunpack.c.l.b16 %v3193
    %v5890 = vunpack.c.h.b16 %v3193
    %v5891 = vunpack.c.l.b16 %v3194
    %v5892 = vunpack.c.h.b16 %v3194
    %v5893 = vunpack.c.l.b16 %v3195
    %v5894 = vunpack.c.h.b16 %v3195
    %v5895 = vunpack.c.l.b16 %v3196
    %v5896 = vunpack.c.h.b16 %v3196
    %v5897 = vunpack.c.l.b16 %v3197
    %v5898 = vunpack.c.h.b16 %v3197
    %v5899 = vunpack.c.l.b16 %v3198
    %v5900 = vunpack.c.h.b16 %v3198
    %v5901 = vunpack.c.l.b16 %v3199
    %v5902 = vunpack.c.h.b16 %v3199
    %v5903 = vunpack.c.l.b16 %v3200
    %v5904 = vunpack.c.h.b16 %v3200
    %v5905 = vunpack.c.l.b16 %v3201
    %v5906 = vunpack.c.h.b16 %v3201
    %v5907 = vunpack.c.l.b16 %v3202
    %v5908 = vunpack.c.h.b16 %v3202
    %v5909 = vunpack.c.l.b16 %v3203
    %v5910 = vunpack.c.h.b16 %v3203
    %v5911 = vunpack.c.l.b16 %v3204
    %v5912 = vunpack.c.h.b16 %v3204
    %v5913 = vunpack.c.l.b16 %v3205
    %v5914 = vunpack.c.h.b16 %v3205
    %v5915 = vunpack.c.l.b16 %v3206
    %v5916 = vunpack.c.h.b16 %v3206
    %v5917 = vunpack.c.l.b16 %v3207
    %v5918 = vunpack.c.h.b16 %v3207
    %v5919 = vunpack.c.l.b16 %v3208
    %v5920 = vunpack.c.h.b16 %v3208
    %v5921 = vunpack.c.l.b16 %v3209
    %v5922 = vunpack.c.h.b16 %v3209
    %v5923 = vunpack.c.l.b16 %v3210
    %v5924 = vunpack.c.h.b16 %v3210
    %v5925 = vunpack.c.l.b16 %v3211
    %v5926 = vunpack.c.h.b16 %v3211
    %v5927 = vunpack.c.l.b16 %v3212
    %v5928 = vunpack.c.h.b16 %v3212
    %v5929 = vunpack.c.l.b16 %v3213
    %v5930 = vunpack.c.h.b16 %v3213
    %v5931 = vunpack.c.l.b16 %v3214
    %v5932 = vunpack.c.h.b16 %v3214
    %v5933 = vunpack.c.l.b16 %v3215
    %v5934 = vunpack.c.h.b16 %v3215
    %v5935 = vunpack.c.l.b16 %v3216
    %v5936 = vunpack.c.h.b16 %v3216
    %v5937 = vunpack.c.l.b16 %v3217
    %v5938 = vunpack.c.h.b16 %v3217
    %v5939 = vunpack.c.l.b16 %v3218
    %v5940 = vunpack.c.h.b16 %v3218
    %v5941 = vunpack.c.l.b16 %v3219
    %v5942 = vunpack.c.h.b16 %v3219
    %v5943 = vunpack.c.l.b16 %v3220
    %v5944 = vunpack.c.h.b16 %v3220
    %v5945 = vunpack.c.l.b16 %v3221
    %v5946 = vunpack.c.h.b16 %v3221
    %v5947 = vunpack.c.l.b16 %v3222
    %v5948 = vunpack.c.h.b16 %v3222
    %v5949 = vunpack.c.l.b16 %v3223
    %v5950 = vunpack.c.h.b16 %v3223
    %v5951 = vunpack.c.l.b16 %v3224
    %v5952 = vunpack.c.h.b16 %v3224
    %v5953 = vunpack.c.l.b16 %v3225
    %v5954 = vunpack.c.h.b16 %v3225
    %v5955 = vunpack.c.l.b16 %v3226
    %v5956 = vunpack.c.h.b16 %v3226
    %v5957 = vunpack.c.l.b16 %v3227
    %v5958 = vunpack.c.h.b16 %v3227
    %v5959 = vunpack.c.l.b16 %v3228
    %v5960 = vunpack.c.h.b16 %v3228
    %v5961 = vunpack.c.l.b16 %v3229
    %v5962 = vunpack.c.h.b16 %v3229
    %v5963 = vunpack.c.l.b16 %v3230
    %v5964 = vunpack.c.h.b16 %v3230
    %v5965 = vunpack.c.l.b16 %v3231
    %v5966 = vunpack.c.h.b16 %v3231
    %v5967 = vunpack.c.l.b16 %v3232
    %v5968 = vunpack.c.h.b16 %v3232
    %v5969 = vunpack.c.l.b16 %v3233
    %v5970 = vunpack.c.h.b16 %v3233
    %v5971 = vunpack.c.l.b16 %v3234
    %v5972 = vunpack.c.h.b16 %v3234
    %v5973 = vunpack.c.l.b16 %v3235
    %v5974 = vunpack.c.h.b16 %v3235
    %v5975 = vunpack.c.l.b16 %v3236
    %v5976 = vunpack.c.h.b16 %v3236
    %v5977 = vunpack.c.l.b16 %v3237
    %v5978 = vunpack.c.h.b16 %v3237
    %v5979 = vunpack.c.l.b16 %v3238
    %v5980 = vunpack.c.h.b16 %v3238
    %v5981 = vunpack.c.l.b16 %v3239
    %v5982 = vunpack.c.h.b16 %v3239
    %v5983 = vunpack.c.l.b16 %v3240
    %v5984 = vunpack.c.h.b16 %v3240
    %v5985 = vunpack.c.l.b16 %v3241
    %v5986 = vunpack.c.h.b16 %v3241
    %v5987 = vunpack.c.l.b16 %v3242
    %v5988 = vunpack.c.h.b16 %v3242
    %v5989 = vunpack.c.l.b16 %v3243
    %v5990 = vunpack.c.h.b16 %v3243
    %v5991 = vunpack.c.l.b16 %v3244
    %v5992 = vunpack.c.h.b16 %v3244
    %v5993 = vunpack.c.l.b16 %v3245
    %v5994 = vunpack.c.h.b16 %v3245
    %v5995 = vunpack.c.l.b16 %v3246
    %v5996 = vunpack.c.h.b16 %v3246
    %v5997 = vunpack.c.l.b16 %v3247
    %v5998 = vunpack.c.h.b16 %v3247
    %v5999 = vunpack.c.l.b16 %v3248
    %v6000 = vunpack.c.h.b16 %v3248
    %v6001 = vunpack.c.l.b16 %v3249
    %v6002 = vunpack.c.h.b16 %v3249
    %v6003 = vunpack.c.l.b16 %v3250
    %v6004 = vunpack.c.h.b16 %v3250
    %v6005 = vunpack.c.l.b16 %v3251
    %v6006 = vunpack.c.h.b16 %v3251
    %v6007 = vunpack.c.l.b16 %v3252
    %v6008 = vunpack.c.h.b16 %v3252
    %v6009 = vunpack.c.l.b16 %v3253
    %v6010 = vunpack.c.h.b16 %v3253
    %v6011 = vunpack.c.l.b16 %v3254
    %v6012 = vunpack.c.h.b16 %v3254
    %v6013 = vunpack.c.l.b16 %v3255
    %v6014 = vunpack.c.h.b16 %v3255
    %v6015 = vunpack.c.l.b16 %v3256
    %v6016 = vunpack.c.h.b16 %v3256
    %v6017 = vunpack.c.l.b16 %v3257
    %v6018 = vunpack.c.h.b16 %v3257
    %v6019 = vunpack.c.l.b16 %v3258
    %v6020 = vunpack.c.h.b16 %v3258
    %v6021 = vunpack.c.l.b16 %v3259
    %v6022 = vunpack.c.h.b16 %v3259
    %v6023 = vunpack.c.l.b16 %v3260
    %v6024 = vunpack.c.h.b16 %v3260
    %v6025 = vunpack.c.l.b16 %v3261
    %v6026 = vunpack.c.h.b16 %v3261
    %v6027 = vunpack.c.l.b16 %v3262
    %v6028 = vunpack.c.h.b16 %v3262
    %v6029 = vunpack.c.l.b16 %v3263
    %v6030 = vunpack.c.h.b16 %v3263
    %v6031 = vunpack.c.l.b16 %v3264
    %v6032 = vunpack.c.h.b16 %v3264
    %v6033 = vunpack.c.l.b16 %v3265
    %v6034 = vunpack.c.h.b16 %v3265
    %v6035 = vunpack.c.l.b16 %v3266
    %v6036 = vunpack.c.h.b16 %v3266
    %v6037 = vunpack.c.l.b16 %v3267
    %v6038 = vunpack.c.h.b16 %v3267
    %v6039 = vunpack.c.l.b16 %v3268
    %v6040 = vunpack.c.h.b16 %v3268
    %v6041 = vunpack.c.l.b16 %v3269
    %v6042 = vunpack.c.h.b16 %v3269
    %v6043 = vunpack.c.l.b16 %v3270
    %v6044 = vunpack.c.h.b16 %v3270
    %v6045 = vunpack.c.l.b16 %v3271
    %v6046 = vunpack.c.h.b16 %v3271
    %v6047 = vunpack.c.l.b16 %v3272
    %v6048 = vunpack.c.h.b16 %v3272
    %v6049 = vunpack.c.l.b16 %v3273
    %v6050 = vunpack.c.h.b16 %v3273
    %v6051 = vunpack.c.l.b16 %v3274
    %v6052 = vunpack.c.h.b16 %v3274
    %v6053 = vunpack.c.l.b16 %v3275
    %v6054 = vunpack.c.h.b16 %v3275
    %v6055 = vunpack.c.l.b16 %v3276
    %v6056 = vunpack.c.h.b16 %v3276
    %v6057 = vunpack.c.l.b16 %v3277
    %v6058 = vunpack.c.h.b16 %v3277
    %v6059 = vunpack.c.l.b16 %v3278
    %v6060 = vunpack.c.h.b16 %v3278
    %v6061 = vunpack.c.l.b16 %v3279
    %v6062 = vunpack.c.h.b16 %v3279
    %v6063 = vunpack.c.l.b16 %v3280
    %v6064 = vunpack.c.h.b16 %v3280
    %v6065 = vunpack.c.l.b16 %v3281
    %v6066 = vunpack.c.h.b16 %v3281
    %v6067 = vunpack.c.l.b16 %v3282
    %v6068 = vunpack.c.h.b16 %v3282
    %v6069 = vunpack.c.l.b16 %v3283
    %v6070 = vunpack.c.h.b16 %v3283
    %v6071 = vunpack.c.l.b16 %v3284
    %v6072 = vunpack.c.h.b16 %v3284
    %v6073 = vunpack.c.l.b16 %v3285
    %v6074 = vunpack.c.h.b16 %v3285
    %v6075 = vunpack.c.l.b16 %v3286
    %v6076 = vunpack.c.h.b16 %v3286
    %v6077 = vunpack.c.l.b16 %v3287
    %v6078 = vunpack.c.h.b16 %v3287
    %v6079 = vunpack.c.l.b16 %v3288
    %v6080 = vunpack.c.h.b16 %v3288
    %v6081 = vunpack.c.l.b16 %v3289
    %v6082 = vunpack.c.h.b16 %v3289
    %v6083 = vunpack.c.l.b16 %v3290
    %v6084 = vunpack.c.h.b16 %v3290
    %v6085 = vunpack.c.l.b16 %v3291
    %v6086 = vunpack.c.h.b16 %v3291
    %v6087 = vunpack.c.l.b16 %v3292
    %v6088 = vunpack.c.h.b16 %v3292
    %v6089 = vunpack.c.l.b16 %v3293
    %v6090 = vunpack.c.h.b16 %v3293
    %v6091 = vunpack.c.l.b16 %v3294
    %v6092 = vunpack.c.h.b16 %v3294
    %v6093 = vunpack.c.l.b16 %v3295
    %v6094 = vunpack.c.h.b16 %v3295
    %v6095 = vunpack.c.l.b16 %v3296
    %v6096 = vunpack.c.h.b16 %v3296
    %v6097 = vunpack.c.l.b16 %v3297
    %v6098 = vunpack.c.h.b16 %v3297
    %v6099 = vunpack.c.l.b16 %v3298
    %v6100 = vunpack.c.h.b16 %v3298
    %v6101 = vunpack.c.l.b16 %v3299
    %v6102 = vunpack.c.h.b16 %v3299
    %v6103 = vunpack.c.l.b16 %v3300
    %v6104 = vunpack.c.h.b16 %v3300
    %v6105 = vunpack.c.l.b16 %v3301
    %v6106 = vunpack.c.h.b16 %v3301
    %v6107 = vunpack.c.l.b16 %v3302
    %v6108 = vunpack.c.h.b16 %v3302
    %v6109 = vunpack.c.l.b16 %v3303
    %v6110 = vunpack.c.h.b16 %v3303
    %v6111 = vunpack.c.l.b16 %v3304
    %v6112 = vunpack.c.h.b16 %v3304
    %v6113 = vunpack.c.l.b16 %v3305
    %v6114 = vunpack.c.h.b16 %v3305
    %v6115 = vunpack.c.l.b16 %v3306
    %v6116 = vunpack.c.h.b16 %v3306
    %v6117 = vunpack.c.l.b16 %v3307
    %v6118 = vunpack.c.h.b16 %v3307
    %v6119 = vunpack.c.l.b16 %v3308
    %v6120 = vunpack.c.h.b16 %v3308
    %v6121 = vunpack.c.l.b16 %v3309
    %v6122 = vunpack.c.h.b16 %v3309
    %v6123 = vunpack.c.l.b16 %v3310
    %v6124 = vunpack.c.h.b16 %v3310
    %v6125 = vunpack.c.l.b16 %v3311
    %v6126 = vunpack.c.h.b16 %v3311
    %v6127 = vunpack.c.l.b16 %v3312
    %v6128 = vunpack.c.h.b16 %v3312
    %v6129 = vunpack.c.l.b16 %v3313
    %v6130 = vunpack.c.h.b16 %v3313
    %v6131 = vunpack.c.l.b16 %v3314
    %v6132 = vunpack.c.h.b16 %v3314
    %v6133 = vunpack.c.l.b16 %v3315
    %v6134 = vunpack.c.h.b16 %v3315
    %v6135 = vunpack.c.l.b16 %v3316
    %v6136 = vunpack.c.h.b16 %v3316
    %v6137 = vunpack.c.l.b16 %v3317
    %v6138 = vunpack.c.h.b16 %v3317
    %v6139 = vunpack.c.l.b16 %v3318
    %v6140 = vunpack.c.h.b16 %v3318
    %v6141 = vunpack.c.l.b16 %v3319
    %v6142 = vunpack.c.h.b16 %v3319
    %v6143 = vunpack.c.l.b16 %v3320
    %v6144 = vunpack.c.h.b16 %v3320
    %v6145 = vunpack.c.l.b16 %v3321
    %v6146 = vunpack.c.h.b16 %v3321
    %v6147 = vunpack.c.l.b16 %v3322
    %v6148 = vunpack.c.h.b16 %v3322
    %v6149 = vunpack.c.l.b16 %v3323
    %v6150 = vunpack.c.h.b16 %v3323
    %v6151 = vunpack.c.l.b16 %v3324
    %v6152 = vunpack.c.h.b16 %v3324
    %v6153 = vunpack.c.l.b16 %v3325
    %v6154 = vunpack.c.h.b16 %v3325
    %v6155 = vunpack.c.l.b16 %v3326
    %v6156 = vunpack.c.h.b16 %v3326
    %v6157 = vunpack.c.l.b16 %v3327
    %v6158 = vunpack.c.h.b16 %v3327
    %v6159 = vunpack.c.l.b16 %v3328
    %v6160 = vunpack.c.h.b16 %v3328
    %v6161 = vunpack.c.l.b16 %v3329
    %v6162 = vunpack.c.h.b16 %v3329
    %v6163 = vunpack.c.l.b16 %v3330
    %v6164 = vunpack.c.h.b16 %v3330
    %v6165 = vunpack.c.l.b16 %v3331
    %v6166 = vunpack.c.h.b16 %v3331
    %v6167 = vunpack.c.l.b16 %v3332
    %v6168 = vunpack.c.h.b16 %v3332
    %v6169 = vunpack.c.l.b16 %v3333
    %v6170 = vunpack.c.h.b16 %v3333
    %v6171 = vunpack.c.l.b16 %v3334
    %v6172 = vunpack.c.h.b16 %v3334
    %v6173 = vunpack.c.l.b16 %v3335
    %v6174 = vunpack.c.h.b16 %v3335
    %v6175 = vunpack.c.l.b16 %v3336
    %v6176 = vunpack.c.h.b16 %v3336
    %v6177 = vunpack.c.l.b16 %v3337
    %v6178 = vunpack.c.h.b16 %v3337
    %v6179 = vunpack.c.l.b16 %v3338
    %v6180 = vunpack.c.h.b16 %v3338
    %v6181 = vunpack.c.l.b16 %v3339
    %v6182 = vunpack.c.h.b16 %v3339
    %v6183 = vunpack.c.l.b16 %v3340
    %v6184 = vunpack.c.h.b16 %v3340
    %v6185 = vunpack.c.l.b16 %v3341
    %v6186 = vunpack.c.h.b16 %v3341
    %v6187 = vunpack.c.l.b16 %v3342
    %v6188 = vunpack.c.h.b16 %v3342
    %v6189 = vunpack.c.l.b16 %v3343
    %v6190 = vunpack.c.h.b16 %v3343
    %v6191 = vunpack.c.l.b16 %v3344
    %v6192 = vunpack.c.h.b16 %v3344
    %v6193 = vunpack.c.l.b16 %v3345
    %v6194 = vunpack.c.h.b16 %v3345
    %v6195 = vunpack.c.l.b16 %v3346
    %v6196 = vunpack.c.h.b16 %v3346
    %v6197 = vunpack.c.l.b16 %v3347
    %v6198 = vunpack.c.h.b16 %v3347
    %v6199 = vunpack.c.l.b16 %v3348
    %v6200 = vunpack.c.h.b16 %v3348
    %v6201 = vunpack.c.l.b16 %v3349
    %v6202 = vunpack.c.h.b16 %v3349
    %v6203 = vunpack.c.l.b16 %v3350
    %v6204 = vunpack.c.h.b16 %v3350
    %v6205 = vunpack.c.l.b16 %v3351
    %v6206 = vunpack.c.h.b16 %v3351
    %v6207 = vunpack.c.l.b16 %v3352
    %v6208 = vunpack.c.h.b16 %v3352
    %v6209 = vunpack.c.l.b16 %v3353
    %v6210 = vunpack.c.h.b16 %v3353
    %v6211 = vunpack.c.l.b16 %v3354
    %v6212 = vunpack.c.h.b16 %v3354
    %v6213 = vunpack.c.l.b16 %v3355
    %v6214 = vunpack.c.h.b16 %v3355
    %v6215 = vunpack.c.l.b16 %v3356
    %v6216 = vunpack.c.h.b16 %v3356
    %v6217 = vunpack.c.l.b16 %v3357
    %v6218 = vunpack.c.h.b16 %v3357
    %v6219 = vunpack.c.l.b16 %v3358
    %v6220 = vunpack.c.h.b16 %v3358
    %v6221 = vunpack.c.l.b16 %v3359
    %v6222 = vunpack.c.h.b16 %v3359
    %v6223 = vunpack.c.l.b16 %v3360
    %v6224 = vunpack.c.h.b16 %v3360
    %v6225 = vunpack.c.l.b16 %v3361
    %v6226 = vunpack.c.h.b16 %v3361
    %v6227 = vunpack.c.l.b16 %v3362
    %v6228 = vunpack.c.h.b16 %v3362
    %v6229 = vunpack.c.l.b16 %v3363
    %v6230 = vunpack.c.h.b16 %v3363
    %v6231 = vunpack.c.l.b16 %v3364
    %v6232 = vunpack.c.h.b16 %v3364
    %v6233 = vunpack.c.l.b16 %v3365
    %v6234 = vunpack.c.h.b16 %v3365
    %v6235 = vunpack.c.l.b16 %v3366
    %v6236 = vunpack.c.h.b16 %v3366
    %v6237 = vunpack.c.l.b16 %v3367
    %v6238 = vunpack.c.h.b16 %v3367
    %v6239 = vunpack.c.l.b16 %v3368
    %v6240 = vunpack.c.h.b16 %v3368
    %v6241 = vunpack.c.l.b16 %v3369
    %v6242 = vunpack.c.h.b16 %v3369
    %v6243 = vunpack.c.l.b16 %v3370
    %v6244 = vunpack.c.h.b16 %v3370
    %v6245 = vunpack.c.l.b16 %v3371
    %v6246 = vunpack.c.h.b16 %v3371
    %v6247 = vunpack.c.l.b16 %v3372
    %v6248 = vunpack.c.h.b16 %v3372
    %v6249 = vunpack.c.l.b16 %v3373
    %v6250 = vunpack.c.h.b16 %v3373
    %v6251 = vunpack.c.l.b16 %v3374
    %v6252 = vunpack.c.h.b16 %v3374
    %v6253 = vunpack.c.l.b16 %v3375
    %v6254 = vunpack.c.h.b16 %v3375
    %v6255 = vunpack.c.l.b16 %v3376
    %v6256 = vunpack.c.h.b16 %v3376
    %v6257 = vunpack.c.l.b16 %v3377
    %v6258 = vunpack.c.h.b16 %v3377
    %v6259 = vunpack.c.l.b16 %v3378
    %v6260 = vunpack.c.h.b16 %v3378
    %v6261 = vunpack.c.l.b16 %v3379
    %v6262 = vunpack.c.h.b16 %v3379
    %v6263 = vunpack.c.l.b16 %v3380
    %v6264 = vunpack.c.h.b16 %v3380
    %v6265 = vunpack.c.l.b16 %v3381
    %v6266 = vunpack.c.h.b16 %v3381
    %v6267 = vunpack.c.l.b16 %v3382
    %v6268 = vunpack.c.h.b16 %v3382
    %v6269 = vunpack.c.l.b16 %v3383
    %v6270 = vunpack.c.h.b16 %v3383
    %v6271 = vunpack.c.l.b16 %v3384
    %v6272 = vunpack.c.h.b16 %v3384
    %v6273 = vunpack.c.l.b16 %v3385
    %v6274 = vunpack.c.h.b16 %v3385
    %v6275 = vunpack.c.l.b16 %v3386
    %v6276 = vunpack.c.h.b16 %v3386
    %v6277 = vunpack.c.l.b16 %v3387
    %v6278 = vunpack.c.h.b16 %v3387
    %v6279 = vunpack.c.l.b16 %v3388
    %v6280 = vunpack.c.h.b16 %v3388
    %v6281 = vunpack.c.l.b16 %v3389
    %v6282 = vunpack.c.h.b16 %v3389
    %v6283 = vunpack.c.l.b16 %v3390
    %v6284 = vunpack.c.h.b16 %v3390
    %v6285 = vunpack.c.l.b16 %v3391
    %v6286 = vunpack.c.h.b16 %v3391
    %v6287 = vunpack.c.l.b16 %v3392
    %v6288 = vunpack.c.h.b16 %v3392
    %v6289 = vunpack.c.l.b16 %v3393
    %v6290 = vunpack.c.h.b16 %v3393
    %v6291 = vunpack.c.l.b16 %v3394
    %v6292 = vunpack.c.h.b16 %v3394
    %v6293 = vunpack.c.l.b16 %v3395
    %v6294 = vunpack.c.h.b16 %v3395
    %v6295 = vunpack.c.l.b16 %v3396
    %v6296 = vunpack.c.h.b16 %v3396
    %v6297 = vunpack.c.l.b16 %v3397
    %v6298 = vunpack.c.h.b16 %v3397
    %v6299 = vunpack.c.l.b16 %v3398
    %v6300 = vunpack.c.h.b16 %v3398
    %v6301 = vunpack.c.l.b16 %v3399
    %v6302 = vunpack.c.h.b16 %v3399
    %v6303 = vunpack.c.l.b16 %v3400
    %v6304 = vunpack.c.h.b16 %v3400
    %v6305 = vunpack.c.l.b16 %v3401
    %v6306 = vunpack.c.h.b16 %v3401
    %v6307 = vunpack.c.l.b16 %v3402
    %v6308 = vunpack.c.h.b16 %v3402
    %v6309 = vunpack.c.l.b16 %v3403
    %v6310 = vunpack.c.h.b16 %v3403
    %v6311 = vunpack.c.l.b16 %v3404
    %v6312 = vunpack.c.h.b16 %v3404
    %v6313 = vunpack.c.l.b16 %v3405
    %v6314 = vunpack.c.h.b16 %v3405
    %v6315 = vunpack.c.l.b16 %v3406
    %v6316 = vunpack.c.h.b16 %v3406
    %v6317 = vunpack.c.l.b16 %v3407
    %v6318 = vunpack.c.h.b16 %v3407
    %v6319 = vunpack.c.l.b16 %v3408
    %v6320 = vunpack.c.h.b16 %v3408
    %v6321 = vunpack.c.l.b16 %v3409
    %v6322 = vunpack.c.h.b16 %v3409
    %v6323 = vunpack.c.l.b16 %v3410
    %v6324 = vunpack.c.h.b16 %v3410
    %v6325 = vunpack.c.l.b16 %v3411
    %v6326 = vunpack.c.h.b16 %v3411
    %v6327 = vunpack.c.l.b16 %v3412
    %v6328 = vunpack.c.h.b16 %v3412
    %v6329 = vunpack.c.l.b16 %v3413
    %v6330 = vunpack.c.h.b16 %v3413
    %v6331 = vunpack.c.l.b16 %v3414
    %v6332 = vunpack.c.h.b16 %v3414
    %v6333 = vunpack.c.l.b16 %v3415
    %v6334 = vunpack.c.h.b16 %v3415
    %v6335 = vunpack.c.l.b16 %v3416
    %v6336 = vunpack.c.h.b16 %v3416
    %v6337 = vunpack.c.l.b16 %v3417
    %v6338 = vunpack.c.h.b16 %v3417
    %v6339 = vunpack.c.l.b16 %v3418
    %v6340 = vunpack.c.h.b16 %v3418
    %v6341 = vunpack.c.l.b16 %v3419
    %v6342 = vunpack.c.h.b16 %v3419
    %v6343 = vunpack.c.l.b16 %v3420
    %v6344 = vunpack.c.h.b16 %v3420
    %v6345 = vunpack.c.l.b16 %v3421
    %v6346 = vunpack.c.h.b16 %v3421
    %v6347 = vunpack.c.l.b16 %v3422
    %v6348 = vunpack.c.h.b16 %v3422
    %v6349 = vunpack.c.l.b16 %v3423
    %v6350 = vunpack.c.h.b16 %v3423
    %v6351 = vunpack.c.l.b16 %v3424
    %v6352 = vunpack.c.h.b16 %v3424
    %v6353 = vunpack.c.l.b16 %v3425
    %v6354 = vunpack.c.h.b16 %v3425
    %v6355 = vunpack.c.l.b16 %v3426
    %v6356 = vunpack.c.h.b16 %v3426
    %v6357 = vunpack.c.l.b16 %v3427
    %v6358 = vunpack.c.h.b16 %v3427
    %v6359 = vunpack.c.l.b16 %v3428
    %v6360 = vunpack.c.h.b16 %v3428
    %v6361 = vunpack.c.l.b16 %v3429
    %v6362 = vunpack.c.h.b16 %v3429
    %v6363 = vunpack.c.l.b16 %v3430
    %v6364 = vunpack.c.h.b16 %v3430
    %v6365 = vunpack.c.l.b16 %v3431
    %v6366 = vunpack.c.h.b16 %v3431
    %v6367 = vunpack.c.l.b16 %v3432
    %v6368 = vunpack.c.h.b16 %v3432
    %v6369 = vunpack.c.l.b16 %v3433
    %v6370 = vunpack.c.h.b16 %v3433
    %v6371 = vunpack.c.l.b16 %v3434
    %v6372 = vunpack.c.h.b16 %v3434
    %v6373 = vunpack.c.l.b16 %v3435
    %v6374 = vunpack.c.h.b16 %v3435
    %v6375 = vunpack.c.l.b16 %v3436
    %v6376 = vunpack.c.h.b16 %v3436
    %v6377 = vunpack.c.l.b16 %v3437
    %v6378 = vunpack.c.h.b16 %v3437
    %v6379 = vunpack.c.l.b16 %v3438
    %v6380 = vunpack.c.h.b16 %v3438
    %v6381 = vunpack.c.l.b16 %v3439
    %v6382 = vunpack.c.h.b16 %v3439
    %v6383 = vunpack.c.l.b16 %v3440
    %v6384 = vunpack.c.h.b16 %v3440
    %v6385 = vunpack.c.l.b16 %v3441
    %v6386 = vunpack.c.h.b16 %v3441
    %v6387 = vunpack.c.l.b16 %v3442
    %v6388 = vunpack.c.h.b16 %v3442
    %v6389 = vunpack.c.l.b16 %v3443
    %v6390 = vunpack.c.h.b16 %v3443
    %v6391 = vunpack.c.l.b16 %v3444
    %v6392 = vunpack.c.h.b16 %v3444
    %v6393 = vunpack.c.l.b16 %v3445
    %v6394 = vunpack.c.h.b16 %v3445
    %v6395 = vunpack.c.l.b16 %v3446
    %v6396 = vunpack.c.h.b16 %v3446
    %v6397 = vunpack.c.l.b16 %v3447
    %v6398 = vunpack.c.h.b16 %v3447
    %v6399 = vunpack.c.l.b16 %v3448
    %v6400 = vunpack.c.h.b16 %v3448
    %v6401 = vunpack.c.l.b16 %v3449
    %v6402 = vunpack.c.h.b16 %v3449
    %v6403 = vunpack.c.l.b16 %v3450
    %v6404 = vunpack.c.h.b16 %v3450
    %v6405 = vunpack.c.l.b16 %v3451
    %v6406 = vunpack.c.h.b16 %v3451
    %v6407 = vunpack.c.l.b16 %v3452
    %v6408 = vunpack.c.h.b16 %v3452
    %v6409 = vunpack.c.l.b16 %v3453
    %v6410 = vunpack.c.h.b16 %v3453
    %v6411 = vunpack.c.l.b16 %v3454
    %v6412 = vunpack.c.h.b16 %v3454
    %v6413 = vunpack.c.l.b16 %v3455
    %v6414 = vunpack.c.h.b16 %v3455
    %v6415 = vunpack.c.l.b16 %v3456
    %v6416 = vunpack.c.h.b16 %v3456
    %v6417 = vunpack.c.l.b16 %v3457
    %v6418 = vunpack.c.h.b16 %v3457
    %v6419 = vunpack.c.l.b16 %v3458
    %v6420 = vunpack.c.h.b16 %v3458
    %v6421 = vunpack.c.l.b16 %v3459
    %v6422 = vunpack.c.h.b16 %v3459
    %v6423 = vunpack.c.l.b16 %v3460
    %v6424 = vunpack.c.h.b16 %v3460
    %v6425 = vunpack.c.l.b16 %v3461
    %v6426 = vunpack.c.h.b16 %v3461
    %v6427 = vunpack.c.l.b16 %v3462
    %v6428 = vunpack.c.h.b16 %v3462
    %v6429 = vunpack.c.l.b16 %v3463
    %v6430 = vunpack.c.h.b16 %v3463
    %v6431 = vunpack.c.l.b16 %v3464
    %v6432 = vunpack.c.h.b16 %v3464
    %v6433 = vunpack.c.l.b16 %v3465
    %v6434 = vunpack.c.h.b16 %v3465
    %v6435 = vunpack.c.l.b16 %v3466
    %v6436 = vunpack.c.h.b16 %v3466
    %v6437 = vunpack.c.l.b16 %v3467
    %v6438 = vunpack.c.h.b16 %v3467
    %v6439 = vunpack.c.l.b16 %v3468
    %v6440 = vunpack.c.h.b16 %v3468
    %v6441 = vunpack.c.l.b16 %v3469
    %v6442 = vunpack.c.h.b16 %v3469
    %v6443 = vunpack.c.l.b16 %v3470
    %v6444 = vunpack.c.h.b16 %v3470
    %v6445 = vunpack.c.l.b16 %v3471
    %v6446 = vunpack.c.h.b16 %v3471
    %v6447 = vunpack.c.l.b16 %v3472
    %v6448 = vunpack.c.h.b16 %v3472
    %v6449 = vunpack.c.l.b16 %v3473
    %v6450 = vunpack.c.h.b16 %v3473
    %v6451 = vunpack.c.l.b16 %v3474
    %v6452 = vunpack.c.h.b16 %v3474
    %v6453 = vunpack.c.l.b16 %v3475
    %v6454 = vunpack.c.h.b16 %v3475
    %v6455 = vunpack.c.l.b16 %v3476
    %v6456 = vunpack.c.h.b16 %v3476
    %v6457 = vunpack.c.l.b16 %v3477
    %v6458 = vunpack.c.h.b16 %v3477
    %v6459 = vunpack.c.l.b16 %v3478
    %v6460 = vunpack.c.h.b16 %v3478
    %v6461 = vunpack.c.l.b16 %v3479
    %v6462 = vunpack.c.h.b16 %v3479
    %v6463 = vunpack.c.l.b16 %v3480
    %v6464 = vunpack.c.h.b16 %v3480
    %v6465 = vunpack.c.l.b16 %v3481
    %v6466 = vunpack.c.h.b16 %v3481
    %v6467 = vunpack.c.l.b16 %v3482
    %v6468 = vunpack.c.h.b16 %v3482
    %v6469 = vunpack.c.l.b16 %v3483
    %v6470 = vunpack.c.h.b16 %v3483
    %v6471 = vunpack.c.l.b16 %v3484
    %v6472 = vunpack.c.h.b16 %v3484
    %v6473 = vunpack.c.l.b16 %v3485
    %v6474 = vunpack.c.h.b16 %v3485
    %v6475 = vunpack.c.l.b16 %v3486
    %v6476 = vunpack.c.h.b16 %v3486
    %v6477 = vunpack.c.l.b16 %v3487
    %v6478 = vunpack.c.h.b16 %v3487
    %v6479 = vunpack.c.l.b16 %v3488
    %v6480 = vunpack.c.h.b16 %v3488
    %v6481 = vunpack.c.l.b16 %v3489
    %v6482 = vunpack.c.h.b16 %v3489
    %v6483 = vunpack.c.l.b16 %v3490
    %v6484 = vunpack.c.h.b16 %v3490
    %v6485 = vunpack.c.l.b16 %v3491
    %v6486 = vunpack.c.h.b16 %v3491
    %v6487 = vunpack.c.l.b16 %v3492
    %v6488 = vunpack.c.h.b16 %v3492
    %v6489 = vunpack.c.l.b16 %v3493
    %v6490 = vunpack.c.h.b16 %v3493
    %v6491 = vunpack.c.l.b16 %v3494
    %v6492 = vunpack.c.h.b16 %v3494
    %v6493 = vunpack.c.l.b16 %v3495
    %v6494 = vunpack.c.h.b16 %v3495
    %v6495 = vunpack.c.l.b16 %v3496
    %v6496 = vunpack.c.h.b16 %v3496
    %v6497 = vunpack.c.l.b16 %v3497
    %v6498 = vunpack.c.h.b16 %v3497
    %v6499 = vunpack.c.l.b16 %v3498
    %v6500 = vunpack.c.h.b16 %v3498
    %v6501 = vunpack.c.l.b16 %v3499
    %v6502 = vunpack.c.h.b16 %v3499
    %v6503 = vunpack.c.l.b16 %v3500
    %v6504 = vunpack.c.h.b16 %v3500
    %v6505 = vunpack.c.l.b16 %v3501
    %v6506 = vunpack.c.h.b16 %v3501
    %v6507 = vunpack.c.l.b16 %v3502
    %v6508 = vunpack.c.h.b16 %v3502
    %v6509 = vunpack.c.l.b16 %v3503
    %v6510 = vunpack.c.h.b16 %v3503
    %v6511 = vunpack.c.l.b16 %v3504
    %v6512 = vunpack.c.h.b16 %v3504
    %v6513 = vunpack.c.l.b16 %v3505
    %v6514 = vunpack.c.h.b16 %v3505
    %v6515 = vunpack.c.l.b16 %v3506
    %v6516 = vunpack.c.h.b16 %v3506
    %v6517 = vunpack.c.l.b16 %v3507
    %v6518 = vunpack.c.h.b16 %v3507
    %v6519 = vunpack.c.l.b16 %v3508
    %v6520 = vunpack.c.h.b16 %v3508
    %v6521 = vunpack.c.l.b16 %v3509
    %v6522 = vunpack.c.h.b16 %v3509
    %v6523 = vunpack.c.l.b16 %v3510
    %v6524 = vunpack.c.h.b16 %v3510
    %v6525 = vunpack.c.l.b16 %v3511
    %v6526 = vunpack.c.h.b16 %v3511
    %v6527 = vunpack.c.l.b16 %v3512
    %v6528 = vunpack.c.h.b16 %v3512
    %v6529 = vunpack.c.l.b16 %v3513
    %v6530 = vunpack.c.h.b16 %v3513
    %v6531 = vunpack.c.l.b16 %v3514
    %v6532 = vunpack.c.h.b16 %v3514
    %v6533 = vunpack.c.l.b16 %v3515
    %v6534 = vunpack.c.h.b16 %v3515
    %v6535 = vunpack.c.l.b16 %v3516
    %v6536 = vunpack.c.h.b16 %v3516
    %v6537 = vunpack.c.l.b16 %v3517
    %v6538 = vunpack.c.h.b16 %v3517
    %v6539 = vunpack.c.l.b16 %v3518
    %v6540 = vunpack.c.h.b16 %v3518
    %v6541 = vunpack.c.l.b16 %v3519
    %v6542 = vunpack.c.h.b16 %v3519
    %v6543 = vunpack.c.l.b16 %v3520
    %v6544 = vunpack.c.h.b16 %v3520
    %v6545 = vunpack.c.l.b16 %v3521
    %v6546 = vunpack.c.h.b16 %v3521
    %v6547 = vunpack.c.l.b16 %v3522
    %v6548 = vunpack.c.h.b16 %v3522
    %v6549 = vunpack.c.l.b16 %v3523
    %v6550 = vunpack.c.h.b16 %v3523
    %v6551 = vunpack.c.l.b16 %v3524
    %v6552 = vunpack.c.h.b16 %v3524
    %v6553 = vunpack.c.l.b16 %v3525
    %v6554 = vunpack.c.h.b16 %v3525
    %v6555 = vunpack.c.l.b16 %v3526
    %v6556 = vunpack.c.h.b16 %v3526
    %v6557 = vunpack.c.l.b16 %v3527
    %v6558 = vunpack.c.h.b16 %v3527
    %v6559 = vunpack.c.l.b16 %v3528
    %v6560 = vunpack.c.h.b16 %v3528
    %v6561 = vunpack.c.l.b16 %v3529
    %v6562 = vunpack.c.h.b16 %v3529
    %v6563 = vunpack.c.l.b16 %v3530
    %v6564 = vunpack.c.h.b16 %v3530
    %v6565 = vunpack.c.l.b16 %v3531
    %v6566 = vunpack.c.h.b16 %v3531
    %v6567 = vunpack.c.l.b16 %v3532
    %v6568 = vunpack.c.h.b16 %v3532
    %v6569 = vunpack.c.l.b16 %v3533
    %v6570 = vunpack.c.h.b16 %v3533
    %v6571 = vunpack.c.l.b16 %v3534
    %v6572 = vunpack.c.h.b16 %v3534
    %v6573 = vunpack.c.l.b16 %v3535
    %v6574 = vunpack.c.h.b16 %v3535
    %v6575 = vunpack.c.l.b16 %v3536
    %v6576 = vunpack.c.h.b16 %v3536
    %v6577 = vunpack.c.l.b16 %v3537
    %v6578 = vunpack.c.h.b16 %v3537
    %v6579 = vunpack.c.l.b16 %v3538
    %v6580 = vunpack.c.h.b16 %v3538
    %v6581 = vunpack.c.l.b16 %v3539
    %v6582 = vunpack.c.h.b16 %v3539
    %v6583 = vunpack.c.l.b16 %v3540
    %v6584 = vunpack.c.h.b16 %v3540
    %v6585 = vunpack.c.l.b16 %v3541
    %v6586 = vunpack.c.h.b16 %v3541
    %v6587 = vunpack.c.l.b16 %v3542
    %v6588 = vunpack.c.h.b16 %v3542
    %v6589 = vunpack.c.l.b16 %v3543
    %v6590 = vunpack.c.h.b16 %v3543
    %v6591 = vunpack.c.l.b16 %v3544
    %v6592 = vunpack.c.h.b16 %v3544
    %v6593 = vunpack.c.l.b16 %v3545
    %v6594 = vunpack.c.h.b16 %v3545
    %v6595 = vunpack.c.l.b16 %v3546
    %v6596 = vunpack.c.h.b16 %v3546
    %v6597 = vunpack.c.l.b16 %v3547
    %v6598 = vunpack.c.h.b16 %v3547
    %v6599 = vunpack.c.l.b16 %v3548
    %v6600 = vunpack.c.h.b16 %v3548
    %v6601 = vunpack.c.l.b16 %v3549
    %v6602 = vunpack.c.h.b16 %v3549
    %v6603 = vunpack.c.l.b16 %v3550
    %v6604 = vunpack.c.h.b16 %v3550
    %v6605 = vunpack.c.l.b16 %v3551
    %v6606 = vunpack.c.h.b16 %v3551
    %v6607 = vunpack.c.l.b16 %v3552
    %v6608 = vunpack.c.h.b16 %v3552
    %v6609 = vunpack.c.l.b16 %v3553
    %v6610 = vunpack.c.h.b16 %v3553
    %v6611 = vunpack.c.l.b16 %v3554
    %v6612 = vunpack.c.h.b16 %v3554
    %v6613 = vunpack.c.l.b16 %v3555
    %v6614 = vunpack.c.h.b16 %v3555
    %v6615 = vunpack.c.l.b16 %v3556
    %v6616 = vunpack.c.h.b16 %v3556
    %v6617 = vunpack.c.l.b16 %v3557
    %v6618 = vunpack.c.h.b16 %v3557
    %v6619 = vunpack.c.l.b16 %v3558
    %v6620 = vunpack.c.h.b16 %v3558
    %v6621 = vunpack.c.l.b16 %v3559
    %v6622 = vunpack.c.h.b16 %v3559
    %v6623 = vunpack.c.l.b16 %v3560
    %v6624 = vunpack.c.h.b16 %v3560
    %v6625 = vunpack.c.l.b16 %v3561
    %v6626 = vunpack.c.h.b16 %v3561
    %v6627 = vunpack.c.l.b16 %v3562
    %v6628 = vunpack.c.h.b16 %v3562
    %v6629 = vunpack.c.l.b16 %v3563
    %v6630 = vunpack.c.h.b16 %v3563
    %v6631 = vunpack.c.l.b16 %v3564
    %v6632 = vunpack.c.h.b16 %v3564
    %v6633 = vunpack.c.l.b16 %v3565
    %v6634 = vunpack.c.h.b16 %v3565
    %v6635 = vunpack.c.l.b16 %v3566
    %v6636 = vunpack.c.h.b16 %v3566
    %v6637 = vunpack.c.l.b16 %v3567
    %v6638 = vunpack.c.h.b16 %v3567
    %v6639 = vunpack.c.l.b16 %v3568
    %v6640 = vunpack.c.h.b16 %v3568
    %v6641 = vunpack.c.l.b16 %v3569
    %v6642 = vunpack.c.h.b16 %v3569
    %v6643 = vunpack.c.l.b16 %v3570
    %v6644 = vunpack.c.h.b16 %v3570
    %v6645 = vunpack.c.l.b16 %v3571
    %v6646 = vunpack.c.h.b16 %v3571
    %v6647 = vunpack.c.l.b16 %v3572
    %v6648 = vunpack.c.h.b16 %v3572
    %v6649 = vunpack.c.l.b16 %v3573
    %v6650 = vunpack.c.h.b16 %v3573
    %v6651 = vunpack.c.l.b16 %v3574
    %v6652 = vunpack.c.h.b16 %v3574
    %v6653 = vunpack.c.l.b16 %v3575
    %v6654 = vunpack.c.h.b16 %v3575
    %v6655 = vunpack.c.l.b16 %v3576
    %v6656 = vunpack.c.h.b16 %v3576
    %v6657 = vunpack.c.l.b16 %v3577
    %v6658 = vunpack.c.h.b16 %v3577
    %v6659 = vunpack.c.l.b16 %v3578
    %v6660 = vunpack.c.h.b16 %v3578
    %v6661 = vunpack.c.l.b16 %v3579
    %v6662 = vunpack.c.h.b16 %v3579
    %v6663 = vunpack.c.l.b16 %v3580
    %v6664 = vunpack.c.h.b16 %v3580
    %v6665 = vunpack.c.l.b16 %v3581
    %v6666 = vunpack.c.h.b16 %v3581
    %v6667 = vunpack.c.l.b16 %v3582
    %v6668 = vunpack.c.h.b16 %v3582
    %v6669 = vunpack.c.l.b16 %v3583
    %v6670 = vunpack.c.h.b16 %v3583
    %v6671 = vunpack.c.l.b16 %v3584
    %v6672 = vunpack.c.h.b16 %v3584
    %v6673 = vunpack.c.l.b16 %v3585
    %v6674 = vunpack.c.h.b16 %v3585
    %v6675 = vunpack.c.l.b16 %v3586
    %v6676 = vunpack.c.h.b16 %v3586
    %v6677 = vunpack.c.l.b16 %v3587
    %v6678 = vunpack.c.h.b16 %v3587
    %v6679 = vunpack.c.l.b16 %v3588
    %v6680 = vunpack.c.h.b16 %v3588
    %v6681 = vunpack.c.l.b16 %v3589
    %v6682 = vunpack.c.h.b16 %v3589
    %v6683 = vunpack.c.l.b16 %v3590
    %v6684 = vunpack.c.h.b16 %v3590
    %v6685 = vunpack.c.l.b16 %v3591
    %v6686 = vunpack.c.h.b16 %v3591
    %v6687 = vunpack.c.l.b16 %v3592
    %v6688 = vunpack.c.h.b16 %v3592
    %v6689 = vunpack.c.l.b16 %v3593
    %v6690 = vunpack.c.h.b16 %v3593
    %v6691 = vunpack.c.l.b16 %v3594
    %v6692 = vunpack.c.h.b16 %v3594
    %v6693 = vunpack.c.l.b16 %v3595
    %v6694 = vunpack.c.h.b16 %v3595
    %v6695 = vunpack.c.l.b16 %v3596
    %v6696 = vunpack.c.h.b16 %v3596
    %v6697 = vunpack.c.l.b16 %v3597
    %v6698 = vunpack.c.h.b16 %v3597
    %v6699 = vunpack.c.l.b16 %v3598
    %v6700 = vunpack.c.h.b16 %v3598
    %v6701 = vunpack.c.l.b16 %v3599
    %v6702 = vunpack.c.h.b16 %v3599
    %v6703 = vunpack.c.l.b16 %v3600
    %v6704 = vunpack.c.h.b16 %v3600
    %v6705 = vunpack.c.l.b16 %v3601
    %v6706 = vunpack.c.h.b16 %v3601
    %v6707 = vunpack.c.l.b16 %v3602
    %v6708 = vunpack.c.h.b16 %v3602
    %v6709 = vunpack.c.l.b16 %v3603
    %v6710 = vunpack.c.h.b16 %v3603
    %v6711 = vunpack.c.l.b16 %v3604
    %v6712 = vunpack.c.h.b16 %v3604
    %v6713 = vunpack.c.l.b16 %v3605
    %v6714 = vunpack.c.h.b16 %v3605
    %v6715 = vunpack.c.l.b16 %v3606
    %v6716 = vunpack.c.h.b16 %v3606
    %v6717 = vunpack.c.l.b16 %v3607
    %v6718 = vunpack.c.h.b16 %v3607
    %v6719 = vunpack.c.l.b16 %v3608
    %v6720 = vunpack.c.h.b16 %v3608
    %v6721 = vunpack.c.l.b16 %v3609
    %v6722 = vunpack.c.h.b16 %v3609
    %v6723 = vunpack.c.l.b16 %v3610
    %v6724 = vunpack.c.h.b16 %v3610
    %v6725 = vunpack.c.l.b16 %v3611
    %v6726 = vunpack.c.h.b16 %v3611
    %v6727 = vunpack.c.l.b16 %v3612
    %v6728 = vunpack.c.h.b16 %v3612
    %v6729 = vunpack.c.l.b16 %v3613
    %v6730 = vunpack.c.h.b16 %v3613
    %v6731 = vunpack.c.l.b16 %v3614
    %v6732 = vunpack.c.h.b16 %v3614
    %v6733 = vunpack.c.l.b16 %v3615
    %v6734 = vunpack.c.h.b16 %v3615
    %v6735 = vunpack.c.l.b16 %v3616
    %v6736 = vunpack.c.h.b16 %v3616
    %v6737 = vunpack.c.l.b16 %v3617
    %v6738 = vunpack.c.h.b16 %v3617
    %v6739 = vunpack.c.l.b16 %v3618
    %v6740 = vunpack.c.h.b16 %v3618
    %v6741 = vunpack.c.l.b16 %v3619
    %v6742 = vunpack.c.h.b16 %v3619
    %v6743 = vunpack.c.l.b16 %v3620
    %v6744 = vunpack.c.h.b16 %v3620
    %v6745 = vunpack.c.l.b16 %v3621
    %v6746 = vunpack.c.h.b16 %v3621
    %v6747 = vunpack.c.l.b16 %v3622
    %v6748 = vunpack.c.h.b16 %v3622
    %v6749 = vunpack.c.l.b16 %v3623
    %v6750 = vunpack.c.h.b16 %v3623
    %v6751 = vunpack.c.l.b16 %v3624
    %v6752 = vunpack.c.h.b16 %v3624
    %v6753 = vunpack.c.l.b16 %v3625
    %v6754 = vunpack.c.h.b16 %v3625
    %v6755 = vunpack.c.l.b16 %v3626
    %v6756 = vunpack.c.h.b16 %v3626
    %v6757 = vunpack.c.l.b16 %v3627
    %v6758 = vunpack.c.h.b16 %v3627
    %v6759 = vunpack.c.l.b16 %v3628
    %v6760 = vunpack.c.h.b16 %v3628
    %v6761 = vunpack.c.l.b16 %v3629
    %v6762 = vunpack.c.h.b16 %v3629
    %v6763 = vunpack.c.l.b16 %v3630
    %v6764 = vunpack.c.h.b16 %v3630
    %v6765 = vunpack.c.l.b16 %v3631
    %v6766 = vunpack.c.h.b16 %v3631
    %v6767 = vunpack.c.l.b16 %v3632
    %v6768 = vunpack.c.h.b16 %v3632
    %v6769 = vunpack.c.l.b16 %v3633
    %v6770 = vunpack.c.h.b16 %v3633
    %v6771 = vunpack.c.l.b16 %v3634
    %v6772 = vunpack.c.h.b16 %v3634
    %v6773 = vunpack.c.l.b16 %v3635
    %v6774 = vunpack.c.h.b16 %v3635
    %v6775 = vunpack.c.l.b16 %v3636
    %v6776 = vunpack.c.h.b16 %v3636
    %v6777 = vunpack.c.l.b16 %v3637
    %v6778 = vunpack.c.h.b16 %v3637
    %v6779 = vunpack.c.l.b16 %v3638
    %v6780 = vunpack.c.h.b16 %v3638
    %v6781 = vunpack.c.l.b16 %v3639
    %v6782 = vunpack.c.h.b16 %v3639
    %v6783 = vunpack.c.l.b16 %v3640
    %v6784 = vunpack.c.h.b16 %v3640
    %v6785 = vunpack.c.l.b16 %v3641
    %v6786 = vunpack.c.h.b16 %v3641
    %v6787 = vunpack.c.l.b16 %v3642
    %v6788 = vunpack.c.h.b16 %v3642
    %v6789 = vunpack.c.l.b16 %v3643
    %v6790 = vunpack.c.h.b16 %v3643
    %v6791 = vunpack.c.l.b16 %v3644
    %v6792 = vunpack.c.h.b16 %v3644
    %v6793 = vunpack.c.l.b16 %v3645
    %v6794 = vunpack.c.h.b16 %v3645
    %v6795 = vunpack.c.l.b16 %v3646
    %v6796 = vunpack.c.h.b16 %v3646
    %v6797 = vunpack.c.l.b16 %v3647
    %v6798 = vunpack.c.h.b16 %v3647
    %v6799 = vunpack.c.l.b16 %v3648
    %v6800 = vunpack.c.h.b16 %v3648
    %v6801 = vunpack.c.l.b16 %v3649
    %v6802 = vunpack.c.h.b16 %v3649
    %v6803 = vunpack.c.l.b16 %v3650
    %v6804 = vunpack.c.h.b16 %v3650
    %v6805 = vunpack.c.l.b16 %v3651
    %v6806 = vunpack.c.h.b16 %v3651
    %v6807 = vunpack.c.l.b16 %v3652
    %v6808 = vunpack.c.h.b16 %v3652
    %v6809 = vpack.c.b16 %v4777, %v4761
    %v6810 = vpack.c.b16 %v4778, %v4762
    %v6811 = vpack.c.b16 %v4779, %v4763
    %v6812 = vpack.c.b16 %v4780, %v4764
    %v6813 = vpack.c.b16 %v4781, %v4765
    %v6814 = vpack.c.b16 %v4782, %v4766
    %v6815 = vpack.c.b16 %v4783, %v4767
    %v6816 = vpack.c.b16 %v4784, %v4768
    %v6817 = vpack.c.b16 %v4785, %v4769
    %v6818 = vpack.c.b16 %v4786, %v4770
    %v6819 = vpack.c.b16 %v4787, %v4771
    %v6820 = vpack.c.b16 %v4788, %v4772
    %v6821 = vpack.c.b16 %v4789, %v4773
    %v6822 = vpack.c.b16 %v4790, %v4774
    %v6823 = vpack.c.b16 %v4791, %v4775
    %v6824 = vpack.c.b16 %v4792, %v4776
    %v6825 = vpack.c.b16 %v4809, %v4793
    %v6826 = vpack.c.b16 %v4810, %v4794
    %v6827 = vpack.c.b16 %v4811, %v4795
    %v6828 = vpack.c.b16 %v4812, %v4796
    %v6829 = vpack.c.b16 %v4813, %v4797
    %v6830 = vpack.c.b16 %v4814, %v4798
    %v6831 = vpack.c.b16 %v4815, %v4799
    %v6832 = vpack.c.b16 %v4816, %v4800
    %v6833 = vpack.c.b16 %v4817, %v4801
    %v6834 = vpack.c.b16 %v4818, %v4802
    %v6835 = vpack.c.b16 %v4819, %v4803
    %v6836 = vpack.c.b16 %v4820, %v4804
    %v6837 = vpack.c.b16 %v4821, %v4805
    %v6838 = vpack.c.b16 %v4822, %v4806
    %v6839 = vpack.c.b16 %v4823, %v4807
    %v6840 = vpack.c.b16 %v4824, %v4808
    %v6841 = vpack.c.b16 %v4841, %v4825
    %v6842 = vpack.c.b16 %v4842, %v4826
    %v6843 = vpack.c.b16 %v4843, %v4827
    %v6844 = vpack.c.b16 %v4844, %v4828
    %v6845 = vpack.c.b16 %v4845, %v4829
    %v6846 = vpack.c.b16 %v4846, %v4830
    %v6847 = vpack.c.b16 %v4847, %v4831
    %v6848 = vpack.c.b16 %v4848, %v4832
    %v6849 = vpack.c.b16 %v4849, %v4833
    %v6850 = vpack.c.b16 %v4850, %v4834
    %v6851 = vpack.c.b16 %v4851, %v4835
    %v6852 = vpack.c.b16 %v4852, %v4836
    %v6853 = vpack.c.b16 %v4853, %v4837
    %v6854 = vpack.c.b16 %v4854, %v4838
    %v6855 = vpack.c.b16 %v4855, %v4839
    %v6856 = vpack.c.b16 %v4856, %v4840
    %v6857 = vpack.c.b16 %v4873, %v4857
    %v6858 = vpack.c.b16 %v4874, %v4858
    %v6859 = vpack.c.b16 %v4875, %v4859
    %v6860 = vpack.c.b16 %v4876, %v4860
    %v6861 = vpack.c.b16 %v4877, %v4861
    %v6862 = vpack.c.b16 %v4878, %v4862
    %v6863 = vpack.c.b16 %v4879, %v4863
    %v6864 = vpack.c.b16 %v4880, %v4864
    %v6865 = vpack.c.b16 %v4881, %v4865
    %v6866 = vpack.c.b16 %v4882, %v4866
    %v6867 = vpack.c.b16 %v4883, %v4867
    %v6868 = vpack.c.b16 %v4884, %v4868
    %v6869 = vpack.c.b16 %v4885, %v4869
    %v6870 = vpack.c.b16 %v4886, %v4870
    %v6871 = vpack.c.b16 %v4887, %v4871
    %v6872 = vpack.c.b16 %v4888, %v4872
    %v6873 = vpack.c.b16 %v4905, %v4889
    %v6874 = vpack.c.b16 %v4906, %v4890
    %v6875 = vpack.c.b16 %v4907, %v4891
    %v6876 = vpack.c.b16 %v4908, %v4892
    %v6877 = vpack.c.b16 %v4909, %v4893
    %v6878 = vpack.c.b16 %v4910, %v4894
    %v6879 = vpack.c.b16 %v4911, %v4895
    %v6880 = vpack.c.b16 %v4912, %v4896
    %v6881 = vpack.c.b16 %v4913, %v4897
    %v6882 = vpack.c.b16 %v4914, %v4898
    %v6883 = vpack.c.b16 %v4915, %v4899
    %v6884 = vpack.c.b16 %v4916, %v4900
    %v6885 = vpack.c.b16 %v4917, %v4901
    %v6886 = vpack.c.b16 %v4918, %v4902
    %v6887 = vpack.c.b16 %v4919, %v4903
    %v6888 = vpack.c.b16 %v4920, %v4904
    %v6889 = vpack.c.b16 %v4937, %v4921
    %v6890 = vpack.c.b16 %v4938, %v4922
    %v6891 = vpack.c.b16 %v4939, %v4923
    %v6892 = vpack.c.b16 %v4940, %v4924
    %v6893 = vpack.c.b16 %v4941, %v4925
    %v6894 = vpack.c.b16 %v4942, %v4926
    %v6895 = vpack.c.b16 %v4943, %v4927
    %v6896 = vpack.c.b16 %v4944, %v4928
    %v6897 = vpack.c.b16 %v4945, %v4929
    %v6898 = vpack.c.b16 %v4946, %v4930
    %v6899 = vpack.c.b16 %v4947, %v4931
    %v6900 = vpack.c.b16 %v4948, %v4932
    %v6901 = vpack.c.b16 %v4949, %v4933
    %v6902 = vpack.c.b16 %v4950, %v4934
    %v6903 = vpack.c.b16 %v4951, %v4935
    %v6904 = vpack.c.b16 %v4952, %v4936
    %v6905 = vpack.c.b16 %v4969, %v4953
    %v6906 = vpack.c.b16 %v4970, %v4954
    %v6907 = vpack.c.b16 %v4971, %v4955
    %v6908 = vpack.c.b16 %v4972, %v4956
    %v6909 = vpack.c.b16 %v4973, %v4957
    %v6910 = vpack.c.b16 %v4974, %v4958
    %v6911 = vpack.c.b16 %v4975, %v4959
    %v6912 = vpack.c.b16 %v4976, %v4960
    %v6913 = vpack.c.b16 %v4977, %v4961
    %v6914 = vpack.c.b16 %v4978, %v4962
    %v6915 = vpack.c.b16 %v4979, %v4963
    %v6916 = vpack.c.b16 %v4980, %v4964
    %v6917 = vpack.c.b16 %v4981, %v4965
    %v6918 = vpack.c.b16 %v4982, %v4966
    %v6919 = vpack.c.b16 %v4983, %v4967
    %v6920 = vpack.c.b16 %v4984, %v4968
    %v6921 = vpack.c.b16 %v5001, %v4985
    %v6922 = vpack.c.b16 %v5002, %v4986
    %v6923 = vpack.c.b16 %v5003, %v4987
    %v6924 = vpack.c.b16 %v5004, %v4988
    %v6925 = vpack.c.b16 %v5005, %v4989
    %v6926 = vpack.c.b16 %v5006, %v4990
    %v6927 = vpack.c.b16 %v5007, %v4991
    %v6928 = vpack.c.b16 %v5008, %v4992
    %v6929 = vpack.c.b16 %v5009, %v4993
    %v6930 = vpack.c.b16 %v5010, %v4994
    %v6931 = vpack.c.b16 %v5011, %v4995
    %v6932 = vpack.c.b16 %v5012, %v4996
    %v6933 = vpack.c.b16 %v5013, %v4997
    %v6934 = vpack.c.b16 %v5014, %v4998
    %v6935 = vpack.c.b16 %v5015, %v4999
    %v6936 = vpack.c.b16 %v5016, %v5000
    %v6937 = vpack.c.b16 %v5033, %v5017
    %v6938 = vpack.c.b16 %v5034, %v5018
    %v6939 = vpack.c.b16 %v5035, %v5019
    %v6940 = vpack.c.b16 %v5036, %v5020
    %v6941 = vpack.c.b16 %v5037, %v5021
    %v6942 = vpack.c.b16 %v5038, %v5022
    %v6943 = vpack.c.b16 %v5039, %v5023
    %v6944 = vpack.c.b16 %v5040, %v5024
    %v6945 = vpack.c.b16 %v5041, %v5025
    %v6946 = vpack.c.b16 %v5042, %v5026
    %v6947 = vpack.c.b16 %v5043, %v5027
    %v6948 = vpack.c.b16 %v5044, %v5028
    %v6949 = vpack.c.b16 %v5045, %v5029
    %v6950 = vpack.c.b16 %v5046, %v5030
    %v6951 = vpack.c.b16 %v5047, %v5031
    %v6952 = vpack.c.b16 %v5048, %v5032
    %v6953 = vpack.c.b16 %v5065, %v5049
    %v6954 = vpack.c.b16 %v5066, %v5050
    %v6955 = vpack.c.b16 %v5067, %v5051
    %v6956 = vpack.c.b16 %v5068, %v5052
    %v6957 = vpack.c.b16 %v5069, %v5053
    %v6958 = vpack.c.b16 %v5070, %v5054
    %v6959 = vpack.c.b16 %v5071, %v5055
    %v6960 = vpack.c.b16 %v5072, %v5056
    %v6961 = vpack.c.b16 %v5073, %v5057
    %v6962 = vpack.c.b16 %v5074, %v5058
    %v6963 = vpack.c.b16 %v5075, %v5059
    %v6964 = vpack.c.b16 %v5076, %v5060
    %v6965 = vpack.c.b16 %v5077, %v5061
    %v6966 = vpack.c.b16 %v5078, %v5062
    %v6967 = vpack.c.b16 %v5079, %v5063
    %v6968 = vpack.c.b16 %v5080, %v5064
    %v6969 = vpack.c.b16 %v5097, %v5081
    %v6970 = vpack.c.b16 %v5098, %v5082
    %v6971 = vpack.c.b16 %v5099, %v5083
    %v6972 = vpack.c.b16 %v5100, %v5084
    %v6973 = vpack.c.b16 %v5101, %v5085
    %v6974 = vpack.c.b16 %v5102, %v5086
    %v6975 = vpack.c.b16 %v5103, %v5087
    %v6976 = vpack.c.b16 %v5104, %v5088
    %v6977 = vpack.c.b16 %v5105, %v5089
    %v6978 = vpack.c.b16 %v5106, %v5090
    %v6979 = vpack.c.b16 %v5107, %v5091
    %v6980 = vpack.c.b16 %v5108, %v5092
    %v6981 = vpack.c.b16 %v5109, %v5093
    %v6982 = vpack.c.b16 %v5110, %v5094
    %v6983 = vpack.c.b16 %v5111, %v5095
    %v6984 = vpack.c.b16 %v5112, %v5096
    %v6985 = vpack.c.b16 %v5129, %v5113
    %v6986 = vpack.c.b16 %v5130, %v5114
    %v6987 = vpack.c.b16 %v5131, %v5115
    %v6988 = vpack.c.b16 %v5132, %v5116
    %v6989 = vpack.c.b16 %v5133, %v5117
    %v6990 = vpack.c.b16 %v5134, %v5118
    %v6991 = vpack.c.b16 %v5135, %v5119
    %v6992 = vpack.c.b16 %v5136, %v5120
    %v6993 = vpack.c.b16 %v5137, %v5121
    %v6994 = vpack.c.b16 %v5138, %v5122
    %v6995 = vpack.c.b16 %v5139, %v5123
    %v6996 = vpack.c.b16 %v5140, %v5124
    %v6997 = vpack.c.b16 %v5141, %v5125
    %v6998 = vpack.c.b16 %v5142, %v5126
    %v6999 = vpack.c.b16 %v5143, %v5127
    %v7000 = vpack.c.b16 %v5144, %v5128
    %v7001 = vpack.c.b16 %v5161, %v5145
    %v7002 = vpack.c.b16 %v5162, %v5146
    %v7003 = vpack.c.b16 %v5163, %v5147
    %v7004 = vpack.c.b16 %v5164, %v5148
    %v7005 = vpack.c.b16 %v5165, %v5149
    %v7006 = vpack.c.b16 %v5166, %v5150
    %v7007 = vpack.c.b16 %v5167, %v5151
    %v7008 = vpack.c.b16 %v5168, %v5152
    %v7009 = vpack.c.b16 %v5169, %v5153
    %v7010 = vpack.c.b16 %v5170, %v5154
    %v7011 = vpack.c.b16 %v5171, %v5155
    %v7012 = vpack.c.b16 %v5172, %v5156
    %v7013 = vpack.c.b16 %v5173, %v5157
    %v7014 = vpack.c.b16 %v5174, %v5158
    %v7015 = vpack.c.b16 %v5175, %v5159
    %v7016 = vpack.c.b16 %v5176, %v5160
    %v7017 = vpack.c.b16 %v5193, %v5177
    %v7018 = vpack.c.b16 %v5194, %v5178
    %v7019 = vpack.c.b16 %v5195, %v5179
    %v7020 = vpack.c.b16 %v5196, %v5180
    %v7021 = vpack.c.b16 %v5197, %v5181
    %v7022 = vpack.c.b16 %v5198, %v5182
    %v7023 = vpack.c.b16 %v5199, %v5183
    %v7024 = vpack.c.b16 %v5200, %v5184
    %v7025 = vpack.c.b16 %v5201, %v5185
    %v7026 = vpack.c.b16 %v5202, %v5186
    %v7027 = vpack.c.b16 %v5203, %v5187
    %v7028 = vpack.c.b16 %v5204, %v5188
    %v7029 = vpack.c.b16 %v5205, %v5189
    %v7030 = vpack.c.b16 %v5206, %v5190
    %v7031 = vpack.c.b16 %v5207, %v5191
    %v7032 = vpack.c.b16 %v5208, %v5192
    %v7033 = vpack.c.b16 %v5225, %v5209
    %v7034 = vpack.c.b16 %v5226, %v5210
    %v7035 = vpack.c.b16 %v5227, %v5211
    %v7036 = vpack.c.b16 %v5228, %v5212
    %v7037 = vpack.c.b16 %v5229, %v5213
    %v7038 = vpack.c.b16 %v5230, %v5214
    %v7039 = vpack.c.b16 %v5231, %v5215
    %v7040 = vpack.c.b16 %v5232, %v5216
    %v7041 = vpack.c.b16 %v5233, %v5217
    %v7042 = vpack.c.b16 %v5234, %v5218
    %v7043 = vpack.c.b16 %v5235, %v5219
    %v7044 = vpack.c.b16 %v5236, %v5220
    %v7045 = vpack.c.b16 %v5237, %v5221
    %v7046 = vpack.c.b16 %v5238, %v5222
    %v7047 = vpack.c.b16 %v5239, %v5223
    %v7048 = vpack.c.b16 %v5240, %v5224
    %v7049 = vpack.c.b16 %v5257, %v5241
    %v7050 = vpack.c.b16 %v5258, %v5242
    %v7051 = vpack.c.b16 %v5259, %v5243
    %v7052 = vpack.c.b16 %v5260, %v5244
    %v7053 = vpack.c.b16 %v5261, %v5245
    %v7054 = vpack.c.b16 %v5262, %v5246
    %v7055 = vpack.c.b16 %v5263, %v5247
    %v7056 = vpack.c.b16 %v5264, %v5248
    %v7057 = vpack.c.b16 %v5265, %v5249
    %v7058 = vpack.c.b16 %v5266, %v5250
    %v7059 = vpack.c.b16 %v5267, %v5251
    %v7060 = vpack.c.b16 %v5268, %v5252
    %v7061 = vpack.c.b16 %v5269, %v5253
    %v7062 = vpack.c.b16 %v5270, %v5254
    %v7063 = vpack.c.b16 %v5271, %v5255
    %v7064 = vpack.c.b16 %v5272, %v5256
    %v7065 = vpack.c.b16 %v5289, %v5273
    %v7066 = vpack.c.b16 %v5290, %v5274
    %v7067 = vpack.c.b16 %v5291, %v5275
    %v7068 = vpack.c.b16 %v5292, %v5276
    %v7069 = vpack.c.b16 %v5293, %v5277
    %v7070 = vpack.c.b16 %v5294, %v5278
    %v7071 = vpack.c.b16 %v5295, %v5279
    %v7072 = vpack.c.b16 %v5296, %v5280
    %v7073 = vpack.c.b16 %v5297, %v5281
    %v7074 = vpack.c.b16 %v5298, %v5282
    %v7075 = vpack.c.b16 %v5299, %v5283
    %v7076 = vpack.c.b16 %v5300, %v5284
    %v7077 = vpack.c.b16 %v5301, %v5285
    %v7078 = vpack.c.b16 %v5302, %v5286
    %v7079 = vpack.c.b16 %v5303, %v5287
    %v7080 = vpack.c.b16 %v5304, %v5288
    %v7081 = vpack.c.b16 %v5321, %v5305
    %v7082 = vpack.c.b16 %v5322, %v5306
    %v7083 = vpack.c.b16 %v5323, %v5307
    %v7084 = vpack.c.b16 %v5324, %v5308
    %v7085 = vpack.c.b16 %v5325, %v5309
    %v7086 = vpack.c.b16 %v5326, %v5310
    %v7087 = vpack.c.b16 %v5327, %v5311
    %v7088 = vpack.c.b16 %v5328, %v5312
    %v7089 = vpack.c.b16 %v5329, %v5313
    %v7090 = vpack.c.b16 %v5330, %v5314
    %v7091 = vpack.c.b16 %v5331, %v5315
    %v7092 = vpack.c.b16 %v5332, %v5316
    %v7093 = vpack.c.b16 %v5333, %v5317
    %v7094 = vpack.c.b16 %v5334, %v5318
    %v7095 = vpack.c.b16 %v5335, %v5319
    %v7096 = vpack.c.b16 %v5336, %v5320
    %v7097 = vpack.c.b16 %v5353, %v5337
    %v7098 = vpack.c.b16 %v5354, %v5338
    %v7099 = vpack.c.b16 %v5355, %v5339
    %v7100 = vpack.c.b16 %v5356, %v5340
    %v7101 = vpack.c.b16 %v5357, %v5341
    %v7102 = vpack.c.b16 %v5358, %v5342
    %v7103 = vpack.c.b16 %v5359, %v5343
    %v7104 = vpack.c.b16 %v5360, %v5344
    %v7105 = vpack.c.b16 %v5361, %v5345
    %v7106 = vpack.c.b16 %v5362, %v5346
    %v7107 = vpack.c.b16 %v5363, %v5347
    %v7108 = vpack.c.b16 %v5364, %v5348
    %v7109 = vpack.c.b16 %v5365, %v5349
    %v7110 = vpack.c.b16 %v5366, %v5350
    %v7111 = vpack.c.b16 %v5367, %v5351
    %v7112 = vpack.c.b16 %v5368, %v5352
    %v7113 = vpack.c.b16 %v5385, %v5369
    %v7114 = vpack.c.b16 %v5386, %v5370
    %v7115 = vpack.c.b16 %v5387, %v5371
    %v7116 = vpack.c.b16 %v5388, %v5372
    %v7117 = vpack.c.b16 %v5389, %v5373
    %v7118 = vpack.c.b16 %v5390, %v5374
    %v7119 = vpack.c.b16 %v5391, %v5375
    %v7120 = vpack.c.b16 %v5392, %v5376
    %v7121 = vpack.c.b16 %v5393, %v5377
    %v7122 = vpack.c.b16 %v5394, %v5378
    %v7123 = vpack.c.b16 %v5395, %v5379
    %v7124 = vpack.c.b16 %v5396, %v5380
    %v7125 = vpack.c.b16 %v5397, %v5381
    %v7126 = vpack.c.b16 %v5398, %v5382
    %v7127 = vpack.c.b16 %v5399, %v5383
    %v7128 = vpack.c.b16 %v5400, %v5384
    %v7129 = vpack.c.b16 %v5417, %v5401
    %v7130 = vpack.c.b16 %v5418, %v5402
    %v7131 = vpack.c.b16 %v5419, %v5403
    %v7132 = vpack.c.b16 %v5420, %v5404
    %v7133 = vpack.c.b16 %v5421, %v5405
    %v7134 = vpack.c.b16 %v5422, %v5406
    %v7135 = vpack.c.b16 %v5423, %v5407
    %v7136 = vpack.c.b16 %v5424, %v5408
    %v7137 = vpack.c.b16 %v5425, %v5409
    %v7138 = vpack.c.b16 %v5426, %v5410
    %v7139 = vpack.c.b16 %v5427, %v5411
    %v7140 = vpack.c.b16 %v5428, %v5412
    %v7141 = vpack.c.b16 %v5429, %v5413
    %v7142 = vpack.c.b16 %v5430, %v5414
    %v7143 = vpack.c.b16 %v5431, %v5415
    %v7144 = vpack.c.b16 %v5432, %v5416
    %v7145 = vpack.c.b16 %v5449, %v5433
    %v7146 = vpack.c.b16 %v5450, %v5434
    %v7147 = vpack.c.b16 %v5451, %v5435
    %v7148 = vpack.c.b16 %v5452, %v5436
    %v7149 = vpack.c.b16 %v5453, %v5437
    %v7150 = vpack.c.b16 %v5454, %v5438
    %v7151 = vpack.c.b16 %v5455, %v5439
    %v7152 = vpack.c.b16 %v5456, %v5440
    %v7153 = vpack.c.b16 %v5457, %v5441
    %v7154 = vpack.c.b16 %v5458, %v5442
    %v7155 = vpack.c.b16 %v5459, %v5443
    %v7156 = vpack.c.b16 %v5460, %v5444
    %v7157 = vpack.c.b16 %v5461, %v5445
    %v7158 = vpack.c.b16 %v5462, %v5446
    %v7159 = vpack.c.b16 %v5463, %v5447
    %v7160 = vpack.c.b16 %v5464, %v5448
    %v7161 = vpack.c.b16 %v5481, %v5465
    %v7162 = vpack.c.b16 %v5482, %v5466
    %v7163 = vpack.c.b16 %v5483, %v5467
    %v7164 = vpack.c.b16 %v5484, %v5468
    %v7165 = vpack.c.b16 %v5485, %v5469
    %v7166 = vpack.c.b16 %v5486, %v5470
    %v7167 = vpack.c.b16 %v5487, %v5471
    %v7168 = vpack.c.b16 %v5488, %v5472
    %v7169 = vpack.c.b16 %v5489, %v5473
    %v7170 = vpack.c.b16 %v5490, %v5474
    %v7171 = vpack.c.b16 %v5491, %v5475
    %v7172 = vpack.c.b16 %v5492, %v5476
    %v7173 = vpack.c.b16 %v5493, %v5477
    %v7174 = vpack.c.b16 %v5494, %v5478
    %v7175 = vpack.c.b16 %v5495, %v5479
    %v7176 = vpack.c.b16 %v5496, %v5480
    %v7177 = vpack.c.b16 %v5513, %v5497
    %v7178 = vpack.c.b16 %v5514, %v5498
    %v7179 = vpack.c.b16 %v5515, %v5499
    %v7180 = vpack.c.b16 %v5516, %v5500
    %v7181 = vpack.c.b16 %v5517, %v5501
    %v7182 = vpack.c.b16 %v5518, %v5502
    %v7183 = vpack.c.b16 %v5519, %v5503
    %v7184 = vpack.c.b16 %v5520, %v5504
    %v7185 = vpack.c.b16 %v5521, %v5505
    %v7186 = vpack.c.b16 %v5522, %v5506
    %v7187 = vpack.c.b16 %v5523, %v5507
    %v7188 = vpack.c.b16 %v5524, %v5508
    %v7189 = vpack.c.b16 %v5525, %v5509
    %v7190 = vpack.c.b16 %v5526, %v5510
    %v7191 = vpack.c.b16 %v5527, %v5511
    %v7192 = vpack.c.b16 %v5528, %v5512
    %v7193 = vpack.c.b16 %v5545, %v5529
    %v7194 = vpack.c.b16 %v5546, %v5530
    %v7195 = vpack.c.b16 %v5547, %v5531
    %v7196 = vpack.c.b16 %v5548, %v5532
    %v7197 = vpack.c.b16 %v5549, %v5533
    %v7198 = vpack.c.b16 %v5550, %v5534
    %v7199 = vpack.c.b16 %v5551, %v5535
    %v7200 = vpack.c.b16 %v5552, %v5536
    %v7201 = vpack.c.b16 %v5553, %v5537
    %v7202 = vpack.c.b16 %v5554, %v5538
    %v7203 = vpack.c.b16 %v5555, %v5539
    %v7204 = vpack.c.b16 %v5556, %v5540
    %v7205 = vpack.c.b16 %v5557, %v5541
    %v7206 = vpack.c.b16 %v5558, %v5542
    %v7207 = vpack.c.b16 %v5559, %v5543
    %v7208 = vpack.c.b16 %v5560, %v5544
    %v7209 = vpack.c.b16 %v5577, %v5561
    %v7210 = vpack.c.b16 %v5578, %v5562
    %v7211 = vpack.c.b16 %v5579, %v5563
    %v7212 = vpack.c.b16 %v5580, %v5564
    %v7213 = vpack.c.b16 %v5581, %v5565
    %v7214 = vpack.c.b16 %v5582, %v5566
    %v7215 = vpack.c.b16 %v5583, %v5567
    %v7216 = vpack.c.b16 %v5584, %v5568
    %v7217 = vpack.c.b16 %v5585, %v5569
    %v7218 = vpack.c.b16 %v5586, %v5570
    %v7219 = vpack.c.b16 %v5587, %v5571
    %v7220 = vpack.c.b16 %v5588, %v5572
    %v7221 = vpack.c.b16 %v5589, %v5573
    %v7222 = vpack.c.b16 %v5590, %v5574
    %v7223 = vpack.c.b16 %v5591, %v5575
    %v7224 = vpack.c.b16 %v5592, %v5576
    %v7225 = vpack.c.b16 %v5609, %v5593
    %v7226 = vpack.c.b16 %v5610, %v5594
    %v7227 = vpack.c.b16 %v5611, %v5595
    %v7228 = vpack.c.b16 %v5612, %v5596
    %v7229 = vpack.c.b16 %v5613, %v5597
    %v7230 = vpack.c.b16 %v5614, %v5598
    %v7231 = vpack.c.b16 %v5615, %v5599
    %v7232 = vpack.c.b16 %v5616, %v5600
    %v7233 = vpack.c.b16 %v5617, %v5601
    %v7234 = vpack.c.b16 %v5618, %v5602
    %v7235 = vpack.c.b16 %v5619, %v5603
    %v7236 = vpack.c.b16 %v5620, %v5604
    %v7237 = vpack.c.b16 %v5621, %v5605
    %v7238 = vpack.c.b16 %v5622, %v5606
    %v7239 = vpack.c.b16 %v5623, %v5607
    %v7240 = vpack.c.b16 %v5624, %v5608
    %v7241 = vpack.c.b16 %v5641, %v5625
    %v7242 = vpack.c.b16 %v5642, %v5626
    %v7243 = vpack.c.b16 %v5643, %v5627
    %v7244 = vpack.c.b16 %v5644, %v5628
    %v7245 = vpack.c.b16 %v5645, %v5629
    %v7246 = vpack.c.b16 %v5646, %v5630
    %v7247 = vpack.c.b16 %v5647, %v5631
    %v7248 = vpack.c.b16 %v5648, %v5632
    %v7249 = vpack.c.b16 %v5649, %v5633
    %v7250 = vpack.c.b16 %v5650, %v5634
    %v7251 = vpack.c.b16 %v5651, %v5635
    %v7252 = vpack.c.b16 %v5652, %v5636
    %v7253 = vpack.c.b16 %v5653, %v5637
    %v7254 = vpack.c.b16 %v5654, %v5638
    %v7255 = vpack.c.b16 %v5655, %v5639
    %v7256 = vpack.c.b16 %v5656, %v5640
    %v7257 = vpack.c.b16 %v5673, %v5657
    %v7258 = vpack.c.b16 %v5674, %v5658
    %v7259 = vpack.c.b16 %v5675, %v5659
    %v7260 = vpack.c.b16 %v5676, %v5660
    %v7261 = vpack.c.b16 %v5677, %v5661
    %v7262 = vpack.c.b16 %v5678, %v5662
    %v7263 = vpack.c.b16 %v5679, %v5663
    %v7264 = vpack.c.b16 %v5680, %v5664
    %v7265 = vpack.c.b16 %v5681, %v5665
    %v7266 = vpack.c.b16 %v5682, %v5666
    %v7267 = vpack.c.b16 %v5683, %v5667
    %v7268 = vpack.c.b16 %v5684, %v5668
    %v7269 = vpack.c.b16 %v5685, %v5669
    %v7270 = vpack.c.b16 %v5686, %v5670
    %v7271 = vpack.c.b16 %v5687, %v5671
    %v7272 = vpack.c.b16 %v5688, %v5672
    %v7273 = vpack.c.b16 %v5705, %v5689
    %v7274 = vpack.c.b16 %v5706, %v5690
    %v7275 = vpack.c.b16 %v5707, %v5691
    %v7276 = vpack.c.b16 %v5708, %v5692
    %v7277 = vpack.c.b16 %v5709, %v5693
    %v7278 = vpack.c.b16 %v5710, %v5694
    %v7279 = vpack.c.b16 %v5711, %v5695
    %v7280 = vpack.c.b16 %v5712, %v5696
    %v7281 = vpack.c.b16 %v5713, %v5697
    %v7282 = vpack.c.b16 %v5714, %v5698
    %v7283 = vpack.c.b16 %v5715, %v5699
    %v7284 = vpack.c.b16 %v5716, %v5700
    %v7285 = vpack.c.b16 %v5717, %v5701
    %v7286 = vpack.c.b16 %v5718, %v5702
    %v7287 = vpack.c.b16 %v5719, %v5703
    %v7288 = vpack.c.b16 %v5720, %v5704
    %v7289 = vpack.c.b16 %v5737, %v5721
    %v7290 = vpack.c.b16 %v5738, %v5722
    %v7291 = vpack.c.b16 %v5739, %v5723
    %v7292 = vpack.c.b16 %v5740, %v5724
    %v7293 = vpack.c.b16 %v5741, %v5725
    %v7294 = vpack.c.b16 %v5742, %v5726
    %v7295 = vpack.c.b16 %v5743, %v5727
    %v7296 = vpack.c.b16 %v5744, %v5728
    %v7297 = vpack.c.b16 %v5745, %v5729
    %v7298 = vpack.c.b16 %v5746, %v5730
    %v7299 = vpack.c.b16 %v5747, %v5731
    %v7300 = vpack.c.b16 %v5748, %v5732
    %v7301 = vpack.c.b16 %v5749, %v5733
    %v7302 = vpack.c.b16 %v5750, %v5734
    %v7303 = vpack.c.b16 %v5751, %v5735
    %v7304 = vpack.c.b16 %v5752, %v5736
    %v7305 = vpack.c.b16 %v5769, %v5753
    %v7306 = vpack.c.b16 %v5770, %v5754
    %v7307 = vpack.c.b16 %v5771, %v5755
    %v7308 = vpack.c.b16 %v5772, %v5756
    %v7309 = vpack.c.b16 %v5773, %v5757
    %v7310 = vpack.c.b16 %v5774, %v5758
    %v7311 = vpack.c.b16 %v5775, %v5759
    %v7312 = vpack.c.b16 %v5776, %v5760
    %v7313 = vpack.c.b16 %v5777, %v5761
    %v7314 = vpack.c.b16 %v5778, %v5762
    %v7315 = vpack.c.b16 %v5779, %v5763
    %v7316 = vpack.c.b16 %v5780, %v5764
    %v7317 = vpack.c.b16 %v5781, %v5765
    %v7318 = vpack.c.b16 %v5782, %v5766
    %v7319 = vpack.c.b16 %v5783, %v5767
    %v7320 = vpack.c.b16 %v5784, %v5768
    %v7321 = vpack.c.b16 %v5801, %v5785
    %v7322 = vpack.c.b16 %v5802, %v5786
    %v7323 = vpack.c.b16 %v5803, %v5787
    %v7324 = vpack.c.b16 %v5804, %v5788
    %v7325 = vpack.c.b16 %v5805, %v5789
    %v7326 = vpack.c.b16 %v5806, %v5790
    %v7327 = vpack.c.b16 %v5807, %v5791
    %v7328 = vpack.c.b16 %v5808, %v5792
    %v7329 = vpack.c.b16 %v5809, %v5793
    %v7330 = vpack.c.b16 %v5810, %v5794
    %v7331 = vpack.c.b16 %v5811, %v5795
    %v7332 = vpack.c.b16 %v5812, %v5796
    %v7333 = vpack.c.b16 %v5813, %v5797
    %v7334 = vpack.c.b16 %v5814, %v5798
    %v7335 = vpack.c.b16 %v5815, %v5799
    %v7336 = vpack.c.b16 %v5816, %v5800
    %v7337 = vpack.c.b16 %v5833, %v5817
    %v7338 = vpack.c.b16 %v5834, %v5818
    %v7339 = vpack.c.b16 %v5835, %v5819
    %v7340 = vpack.c.b16 %v5836, %v5820
    %v7341 = vpack.c.b16 %v5837, %v5821
    %v7342 = vpack.c.b16 %v5838, %v5822
    %v7343 = vpack.c.b16 %v5839, %v5823
    %v7344 = vpack.c.b16 %v5840, %v5824
    %v7345 = vpack.c.b16 %v5841, %v5825
    %v7346 = vpack.c.b16 %v5842, %v5826
    %v7347 = vpack.c.b16 %v5843, %v5827
    %v7348 = vpack.c.b16 %v5844, %v5828
    %v7349 = vpack.c.b16 %v5845, %v5829
    %v7350 = vpack.c.b16 %v5846, %v5830
    %v7351 = vpack.c.b16 %v5847, %v5831
    %v7352 = vpack.c.b16 %v5848, %v5832
    %v7353 = vpack.c.b16 %v5865, %v5849
    %v7354 = vpack.c.b16 %v5866, %v5850
    %v7355 = vpack.c.b16 %v5867, %v5851
    %v7356 = vpack.c.b16 %v5868, %v5852
    %v7357 = vpack.c.b16 %v5869, %v5853
    %v7358 = vpack.c.b16 %v5870, %v5854
    %v7359 = vpack.c.b16 %v5871, %v5855
    %v7360 = vpack.c.b16 %v5872, %v5856
    %v7361 = vpack.c.b16 %v5873, %v5857
    %v7362 = vpack.c.b16 %v5874, %v5858
    %v7363 = vpack.c.b16 %v5875, %v5859
    %v7364 = vpack.c.b16 %v5876, %v5860
    %v7365 = vpack.c.b16 %v5877, %v5861
    %v7366 = vpack.c.b16 %v5878, %v5862
    %v7367 = vpack.c.b16 %v5879, %v5863
    %v7368 = vpack.c.b16 %v5880, %v5864
    %v7369 = vpack.c.b16 %v5897, %v5881
    %v7370 = vpack.c.b16 %v5898, %v5882
    %v7371 = vpack.c.b16 %v5899, %v5883
    %v7372 = vpack.c.b16 %v5900, %v5884
    %v7373 = vpack.c.b16 %v5901, %v5885
    %v7374 = vpack.c.b16 %v5902, %v5886
    %v7375 = vpack.c.b16 %v5903, %v5887
    %v7376 = vpack.c.b16 %v5904, %v5888
    %v7377 = vpack.c.b16 %v5905, %v5889
    %v7378 = vpack.c.b16 %v5906, %v5890
    %v7379 = vpack.c.b16 %v5907, %v5891
    %v7380 = vpack.c.b16 %v5908, %v5892
    %v7381 = vpack.c.b16 %v5909, %v5893
    %v7382 = vpack.c.b16 %v5910, %v5894
    %v7383 = vpack.c.b16 %v5911, %v5895
    %v7384 = vpack.c.b16 %v5912, %v5896
    %v7385 = vpack.c.b16 %v5929, %v5913
    %v7386 = vpack.c.b16 %v5930, %v5914
    %v7387 = vpack.c.b16 %v5931, %v5915
    %v7388 = vpack.c.b16 %v5932, %v5916
    %v7389 = vpack.c.b16 %v5933, %v5917
    %v7390 = vpack.c.b16 %v5934, %v5918
    %v7391 = vpack.c.b16 %v5935, %v5919
    %v7392 = vpack.c.b16 %v5936, %v5920
    %v7393 = vpack.c.b16 %v5937, %v5921
    %v7394 = vpack.c.b16 %v5938, %v5922
    %v7395 = vpack.c.b16 %v5939, %v5923
    %v7396 = vpack.c.b16 %v5940, %v5924
    %v7397 = vpack.c.b16 %v5941, %v5925
    %v7398 = vpack.c.b16 %v5942, %v5926
    %v7399 = vpack.c.b16 %v5943, %v5927
    %v7400 = vpack.c.b16 %v5944, %v5928
    %v7401 = vpack.c.b16 %v5961, %v5945
    %v7402 = vpack.c.b16 %v5962, %v5946
    %v7403 = vpack.c.b16 %v5963, %v5947
    %v7404 = vpack.c.b16 %v5964, %v5948
    %v7405 = vpack.c.b16 %v5965, %v5949
    %v7406 = vpack.c.b16 %v5966, %v5950
    %v7407 = vpack.c.b16 %v5967, %v5951
    %v7408 = vpack.c.b16 %v5968, %v5952
    %v7409 = vpack.c.b16 %v5969, %v5953
    %v7410 = vpack.c.b16 %v5970, %v5954
    %v7411 = vpack.c.b16 %v5971, %v5955
    %v7412 = vpack.c.b16 %v5972, %v5956
    %v7413 = vpack.c.b16 %v5973, %v5957
    %v7414 = vpack.c.b16 %v5974, %v5958
    %v7415 = vpack.c.b16 %v5975, %v5959
    %v7416 = vpack.c.b16 %v5976, %v5960
    %v7417 = vpack.c.b16 %v5993, %v5977
    %v7418 = vpack.c.b16 %v5994, %v5978
    %v7419 = vpack.c.b16 %v5995, %v5979
    %v7420 = vpack.c.b16 %v5996, %v5980
    %v7421 = vpack.c.b16 %v5997, %v5981
    %v7422 = vpack.c.b16 %v5998, %v5982
    %v7423 = vpack.c.b16 %v5999, %v5983
    %v7424 = vpack.c.b16 %v6000, %v5984
    %v7425 = vpack.c.b16 %v6001, %v5985
    %v7426 = vpack.c.b16 %v6002, %v5986
    %v7427 = vpack.c.b16 %v6003, %v5987
    %v7428 = vpack.c.b16 %v6004, %v5988
    %v7429 = vpack.c.b16 %v6005, %v5989
    %v7430 = vpack.c.b16 %v6006, %v5990
    %v7431 = vpack.c.b16 %v6007, %v5991
    %v7432 = vpack.c.b16 %v6008, %v5992
    %v7433 = vpack.c.b16 %v6025, %v6009
    %v7434 = vpack.c.b16 %v6026, %v6010
    %v7435 = vpack.c.b16 %v6027, %v6011
    %v7436 = vpack.c.b16 %v6028, %v6012
    %v7437 = vpack.c.b16 %v6029, %v6013
    %v7438 = vpack.c.b16 %v6030, %v6014
    %v7439 = vpack.c.b16 %v6031, %v6015
    %v7440 = vpack.c.b16 %v6032, %v6016
    %v7441 = vpack.c.b16 %v6033, %v6017
    %v7442 = vpack.c.b16 %v6034, %v6018
    %v7443 = vpack.c.b16 %v6035, %v6019
    %v7444 = vpack.c.b16 %v6036, %v6020
    %v7445 = vpack.c.b16 %v6037, %v6021
    %v7446 = vpack.c.b16 %v6038, %v6022
    %v7447 = vpack.c.b16 %v6039, %v6023
    %v7448 = vpack.c.b16 %v6040, %v6024
    %v7449 = vpack.c.b16 %v6057, %v6041
    %v7450 = vpack.c.b16 %v6058, %v6042
    %v7451 = vpack.c.b16 %v6059, %v6043
    %v7452 = vpack.c.b16 %v6060, %v6044
    %v7453 = vpack.c.b16 %v6061, %v6045
    %v7454 = vpack.c.b16 %v6062, %v6046
    %v7455 = vpack.c.b16 %v6063, %v6047
    %v7456 = vpack.c.b16 %v6064, %v6048
    %v7457 = vpack.c.b16 %v6065, %v6049
    %v7458 = vpack.c.b16 %v6066, %v6050
    %v7459 = vpack.c.b16 %v6067, %v6051
    %v7460 = vpack.c.b16 %v6068, %v6052
    %v7461 = vpack.c.b16 %v6069, %v6053
    %v7462 = vpack.c.b16 %v6070, %v6054
    %v7463 = vpack.c.b16 %v6071, %v6055
    %v7464 = vpack.c.b16 %v6072, %v6056
    %v7465 = vpack.c.b16 %v6089, %v6073
    %v7466 = vpack.c.b16 %v6090, %v6074
    %v7467 = vpack.c.b16 %v6091, %v6075
    %v7468 = vpack.c.b16 %v6092, %v6076
    %v7469 = vpack.c.b16 %v6093, %v6077
    %v7470 = vpack.c.b16 %v6094, %v6078
    %v7471 = vpack.c.b16 %v6095, %v6079
    %v7472 = vpack.c.b16 %v6096, %v6080
    %v7473 = vpack.c.b16 %v6097, %v6081
    %v7474 = vpack.c.b16 %v6098, %v6082
    %v7475 = vpack.c.b16 %v6099, %v6083
    %v7476 = vpack.c.b16 %v6100, %v6084
    %v7477 = vpack.c.b16 %v6101, %v6085
    %v7478 = vpack.c.b16 %v6102, %v6086
    %v7479 = vpack.c.b16 %v6103, %v6087
    %v7480 = vpack.c.b16 %v6104, %v6088
    %v7481 = vpack.c.b16 %v6121, %v6105
    %v7482 = vpack.c.b16 %v6122, %v6106
    %v7483 = vpack.c.b16 %v6123, %v6107
    %v7484 = vpack.c.b16 %v6124, %v6108
    %v7485 = vpack.c.b16 %v6125, %v6109
    %v7486 = vpack.c.b16 %v6126, %v6110
    %v7487 = vpack.c.b16 %v6127, %v6111
    %v7488 = vpack.c.b16 %v6128, %v6112
    %v7489 = vpack.c.b16 %v6129, %v6113
    %v7490 = vpack.c.b16 %v6130, %v6114
    %v7491 = vpack.c.b16 %v6131, %v6115
    %v7492 = vpack.c.b16 %v6132, %v6116
    %v7493 = vpack.c.b16 %v6133, %v6117
    %v7494 = vpack.c.b16 %v6134, %v6118
    %v7495 = vpack.c.b16 %v6135, %v6119
    %v7496 = vpack.c.b16 %v6136, %v6120
    %v7497 = vpack.c.b16 %v6153, %v6137
    %v7498 = vpack.c.b16 %v6154, %v6138
    %v7499 = vpack.c.b16 %v6155, %v6139
    %v7500 = vpack.c.b16 %v6156, %v6140
    %v7501 = vpack.c.b16 %v6157, %v6141
    %v7502 = vpack.c.b16 %v6158, %v6142
    %v7503 = vpack.c.b16 %v6159, %v6143
    %v7504 = vpack.c.b16 %v6160, %v6144
    %v7505 = vpack.c.b16 %v6161, %v6145
    %v7506 = vpack.c.b16 %v6162, %v6146
    %v7507 = vpack.c.b16 %v6163, %v6147
    %v7508 = vpack.c.b16 %v6164, %v6148
    %v7509 = vpack.c.b16 %v6165, %v6149
    %v7510 = vpack.c.b16 %v6166, %v6150
    %v7511 = vpack.c.b16 %v6167, %v6151
    %v7512 = vpack.c.b16 %v6168, %v6152
    %v7513 = vpack.c.b16 %v6185, %v6169
    %v7514 = vpack.c.b16 %v6186, %v6170
    %v7515 = vpack.c.b16 %v6187, %v6171
    %v7516 = vpack.c.b16 %v6188, %v6172
    %v7517 = vpack.c.b16 %v6189, %v6173
    %v7518 = vpack.c.b16 %v6190, %v6174
    %v7519 = vpack.c.b16 %v6191, %v6175
    %v7520 = vpack.c.b16 %v6192, %v6176
    %v7521 = vpack.c.b16 %v6193, %v6177
    %v7522 = vpack.c.b16 %v6194, %v6178
    %v7523 = vpack.c.b16 %v6195, %v6179
    %v7524 = vpack.c.b16 %v6196, %v6180
    %v7525 = vpack.c.b16 %v6197, %v6181
    %v7526 = vpack.c.b16 %v6198, %v6182
    %v7527 = vpack.c.b16 %v6199, %v6183
    %v7528 = vpack.c.b16 %v6200, %v6184
    %v7529 = vpack.c.b16 %v6217, %v6201
    %v7530 = vpack.c.b16 %v6218, %v6202
    %v7531 = vpack.c.b16 %v6219, %v6203
    %v7532 = vpack.c.b16 %v6220, %v6204
    %v7533 = vpack.c.b16 %v6221, %v6205
    %v7534 = vpack.c.b16 %v6222, %v6206
    %v7535 = vpack.c.b16 %v6223, %v6207
    %v7536 = vpack.c.b16 %v6224, %v6208
    %v7537 = vpack.c.b16 %v6225, %v6209
    %v7538 = vpack.c.b16 %v6226, %v6210
    %v7539 = vpack.c.b16 %v6227, %v6211
    %v7540 = vpack.c.b16 %v6228, %v6212
    %v7541 = vpack.c.b16 %v6229, %v6213
    %v7542 = vpack.c.b16 %v6230, %v6214
    %v7543 = vpack.c.b16 %v6231, %v6215
    %v7544 = vpack.c.b16 %v6232, %v6216
    %v7545 = vpack.c.b16 %v6249, %v6233
    %v7546 = vpack.c.b16 %v6250, %v6234
    %v7547 = vpack.c.b16 %v6251, %v6235
    %v7548 = vpack.c.b16 %v6252, %v6236
    %v7549 = vpack.c.b16 %v6253, %v6237
    %v7550 = vpack.c.b16 %v6254, %v6238
    %v7551 = vpack.c.b16 %v6255, %v6239
    %v7552 = vpack.c.b16 %v6256, %v6240
    %v7553 = vpack.c.b16 %v6257, %v6241
    %v7554 = vpack.c.b16 %v6258, %v6242
    %v7555 = vpack.c.b16 %v6259, %v6243
    %v7556 = vpack.c.b16 %v6260, %v6244
    %v7557 = vpack.c.b16 %v6261, %v6245
    %v7558 = vpack.c.b16 %v6262, %v6246
    %v7559 = vpack.c.b16 %v6263, %v6247
    %v7560 = vpack.c.b16 %v6264, %v6248
    %v7561 = vpack.c.b16 %v6281, %v6265
    %v7562 = vpack.c.b16 %v6282, %v6266
    %v7563 = vpack.c.b16 %v6283, %v6267
    %v7564 = vpack.c.b16 %v6284, %v6268
    %v7565 = vpack.c.b16 %v6285, %v6269
    %v7566 = vpack.c.b16 %v6286, %v6270
    %v7567 = vpack.c.b16 %v6287, %v6271
    %v7568 = vpack.c.b16 %v6288, %v6272
    %v7569 = vpack.c.b16 %v6289, %v6273
    %v7570 = vpack.c.b16 %v6290, %v6274
    %v7571 = vpack.c.b16 %v6291, %v6275
    %v7572 = vpack.c.b16 %v6292, %v6276
    %v7573 = vpack.c.b16 %v6293, %v6277
    %v7574 = vpack.c.b16 %v6294, %v6278
    %v7575 = vpack.c.b16 %v6295, %v6279
    %v7576 = vpack.c.b16 %v6296, %v6280
    %v7577 = vpack.c.b16 %v6313, %v6297
    %v7578 = vpack.c.b16 %v6314, %v6298
    %v7579 = vpack.c.b16 %v6315, %v6299
    %v7580 = vpack.c.b16 %v6316, %v6300
    %v7581 = vpack.c.b16 %v6317, %v6301
    %v7582 = vpack.c.b16 %v6318, %v6302
    %v7583 = vpack.c.b16 %v6319, %v6303
    %v7584 = vpack.c.b16 %v6320, %v6304
    %v7585 = vpack.c.b16 %v6321, %v6305
    %v7586 = vpack.c.b16 %v6322, %v6306
    %v7587 = vpack.c.b16 %v6323, %v6307
    %v7588 = vpack.c.b16 %v6324, %v6308
    %v7589 = vpack.c.b16 %v6325, %v6309
    %v7590 = vpack.c.b16 %v6326, %v6310
    %v7591 = vpack.c.b16 %v6327, %v6311
    %v7592 = vpack.c.b16 %v6328, %v6312
    %v7593 = vpack.c.b16 %v6345, %v6329
    %v7594 = vpack.c.b16 %v6346, %v6330
    %v7595 = vpack.c.b16 %v6347, %v6331
    %v7596 = vpack.c.b16 %v6348, %v6332
    %v7597 = vpack.c.b16 %v6349, %v6333
    %v7598 = vpack.c.b16 %v6350, %v6334
    %v7599 = vpack.c.b16 %v6351, %v6335
    %v7600 = vpack.c.b16 %v6352, %v6336
    %v7601 = vpack.c.b16 %v6353, %v6337
    %v7602 = vpack.c.b16 %v6354, %v6338
    %v7603 = vpack.c.b16 %v6355, %v6339
    %v7604 = vpack.c.b16 %v6356, %v6340
    %v7605 = vpack.c.b16 %v6357, %v6341
    %v7606 = vpack.c.b16 %v6358, %v6342
    %v7607 = vpack.c.b16 %v6359, %v6343
    %v7608 = vpack.c.b16 %v6360, %v6344
    %v7609 = vpack.c.b16 %v6377, %v6361
    %v7610 = vpack.c.b16 %v6378, %v6362
    %v7611 = vpack.c.b16 %v6379, %v6363
    %v7612 = vpack.c.b16 %v6380, %v6364
    %v7613 = vpack.c.b16 %v6381, %v6365
    %v7614 = vpack.c.b16 %v6382, %v6366
    %v7615 = vpack.c.b16 %v6383, %v6367
    %v7616 = vpack.c.b16 %v6384, %v6368
    %v7617 = vpack.c.b16 %v6385, %v6369
    %v7618 = vpack.c.b16 %v6386, %v6370
    %v7619 = vpack.c.b16 %v6387, %v6371
    %v7620 = vpack.c.b16 %v6388, %v6372
    %v7621 = vpack.c.b16 %v6389, %v6373
    %v7622 = vpack.c.b16 %v6390, %v6374
    %v7623 = vpack.c.b16 %v6391, %v6375
    %v7624 = vpack.c.b16 %v6392, %v6376
    %v7625 = vpack.c.b16 %v6409, %v6393
    %v7626 = vpack.c.b16 %v6410, %v6394
    %v7627 = vpack.c.b16 %v6411, %v6395
    %v7628 = vpack.c.b16 %v6412, %v6396
    %v7629 = vpack.c.b16 %v6413, %v6397
    %v7630 = vpack.c.b16 %v6414, %v6398
    %v7631 = vpack.c.b16 %v6415, %v6399
    %v7632 = vpack.c.b16 %v6416, %v6400
    %v7633 = vpack.c.b16 %v6417, %v6401
    %v7634 = vpack.c.b16 %v6418, %v6402
    %v7635 = vpack.c.b16 %v6419, %v6403
    %v7636 = vpack.c.b16 %v6420, %v6404
    %v7637 = vpack.c.b16 %v6421, %v6405
    %v7638 = vpack.c.b16 %v6422, %v6406
    %v7639 = vpack.c.b16 %v6423, %v6407
    %v7640 = vpack.c.b16 %v6424, %v6408
    %v7641 = vpack.c.b16 %v6441, %v6425
    %v7642 = vpack.c.b16 %v6442, %v6426
    %v7643 = vpack.c.b16 %v6443, %v6427
    %v7644 = vpack.c.b16 %v6444, %v6428
    %v7645 = vpack.c.b16 %v6445, %v6429
    %v7646 = vpack.c.b16 %v6446, %v6430
    %v7647 = vpack.c.b16 %v6447, %v6431
    %v7648 = vpack.c.b16 %v6448, %v6432
    %v7649 = vpack.c.b16 %v6449, %v6433
    %v7650 = vpack.c.b16 %v6450, %v6434
    %v7651 = vpack.c.b16 %v6451, %v6435
    %v7652 = vpack.c.b16 %v6452, %v6436
    %v7653 = vpack.c.b16 %v6453, %v6437
    %v7654 = vpack.c.b16 %v6454, %v6438
    %v7655 = vpack.c.b16 %v6455, %v6439
    %v7656 = vpack.c.b16 %v6456, %v6440
    %v7657 = vpack.c.b16 %v6473, %v6457
    %v7658 = vpack.c.b16 %v6474, %v6458
    %v7659 = vpack.c.b16 %v6475, %v6459
    %v7660 = vpack.c.b16 %v6476, %v6460
    %v7661 = vpack.c.b16 %v6477, %v6461
    %v7662 = vpack.c.b16 %v6478, %v6462
    %v7663 = vpack.c.b16 %v6479, %v6463
    %v7664 = vpack.c.b16 %v6480, %v6464
    %v7665 = vpack.c.b16 %v6481, %v6465
    %v7666 = vpack.c.b16 %v6482, %v6466
    %v7667 = vpack.c.b16 %v6483, %v6467
    %v7668 = vpack.c.b16 %v6484, %v6468
    %v7669 = vpack.c.b16 %v6485, %v6469
    %v7670 = vpack.c.b16 %v6486, %v6470
    %v7671 = vpack.c.b16 %v6487, %v6471
    %v7672 = vpack.c.b16 %v6488, %v6472
    %v7673 = vpack.c.b16 %v6505, %v6489
    %v7674 = vpack.c.b16 %v6506, %v6490
    %v7675 = vpack.c.b16 %v6507, %v6491
    %v7676 = vpack.c.b16 %v6508, %v6492
    %v7677 = vpack.c.b16 %v6509, %v6493
    %v7678 = vpack.c.b16 %v6510, %v6494
    %v7679 = vpack.c.b16 %v6511, %v6495
    %v7680 = vpack.c.b16 %v6512, %v6496
    %v7681 = vpack.c.b16 %v6513, %v6497
    %v7682 = vpack.c.b16 %v6514, %v6498
    %v7683 = vpack.c.b16 %v6515, %v6499
    %v7684 = vpack.c.b16 %v6516, %v6500
    %v7685 = vpack.c.b16 %v6517, %v6501
    %v7686 = vpack.c.b16 %v6518, %v6502
    %v7687 = vpack.c.b16 %v6519, %v6503
    %v7688 = vpack.c.b16 %v6520, %v6504
    %v7689 = vpack.c.b16 %v6537, %v6521
    %v7690 = vpack.c.b16 %v6538, %v6522
    %v7691 = vpack.c.b16 %v6539, %v6523
    %v7692 = vpack.c.b16 %v6540, %v6524
    %v7693 = vpack.c.b16 %v6541, %v6525
    %v7694 = vpack.c.b16 %v6542, %v6526
    %v7695 = vpack.c.b16 %v6543, %v6527
    %v7696 = vpack.c.b16 %v6544, %v6528
    %v7697 = vpack.c.b16 %v6545, %v6529
    %v7698 = vpack.c.b16 %v6546, %v6530
    %v7699 = vpack.c.b16 %v6547, %v6531
    %v7700 = vpack.c.b16 %v6548, %v6532
    %v7701 = vpack.c.b16 %v6549, %v6533
    %v7702 = vpack.c.b16 %v6550, %v6534
    %v7703 = vpack.c.b16 %v6551, %v6535
    %v7704 = vpack.c.b16 %v6552, %v6536
    %v7705 = vpack.c.b16 %v6569, %v6553
    %v7706 = vpack.c.b16 %v6570, %v6554
    %v7707 = vpack.c.b16 %v6571, %v6555
    %v7708 = vpack.c.b16 %v6572, %v6556
    %v7709 = vpack.c.b16 %v6573, %v6557
    %v7710 = vpack.c.b16 %v6574, %v6558
    %v7711 = vpack.c.b16 %v6575, %v6559
    %v7712 = vpack.c.b16 %v6576, %v6560
    %v7713 = vpack.c.b16 %v6577, %v6561
    %v7714 = vpack.c.b16 %v6578, %v6562
    %v7715 = vpack.c.b16 %v6579, %v6563
    %v7716 = vpack.c.b16 %v6580, %v6564
    %v7717 = vpack.c.b16 %v6581, %v6565
    %v7718 = vpack.c.b16 %v6582, %v6566
    %v7719 = vpack.c.b16 %v6583, %v6567
    %v7720 = vpack.c.b16 %v6584, %v6568
    %v7721 = vpack.c.b16 %v6601, %v6585
    %v7722 = vpack.c.b16 %v6602, %v6586
    %v7723 = vpack.c.b16 %v6603, %v6587
    %v7724 = vpack.c.b16 %v6604, %v6588
    %v7725 = vpack.c.b16 %v6605, %v6589
    %v7726 = vpack.c.b16 %v6606, %v6590
    %v7727 = vpack.c.b16 %v6607, %v6591
    %v7728 = vpack.c.b16 %v6608, %v6592
    %v7729 = vpack.c.b16 %v6609, %v6593
    %v7730 = vpack.c.b16 %v6610, %v6594
    %v7731 = vpack.c.b16 %v6611, %v6595
    %v7732 = vpack.c.b16 %v6612, %v6596
    %v7733 = vpack.c.b16 %v6613, %v6597
    %v7734 = vpack.c.b16 %v6614, %v6598
    %v7735 = vpack.c.b16 %v6615, %v6599
    %v7736 = vpack.c.b16 %v6616, %v6600
    %v7737 = vpack.c.b16 %v6633, %v6617
    %v7738 = vpack.c.b16 %v6634, %v6618
    %v7739 = vpack.c.b16 %v6635, %v6619
    %v7740 = vpack.c.b16 %v6636, %v6620
    %v7741 = vpack.c.b16 %v6637, %v6621
    %v7742 = vpack.c.b16 %v6638, %v6622
    %v7743 = vpack.c.b16 %v6639, %v6623
    %v7744 = vpack.c.b16 %v6640, %v6624
    %v7745 = vpack.c.b16 %v6641, %v6625
    %v7746 = vpack.c.b16 %v6642, %v6626
    %v7747 = vpack.c.b16 %v6643, %v6627
    %v7748 = vpack.c.b16 %v6644, %v6628
    %v7749 = vpack.c.b16 %v6645, %v6629
    %v7750 = vpack.c.b16 %v6646, %v6630
    %v7751 = vpack.c.b16 %v6647, %v6631
    %v7752 = vpack.c.b16 %v6648, %v6632
    %v7753 = vpack.c.b16 %v6665, %v6649
    %v7754 = vpack.c.b16 %v6666, %v6650
    %v7755 = vpack.c.b16 %v6667, %v6651
    %v7756 = vpack.c.b16 %v6668, %v6652
    %v7757 = vpack.c.b16 %v6669, %v6653
    %v7758 = vpack.c.b16 %v6670, %v6654
    %v7759 = vpack.c.b16 %v6671, %v6655
    %v7760 = vpack.c.b16 %v6672, %v6656
    %v7761 = vpack.c.b16 %v6673, %v6657
    %v7762 = vpack.c.b16 %v6674, %v6658
    %v7763 = vpack.c.b16 %v6675, %v6659
    %v7764 = vpack.c.b16 %v6676, %v6660
    %v7765 = vpack.c.b16 %v6677, %v6661
    %v7766 = vpack.c.b16 %v6678, %v6662
    %v7767 = vpack.c.b16 %v6679, %v6663
    %v7768 = vpack.c.b16 %v6680, %v6664
    %v7769 = vpack.c.b16 %v6697, %v6681
    %v7770 = vpack.c.b16 %v6698, %v6682
    %v7771 = vpack.c.b16 %v6699, %v6683
    %v7772 = vpack.c.b16 %v6700, %v6684
    %v7773 = vpack.c.b16 %v6701, %v6685
    %v7774 = vpack.c.b16 %v6702, %v6686
    %v7775 = vpack.c.b16 %v6703, %v6687
    %v7776 = vpack.c.b16 %v6704, %v6688
    %v7777 = vpack.c.b16 %v6705, %v6689
    %v7778 = vpack.c.b16 %v6706, %v6690
    %v7779 = vpack.c.b16 %v6707, %v6691
    %v7780 = vpack.c.b16 %v6708, %v6692
    %v7781 = vpack.c.b16 %v6709, %v6693
    %v7782 = vpack.c.b16 %v6710, %v6694
    %v7783 = vpack.c.b16 %v6711, %v6695
    %v7784 = vpack.c.b16 %v6712, %v6696
    %v7785 = vpack.c.b16 %v6729, %v6713
    %v7786 = vpack.c.b16 %v6730, %v6714
    %v7787 = vpack.c.b16 %v6731, %v6715
    %v7788 = vpack.c.b16 %v6732, %v6716
    %v7789 = vpack.c.b16 %v6733, %v6717
    %v7790 = vpack.c.b16 %v6734, %v6718
    %v7791 = vpack.c.b16 %v6735, %v6719
    %v7792 = vpack.c.b16 %v6736, %v6720
    %v7793 = vpack.c.b16 %v6737, %v6721
    %v7794 = vpack.c.b16 %v6738, %v6722
    %v7795 = vpack.c.b16 %v6739, %v6723
    %v7796 = vpack.c.b16 %v6740, %v6724
    %v7797 = vpack.c.b16 %v6741, %v6725
    %v7798 = vpack.c.b16 %v6742, %v6726
    %v7799 = vpack.c.b16 %v6743, %v6727
    %v7800 = vpack.c.b16 %v6744, %v6728
    %v7801 = vpack.c.b16 %v6761, %v6745
    %v7802 = vpack.c.b16 %v6762, %v6746
    %v7803 = vpack.c.b16 %v6763, %v6747
    %v7804 = vpack.c.b16 %v6764, %v6748
    %v7805 = vpack.c.b16 %v6765, %v6749
    %v7806 = vpack.c.b16 %v6766, %v6750
    %v7807 = vpack.c.b16 %v6767, %v6751
    %v7808 = vpack.c.b16 %v6768, %v6752
    %v7809 = vpack.c.b16 %v6769, %v6753
    %v7810 = vpack.c.b16 %v6770, %v6754
    %v7811 = vpack.c.b16 %v6771, %v6755
    %v7812 = vpack.c.b16 %v6772, %v6756
    %v7813 = vpack.c.b16 %v6773, %v6757
    %v7814 = vpack.c.b16 %v6774, %v6758
    %v7815 = vpack.c.b16 %v6775, %v6759
    %v7816 = vpack.c.b16 %v6776, %v6760
    %v7817 = vpack.c.b16 %v6793, %v6777
    %v7818 = vpack.c.b16 %v6794, %v6778
    %v7819 = vpack.c.b16 %v6795, %v6779
    %v7820 = vpack.c.b16 %v6796, %v6780
    %v7821 = vpack.c.b16 %v6797, %v6781
    %v7822 = vpack.c.b16 %v6798, %v6782
    %v7823 = vpack.c.b16 %v6799, %v6783
    %v7824 = vpack.c.b16 %v6800, %v6784
    %v7825 = vpack.c.b16 %v6801, %v6785
    %v7826 = vpack.c.b16 %v6802, %v6786
    %v7827 = vpack.c.b16 %v6803, %v6787
    %v7828 = vpack.c.b16 %v6804, %v6788
    %v7829 = vpack.c.b16 %v6805, %v6789
    %v7830 = vpack.c.b16 %v6806, %v6790
    %v7831 = vpack.c.b16 %v6807, %v6791
    %v7832 = vpack.c.b16 %v6808, %v6792
    %8857 = vmatprep.subr.bf16.mxu0 %v6810
    %8858 = vmatpush1.bf16.msra.mxu0 %v6809
    %8859 = vmatprep.subr.bf16.mxu0 %v6826
    %8860 = vmatpush1.bf16.msra.mxu0 %v6825
    %8861 = vmatprep.subr.bf16.mxu0 %v6842
    %8862 = vmatpush1.bf16.msra.mxu0 %v6841
    %8863 = vmatprep.subr.bf16.mxu0 %v6858
    %8864 = vmatpush1.bf16.msra.mxu0 %v6857
    %8865 = vmatprep.subr.bf16.mxu0 %v6874
    %8866 = vmatpush1.bf16.msra.mxu0 %v6873
    %8867 = vmatprep.subr.bf16.mxu0 %v6890
    %8868 = vmatpush1.bf16.msra.mxu0 %v6889
    %8869 = vmatprep.subr.bf16.mxu0 %v6906
    %8870 = vmatpush1.bf16.msra.mxu0 %v6905
    %8871 = vmatprep.subr.bf16.mxu0 %v6922
    %8872 = vmatpush1.bf16.msra.mxu0 %v6921
    %8873 = vmatprep.subr.bf16.mxu0 %v6938
    %8874 = vmatpush1.bf16.msra.mxu0 %v6937
    %8875 = vmatprep.subr.bf16.mxu0 %v6954
    %8876 = vmatpush1.bf16.msra.mxu0 %v6953
    %8877 = vmatprep.subr.bf16.mxu0 %v6970
    %8878 = vmatpush1.bf16.msra.mxu0 %v6969
    %8879 = vmatprep.subr.bf16.mxu0 %v6986
    %8880 = vmatpush1.bf16.msra.mxu0 %v6985
    %8881 = vmatprep.subr.bf16.mxu0 %v7002
    %8882 = vmatpush1.bf16.msra.mxu0 %v7001
    %8883 = vmatprep.subr.bf16.mxu0 %v7018
    %8884 = vmatpush1.bf16.msra.mxu0 %v7017
    %8885 = vmatprep.subr.bf16.mxu0 %v7034
    %8886 = vmatpush1.bf16.msra.mxu0 %v7033
    %8887 = vmatprep.subr.bf16.mxu0 %v7050
    %8888 = vmatpush1.bf16.msra.mxu0 %v7049
    %8889 = vmatprep.mubr.bf16.mxu0 %v2622
    %8890 = vmatmul.mubr.bf16.gmra.mrb[0].mxu0 %v2621
    %v8891 = vpop.f32.mrb[0].mxu0
    %v8892 = vadd.f32 %v3660, %v8891
    %v8893 = vpop.f32.mrb[0].mxu0
    %v8894 = vadd.f32 %v3664, %v8893
    %v8895 = vpop.f32.mrb[0].mxu0
    %v8896 = vadd.f32 %v3660, %v8895
    %v8897 = vpop.f32.mrb[0].mxu0
    %v8898 = vadd.f32 %v3664, %v8897
    %8899 = vdwg.mxu0
    %8900 = vmatprep.subr.bf16.mxu0 %v7066
    %8901 = vmatpush1.bf16.msra.mxu0 %v7065
    %8902 = vmatprep.subr.bf16.mxu0 %v7082
    %8903 = vmatpush1.bf16.msra.mxu0 %v7081
    %8904 = vmatprep.subr.bf16.mxu0 %v7098
    %8905 = vmatpush1.bf16.msra.mxu0 %v7097
    %8906 = vmatprep.subr.bf16.mxu0 %v7114
    %8907 = vmatpush1.bf16.msra.mxu0 %v7113
    %8908 = vmatprep.subr.bf16.mxu0 %v7130
    %8909 = vmatpush1.bf16.msra.mxu0 %v7129
    %8910 = vmatprep.subr.bf16.mxu0 %v7146
    %8911 = vmatpush1.bf16.msra.mxu0 %v7145
    %8912 = vmatprep.subr.bf16.mxu0 %v7162
    %8913 = vmatpush1.bf16.msra.mxu0 %v7161
    %8914 = vmatprep.subr.bf16.mxu0 %v7178
    %8915 = vmatpush1.bf16.msra.mxu0 %v7177
    %8916 = vmatprep.subr.bf16.mxu0 %v7194
    %8917 = vmatpush1.bf16.msra.mxu0 %v7193
    %8918 = vmatprep.subr.bf16.mxu0 %v7210
    %8919 = vmatpush1.bf16.msra.mxu0 %v7209
    %8920 = vmatprep.subr.bf16.mxu0 %v7226
    %8921 = vmatpush1.bf16.msra.mxu0 %v7225
    %8922 = vmatprep.subr.bf16.mxu0 %v7242
    %8923 = vmatpush1.bf16.msra.mxu0 %v7241
    %8924 = vmatprep.subr.bf16.mxu0 %v7258
    %8925 = vmatpush1.bf16.msra.mxu0 %v7257
    %8926 = vmatprep.subr.bf16.mxu0 %v7274
    %8927 = vmatpush1.bf16.msra.mxu0 %v7273
    %8928 = vmatprep.subr.bf16.mxu0 %v7290
    %8929 = vmatpush1.bf16.msra.mxu0 %v7289
    %8930 = vmatprep.subr.bf16.mxu0 %v7306
    %8931 = vmatpush1.bf16.msra.mxu0 %v7305
    %8932 = vmatprep.mubr.bf16.mxu0 %v2624
    %8933 = vmatmul.mubr.bf16.gmra.mrb[0].mxu0 %v2623
    %v8934 = vpop.f32.mrb[0].mxu0
    %v8935 = vadd.f32 %v8892, %v8934
    %v8936 = vpop.f32.mrb[0].mxu0
    %v8937 = vadd.f32 %v8894, %v8936
    %v8938 = vpop.f32.mrb[0].mxu0
    %v8939 = vadd.f32 %v8896, %v8938
    %v8940 = vpop.f32.mrb[0].mxu0
    %v8941 = vadd.f32 %v8898, %v8940
    %8942 = vdwg.mxu0
    %8943 = vmatprep.subr.bf16.mxu0 %v7322
    %8944 = vmatpush1.bf16.msra.mxu0 %v7321
    %8945 = vmatprep.subr.bf16.mxu0 %v7338
    %8946 = vmatpush1.bf16.msra.mxu0 %v7337
    %8947 = vmatprep.subr.bf16.mxu0 %v7354
    %8948 = vmatpush1.bf16.msra.mxu0 %v7353
    %8949 = vmatprep.subr.bf16.mxu0 %v7370
    %8950 = vmatpush1.bf16.msra.mxu0 %v7369
    %8951 = vmatprep.subr.bf16.mxu0 %v7386
    %8952 = vmatpush1.bf16.msra.mxu0 %v7385
    %8953 = vmatprep.subr.bf16.mxu0 %v7402
    %8954 = vmatpush1.bf16.msra.mxu0 %v7401
    %8955 = vmatprep.subr.bf16.mxu0 %v7418
    %8956 = vmatpush1.bf16.msra.mxu0 %v7417
    %8957 = vmatprep.subr.bf16.mxu0 %v7434
    %8958 = vmatpush1.bf16.msra.mxu0 %v7433
    %8959 = vmatprep.subr.bf16.mxu0 %v7450
    %8960 = vmatpush1.bf16.msra.mxu0 %v7449
    %8961 = vmatprep.subr.bf16.mxu0 %v7466
    %8962 = vmatpush1.bf16.msra.mxu0 %v7465
    %8963 = vmatprep.subr.bf16.mxu0 %v7482
    %8964 = vmatpush1.bf16.msra.mxu0 %v7481
    %8965 = vmatprep.subr.bf16.mxu0 %v7498
    %8966 = vmatpush1.bf16.msra.mxu0 %v7497
    %8967 = vmatprep.subr.bf16.mxu0 %v7514
    %8968 = vmatpush1.bf16.msra.mxu0 %v7513
    %8969 = vmatprep.subr.bf16.mxu0 %v7530
    %8970 = vmatpush1.bf16.msra.mxu0 %v7529
    %8971 = vmatprep.subr.bf16.mxu0 %v7546
    %8972 = vmatpush1.bf16.msra.mxu0 %v7545
    %8973 = vmatprep.subr.bf16.mxu0 %v7562
    %8974 = vmatpush1.bf16.msra.mxu0 %v7561
    %8975 = vmatprep.mubr.bf16.mxu0 %v2626
    %8976 = vmatmul.mubr.bf16.gmra.mrb[0].mxu0 %v2625
    %v8977 = vpop.f32.mrb[0].mxu0
    %v8978 = vadd.f32 %v8935, %v8977
    %v8979 = vpop.f32.mrb[0].mxu0
    %v8980 = vadd.f32 %v8937, %v8979
    %v8981 = vpop.f32.mrb[0].mxu0
    %v8982 = vadd.f32 %v8939, %v8981
    %v8983 = vpop.f32.mrb[0].mxu0
    %v8984 = vadd.f32 %v8941, %v8983
    %8985 = vdwg.mxu0
    %8986 = vmatprep.subr.bf16.mxu0 %v7578
    %8987 = vmatpush1.bf16.msra.mxu0 %v7577
    %8988 = vmatprep.subr.bf16.mxu0 %v7594
    %8989 = vmatpush1.bf16.msra.mxu0 %v7593
    %8990 = vmatprep.subr.bf16.mxu0 %v7610
    %8991 = vmatpush1.bf16.msra.mxu0 %v7609
    %8992 = vmatprep.subr.bf16.mxu0 %v7626
    %8993 = vmatpush1.bf16.msra.mxu0 %v7625
    %8994 = vmatprep.subr.bf16.mxu0 %v7642
    %8995 = vmatpush1.bf16.msra.mxu0 %v7641
    %8996 = vmatprep.subr.bf16.mxu0 %v7658
    %8997 = vmatpush1.bf16.msra.mxu0 %v7657
    %8998 = vmatprep.subr.bf16.mxu0 %v7674
    %8999 = vmatpush1.bf16.msra.mxu0 %v7673
    %9000 = vmatprep.subr.bf16.mxu0 %v7690
    %9001 = vmatpush1.bf16.msra.mxu0 %v7689
    %9002 = vmatprep.subr.bf16.mxu0 %v7706
    %9003 = vmatpush1.bf16.msra.mxu0 %v7705
    %9004 = vmatprep.subr.bf16.mxu0 %v7722
    %9005 = vmatpush1.bf16.msra.mxu0 %v7721
    %9006 = vmatprep.subr.bf16.mxu0 %v7738
    %9007 = vmatpush1.bf16.msra.mxu0 %v7737
    %9008 = vmatprep.subr.bf16.mxu0 %v7754
    %9009 = vmatpush1.bf16.msra.mxu0 %v7753
    %9010 = vmatprep.subr.bf16.mxu0 %v7770
    %9011 = vmatpush1.bf16.msra.mxu0 %v7769
    %9012 = vmatprep.subr.bf16.mxu0 %v7786
    %9013 = vmatpush1.bf16.msra.mxu0 %v7785
    %9014 = vmatprep.subr.bf16.mxu0 %v7802
    %9015 = vmatpush1.bf16.msra.mxu0 %v7801
    %9016 = vmatprep.subr.bf16.mxu0 %v7818
    %9017 = vmatpush1.bf16.msra.mxu0 %v7817
    %9018 = vmatprep.mubr.bf16.mxu0 %v2628
    %9019 = vmatmul.mubr.bf16.gmra.mrb[0].mxu0 %v2627
    %v9020 = vpop.f32.mrb[0].mxu0
    %v9021 = vadd.f32 %v8978, %v9020
    %v9022 = vpop.f32.mrb[0].mxu0
    %v9023 = vadd.f32 %v8980, %v9022
    %v9024 = vpop.f32.mrb[0].mxu0
    %v9025 = vadd.f32 %v8982, %v9024
    %v9026 = vpop.f32.mrb[0].mxu0
    %v9027 = vadd.f32 %v8984, %v9026
    %9028 = vdwg.mxu0
    %9029 = vmatprep.subr.bf16.mxu0 %v6812
    %9030 = vmatpush1.bf16.msra.mxu0 %v6811
    %9031 = vmatprep.subr.bf16.mxu0 %v6828
    %9032 = vmatpush1.bf16.msra.mxu0 %v6827
    %9033 = vmatprep.subr.bf16.mxu0 %v6844
    %9034 = vmatpush1.bf16.msra.mxu0 %v6843
    %9035 = vmatprep.subr.bf16.mxu0 %v6860
    %9036 = vmatpush1.bf16.msra.mxu0 %v6859
    %9037 = vmatprep.subr.bf16.mxu0 %v6876
    %9038 = vmatpush1.bf16.msra.mxu0 %v6875
    %9039 = vmatprep.subr.bf16.mxu0 %v6892
    %9040 = vmatpush1.bf16.msra.mxu0 %v6891
    %9041 = vmatprep.subr.bf16.mxu0 %v6908
    %9042 = vmatpush1.bf16.msra.mxu0 %v6907
    %9043 = vmatprep.subr.bf16.mxu0 %v6924
    %9044 = vmatpush1.bf16.msra.mxu0 %v6923
    %9045 = vmatprep.subr.bf16.mxu0 %v6940
    %9046 = vmatpush1.bf16.msra.mxu0 %v6939
    %9047 = vmatprep.subr.bf16.mxu0 %v6956
    %9048 = vmatpush1.bf16.msra.mxu0 %v6955
    %9049 = vmatprep.subr.bf16.mxu0 %v6972
    %9050 = vmatpush1.bf16.msra.mxu0 %v6971
    %9051 = vmatprep.subr.bf16.mxu0 %v6988
    %9052 = vmatpush1.bf16.msra.mxu0 %v6987
    %9053 = vmatprep.subr.bf16.mxu0 %v7004
    %9054 = vmatpush1.bf16.msra.mxu0 %v7003
    %9055 = vmatprep.subr.bf16.mxu0 %v7020
    %9056 = vmatpush1.bf16.msra.mxu0 %v7019
    %9057 = vmatprep.subr.bf16.mxu0 %v7036
    %9058 = vmatpush1.bf16.msra.mxu0 %v7035
    %9059 = vmatprep.subr.bf16.mxu0 %v7052
    %9060 = vmatpush1.bf16.msra.mxu0 %v7051
    %9061 = vmatprep.mubr.bf16.mxu0 %v2622
    %9062 = vmatmul.mubr.bf16.gmra.mrb[0].mxu0 %v2621
    %v9063 = vpop.f32.mrb[0].mxu0
    %v9064 = vadd.f32 %v3668, %v9063
    %v9065 = vpop.f32.mrb[0].mxu0
    %v9066 = vadd.f32 %v3672, %v9065
    %v9067 = vpop.f32.mrb[0].mxu0
    %v9068 = vadd.f32 %v3668, %v9067
    %v9069 = vpop.f32.mrb[0].mxu0
    %v9070 = vadd.f32 %v3672, %v9069
    %9071 = vdwg.mxu0
    %9072 = vmatprep.subr.bf16.mxu0 %v7068
    %9073 = vmatpush1.bf16.msra.mxu0 %v7067
    %9074 = vmatprep.subr.bf16.mxu0 %v7084
    %9075 = vmatpush1.bf16.msra.mxu0 %v7083
    %9076 = vmatprep.subr.bf16.mxu0 %v7100
    %9077 = vmatpush1.bf16.msra.mxu0 %v7099
    %9078 = vmatprep.subr.bf16.mxu0 %v7116
    %9079 = vmatpush1.bf16.msra.mxu0 %v7115
    %9080 = vmatprep.subr.bf16.mxu0 %v7132
    %9081 = vmatpush1.bf16.msra.mxu0 %v7131
    %9082 = vmatprep.subr.bf16.mxu0 %v7148
    %9083 = vmatpush1.bf16.msra.mxu0 %v7147
    %9084 = vmatprep.subr.bf16.mxu0 %v7164
    %9085 = vmatpush1.bf16.msra.mxu0 %v7163
    %9086 = vmatprep.subr.bf16.mxu0 %v7180
    %9087 = vmatpush1.bf16.msra.mxu0 %v7179
    %9088 = vmatprep.subr.bf16.mxu0 %v7196
    %9089 = vmatpush1.bf16.msra.mxu0 %v7195
    %9090 = vmatprep.subr.bf16.mxu0 %v7212
    %9091 = vmatpush1.bf16.msra.mxu0 %v7211
    %9092 = vmatprep.subr.bf16.mxu0 %v7228
    %9093 = vmatpush1.bf16.msra.mxu0 %v7227
    %9094 = vmatprep.subr.bf16.mxu0 %v7244
    %9095 = vmatpush1.bf16.msra.mxu0 %v7243
    %9096 = vmatprep.subr.bf16.mxu0 %v7260
    %9097 = vmatpush1.bf16.msra.mxu0 %v7259
    %9098 = vmatprep.subr.bf16.mxu0 %v7276
    %9099 = vmatpush1.bf16.msra.mxu0 %v7275
    %9100 = vmatprep.subr.bf16.mxu0 %v7292
    %9101 = vmatpush1.bf16.msra.mxu0 %v7291
    %9102 = vmatprep.subr.bf16.mxu0 %v7308
    %9103 = vmatpush1.bf16.msra.mxu0 %v7307
    %9104 = vmatprep.mubr.bf16.mxu0 %v2624
    %9105 = vmatmul.mubr.bf16.gmra.mrb[0].mxu0 %v2623
    %v9106 = vpop.f32.mrb[0].mxu0
    %v9107 = vadd.f32 %v9064, %v9106
    %v9108 = vpop.f32.mrb[0].mxu0
    %v9109 = vadd.f32 %v9066, %v9108
    %v9110 = vpop.f32.mrb[0].mxu0
    %v9111 = vadd.f32 %v9068, %v9110
    %v9112 = vpop.f32.mrb[0].mxu0
    %v9113 = vadd.f32 %v9070, %v9112
    %9114 = vdwg.mxu0
    %9115 = vmatprep.subr.bf16.mxu0 %v7324
    %9116 = vmatpush1.bf16.msra.mxu0 %v7323
    %9117 = vmatprep.subr.bf16.mxu0 %v7340
    %9118 = vmatpush1.bf16.msra.mxu0 %v7339
    %9119 = vmatprep.subr.bf16.mxu0 %v7356
    %9120 = vmatpush1.bf16.msra.mxu0 %v7355
    %9121 = vmatprep.subr.bf16.mxu0 %v7372
    %9122 = vmatpush1.bf16.msra.mxu0 %v7371
    %9123 = vmatprep.subr.bf16.mxu0 %v7388
    %9124 = vmatpush1.bf16.msra.mxu0 %v7387
    %9125 = vmatprep.subr.bf16.mxu0 %v7404
    %9126 = vmatpush1.bf16.msra.mxu0 %v7403
    %9127 = vmatprep.subr.bf16.mxu0 %v7420
    %9128 = vmatpush1.bf16.msra.mxu0 %v7419
    %9129 = vmatprep.subr.bf16.mxu0 %v7436
    %9130 = vmatpush1.bf16.msra.mxu0 %v7435
    %9131 = vmatprep.subr.bf16.mxu0 %v7452
    %9132 = vmatpush1.bf16.msra.mxu0 %v7451
    %9133 = vmatprep.subr.bf16.mxu0 %v7468
    %9134 = vmatpush1.bf16.msra.mxu0 %v7467
    %9135 = vmatprep.subr.bf16.mxu0 %v7484
    %9136 = vmatpush1.bf16.msra.mxu0 %v7483
    %9137 = vmatprep.subr.bf16.mxu0 %v7500
    %9138 = vmatpush1.bf16.msra.mxu0 %v7499
    %9139 = vmatprep.subr.bf16.mxu0 %v7516
    %9140 = vmatpush1.bf16.msra.mxu0 %v7515
    %9141 = vmatprep.subr.bf16.mxu0 %v7532
    %9142 = vmatpush1.bf16.msra.mxu0 %v7531
    %9143 = vmatprep.subr.bf16.mxu0 %v7548
    %9144 = vmatpush1.bf16.msra.mxu0 %v7547
    %9145 = vmatprep.subr.bf16.mxu0 %v7564
    %9146 = vmatpush1.bf16.msra.mxu0 %v7563
    %9147 = vmatprep.mubr.bf16.mxu0 %v2626
    %9148 = vmatmul.mubr.bf16.gmra.mrb[0].mxu0 %v2625
    %v9149 = vpop.f32.mrb[0].mxu0
    %v9150 = vadd.f32 %v9107, %v9149
    %v9151 = vpop.f32.mrb[0].mxu0
    %v9152 = vadd.f32 %v9109, %v9151
    %v9153 = vpop.f32.mrb[0].mxu0
    %v9154 = vadd.f32 %v9111, %v9153
    %v9155 = vpop.f32.mrb[0].mxu0
    %v9156 = vadd.f32 %v9113, %v9155
    %9157 = vdwg.mxu0
    %9158 = vmatprep.subr.bf16.mxu0 %v7580
    %9159 = vmatpush1.bf16.msra.mxu0 %v7579
    %9160 = vmatprep.subr.bf16.mxu0 %v7596
    %9161 = vmatpush1.bf16.msra.mxu0 %v7595
    %9162 = vmatprep.subr.bf16.mxu0 %v7612
    %9163 = vmatpush1.bf16.msra.mxu0 %v7611
    %9164 = vmatprep.subr.bf16.mxu0 %v7628
    %9165 = vmatpush1.bf16.msra.mxu0 %v7627
    %9166 = vmatprep.subr.bf16.mxu0 %v7644
    %9167 = vmatpush1.bf16.msra.mxu0 %v7643
    %9168 = vmatprep.subr.bf16.mxu0 %v7660
    %9169 = vmatpush1.bf16.msra.mxu0 %v7659
    %9170 = vmatprep.subr.bf16.mxu0 %v7676
    %9171 = vmatpush1.bf16.msra.mxu0 %v7675
    %9172 = vmatprep.subr.bf16.mxu0 %v7692
    %9173 = vmatpush1.bf16.msra.mxu0 %v7691
    %9174 = vmatprep.subr.bf16.mxu0 %v7708
    %9175 = vmatpush1.bf16.msra.mxu0 %v7707
    %9176 = vmatprep.subr.bf16.mxu0 %v7724
    %9177 = vmatpush1.bf16.msra.mxu0 %v7723
    %9178 = vmatprep.subr.bf16.mxu0 %v7740
    %9179 = vmatpush1.bf16.msra.mxu0 %v7739
    %9180 = vmatprep.subr.bf16.mxu0 %v7756
    %9181 = vmatpush1.bf16.msra.mxu0 %v7755
    %9182 = vmatprep.subr.bf16.mxu0 %v7772
    %9183 = vmatpush1.bf16.msra.mxu0 %v7771
    %9184 = vmatprep.subr.bf16.mxu0 %v7788
    %9185 = vmatpush1.bf16.msra.mxu0 %v7787
    %9186 = vmatprep.subr.bf16.mxu0 %v7804
    %9187 = vmatpush1.bf16.msra.mxu0 %v7803
    %9188 = vmatprep.subr.bf16.mxu0 %v7820
    %9189 = vmatpush1.bf16.msra.mxu0 %v7819
    %9190 = vmatprep.mubr.bf16.mxu0 %v2628
    %9191 = vmatmul.mubr.bf16.gmra.mrb[0].mxu0 %v2627
    %v9192 = vpop.f32.mrb[0].mxu0
    %v9193 = vadd.f32 %v9150, %v9192
    %v9194 = vpop.f32.mrb[0].mxu0
    %v9195 = vadd.f32 %v9152, %v9194
    %v9196 = vpop.f32.mrb[0].mxu0
    %v9197 = vadd.f32 %v9154, %v9196
    %v9198 = vpop.f32.mrb[0].mxu0
    %v9199 = vadd.f32 %v9156, %v9198
    %9200 = vdwg.mxu0
    %9201 = vmatprep.subr.bf16.mxu0 %v6814
    %9202 = vmatpush1.bf16.msra.mxu0 %v6813
    %9203 = vmatprep.subr.bf16.mxu0 %v6830
    %9204 = vmatpush1.bf16.msra.mxu0 %v6829
    %9205 = vmatprep.subr.bf16.mxu0 %v6846
    %9206 = vmatpush1.bf16.msra.mxu0 %v6845
    %9207 = vmatprep.subr.bf16.mxu0 %v6862
    %9208 = vmatpush1.bf16.msra.mxu0 %v6861
    %9209 = vmatprep.subr.bf16.mxu0 %v6878
    %9210 = vmatpush1.bf16.msra.mxu0 %v6877
    %9211 = vmatprep.subr.bf16.mxu0 %v6894
    %9212 = vmatpush1.bf16.msra.mxu0 %v6893
    %9213 = vmatprep.subr.bf16.mxu0 %v6910
    %9214 = vmatpush1.bf16.msra.mxu0 %v6909
    %9215 = vmatprep.subr.bf16.mxu0 %v6926
    %9216 = vmatpush1.bf16.msra.mxu0 %v6925
    %9217 = vmatprep.subr.bf16.mxu0 %v6942
    %9218 = vmatpush1.bf16.msra.mxu0 %v6941
    %9219 = vmatprep.subr.bf16.mxu0 %v6958
    %9220 = vmatpush1.bf16.msra.mxu0 %v6957
    %9221 = vmatprep.subr.bf16.mxu0 %v6974
    %9222 = vmatpush1.bf16.msra.mxu0 %v6973
    %9223 = vmatprep.subr.bf16.mxu0 %v6990
    %9224 = vmatpush1.bf16.msra.mxu0 %v6989
    %9225 = vmatprep.subr.bf16.mxu0 %v7006
    %9226 = vmatpush1.bf16.msra.mxu0 %v7005
    %9227 = vmatprep.subr.bf16.mxu0 %v7022
    %9228 = vmatpush1.bf16.msra.mxu0 %v7021
    %9229 = vmatprep.subr.bf16.mxu0 %v7038
    %9230 = vmatpush1.bf16.msra.mxu0 %v7037
    %9231 = vmatprep.subr.bf16.mxu0 %v7054
    %9232 = vmatpush1.bf16.msra.mxu0 %v7053
    %9233 = vmatprep.mubr.bf16.mxu0 %v2622
    %9234 = vmatmul.mubr.bf16.gmra.mrb[0].mxu0 %v2621
    %v9235 = vpop.f32.mrb[0].mxu0
    %v9236 = vadd.f32 %v3676, %v9235
    %v9237 = vpop.f32.mrb[0].mxu0
    %v9238 = vadd.f32 %v3680, %v9237
    %v9239 = vpop.f32.mrb[0].mxu0
    %v9240 = vadd.f32 %v3676, %v9239
    %v9241 = vpop.f32.mrb[0].mxu0
    %v9242 = vadd.f32 %v3680, %v9241
    %9243 = vdwg.mxu0
    %9244 = vmatprep.subr.bf16.mxu0 %v7070
    %9245 = vmatpush1.bf16.msra.mxu0 %v7069
    %9246 = vmatprep.subr.bf16.mxu0 %v7086
    %9247 = vmatpush1.bf16.msra.mxu0 %v7085
    %9248 = vmatprep.subr.bf16.mxu0 %v7102
    %9249 = vmatpush1.bf16.msra.mxu0 %v7101
    %9250 = vmatprep.subr.bf16.mxu0 %v7118
    %9251 = vmatpush1.bf16.msra.mxu0 %v7117
    %9252 = vmatprep.subr.bf16.mxu0 %v7134
    %9253 = vmatpush1.bf16.msra.mxu0 %v7133
    %9254 = vmatprep.subr.bf16.mxu0 %v7150
    %9255 = vmatpush1.bf16.msra.mxu0 %v7149
    %9256 = vmatprep.subr.bf16.mxu0 %v7166
    %9257 = vmatpush1.bf16.msra.mxu0 %v7165
    %9258 = vmatprep.subr.bf16.mxu0 %v7182
    %9259 = vmatpush1.bf16.msra.mxu0 %v7181
    %9260 = vmatprep.subr.bf16.mxu0 %v7198
    %9261 = vmatpush1.bf16.msra.mxu0 %v7197
    %9262 = vmatprep.subr.bf16.mxu0 %v7214
    %9263 = vmatpush1.bf16.msra.mxu0 %v7213
    %9264 = vmatprep.subr.bf16.mxu0 %v7230
    %9265 = vmatpush1.bf16.msra.mxu0 %v7229
    %9266 = vmatprep.subr.bf16.mxu0 %v7246
    %9267 = vmatpush1.bf16.msra.mxu0 %v7245
    %9268 = vmatprep.subr.bf16.mxu0 %v7262
    %9269 = vmatpush1.bf16.msra.mxu0 %v7261
    %9270 = vmatprep.subr.bf16.mxu0 %v7278
    %9271 = vmatpush1.bf16.msra.mxu0 %v7277
    %9272 = vmatprep.subr.bf16.mxu0 %v7294
    %9273 = vmatpush1.bf16.msra.mxu0 %v7293
    %9274 = vmatprep.subr.bf16.mxu0 %v7310
    %9275 = vmatpush1.bf16.msra.mxu0 %v7309
    %9276 = vmatprep.mubr.bf16.mxu0 %v2624
    %9277 = vmatmul.mubr.bf16.gmra.mrb[0].mxu0 %v2623
    %v9278 = vpop.f32.mrb[0].mxu0
    %v9279 = vadd.f32 %v9236, %v9278
    %v9280 = vpop.f32.mrb[0].mxu0
    %v9281 = vadd.f32 %v9238, %v9280
    %v9282 = vpop.f32.mrb[0].mxu0
    %v9283 = vadd.f32 %v9240, %v9282
    %v9284 = vpop.f32.mrb[0].mxu0
    %v9285 = vadd.f32 %v9242, %v9284
    %9286 = vdwg.mxu0
    %9287 = vmatprep.subr.bf16.mxu0 %v7326
    %9288 = vmatpush1.bf16.msra.mxu0 %v7325
    %9289 = vmatprep.subr.bf16.mxu0 %v7342
    %9290 = vmatpush1.bf16.msra.mxu0 %v7341
    %9291 = vmatprep.subr.bf16.mxu0 %v7358
    %9292 = vmatpush1.bf16.msra.mxu0 %v7357
    %9293 = vmatprep.subr.bf16.mxu0 %v7374
    %9294 = vmatpush1.bf16.msra.mxu0 %v7373
    %9295 = vmatprep.subr.bf16.mxu0 %v7390
    %9296 = vmatpush1.bf16.msra.mxu0 %v7389
    %9297 = vmatprep.subr.bf16.mxu0 %v7406
    %9298 = vmatpush1.bf16.msra.mxu0 %v7405
    %9299 = vmatprep.subr.bf16.mxu0 %v7422
    %9300 = vmatpush1.bf16.msra.mxu0 %v7421
    %9301 = vmatprep.subr.bf16.mxu0 %v7438
    %9302 = vmatpush1.bf16.msra.mxu0 %v7437
    %9303 = vmatprep.subr.bf16.mxu0 %v7454
    %9304 = vmatpush1.bf16.msra.mxu0 %v7453
    %9305 = vmatprep.subr.bf16.mxu0 %v7470
    %9306 = vmatpush1.bf16.msra.mxu0 %v7469
    %9307 = vmatprep.subr.bf16.mxu0 %v7486
    %9308 = vmatpush1.bf16.msra.mxu0 %v7485
    %9309 = vmatprep.subr.bf16.mxu0 %v7502
    %9310 = vmatpush1.bf16.msra.mxu0 %v7501
    %9311 = vmatprep.subr.bf16.mxu0 %v7518
    %9312 = vmatpush1.bf16.msra.mxu0 %v7517
    %9313 = vmatprep.subr.bf16.mxu0 %v7534
    %9314 = vmatpush1.bf16.msra.mxu0 %v7533
    %9315 = vmatprep.subr.bf16.mxu0 %v7550
    %9316 = vmatpush1.bf16.msra.mxu0 %v7549
    %9317 = vmatprep.subr.bf16.mxu0 %v7566
    %9318 = vmatpush1.bf16.msra.mxu0 %v7565
    %9319 = vmatprep.mubr.bf16.mxu0 %v2626
    %9320 = vmatmul.mubr.bf16.gmra.mrb[0].mxu0 %v2625
    %v9321 = vpop.f32.mrb[0].mxu0
    %v9322 = vadd.f32 %v9279, %v9321
    %v9323 = vpop.f32.mrb[0].mxu0
    %v9324 = vadd.f32 %v9281, %v9323
    %v9325 = vpop.f32.mrb[0].mxu0
    %v9326 = vadd.f32 %v9283, %v9325
    %v9327 = vpop.f32.mrb[0].mxu0
    %v9328 = vadd.f32 %v9285, %v9327
    %9329 = vdwg.mxu0
    %9330 = vmatprep.subr.bf16.mxu0 %v7582
    %9331 = vmatpush1.bf16.msra.mxu0 %v7581
    %9332 = vmatprep.subr.bf16.mxu0 %v7598
    %9333 = vmatpush1.bf16.msra.mxu0 %v7597
    %9334 = vmatprep.subr.bf16.mxu0 %v7614
    %9335 = vmatpush1.bf16.msra.mxu0 %v7613
    %9336 = vmatprep.subr.bf16.mxu0 %v7630
    %9337 = vmatpush1.bf16.msra.mxu0 %v7629
    %9338 = vmatprep.subr.bf16.mxu0 %v7646
    %9339 = vmatpush1.bf16.msra.mxu0 %v7645
    %9340 = vmatprep.subr.bf16.mxu0 %v7662
    %9341 = vmatpush1.bf16.msra.mxu0 %v7661
    %9342 = vmatprep.subr.bf16.mxu0 %v7678
    %9343 = vmatpush1.bf16.msra.mxu0 %v7677
    %9344 = vmatprep.subr.bf16.mxu0 %v7694
    %9345 = vmatpush1.bf16.msra.mxu0 %v7693
    %9346 = vmatprep.subr.bf16.mxu0 %v7710
    %9347 = vmatpush1.bf16.msra.mxu0 %v7709
    %9348 = vmatprep.subr.bf16.mxu0 %v7726
    %9349 = vmatpush1.bf16.msra.mxu0 %v7725
    %9350 = vmatprep.subr.bf16.mxu0 %v7742
    %9351 = vmatpush1.bf16.msra.mxu0 %v7741
    %9352 = vmatprep.subr.bf16.mxu0 %v7758
    %9353 = vmatpush1.bf16.msra.mxu0 %v7757
    %9354 = vmatprep.subr.bf16.mxu0 %v7774
    %9355 = vmatpush1.bf16.msra.mxu0 %v7773
    %9356 = vmatprep.subr.bf16.mxu0 %v7790
    %9357 = vmatpush1.bf16.msra.mxu0 %v7789
    %9358 = vmatprep.subr.bf16.mxu0 %v7806
    %9359 = vmatpush1.bf16.msra.mxu0 %v7805
    %9360 = vmatprep.subr.bf16.mxu0 %v7822
    %9361 = vmatpush1.bf16.msra.mxu0 %v7821
    %9362 = vmatprep.mubr.bf16.mxu0 %v2628
    %9363 = vmatmul.mubr.bf16.gmra.mrb[0].mxu0 %v2627
    %v9364 = vpop.f32.mrb[0].mxu0
    %v9365 = vadd.f32 %v9322, %v9364
    %v9366 = vpop.f32.mrb[0].mxu0
    %v9367 = vadd.f32 %v9324, %v9366
    %v9368 = vpop.f32.mrb[0].mxu0
    %v9369 = vadd.f32 %v9326, %v9368
    %v9370 = vpop.f32.mrb[0].mxu0
    %v9371 = vadd.f32 %v9328, %v9370
    %9372 = vdwg.mxu0
    %9373 = vmatprep.subr.bf16.mxu0 %v6816
    %9374 = vmatpush1.bf16.msra.mxu0 %v6815
    %9375 = vmatprep.subr.bf16.mxu0 %v6832
    %9376 = vmatpush1.bf16.msra.mxu0 %v6831
    %9377 = vmatprep.subr.bf16.mxu0 %v6848
    %9378 = vmatpush1.bf16.msra.mxu0 %v6847
    %9379 = vmatprep.subr.bf16.mxu0 %v6864
    %9380 = vmatpush1.bf16.msra.mxu0 %v6863
    %9381 = vmatprep.subr.bf16.mxu0 %v6880
    %9382 = vmatpush1.bf16.msra.mxu0 %v6879
    %9383 = vmatprep.subr.bf16.mxu0 %v6896
    %9384 = vmatpush1.bf16.msra.mxu0 %v6895
    %9385 = vmatprep.subr.bf16.mxu0 %v6912
    %9386 = vmatpush1.bf16.msra.mxu0 %v6911
    %9387 = vmatprep.subr.bf16.mxu0 %v6928
    %9388 = vmatpush1.bf16.msra.mxu0 %v6927
    %9389 = vmatprep.subr.bf16.mxu0 %v6944
    %9390 = vmatpush1.bf16.msra.mxu0 %v6943
    %9391 = vmatprep.subr.bf16.mxu0 %v6960
    %9392 = vmatpush1.bf16.msra.mxu0 %v6959
    %9393 = vmatprep.subr.bf16.mxu0 %v6976
    %9394 = vmatpush1.bf16.msra.mxu0 %v6975
    %9395 = vmatprep.subr.bf16.mxu0 %v6992
    %9396 = vmatpush1.bf16.msra.mxu0 %v6991
    %9397 = vmatprep.subr.bf16.mxu0 %v7008
    %9398 = vmatpush1.bf16.msra.mxu0 %v7007
    %9399 = vmatprep.subr.bf16.mxu0 %v7024
    %9400 = vmatpush1.bf16.msra.mxu0 %v7023
    %9401 = vmatprep.subr.bf16.mxu0 %v7040
    %9402 = vmatpush1.bf16.msra.mxu0 %v7039
    %9403 = vmatprep.subr.bf16.mxu0 %v7056
    %9404 = vmatpush1.bf16.msra.mxu0 %v7055
    %9405 = vmatprep.mubr.bf16.mxu0 %v2622
    %9406 = vmatmul.mubr.bf16.gmra.mrb[0].mxu0 %v2621
    %v9407 = vpop.f32.mrb[0].mxu0
    %v9408 = vadd.f32 %v3684, %v9407
    %v9409 = vpop.f32.mrb[0].mxu0
    %v9410 = vadd.f32 %v3688, %v9409
    %v9411 = vpop.f32.mrb[0].mxu0
    %v9412 = vadd.f32 %v3684, %v9411
    %v9413 = vpop.f32.mrb[0].mxu0
    %v9414 = vadd.f32 %v3688, %v9413
    %9415 = vdwg.mxu0
    %9416 = vmatprep.subr.bf16.mxu0 %v7072
    %9417 = vmatpush1.bf16.msra.mxu0 %v7071
    %9418 = vmatprep.subr.bf16.mxu0 %v7088
    %9419 = vmatpush1.bf16.msra.mxu0 %v7087
    %9420 = vmatprep.subr.bf16.mxu0 %v7104
    %9421 = vmatpush1.bf16.msra.mxu0 %v7103
    %9422 = vmatprep.subr.bf16.mxu0 %v7120
    %9423 = vmatpush1.bf16.msra.mxu0 %v7119
    %9424 = vmatprep.subr.bf16.mxu0 %v7136
    %9425 = vmatpush1.bf16.msra.mxu0 %v7135
    %9426 = vmatprep.subr.bf16.mxu0 %v7152
    %9427 = vmatpush1.bf16.msra.mxu0 %v7151
    %9428 = vmatprep.subr.bf16.mxu0 %v7168
    %9429 = vmatpush1.bf16.msra.mxu0 %v7167
    %9430 = vmatprep.subr.bf16.mxu0 %v7184
    %9431 = vmatpush1.bf16.msra.mxu0 %v7183
    %9432 = vmatprep.subr.bf16.mxu0 %v7200
    %9433 = vmatpush1.bf16.msra.mxu0 %v7199
    %9434 = vmatprep.subr.bf16.mxu0 %v7216
    %9435 = vmatpush1.bf16.msra.mxu0 %v7215
    %9436 = vmatprep.subr.bf16.mxu0 %v7232
    %9437 = vmatpush1.bf16.msra.mxu0 %v7231
    %9438 = vmatprep.subr.bf16.mxu0 %v7248
    %9439 = vmatpush1.bf16.msra.mxu0 %v7247
    %9440 = vmatprep.subr.bf16.mxu0 %v7264
    %9441 = vmatpush1.bf16.msra.mxu0 %v7263
    %9442 = vmatprep.subr.bf16.mxu0 %v7280
    %9443 = vmatpush1.bf16.msra.mxu0 %v7279
    %9444 = vmatprep.subr.bf16.mxu0 %v7296
    %9445 = vmatpush1.bf16.msra.mxu0 %v7295
    %9446 = vmatprep.subr.bf16.mxu0 %v7312
    %9447 = vmatpush1.bf16.msra.mxu0 %v7311
    %9448 = vmatprep.mubr.bf16.mxu0 %v2624
    %9449 = vmatmul.mubr.bf16.gmra.mrb[0].mxu0 %v2623
    %v9450 = vpop.f32.mrb[0].mxu0
    %v9451 = vadd.f32 %v9408, %v9450
    %v9452 = vpop.f32.mrb[0].mxu0
    %v9453 = vadd.f32 %v9410, %v9452
    %v9454 = vpop.f32.mrb[0].mxu0
    %v9455 = vadd.f32 %v9412, %v9454
    %v9456 = vpop.f32.mrb[0].mxu0
    %v9457 = vadd.f32 %v9414, %v9456
    %9458 = vdwg.mxu0
    %9459 = vmatprep.subr.bf16.mxu0 %v7328
    %9460 = vmatpush1.bf16.msra.mxu0 %v7327
    %9461 = vmatprep.subr.bf16.mxu0 %v7344
    %9462 = vmatpush1.bf16.msra.mxu0 %v7343
    %9463 = vmatprep.subr.bf16.mxu0 %v7360
    %9464 = vmatpush1.bf16.msra.mxu0 %v7359
    %9465 = vmatprep.subr.bf16.mxu0 %v7376
    %9466 = vmatpush1.bf16.msra.mxu0 %v7375
    %9467 = vmatprep.subr.bf16.mxu0 %v7392
    %9468 = vmatpush1.bf16.msra.mxu0 %v7391
    %9469 = vmatprep.subr.bf16.mxu0 %v7408
    %9470 = vmatpush1.bf16.msra.mxu0 %v7407
    %9471 = vmatprep.subr.bf16.mxu0 %v7424
    %9472 = vmatpush1.bf16.msra.mxu0 %v7423
    %9473 = vmatprep.subr.bf16.mxu0 %v7440
    %9474 = vmatpush1.bf16.msra.mxu0 %v7439
    %9475 = vmatprep.subr.bf16.mxu0 %v7456
    %9476 = vmatpush1.bf16.msra.mxu0 %v7455
    %9477 = vmatprep.subr.bf16.mxu0 %v7472
    %9478 = vmatpush1.bf16.msra.mxu0 %v7471
    %9479 = vmatprep.subr.bf16.mxu0 %v7488
    %9480 = vmatpush1.bf16.msra.mxu0 %v7487
    %9481 = vmatprep.subr.bf16.mxu0 %v7504
    %9482 = vmatpush1.bf16.msra.mxu0 %v7503
    %9483 = vmatprep.subr.bf16.mxu0 %v7520
    %9484 = vmatpush1.bf16.msra.mxu0 %v7519
    %9485 = vmatprep.subr.bf16.mxu0 %v7536
    %9486 = vmatpush1.bf16.msra.mxu0 %v7535
    %9487 = vmatprep.subr.bf16.mxu0 %v7552
    %9488 = vmatpush1.bf16.msra.mxu0 %v7551
    %9489 = vmatprep.subr.bf16.mxu0 %v7568
    %9490 = vmatpush1.bf16.msra.mxu0 %v7567
    %9491 = vmatprep.mubr.bf16.mxu0 %v2626
    %9492 = vmatmul.mubr.bf16.gmra.mrb[0].mxu0 %v2625
    %v9493 = vpop.f32.mrb[0].mxu0
    %v9494 = vadd.f32 %v9451, %v9493
    %v9495 = vpop.f32.mrb[0].mxu0
    %v9496 = vadd.f32 %v9453, %v9495
    %v9497 = vpop.f32.mrb[0].mxu0
    %v9498 = vadd.f32 %v9455, %v9497
    %v9499 = vpop.f32.mrb[0].mxu0
    %v9500 = vadd.f32 %v9457, %v9499
    %9501 = vdwg.mxu0
    %9502 = vmatprep.subr.bf16.mxu0 %v7584
    %9503 = vmatpush1.bf16.msra.mxu0 %v7583
    %9504 = vmatprep.subr.bf16.mxu0 %v7600
    %9505 = vmatpush1.bf16.msra.mxu0 %v7599
    %9506 = vmatprep.subr.bf16.mxu0 %v7616
    %9507 = vmatpush1.bf16.msra.mxu0 %v7615
    %9508 = vmatprep.subr.bf16.mxu0 %v7632
    %9509 = vmatpush1.bf16.msra.mxu0 %v7631
    %9510 = vmatprep.subr.bf16.mxu0 %v7648
    %9511 = vmatpush1.bf16.msra.mxu0 %v7647
    %9512 = vmatprep.subr.bf16.mxu0 %v7664
    %9513 = vmatpush1.bf16.msra.mxu0 %v7663
    %9514 = vmatprep.subr.bf16.mxu0 %v7680
    %9515 = vmatpush1.bf16.msra.mxu0 %v7679
    %9516 = vmatprep.subr.bf16.mxu0 %v7696
    %9517 = vmatpush1.bf16.msra.mxu0 %v7695
    %9518 = vmatprep.subr.bf16.mxu0 %v7712
    %9519 = vmatpush1.bf16.msra.mxu0 %v7711
    %9520 = vmatprep.subr.bf16.mxu0 %v7728
    %9521 = vmatpush1.bf16.msra.mxu0 %v7727
    %9522 = vmatprep.subr.bf16.mxu0 %v7744
    %9523 = vmatpush1.bf16.msra.mxu0 %v7743
    %9524 = vmatprep.subr.bf16.mxu0 %v7760
    %9525 = vmatpush1.bf16.msra.mxu0 %v7759
    %9526 = vmatprep.subr.bf16.mxu0 %v7776
    %9527 = vmatpush1.bf16.msra.mxu0 %v7775
    %9528 = vmatprep.subr.bf16.mxu0 %v7792
    %9529 = vmatpush1.bf16.msra.mxu0 %v7791
    %9530 = vmatprep.subr.bf16.mxu0 %v7808
    %9531 = vmatpush1.bf16.msra.mxu0 %v7807
    %9532 = vmatprep.subr.bf16.mxu0 %v7824
    %9533 = vmatpush1.bf16.msra.mxu0 %v7823
    %9534 = vmatprep.mubr.bf16.mxu0 %v2628
    %9535 = vmatmul.mubr.bf16.gmra.mrb[0].mxu0 %v2627
    %v9536 = vpop.f32.mrb[0].mxu0
    %v9537 = vadd.f32 %v9494, %v9536
    %v9538 = vpop.f32.mrb[0].mxu0
    %v9539 = vadd.f32 %v9496, %v9538
    %v9540 = vpop.f32.mrb[0].mxu0
    %v9541 = vadd.f32 %v9498, %v9540
    %v9542 = vpop.f32.mrb[0].mxu0
    %v9543 = vadd.f32 %v9500, %v9542
    %9544 = vdwg.mxu0
    %9545 = vmatprep.subr.bf16.mxu0 %v6818
    %9546 = vmatpush1.bf16.msra.mxu0 %v6817
    %9547 = vmatprep.subr.bf16.mxu0 %v6834
    %9548 = vmatpush1.bf16.msra.mxu0 %v6833
    %9549 = vmatprep.subr.bf16.mxu0 %v6850
    %9550 = vmatpush1.bf16.msra.mxu0 %v6849
    %9551 = vmatprep.subr.bf16.mxu0 %v6866
    %9552 = vmatpush1.bf16.msra.mxu0 %v6865
    %9553 = vmatprep.subr.bf16.mxu0 %v6882
    %9554 = vmatpush1.bf16.msra.mxu0 %v6881
    %9555 = vmatprep.subr.bf16.mxu0 %v6898
    %9556 = vmatpush1.bf16.msra.mxu0 %v6897
    %9557 = vmatprep.subr.bf16.mxu0 %v6914
    %9558 = vmatpush1.bf16.msra.mxu0 %v6913
    %9559 = vmatprep.subr.bf16.mxu0 %v6930
    %9560 = vmatpush1.bf16.msra.mxu0 %v6929
    %9561 = vmatprep.subr.bf16.mxu0 %v6946
    %9562 = vmatpush1.bf16.msra.mxu0 %v6945
    %9563 = vmatprep.subr.bf16.mxu0 %v6962
    %9564 = vmatpush1.bf16.msra.mxu0 %v6961
    %9565 = vmatprep.subr.bf16.mxu0 %v6978
    %9566 = vmatpush1.bf16.msra.mxu0 %v6977
    %9567 = vmatprep.subr.bf16.mxu0 %v6994
    %9568 = vmatpush1.bf16.msra.mxu0 %v6993
    %9569 = vmatprep.subr.bf16.mxu0 %v7010
    %9570 = vmatpush1.bf16.msra.mxu0 %v7009
    %9571 = vmatprep.subr.bf16.mxu0 %v7026
    %9572 = vmatpush1.bf16.msra.mxu0 %v7025
    %9573 = vmatprep.subr.bf16.mxu0 %v7042
    %9574 = vmatpush1.bf16.msra.mxu0 %v7041
    %9575 = vmatprep.subr.bf16.mxu0 %v7058
    %9576 = vmatpush1.bf16.msra.mxu0 %v7057
    %9577 = vmatprep.mubr.bf16.mxu0 %v2622
    %9578 = vmatmul.mubr.bf16.gmra.mrb[0].mxu0 %v2621
    %v9579 = vpop.f32.mrb[0].mxu0
    %v9580 = vadd.f32 %v3692, %v9579
    %v9581 = vpop.f32.mrb[0].mxu0
    %v9582 = vadd.f32 %v3696, %v9581
    %v9583 = vpop.f32.mrb[0].mxu0
    %v9584 = vadd.f32 %v3692, %v9583
    %v9585 = vpop.f32.mrb[0].mxu0
    %v9586 = vadd.f32 %v3696, %v9585
    %9587 = vdwg.mxu0
    %9588 = vmatprep.subr.bf16.mxu0 %v7074
    %9589 = vmatpush1.bf16.msra.mxu0 %v7073
    %9590 = vmatprep.subr.bf16.mxu0 %v7090
    %9591 = vmatpush1.bf16.msra.mxu0 %v7089
    %9592 = vmatprep.subr.bf16.mxu0 %v7106
    %9593 = vmatpush1.bf16.msra.mxu0 %v7105
    %9594 = vmatprep.subr.bf16.mxu0 %v7122
    %9595 = vmatpush1.bf16.msra.mxu0 %v7121
    %9596 = vmatprep.subr.bf16.mxu0 %v7138
    %9597 = vmatpush1.bf16.msra.mxu0 %v7137
    %9598 = vmatprep.subr.bf16.mxu0 %v7154
    %9599 = vmatpush1.bf16.msra.mxu0 %v7153
    %9600 = vmatprep.subr.bf16.mxu0 %v7170
    %9601 = vmatpush1.bf16.msra.mxu0 %v7169
    %9602 = vmatprep.subr.bf16.mxu0 %v7186
    %9603 = vmatpush1.bf16.msra.mxu0 %v7185
    %9604 = vmatprep.subr.bf16.mxu0 %v7202
    %9605 = vmatpush1.bf16.msra.mxu0 %v7201
    %9606 = vmatprep.subr.bf16.mxu0 %v7218
    %9607 = vmatpush1.bf16.msra.mxu0 %v7217
    %9608 = vmatprep.subr.bf16.mxu0 %v7234
    %9609 = vmatpush1.bf16.msra.mxu0 %v7233
    %9610 = vmatprep.subr.bf16.mxu0 %v7250
    %9611 = vmatpush1.bf16.msra.mxu0 %v7249
    %9612 = vmatprep.subr.bf16.mxu0 %v7266
    %9613 = vmatpush1.bf16.msra.mxu0 %v7265
    %9614 = vmatprep.subr.bf16.mxu0 %v7282
    %9615 = vmatpush1.bf16.msra.mxu0 %v7281
    %9616 = vmatprep.subr.bf16.mxu0 %v7298
    %9617 = vmatpush1.bf16.msra.mxu0 %v7297
    %9618 = vmatprep.subr.bf16.mxu0 %v7314
    %9619 = vmatpush1.bf16.msra.mxu0 %v7313
    %9620 = vmatprep.mubr.bf16.mxu0 %v2624
    %9621 = vmatmul.mubr.bf16.gmra.mrb[0].mxu0 %v2623
    %v9622 = vpop.f32.mrb[0].mxu0
    %v9623 = vadd.f32 %v9580, %v9622
    %v9624 = vpop.f32.mrb[0].mxu0
    %v9625 = vadd.f32 %v9582, %v9624
    %v9626 = vpop.f32.mrb[0].mxu0
    %v9627 = vadd.f32 %v9584, %v9626
    %v9628 = vpop.f32.mrb[0].mxu0
    %v9629 = vadd.f32 %v9586, %v9628
    %9630 = vdwg.mxu0
    %9631 = vmatprep.subr.bf16.mxu0 %v7330
    %9632 = vmatpush1.bf16.msra.mxu0 %v7329
    %9633 = vmatprep.subr.bf16.mxu0 %v7346
    %9634 = vmatpush1.bf16.msra.mxu0 %v7345
    %9635 = vmatprep.subr.bf16.mxu0 %v7362
    %9636 = vmatpush1.bf16.msra.mxu0 %v7361
    %9637 = vmatprep.subr.bf16.mxu0 %v7378
    %9638 = vmatpush1.bf16.msra.mxu0 %v7377
    %9639 = vmatprep.subr.bf16.mxu0 %v7394
    %9640 = vmatpush1.bf16.msra.mxu0 %v7393
    %9641 = vmatprep.subr.bf16.mxu0 %v7410
    %9642 = vmatpush1.bf16.msra.mxu0 %v7409
    %9643 = vmatprep.subr.bf16.mxu0 %v7426
    %9644 = vmatpush1.bf16.msra.mxu0 %v7425
    %9645 = vmatprep.subr.bf16.mxu0 %v7442
    %9646 = vmatpush1.bf16.msra.mxu0 %v7441
    %9647 = vmatprep.subr.bf16.mxu0 %v7458
    %9648 = vmatpush1.bf16.msra.mxu0 %v7457
    %9649 = vmatprep.subr.bf16.mxu0 %v7474
    %9650 = vmatpush1.bf16.msra.mxu0 %v7473
    %9651 = vmatprep.subr.bf16.mxu0 %v7490
    %9652 = vmatpush1.bf16.msra.mxu0 %v7489
    %9653 = vmatprep.subr.bf16.mxu0 %v7506
    %9654 = vmatpush1.bf16.msra.mxu0 %v7505
    %9655 = vmatprep.subr.bf16.mxu0 %v7522
    %9656 = vmatpush1.bf16.msra.mxu0 %v7521
    %9657 = vmatprep.subr.bf16.mxu0 %v7538
    %9658 = vmatpush1.bf16.msra.mxu0 %v7537
    %9659 = vmatprep.subr.bf16.mxu0 %v7554
    %9660 = vmatpush1.bf16.msra.mxu0 %v7553
    %9661 = vmatprep.subr.bf16.mxu0 %v7570
    %9662 = vmatpush1.bf16.msra.mxu0 %v7569
    %9663 = vmatprep.mubr.bf16.mxu0 %v2626
    %9664 = vmatmul.mubr.bf16.gmra.mrb[0].mxu0 %v2625
    %v9665 = vpop.f32.mrb[0].mxu0
    %v9666 = vadd.f32 %v9623, %v9665
    %v9667 = vpop.f32.mrb[0].mxu0
    %v9668 = vadd.f32 %v9625, %v9667
    %v9669 = vpop.f32.mrb[0].mxu0
    %v9670 = vadd.f32 %v9627, %v9669
    %v9671 = vpop.f32.mrb[0].mxu0
    %v9672 = vadd.f32 %v9629, %v9671
    %9673 = vdwg.mxu0
    %9674 = vmatprep.subr.bf16.mxu0 %v7586
    %9675 = vmatpush1.bf16.msra.mxu0 %v7585
    %9676 = vmatprep.subr.bf16.mxu0 %v7602
    %9677 = vmatpush1.bf16.msra.mxu0 %v7601
    %9678 = vmatprep.subr.bf16.mxu0 %v7618
    %9679 = vmatpush1.bf16.msra.mxu0 %v7617
    %9680 = vmatprep.subr.bf16.mxu0 %v7634
    %9681 = vmatpush1.bf16.msra.mxu0 %v7633
    %9682 = vmatprep.subr.bf16.mxu0 %v7650
    %9683 = vmatpush1.bf16.msra.mxu0 %v7649
    %9684 = vmatprep.subr.bf16.mxu0 %v7666
    %9685 = vmatpush1.bf16.msra.mxu0 %v7665
    %9686 = vmatprep.subr.bf16.mxu0 %v7682
    %9687 = vmatpush1.bf16.msra.mxu0 %v7681
    %9688 = vmatprep.subr.bf16.mxu0 %v7698
    %9689 = vmatpush1.bf16.msra.mxu0 %v7697
    %9690 = vmatprep.subr.bf16.mxu0 %v7714
    %9691 = vmatpush1.bf16.msra.mxu0 %v7713
    %9692 = vmatprep.subr.bf16.mxu0 %v7730
    %9693 = vmatpush1.bf16.msra.mxu0 %v7729
    %9694 = vmatprep.subr.bf16.mxu0 %v7746
    %9695 = vmatpush1.bf16.msra.mxu0 %v7745
    %9696 = vmatprep.subr.bf16.mxu0 %v7762
    %9697 = vmatpush1.bf16.msra.mxu0 %v7761
    %9698 = vmatprep.subr.bf16.mxu0 %v7778
    %9699 = vmatpush1.bf16.msra.mxu0 %v7777
    %9700 = vmatprep.subr.bf16.mxu0 %v7794
    %9701 = vmatpush1.bf16.msra.mxu0 %v7793
    %9702 = vmatprep.subr.bf16.mxu0 %v7810
    %9703 = vmatpush1.bf16.msra.mxu0 %v7809
    %9704 = vmatprep.subr.bf16.mxu0 %v7826
    %9705 = vmatpush1.bf16.msra.mxu0 %v7825
    %9706 = vmatprep.mubr.bf16.mxu0 %v2628
    %9707 = vmatmul.mubr.bf16.gmra.mrb[0].mxu0 %v2627
    %v9708 = vpop.f32.mrb[0].mxu0
    %v9709 = vadd.f32 %v9666, %v9708
    %v9710 = vpop.f32.mrb[0].mxu0
    %v9711 = vadd.f32 %v9668, %v9710
    %v9712 = vpop.f32.mrb[0].mxu0
    %v9713 = vadd.f32 %v9670, %v9712
    %v9714 = vpop.f32.mrb[0].mxu0
    %v9715 = vadd.f32 %v9672, %v9714
    %9716 = vdwg.mxu0
    %9717 = vmatprep.subr.bf16.mxu0 %v6820
    %9718 = vmatpush1.bf16.msra.mxu0 %v6819
    %9719 = vmatprep.subr.bf16.mxu0 %v6836
    %9720 = vmatpush1.bf16.msra.mxu0 %v6835
    %9721 = vmatprep.subr.bf16.mxu0 %v6852
    %9722 = vmatpush1.bf16.msra.mxu0 %v6851
    %9723 = vmatprep.subr.bf16.mxu0 %v6868
    %9724 = vmatpush1.bf16.msra.mxu0 %v6867
    %9725 = vmatprep.subr.bf16.mxu0 %v6884
    %9726 = vmatpush1.bf16.msra.mxu0 %v6883
    %9727 = vmatprep.subr.bf16.mxu0 %v6900
    %9728 = vmatpush1.bf16.msra.mxu0 %v6899
    %9729 = vmatprep.subr.bf16.mxu0 %v6916
    %9730 = vmatpush1.bf16.msra.mxu0 %v6915
    %9731 = vmatprep.subr.bf16.mxu0 %v6932
    %9732 = vmatpush1.bf16.msra.mxu0 %v6931
    %9733 = vmatprep.subr.bf16.mxu0 %v6948
    %9734 = vmatpush1.bf16.msra.mxu0 %v6947
    %9735 = vmatprep.subr.bf16.mxu0 %v6964
    %9736 = vmatpush1.bf16.msra.mxu0 %v6963
    %9737 = vmatprep.subr.bf16.mxu0 %v6980
    %9738 = vmatpush1.bf16.msra.mxu0 %v6979
    %9739 = vmatprep.subr.bf16.mxu0 %v6996
    %9740 = vmatpush1.bf16.msra.mxu0 %v6995
    %9741 = vmatprep.subr.bf16.mxu0 %v7012
    %9742 = vmatpush1.bf16.msra.mxu0 %v7011
    %9743 = vmatprep.subr.bf16.mxu0 %v7028
    %9744 = vmatpush1.bf16.msra.mxu0 %v7027
    %9745 = vmatprep.subr.bf16.mxu0 %v7044
    %9746 = vmatpush1.bf16.msra.mxu0 %v7043
    %9747 = vmatprep.subr.bf16.mxu0 %v7060
    %9748 = vmatpush1.bf16.msra.mxu0 %v7059
    %9749 = vmatprep.mubr.bf16.mxu0 %v2622
    %9750 = vmatmul.mubr.bf16.gmra.mrb[0].mxu0 %v2621
    %v9751 = vpop.f32.mrb[0].mxu0
    %v9752 = vadd.f32 %v3700, %v9751
    %v9753 = vpop.f32.mrb[0].mxu0
    %v9754 = vadd.f32 %v3704, %v9753
    %v9755 = vpop.f32.mrb[0].mxu0
    %v9756 = vadd.f32 %v3700, %v9755
    %v9757 = vpop.f32.mrb[0].mxu0
    %v9758 = vadd.f32 %v3704, %v9757
    %9759 = vdwg.mxu0
    %9760 = vmatprep.subr.bf16.mxu0 %v7076
    %9761 = vmatpush1.bf16.msra.mxu0 %v7075
    %9762 = vmatprep.subr.bf16.mxu0 %v7092
    %9763 = vmatpush1.bf16.msra.mxu0 %v7091
    %9764 = vmatprep.subr.bf16.mxu0 %v7108
    %9765 = vmatpush1.bf16.msra.mxu0 %v7107
    %9766 = vmatprep.subr.bf16.mxu0 %v7124
    %9767 = vmatpush1.bf16.msra.mxu0 %v7123
    %9768 = vmatprep.subr.bf16.mxu0 %v7140
    %9769 = vmatpush1.bf16.msra.mxu0 %v7139
    %9770 = vmatprep.subr.bf16.mxu0 %v7156
    %9771 = vmatpush1.bf16.msra.mxu0 %v7155
    %9772 = vmatprep.subr.bf16.mxu0 %v7172
    %9773 = vmatpush1.bf16.msra.mxu0 %v7171
    %9774 = vmatprep.subr.bf16.mxu0 %v7188
    %9775 = vmatpush1.bf16.msra.mxu0 %v7187
    %9776 = vmatprep.subr.bf16.mxu0 %v7204
    %9777 = vmatpush1.bf16.msra.mxu0 %v7203
    %9778 = vmatprep.subr.bf16.mxu0 %v7220
    %9779 = vmatpush1.bf16.msra.mxu0 %v7219
    %9780 = vmatprep.subr.bf16.mxu0 %v7236
    %9781 = vmatpush1.bf16.msra.mxu0 %v7235
    %9782 = vmatprep.subr.bf16.mxu0 %v7252
    %9783 = vmatpush1.bf16.msra.mxu0 %v7251
    %9784 = vmatprep.subr.bf16.mxu0 %v7268
    %9785 = vmatpush1.bf16.msra.mxu0 %v7267
    %9786 = vmatprep.subr.bf16.mxu0 %v7284
    %9787 = vmatpush1.bf16.msra.mxu0 %v7283
    %9788 = vmatprep.subr.bf16.mxu0 %v7300
    %9789 = vmatpush1.bf16.msra.mxu0 %v7299
    %9790 = vmatprep.subr.bf16.mxu0 %v7316
    %9791 = vmatpush1.bf16.msra.mxu0 %v7315
    %9792 = vmatprep.mubr.bf16.mxu0 %v2624
    %9793 = vmatmul.mubr.bf16.gmra.mrb[0].mxu0 %v2623
    %v9794 = vpop.f32.mrb[0].mxu0
    %v9795 = vadd.f32 %v9752, %v9794
    %v9796 = vpop.f32.mrb[0].mxu0
    %v9797 = vadd.f32 %v9754, %v9796
    %v9798 = vpop.f32.mrb[0].mxu0
    %v9799 = vadd.f32 %v9756, %v9798
    %v9800 = vpop.f32.mrb[0].mxu0
    %v9801 = vadd.f32 %v9758, %v9800
    %9802 = vdwg.mxu0
    %9803 = vmatprep.subr.bf16.mxu0 %v7332
    %9804 = vmatpush1.bf16.msra.mxu0 %v7331
    %9805 = vmatprep.subr.bf16.mxu0 %v7348
    %9806 = vmatpush1.bf16.msra.mxu0 %v7347
    %9807 = vmatprep.subr.bf16.mxu0 %v7364
    %9808 = vmatpush1.bf16.msra.mxu0 %v7363
    %9809 = vmatprep.subr.bf16.mxu0 %v7380
    %9810 = vmatpush1.bf16.msra.mxu0 %v7379
    %9811 = vmatprep.subr.bf16.mxu0 %v7396
    %9812 = vmatpush1.bf16.msra.mxu0 %v7395
    %9813 = vmatprep.subr.bf16.mxu0 %v7412
    %9814 = vmatpush1.bf16.msra.mxu0 %v7411
    %9815 = vmatprep.subr.bf16.mxu0 %v7428
    %9816 = vmatpush1.bf16.msra.mxu0 %v7427
    %9817 = vmatprep.subr.bf16.mxu0 %v7444
    %9818 = vmatpush1.bf16.msra.mxu0 %v7443
    %9819 = vmatprep.subr.bf16.mxu0 %v7460
    %9820 = vmatpush1.bf16.msra.mxu0 %v7459
    %9821 = vmatprep.subr.bf16.mxu0 %v7476
    %9822 = vmatpush1.bf16.msra.mxu0 %v7475
    %9823 = vmatprep.subr.bf16.mxu0 %v7492
    %9824 = vmatpush1.bf16.msra.mxu0 %v7491
    %9825 = vmatprep.subr.bf16.mxu0 %v7508
    %9826 = vmatpush1.bf16.msra.mxu0 %v7507
    %9827 = vmatprep.subr.bf16.mxu0 %v7524
    %9828 = vmatpush1.bf16.msra.mxu0 %v7523
    %9829 = vmatprep.subr.bf16.mxu0 %v7540
    %9830 = vmatpush1.bf16.msra.mxu0 %v7539
    %9831 = vmatprep.subr.bf16.mxu0 %v7556
    %9832 = vmatpush1.bf16.msra.mxu0 %v7555
    %9833 = vmatprep.subr.bf16.mxu0 %v7572
    %9834 = vmatpush1.bf16.msra.mxu0 %v7571
    %9835 = vmatprep.mubr.bf16.mxu0 %v2626
    %9836 = vmatmul.mubr.bf16.gmra.mrb[0].mxu0 %v2625
    %v9837 = vpop.f32.mrb[0].mxu0
    %v9838 = vadd.f32 %v9795, %v9837
    %v9839 = vpop.f32.mrb[0].mxu0
    %v9840 = vadd.f32 %v9797, %v9839
    %v9841 = vpop.f32.mrb[0].mxu0
    %v9842 = vadd.f32 %v9799, %v9841
    %v9843 = vpop.f32.mrb[0].mxu0
    %v9844 = vadd.f32 %v9801, %v9843
    %9845 = vdwg.mxu0
    %9846 = vmatprep.subr.bf16.mxu0 %v7588
    %9847 = vmatpush1.bf16.msra.mxu0 %v7587
    %9848 = vmatprep.subr.bf16.mxu0 %v7604
    %9849 = vmatpush1.bf16.msra.mxu0 %v7603
    %9850 = vmatprep.subr.bf16.mxu0 %v7620
    %9851 = vmatpush1.bf16.msra.mxu0 %v7619
    %9852 = vmatprep.subr.bf16.mxu0 %v7636
    %9853 = vmatpush1.bf16.msra.mxu0 %v7635
    %9854 = vmatprep.subr.bf16.mxu0 %v7652
    %9855 = vmatpush1.bf16.msra.mxu0 %v7651
    %9856 = vmatprep.subr.bf16.mxu0 %v7668
    %9857 = vmatpush1.bf16.msra.mxu0 %v7667
    %9858 = vmatprep.subr.bf16.mxu0 %v7684
    %9859 = vmatpush1.bf16.msra.mxu0 %v7683
    %9860 = vmatprep.subr.bf16.mxu0 %v7700
    %9861 = vmatpush1.bf16.msra.mxu0 %v7699
    %9862 = vmatprep.subr.bf16.mxu0 %v7716
    %9863 = vmatpush1.bf16.msra.mxu0 %v7715
    %9864 = vmatprep.subr.bf16.mxu0 %v7732
    %9865 = vmatpush1.bf16.msra.mxu0 %v7731
    %9866 = vmatprep.subr.bf16.mxu0 %v7748
    %9867 = vmatpush1.bf16.msra.mxu0 %v7747
    %9868 = vmatprep.subr.bf16.mxu0 %v7764
    %9869 = vmatpush1.bf16.msra.mxu0 %v7763
    %9870 = vmatprep.subr.bf16.mxu0 %v7780
    %9871 = vmatpush1.bf16.msra.mxu0 %v7779
    %9872 = vmatprep.subr.bf16.mxu0 %v7796
    %9873 = vmatpush1.bf16.msra.mxu0 %v7795
    %9874 = vmatprep.subr.bf16.mxu0 %v7812
    %9875 = vmatpush1.bf16.msra.mxu0 %v7811
    %9876 = vmatprep.subr.bf16.mxu0 %v7828
    %9877 = vmatpush1.bf16.msra.mxu0 %v7827
    %9878 = vmatprep.mubr.bf16.mxu0 %v2628
    %9879 = vmatmul.mubr.bf16.gmra.mrb[0].mxu0 %v2627
    %v9880 = vpop.f32.mrb[0].mxu0
    %v9881 = vadd.f32 %v9838, %v9880
    %v9882 = vpop.f32.mrb[0].mxu0
    %v9883 = vadd.f32 %v9840, %v9882
    %v9884 = vpop.f32.mrb[0].mxu0
    %v9885 = vadd.f32 %v9842, %v9884
    %v9886 = vpop.f32.mrb[0].mxu0
    %v9887 = vadd.f32 %v9844, %v9886
    %9888 = vdwg.mxu0
    %9889 = vmatprep.subr.bf16.mxu0 %v6822
    %9890 = vmatpush1.bf16.msra.mxu0 %v6821
    %9891 = vmatprep.subr.bf16.mxu0 %v6838
    %9892 = vmatpush1.bf16.msra.mxu0 %v6837
    %9893 = vmatprep.subr.bf16.mxu0 %v6854
    %9894 = vmatpush1.bf16.msra.mxu0 %v6853
    %9895 = vmatprep.subr.bf16.mxu0 %v6870
    %9896 = vmatpush1.bf16.msra.mxu0 %v6869
    %9897 = vmatprep.subr.bf16.mxu0 %v6886
    %9898 = vmatpush1.bf16.msra.mxu0 %v6885
    %9899 = vmatprep.subr.bf16.mxu0 %v6902
    %9900 = vmatpush1.bf16.msra.mxu0 %v6901
    %9901 = vmatprep.subr.bf16.mxu0 %v6918
    %9902 = vmatpush1.bf16.msra.mxu0 %v6917
    %9903 = vmatprep.subr.bf16.mxu0 %v6934
    %9904 = vmatpush1.bf16.msra.mxu0 %v6933
    %9905 = vmatprep.subr.bf16.mxu0 %v6950
    %9906 = vmatpush1.bf16.msra.mxu0 %v6949
    %9907 = vmatprep.subr.bf16.mxu0 %v6966
    %9908 = vmatpush1.bf16.msra.mxu0 %v6965
    %9909 = vmatprep.subr.bf16.mxu0 %v6982
    %9910 = vmatpush1.bf16.msra.mxu0 %v6981
    %9911 = vmatprep.subr.bf16.mxu0 %v6998
    %9912 = vmatpush1.bf16.msra.mxu0 %v6997
    %9913 = vmatprep.subr.bf16.mxu0 %v7014
    %9914 = vmatpush1.bf16.msra.mxu0 %v7013
    %9915 = vmatprep.subr.bf16.mxu0 %v7030
    %9916 = vmatpush1.bf16.msra.mxu0 %v7029
    %9917 = vmatprep.subr.bf16.mxu0 %v7046
    %9918 = vmatpush1.bf16.msra.mxu0 %v7045
    %9919 = vmatprep.subr.bf16.mxu0 %v7062
    %9920 = vmatpush1.bf16.msra.mxu0 %v7061
    %9921 = vmatprep.mubr.bf16.mxu0 %v2622
    %9922 = vmatmul.mubr.bf16.gmra.mrb[0].mxu0 %v2621
    %v9923 = vpop.f32.mrb[0].mxu0
    %v9924 = vadd.f32 %v3708, %v9923
    %v9925 = vpop.f32.mrb[0].mxu0
    %v9926 = vadd.f32 %v3712, %v9925
    %v9927 = vpop.f32.mrb[0].mxu0
    %v9928 = vadd.f32 %v3708, %v9927
    %v9929 = vpop.f32.mrb[0].mxu0
    %v9930 = vadd.f32 %v3712, %v9929
    %9931 = vdwg.mxu0
    %9932 = vmatprep.subr.bf16.mxu0 %v7078
    %9933 = vmatpush1.bf16.msra.mxu0 %v7077
    %9934 = vmatprep.subr.bf16.mxu0 %v7094
    %9935 = vmatpush1.bf16.msra.mxu0 %v7093
    %9936 = vmatprep.subr.bf16.mxu0 %v7110
    %9937 = vmatpush1.bf16.msra.mxu0 %v7109
    %9938 = vmatprep.subr.bf16.mxu0 %v7126
    %9939 = vmatpush1.bf16.msra.mxu0 %v7125
    %9940 = vmatprep.subr.bf16.mxu0 %v7142
    %9941 = vmatpush1.bf16.msra.mxu0 %v7141
    %9942 = vmatprep.subr.bf16.mxu0 %v7158
    %9943 = vmatpush1.bf16.msra.mxu0 %v7157
    %9944 = vmatprep.subr.bf16.mxu0 %v7174
    %9945 = vmatpush1.bf16.msra.mxu0 %v7173
    %9946 = vmatprep.subr.bf16.mxu0 %v7190
    %9947 = vmatpush1.bf16.msra.mxu0 %v7189
    %9948 = vmatprep.subr.bf16.mxu0 %v7206
    %9949 = vmatpush1.bf16.msra.mxu0 %v7205
    %9950 = vmatprep.subr.bf16.mxu0 %v7222
    %9951 = vmatpush1.bf16.msra.mxu0 %v7221
    %9952 = vmatprep.subr.bf16.mxu0 %v7238
    %9953 = vmatpush1.bf16.msra.mxu0 %v7237
    %9954 = vmatprep.subr.bf16.mxu0 %v7254
    %9955 = vmatpush1.bf16.msra.mxu0 %v7253
    %9956 = vmatprep.subr.bf16.mxu0 %v7270
    %9957 = vmatpush1.bf16.msra.mxu0 %v7269
    %9958 = vmatprep.subr.bf16.mxu0 %v7286
    %9959 = vmatpush1.bf16.msra.mxu0 %v7285
    %9960 = vmatprep.subr.bf16.mxu0 %v7302
    %9961 = vmatpush1.bf16.msra.mxu0 %v7301
    %9962 = vmatprep.subr.bf16.mxu0 %v7318
    %9963 = vmatpush1.bf16.msra.mxu0 %v7317
    %9964 = vmatprep.mubr.bf16.mxu0 %v2624
    %9965 = vmatmul.mubr.bf16.gmra.mrb[0].mxu0 %v2623
    %v9966 = vpop.f32.mrb[0].mxu0
    %v9967 = vadd.f32 %v9924, %v9966
    %v9968 = vpop.f32.mrb[0].mxu0
    %v9969 = vadd.f32 %v9926, %v9968
    %v9970 = vpop.f32.mrb[0].mxu0
    %v9971 = vadd.f32 %v9928, %v9970
    %v9972 = vpop.f32.mrb[0].mxu0
    %v9973 = vadd.f32 %v9930, %v9972
    %9974 = vdwg.mxu0
    %9975 = vmatprep.subr.bf16.mxu0 %v7334
    %9976 = vmatpush1.bf16.msra.mxu0 %v7333
    %9977 = vmatprep.subr.bf16.mxu0 %v7350
    %9978 = vmatpush1.bf16.msra.mxu0 %v7349
    %9979 = vmatprep.subr.bf16.mxu0 %v7366
    %9980 = vmatpush1.bf16.msra.mxu0 %v7365
    %9981 = vmatprep.subr.bf16.mxu0 %v7382
    %9982 = vmatpush1.bf16.msra.mxu0 %v7381
    %9983 = vmatprep.subr.bf16.mxu0 %v7398
    %9984 = vmatpush1.bf16.msra.mxu0 %v7397
    %9985 = vmatprep.subr.bf16.mxu0 %v7414
    %9986 = vmatpush1.bf16.msra.mxu0 %v7413
    %9987 = vmatprep.subr.bf16.mxu0 %v7430
    %9988 = vmatpush1.bf16.msra.mxu0 %v7429
    %9989 = vmatprep.subr.bf16.mxu0 %v7446
    %9990 = vmatpush1.bf16.msra.mxu0 %v7445
    %9991 = vmatprep.subr.bf16.mxu0 %v7462
    %9992 = vmatpush1.bf16.msra.mxu0 %v7461
    %9993 = vmatprep.subr.bf16.mxu0 %v7478
    %9994 = vmatpush1.bf16.msra.mxu0 %v7477
    %9995 = vmatprep.subr.bf16.mxu0 %v7494
    %9996 = vmatpush1.bf16.msra.mxu0 %v7493
    %9997 = vmatprep.subr.bf16.mxu0 %v7510
    %9998 = vmatpush1.bf16.msra.mxu0 %v7509
    %9999 = vmatprep.subr.bf16.mxu0 %v7526
    %10000 = vmatpush1.bf16.msra.mxu0 %v7525
    %10001 = vmatprep.subr.bf16.mxu0 %v7542
    %10002 = vmatpush1.bf16.msra.mxu0 %v7541
    %10003 = vmatprep.subr.bf16.mxu0 %v7558
    %10004 = vmatpush1.bf16.msra.mxu0 %v7557
    %10005 = vmatprep.subr.bf16.mxu0 %v7574
    %10006 = vmatpush1.bf16.msra.mxu0 %v7573
    %10007 = vmatprep.mubr.bf16.mxu0 %v2626
    %10008 = vmatmul.mubr.bf16.gmra.mrb[0].mxu0 %v2625
    %v10009 = vpop.f32.mrb[0].mxu0
    %v10010 = vadd.f32 %v9967, %v10009
    %v10011 = vpop.f32.mrb[0].mxu0
    %v10012 = vadd.f32 %v9969, %v10011
    %v10013 = vpop.f32.mrb[0].mxu0
    %v10014 = vadd.f32 %v9971, %v10013
    %v10015 = vpop.f32.mrb[0].mxu0
    %v10016 = vadd.f32 %v9973, %v10015
    %10017 = vdwg.mxu0
    %10018 = vmatprep.subr.bf16.mxu0 %v7590
    %10019 = vmatpush1.bf16.msra.mxu0 %v7589
    %10020 = vmatprep.subr.bf16.mxu0 %v7606
    %10021 = vmatpush1.bf16.msra.mxu0 %v7605
    %10022 = vmatprep.subr.bf16.mxu0 %v7622
    %10023 = vmatpush1.bf16.msra.mxu0 %v7621
    %10024 = vmatprep.subr.bf16.mxu0 %v7638
    %10025 = vmatpush1.bf16.msra.mxu0 %v7637
    %10026 = vmatprep.subr.bf16.mxu0 %v7654
    %10027 = vmatpush1.bf16.msra.mxu0 %v7653
    %10028 = vmatprep.subr.bf16.mxu0 %v7670
    %10029 = vmatpush1.bf16.msra.mxu0 %v7669
    %10030 = vmatprep.subr.bf16.mxu0 %v7686
    %10031 = vmatpush1.bf16.msra.mxu0 %v7685
    %10032 = vmatprep.subr.bf16.mxu0 %v7702
    %10033 = vmatpush1.bf16.msra.mxu0 %v7701
    %10034 = vmatprep.subr.bf16.mxu0 %v7718
    %10035 = vmatpush1.bf16.msra.mxu0 %v7717
    %10036 = vmatprep.subr.bf16.mxu0 %v7734
    %10037 = vmatpush1.bf16.msra.mxu0 %v7733
    %10038 = vmatprep.subr.bf16.mxu0 %v7750
    %10039 = vmatpush1.bf16.msra.mxu0 %v7749
    %10040 = vmatprep.subr.bf16.mxu0 %v7766
    %10041 = vmatpush1.bf16.msra.mxu0 %v7765
    %10042 = vmatprep.subr.bf16.mxu0 %v7782
    %10043 = vmatpush1.bf16.msra.mxu0 %v7781
    %10044 = vmatprep.subr.bf16.mxu0 %v7798
    %10045 = vmatpush1.bf16.msra.mxu0 %v7797
    %10046 = vmatprep.subr.bf16.mxu0 %v7814
    %10047 = vmatpush1.bf16.msra.mxu0 %v7813
    %10048 = vmatprep.subr.bf16.mxu0 %v7830
    %10049 = vmatpush1.bf16.msra.mxu0 %v7829
    %10050 = vmatprep.mubr.bf16.mxu0 %v2628
    %10051 = vmatmul.mubr.bf16.gmra.mrb[0].mxu0 %v2627
    %v10052 = vpop.f32.mrb[0].mxu0
    %v10053 = vadd.f32 %v10010, %v10052
    %v10054 = vpop.f32.mrb[0].mxu0
    %v10055 = vadd.f32 %v10012, %v10054
    %v10056 = vpop.f32.mrb[0].mxu0
    %v10057 = vadd.f32 %v10014, %v10056
    %v10058 = vpop.f32.mrb[0].mxu0
    %v10059 = vadd.f32 %v10016, %v10058
    %10060 = vdwg.mxu0
    %10061 = vmatprep.subr.bf16.mxu0 %v6824
    %10062 = vmatpush1.bf16.msra.mxu0 %v6823
    %10063 = vmatprep.subr.bf16.mxu0 %v6840
    %10064 = vmatpush1.bf16.msra.mxu0 %v6839
    %10065 = vmatprep.subr.bf16.mxu0 %v6856
    %10066 = vmatpush1.bf16.msra.mxu0 %v6855
    %10067 = vmatprep.subr.bf16.mxu0 %v6872
    %10068 = vmatpush1.bf16.msra.mxu0 %v6871
    %10069 = vmatprep.subr.bf16.mxu0 %v6888
    %10070 = vmatpush1.bf16.msra.mxu0 %v6887
    %10071 = vmatprep.subr.bf16.mxu0 %v6904
    %10072 = vmatpush1.bf16.msra.mxu0 %v6903
    %10073 = vmatprep.subr.bf16.mxu0 %v6920
    %10074 = vmatpush1.bf16.msra.mxu0 %v6919
    %10075 = vmatprep.subr.bf16.mxu0 %v6936
    %10076 = vmatpush1.bf16.msra.mxu0 %v6935
    %10077 = vmatprep.subr.bf16.mxu0 %v6952
    %10078 = vmatpush1.bf16.msra.mxu0 %v6951
    %10079 = vmatprep.subr.bf16.mxu0 %v6968
    %10080 = vmatpush1.bf16.msra.mxu0 %v6967
    %10081 = vmatprep.subr.bf16.mxu0 %v6984
    %10082 = vmatpush1.bf16.msra.mxu0 %v6983
    %10083 = vmatprep.subr.bf16.mxu0 %v7000
    %10084 = vmatpush1.bf16.msra.mxu0 %v6999
    %10085 = vmatprep.subr.bf16.mxu0 %v7016
    %10086 = vmatpush1.bf16.msra.mxu0 %v7015
    %10087 = vmatprep.subr.bf16.mxu0 %v7032
    %10088 = vmatpush1.bf16.msra.mxu0 %v7031
    %10089 = vmatprep.subr.bf16.mxu0 %v7048
    %10090 = vmatpush1.bf16.msra.mxu0 %v7047
    %10091 = vmatprep.subr.bf16.mxu0 %v7064
    %10092 = vmatpush1.bf16.msra.mxu0 %v7063
    %10093 = vmatprep.mubr.bf16.mxu0 %v2622
    %10094 = vmatmul.mubr.bf16.gmra.mrb[0].mxu0 %v2621
    %v10095 = vpop.f32.mrb[0].mxu0
    %v10096 = vadd.f32 %v3716, %v10095
    %v10097 = vpop.f32.mrb[0].mxu0
    %v10098 = vadd.f32 %v3720, %v10097
    %v10099 = vpop.f32.mrb[0].mxu0
    %v10100 = vadd.f32 %v3716, %v10099
    %v10101 = vpop.f32.mrb[0].mxu0
    %v10102 = vadd.f32 %v3720, %v10101
    %10103 = vdwg.mxu0
    %10104 = vmatprep.subr.bf16.mxu0 %v7080
    %10105 = vmatpush1.bf16.msra.mxu0 %v7079
    %10106 = vmatprep.subr.bf16.mxu0 %v7096
    %10107 = vmatpush1.bf16.msra.mxu0 %v7095
    %10108 = vmatprep.subr.bf16.mxu0 %v7112
    %10109 = vmatpush1.bf16.msra.mxu0 %v7111
    %10110 = vmatprep.subr.bf16.mxu0 %v7128
    %10111 = vmatpush1.bf16.msra.mxu0 %v7127
    %10112 = vmatprep.subr.bf16.mxu0 %v7144
    %10113 = vmatpush1.bf16.msra.mxu0 %v7143
    %10114 = vmatprep.subr.bf16.mxu0 %v7160
    %10115 = vmatpush1.bf16.msra.mxu0 %v7159
    %10116 = vmatprep.subr.bf16.mxu0 %v7176
    %10117 = vmatpush1.bf16.msra.mxu0 %v7175
    %10118 = vmatprep.subr.bf16.mxu0 %v7192
    %10119 = vmatpush1.bf16.msra.mxu0 %v7191
    %10120 = vmatprep.subr.bf16.mxu0 %v7208
    %10121 = vmatpush1.bf16.msra.mxu0 %v7207
    %10122 = vmatprep.subr.bf16.mxu0 %v7224
    %10123 = vmatpush1.bf16.msra.mxu0 %v7223
    %10124 = vmatprep.subr.bf16.mxu0 %v7240
    %10125 = vmatpush1.bf16.msra.mxu0 %v7239
    %10126 = vmatprep.subr.bf16.mxu0 %v7256
    %10127 = vmatpush1.bf16.msra.mxu0 %v7255
    %10128 = vmatprep.subr.bf16.mxu0 %v7272
    %10129 = vmatpush1.bf16.msra.mxu0 %v7271
    %10130 = vmatprep.subr.bf16.mxu0 %v7288
    %10131 = vmatpush1.bf16.msra.mxu0 %v7287
    %10132 = vmatprep.subr.bf16.mxu0 %v7304
    %10133 = vmatpush1.bf16.msra.mxu0 %v7303
    %10134 = vmatprep.subr.bf16.mxu0 %v7320
    %10135 = vmatpush1.bf16.msra.mxu0 %v7319
    %10136 = vmatprep.mubr.bf16.mxu0 %v2624
    %10137 = vmatmul.mubr.bf16.gmra.mrb[0].mxu0 %v2623
    %v10138 = vpop.f32.mrb[0].mxu0
    %v10139 = vadd.f32 %v10096, %v10138
    %v10140 = vpop.f32.mrb[0].mxu0
    %v10141 = vadd.f32 %v10098, %v10140
    %v10142 = vpop.f32.mrb[0].mxu0
    %v10143 = vadd.f32 %v10100, %v10142
    %v10144 = vpop.f32.mrb[0].mxu0
    %v10145 = vadd.f32 %v10102, %v10144
    %10146 = vdwg.mxu0
    %10147 = vmatprep.subr.bf16.mxu0 %v7336
    %10148 = vmatpush1.bf16.msra.mxu0 %v7335
    %10149 = vmatprep.subr.bf16.mxu0 %v7352
    %10150 = vmatpush1.bf16.msra.mxu0 %v7351
    %10151 = vmatprep.subr.bf16.mxu0 %v7368
    %10152 = vmatpush1.bf16.msra.mxu0 %v7367
    %10153 = vmatprep.subr.bf16.mxu0 %v7384
    %10154 = vmatpush1.bf16.msra.mxu0 %v7383
    %10155 = vmatprep.subr.bf16.mxu0 %v7400
    %10156 = vmatpush1.bf16.msra.mxu0 %v7399
    %10157 = vmatprep.subr.bf16.mxu0 %v7416
    %10158 = vmatpush1.bf16.msra.mxu0 %v7415
    %10159 = vmatprep.subr.bf16.mxu0 %v7432
    %10160 = vmatpush1.bf16.msra.mxu0 %v7431
    %10161 = vmatprep.subr.bf16.mxu0 %v7448
    %10162 = vmatpush1.bf16.msra.mxu0 %v7447
    %10163 = vmatprep.subr.bf16.mxu0 %v7464
    %10164 = vmatpush1.bf16.msra.mxu0 %v7463
    %10165 = vmatprep.subr.bf16.mxu0 %v7480
    %10166 = vmatpush1.bf16.msra.mxu0 %v7479
    %10167 = vmatprep.subr.bf16.mxu0 %v7496
    %10168 = vmatpush1.bf16.msra.mxu0 %v7495
    %10169 = vmatprep.subr.bf16.mxu0 %v7512
    %10170 = vmatpush1.bf16.msra.mxu0 %v7511
    %10171 = vmatprep.subr.bf16.mxu0 %v7528
    %10172 = vmatpush1.bf16.msra.mxu0 %v7527
    %10173 = vmatprep.subr.bf16.mxu0 %v7544
    %10174 = vmatpush1.bf16.msra.mxu0 %v7543
    %10175 = vmatprep.subr.bf16.mxu0 %v7560
    %10176 = vmatpush1.bf16.msra.mxu0 %v7559
    %10177 = vmatprep.subr.bf16.mxu0 %v7576
    %10178 = vmatpush1.bf16.msra.mxu0 %v7575
    %10179 = vmatprep.mubr.bf16.mxu0 %v2626
    %10180 = vmatmul.mubr.bf16.gmra.mrb[0].mxu0 %v2625
    %v10181 = vpop.f32.mrb[0].mxu0
    %v10182 = vadd.f32 %v10139, %v10181
    %v10183 = vpop.f32.mrb[0].mxu0
    %v10184 = vadd.f32 %v10141, %v10183
    %v10185 = vpop.f32.mrb[0].mxu0
    %v10186 = vadd.f32 %v10143, %v10185
    %v10187 = vpop.f32.mrb[0].mxu0
    %v10188 = vadd.f32 %v10145, %v10187
    %10189 = vdwg.mxu0
    %10190 = vmatprep.subr.bf16.mxu0 %v7592
    %10191 = vmatpush1.bf16.msra.mxu0 %v7591
    %10192 = vmatprep.subr.bf16.mxu0 %v7608
    %10193 = vmatpush1.bf16.msra.mxu0 %v7607
    %10194 = vmatprep.subr.bf16.mxu0 %v7624
    %10195 = vmatpush1.bf16.msra.mxu0 %v7623
    %10196 = vmatprep.subr.bf16.mxu0 %v7640
    %10197 = vmatpush1.bf16.msra.mxu0 %v7639
    %10198 = vmatprep.subr.bf16.mxu0 %v7656
    %10199 = vmatpush1.bf16.msra.mxu0 %v7655
    %10200 = vmatprep.subr.bf16.mxu0 %v7672
    %10201 = vmatpush1.bf16.msra.mxu0 %v7671
    %10202 = vmatprep.subr.bf16.mxu0 %v7688
    %10203 = vmatpush1.bf16.msra.mxu0 %v7687
    %10204 = vmatprep.subr.bf16.mxu0 %v7704
    %10205 = vmatpush1.bf16.msra.mxu0 %v7703
    %10206 = vmatprep.subr.bf16.mxu0 %v7720
    %10207 = vmatpush1.bf16.msra.mxu0 %v7719
    %10208 = vmatprep.subr.bf16.mxu0 %v7736
    %10209 = vmatpush1.bf16.msra.mxu0 %v7735
    %10210 = vmatprep.subr.bf16.mxu0 %v7752
    %10211 = vmatpush1.bf16.msra.mxu0 %v7751
    %10212 = vmatprep.subr.bf16.mxu0 %v7768
    %10213 = vmatpush1.bf16.msra.mxu0 %v7767
    %10214 = vmatprep.subr.bf16.mxu0 %v7784
    %10215 = vmatpush1.bf16.msra.mxu0 %v7783
    %10216 = vmatprep.subr.bf16.mxu0 %v7800
    %10217 = vmatpush1.bf16.msra.mxu0 %v7799
    %10218 = vmatprep.subr.bf16.mxu0 %v7816
    %10219 = vmatpush1.bf16.msra.mxu0 %v7815
    %10220 = vmatprep.subr.bf16.mxu0 %v7832
    %10221 = vmatpush1.bf16.msra.mxu0 %v7831
    %10222 = vmatprep.mubr.bf16.mxu0 %v2628
    %10223 = vmatmul.mubr.bf16.gmra.mrb[0].mxu0 %v2627
    %v10224 = vpop.f32.mrb[0].mxu0
    %v10225 = vadd.f32 %v10182, %v10224
    %v10226 = vpop.f32.mrb[0].mxu0
    %v10227 = vadd.f32 %v10184, %v10226
    %v10228 = vpop.f32.mrb[0].mxu0
    %v10229 = vadd.f32 %v10186, %v10228
    %v10230 = vpop.f32.mrb[0].mxu0
    %v10231 = vadd.f32 %v10188, %v10230
    %10232 = vdwg.mxu0
    %v10233 = vpack.c.bf16 %v9025, %v9021
    %v10234 = vpack.c.bf16 %v9027, %v9023
    %v10235 = vpack.c.bf16 %v9197, %v9193
    %v10236 = vpack.c.bf16 %v9199, %v9195
    %v10237 = vpack.c.bf16 %v9369, %v9365
    %v10238 = vpack.c.bf16 %v9371, %v9367
    %v10239 = vpack.c.bf16 %v9541, %v9537
    %v10240 = vpack.c.bf16 %v9543, %v9539
    %v10241 = vpack.c.bf16 %v9713, %v9709
    %v10242 = vpack.c.bf16 %v9715, %v9711
    %v10243 = vpack.c.bf16 %v9885, %v9881
    %v10244 = vpack.c.bf16 %v9887, %v9883
    %v10245 = vpack.c.bf16 %v10057, %v10053
    %v10246 = vpack.c.bf16 %v10059, %v10055
    %v10247 = vpack.c.bf16 %v10229, %v10225
    %v10248 = vpack.c.bf16 %v10231, %v10227
    %v10249 = vld [vmem:[#allocation20] sm:$0xff]
    %v10250 = vld [vmem:[#allocation20 + $0x8] sm:$0xff]
    %v10251 = vld [vmem:[#allocation20 + $0x10] sm:$0xff]
    %v10252 = vld [vmem:[#allocation20 + $0x18] sm:$0xff]
    %v10253 = vld [vmem:[#allocation20 + $0x20] sm:$0xff]
    %v10254 = vld [vmem:[#allocation20 + $0x28] sm:$0xff]
    %v10255 = vld [vmem:[#allocation20 + $0x30] sm:$0xff]
    %v10256 = vld [vmem:[#allocation20 + $0x38] sm:$0xff]
    %v10257 = vld [vmem:[#allocation20 + $0x40] sm:$0xff]
    %v10258 = vld [vmem:[#allocation20 + $0x48] sm:$0xff]
    %v10259 = vld [vmem:[#allocation20 + $0x50] sm:$0xff]
    %v10260 = vld [vmem:[#allocation20 + $0x58] sm:$0xff]
    %v10261 = vld [vmem:[#allocation20 + $0x60] sm:$0xff]
    %v10262 = vld [vmem:[#allocation20 + $0x68] sm:$0xff]
    %v10263 = vld [vmem:[#allocation20 + $0x70] sm:$0xff]
    %v10264 = vld [vmem:[#allocation20 + $0x78] sm:$0xff]
    %v10265 = vld [vmem:[#allocation20 + $0x80] sm:$0xff]
    %v10266 = vld [vmem:[#allocation20 + $0x88] sm:$0xff]
    %v10267 = vld [vmem:[#allocation20 + $0x90] sm:$0xff]
    %v10268 = vld [vmem:[#allocation20 + $0x98] sm:$0xff]
    %v10269 = vld [vmem:[#allocation20 + $0xa0] sm:$0xff]
    %v10270 = vld [vmem:[#allocation20 + $0xa8] sm:$0xff]
    %v10271 = vld [vmem:[#allocation20 + $0xb0] sm:$0xff]
    %v10272 = vld [vmem:[#allocation20 + $0xb8] sm:$0xff]
    %v10273 = vld [vmem:[#allocation20 + $0xc0] sm:$0xff]
    %v10274 = vld [vmem:[#allocation20 + $0xc8] sm:$0xff]
    %v10275 = vld [vmem:[#allocation20 + $0xd0] sm:$0xff]
    %v10276 = vld [vmem:[#allocation20 + $0xd8] sm:$0xff]
    %v10277 = vld [vmem:[#allocation20 + $0xe0] sm:$0xff]
    %v10278 = vld [vmem:[#allocation20 + $0xe8] sm:$0xff]
    %v10279 = vld [vmem:[#allocation20 + $0xf0] sm:$0xff]
    %v10280 = vld [vmem:[#allocation20 + $0xf8] sm:$0xff]
    %v10281 = vld [vmem:[#allocation20 + $0x100] sm:$0xff]
    %v10282 = vld [vmem:[#allocation20 + $0x108] sm:$0xff]
    %v10283 = vld [vmem:[#allocation20 + $0x110] sm:$0xff]
    %v10284 = vld [vmem:[#allocation20 + $0x118] sm:$0xff]
    %v10285 = vld [vmem:[#allocation20 + $0x120] sm:$0xff]
    %v10286 = vld [vmem:[#allocation20 + $0x128] sm:$0xff]
    %v10287 = vld [vmem:[#allocation20 + $0x130] sm:$0xff]
    %v10288 = vld [vmem:[#allocation20 + $0x138] sm:$0xff]
    %v10289 = vld [vmem:[#allocation20 + $0x140] sm:$0xff]
    %v10290 = vld [vmem:[#allocation20 + $0x148] sm:$0xff]
    %v10291 = vld [vmem:[#allocation20 + $0x150] sm:$0xff]
    %v10292 = vld [vmem:[#allocation20 + $0x158] sm:$0xff]
    %v10293 = vld [vmem:[#allocation20 + $0x160] sm:$0xff]
    %v10294 = vld [vmem:[#allocation20 + $0x168] sm:$0xff]
    %v10295 = vld [vmem:[#allocation20 + $0x170] sm:$0xff]
    %v10296 = vld [vmem:[#allocation20 + $0x178] sm:$0xff]
    %v10297 = vld [vmem:[#allocation20 + $0x180] sm:$0xff]
    %v10298 = vld [vmem:[#allocation20 + $0x188] sm:$0xff]
    %v10299 = vld [vmem:[#allocation20 + $0x190] sm:$0xff]
    %v10300 = vld [vmem:[#allocation20 + $0x198] sm:$0xff]
    %v10301 = vld [vmem:[#allocation20 + $0x1a0] sm:$0xff]
    %v10302 = vld [vmem:[#allocation20 + $0x1a8] sm:$0xff]
    %v10303 = vld [vmem:[#allocation20 + $0x1b0] sm:$0xff]
    %v10304 = vld [vmem:[#allocation20 + $0x1b8] sm:$0xff]
    %v10305 = vld [vmem:[#allocation20 + $0x1c0] sm:$0xff]
    %v10306 = vld [vmem:[#allocation20 + $0x1c8] sm:$0xff]
    %v10307 = vld [vmem:[#allocation20 + $0x1d0] sm:$0xff]
    %v10308 = vld [vmem:[#allocation20 + $0x1d8] sm:$0xff]
    %v10309 = vld [vmem:[#allocation20 + $0x1e0] sm:$0xff]
    %v10310 = vld [vmem:[#allocation20 + $0x1e8] sm:$0xff]
    %v10311 = vld [vmem:[#allocation20 + $0x1f0] sm:$0xff]
    %v10312 = vld [vmem:[#allocation20 + $0x1f8] sm:$0xff]
    %v10313 = vld [vmem:[#allocation20 + $0x200] sm:$0xff]
    %v10314 = vld [vmem:[#allocation20 + $0x208] sm:$0xff]
    %v10315 = vld [vmem:[#allocation20 + $0x210] sm:$0xff]
    %v10316 = vld [vmem:[#allocation20 + $0x218] sm:$0xff]
    %v10317 = vld [vmem:[#allocation20 + $0x220] sm:$0xff]
    %v10318 = vld [vmem:[#allocation20 + $0x228] sm:$0xff]
    %v10319 = vld [vmem:[#allocation20 + $0x230] sm:$0xff]
    %v10320 = vld [vmem:[#allocation20 + $0x238] sm:$0xff]
    %v10321 = vld [vmem:[#allocation20 + $0x240] sm:$0xff]
    %v10322 = vld [vmem:[#allocation20 + $0x248] sm:$0xff]
    %v10323 = vld [vmem:[#allocation20 + $0x250] sm:$0xff]
    %v10324 = vld [vmem:[#allocation20 + $0x258] sm:$0xff]
    %v10325 = vld [vmem:[#allocation20 + $0x260] sm:$0xff]
    %v10326 = vld [vmem:[#allocation20 + $0x268] sm:$0xff]
    %v10327 = vld [vmem:[#allocation20 + $0x270] sm:$0xff]
    %v10328 = vld [vmem:[#allocation20 + $0x278] sm:$0xff]
    %v10329 = vld [vmem:[#allocation20 + $0x280] sm:$0xff]
    %v10330 = vld [vmem:[#allocation20 + $0x288] sm:$0xff]
    %v10331 = vld [vmem:[#allocation20 + $0x290] sm:$0xff]
    %v10332 = vld [vmem:[#allocation20 + $0x298] sm:$0xff]
    %v10333 = vld [vmem:[#allocation20 + $0x2a0] sm:$0xff]
    %v10334 = vld [vmem:[#allocation20 + $0x2a8] sm:$0xff]
    %v10335 = vld [vmem:[#allocation20 + $0x2b0] sm:$0xff]
    %v10336 = vld [vmem:[#allocation20 + $0x2b8] sm:$0xff]
    %v10337 = vld [vmem:[#allocation20 + $0x2c0] sm:$0xff]
    %v10338 = vld [vmem:[#allocation20 + $0x2c8] sm:$0xff]
    %v10339 = vld [vmem:[#allocation20 + $0x2d0] sm:$0xff]
    %v10340 = vld [vmem:[#allocation20 + $0x2d8] sm:$0xff]
    %v10341 = vld [vmem:[#allocation20 + $0x2e0] sm:$0xff]
    %v10342 = vld [vmem:[#allocation20 + $0x2e8] sm:$0xff]
    %v10343 = vld [vmem:[#allocation20 + $0x2f0] sm:$0xff]
    %v10344 = vld [vmem:[#allocation20 + $0x2f8] sm:$0xff]
    %v10345 = vld [vmem:[#allocation20 + $0x300] sm:$0xff]
    %v10346 = vld [vmem:[#allocation20 + $0x308] sm:$0xff]
    %v10347 = vld [vmem:[#allocation20 + $0x310] sm:$0xff]
    %v10348 = vld [vmem:[#allocation20 + $0x318] sm:$0xff]
    %v10349 = vld [vmem:[#allocation20 + $0x320] sm:$0xff]
    %v10350 = vld [vmem:[#allocation20 + $0x328] sm:$0xff]
    %v10351 = vld [vmem:[#allocation20 + $0x330] sm:$0xff]
    %v10352 = vld [vmem:[#allocation20 + $0x338] sm:$0xff]
    %v10353 = vld [vmem:[#allocation20 + $0x340] sm:$0xff]
    %v10354 = vld [vmem:[#allocation20 + $0x348] sm:$0xff]
    %v10355 = vld [vmem:[#allocation20 + $0x350] sm:$0xff]
    %v10356 = vld [vmem:[#allocation20 + $0x358] sm:$0xff]
    %v10357 = vld [vmem:[#allocation20 + $0x360] sm:$0xff]
    %v10358 = vld [vmem:[#allocation20 + $0x368] sm:$0xff]
    %v10359 = vld [vmem:[#allocation20 + $0x370] sm:$0xff]
    %v10360 = vld [vmem:[#allocation20 + $0x378] sm:$0xff]
    %v10361 = vld [vmem:[#allocation20 + $0x380] sm:$0xff]
    %v10362 = vld [vmem:[#allocation20 + $0x388] sm:$0xff]
    %v10363 = vld [vmem:[#allocation20 + $0x390] sm:$0xff]
    %v10364 = vld [vmem:[#allocation20 + $0x398] sm:$0xff]
    %v10365 = vld [vmem:[#allocation20 + $0x3a0] sm:$0xff]
    %v10366 = vld [vmem:[#allocation20 + $0x3a8] sm:$0xff]
    %v10367 = vld [vmem:[#allocation20 + $0x3b0] sm:$0xff]
    %v10368 = vld [vmem:[#allocation20 + $0x3b8] sm:$0xff]
    %v10369 = vld [vmem:[#allocation20 + $0x3c0] sm:$0xff]
    %v10370 = vld [vmem:[#allocation20 + $0x3c8] sm:$0xff]
    %v10371 = vld [vmem:[#allocation20 + $0x3d0] sm:$0xff]
    %v10372 = vld [vmem:[#allocation20 + $0x3d8] sm:$0xff]
    %v10373 = vld [vmem:[#allocation20 + $0x3e0] sm:$0xff]
    %v10374 = vld [vmem:[#allocation20 + $0x3e8] sm:$0xff]
    %v10375 = vld [vmem:[#allocation20 + $0x3f0] sm:$0xff]
    %v10376 = vld [vmem:[#allocation20 + $0x3f8] sm:$0xff]
    %v10377 = vld [vmem:[#allocation20 + $0x400] sm:$0xff]
    %v10378 = vld [vmem:[#allocation20 + $0x408] sm:$0xff]
    %v10379 = vld [vmem:[#allocation20 + $0x410] sm:$0xff]
    %v10380 = vld [vmem:[#allocation20 + $0x418] sm:$0xff]
    %v10381 = vld [vmem:[#allocation20 + $0x420] sm:$0xff]
    %v10382 = vld [vmem:[#allocation20 + $0x428] sm:$0xff]
    %v10383 = vld [vmem:[#allocation20 + $0x430] sm:$0xff]
    %v10384 = vld [vmem:[#allocation20 + $0x438] sm:$0xff]
    %v10385 = vld [vmem:[#allocation20 + $0x440] sm:$0xff]
    %v10386 = vld [vmem:[#allocation20 + $0x448] sm:$0xff]
    %v10387 = vld [vmem:[#allocation20 + $0x450] sm:$0xff]
    %v10388 = vld [vmem:[#allocation20 + $0x458] sm:$0xff]
    %v10389 = vld [vmem:[#allocation20 + $0x460] sm:$0xff]
    %v10390 = vld [vmem:[#allocation20 + $0x468] sm:$0xff]
    %v10391 = vld [vmem:[#allocation20 + $0x470] sm:$0xff]
    %v10392 = vld [vmem:[#allocation20 + $0x478] sm:$0xff]
    %v10393 = vld [vmem:[#allocation20 + $0x480] sm:$0xff]
    %v10394 = vld [vmem:[#allocation20 + $0x488] sm:$0xff]
    %v10395 = vld [vmem:[#allocation20 + $0x490] sm:$0xff]
    %v10396 = vld [vmem:[#allocation20 + $0x498] sm:$0xff]
    %v10397 = vld [vmem:[#allocation20 + $0x4a0] sm:$0xff]
    %v10398 = vld [vmem:[#allocation20 + $0x4a8] sm:$0xff]
    %v10399 = vld [vmem:[#allocation20 + $0x4b0] sm:$0xff]
    %v10400 = vld [vmem:[#allocation20 + $0x4b8] sm:$0xff]
    %v10401 = vld [vmem:[#allocation20 + $0x4c0] sm:$0xff]
    %v10402 = vld [vmem:[#allocation20 + $0x4c8] sm:$0xff]
    %v10403 = vld [vmem:[#allocation20 + $0x4d0] sm:$0xff]
    %v10404 = vld [vmem:[#allocation20 + $0x4d8] sm:$0xff]
    %v10405 = vld [vmem:[#allocation20 + $0x4e0] sm:$0xff]
    %v10406 = vld [vmem:[#allocation20 + $0x4e8] sm:$0xff]
    %v10407 = vld [vmem:[#allocation20 + $0x4f0] sm:$0xff]
    %v10408 = vld [vmem:[#allocation20 + $0x4f8] sm:$0xff]
    %v10409 = vld [vmem:[#allocation20 + $0x500] sm:$0xff]
    %v10410 = vld [vmem:[#allocation20 + $0x508] sm:$0xff]
    %v10411 = vld [vmem:[#allocation20 + $0x510] sm:$0xff]
    %v10412 = vld [vmem:[#allocation20 + $0x518] sm:$0xff]
    %v10413 = vld [vmem:[#allocation20 + $0x520] sm:$0xff]
    %v10414 = vld [vmem:[#allocation20 + $0x528] sm:$0xff]
    %v10415 = vld [vmem:[#allocation20 + $0x530] sm:$0xff]
    %v10416 = vld [vmem:[#allocation20 + $0x538] sm:$0xff]
    %v10417 = vld [vmem:[#allocation20 + $0x540] sm:$0xff]
    %v10418 = vld [vmem:[#allocation20 + $0x548] sm:$0xff]
    %v10419 = vld [vmem:[#allocation20 + $0x550] sm:$0xff]
    %v10420 = vld [vmem:[#allocation20 + $0x558] sm:$0xff]
    %v10421 = vld [vmem:[#allocation20 + $0x560] sm:$0xff]
    %v10422 = vld [vmem:[#allocation20 + $0x568] sm:$0xff]
    %v10423 = vld [vmem:[#allocation20 + $0x570] sm:$0xff]
    %v10424 = vld [vmem:[#allocation20 + $0x578] sm:$0xff]
    %v10425 = vld [vmem:[#allocation20 + $0x580] sm:$0xff]
    %v10426 = vld [vmem:[#allocation20 + $0x588] sm:$0xff]
    %v10427 = vld [vmem:[#allocation20 + $0x590] sm:$0xff]
    %v10428 = vld [vmem:[#allocation20 + $0x598] sm:$0xff]
    %v10429 = vld [vmem:[#allocation20 + $0x5a0] sm:$0xff]
    %v10430 = vld [vmem:[#allocation20 + $0x5a8] sm:$0xff]
    %v10431 = vld [vmem:[#allocation20 + $0x5b0] sm:$0xff]
    %v10432 = vld [vmem:[#allocation20 + $0x5b8] sm:$0xff]
    %v10433 = vld [vmem:[#allocation20 + $0x5c0] sm:$0xff]
    %v10434 = vld [vmem:[#allocation20 + $0x5c8] sm:$0xff]
    %v10435 = vld [vmem:[#allocation20 + $0x5d0] sm:$0xff]
    %v10436 = vld [vmem:[#allocation20 + $0x5d8] sm:$0xff]
    %v10437 = vld [vmem:[#allocation20 + $0x5e0] sm:$0xff]
    %v10438 = vld [vmem:[#allocation20 + $0x5e8] sm:$0xff]
    %v10439 = vld [vmem:[#allocation20 + $0x5f0] sm:$0xff]
    %v10440 = vld [vmem:[#allocation20 + $0x5f8] sm:$0xff]
    %v10441 = vld [vmem:[#allocation20 + $0x600] sm:$0xff]
    %v10442 = vld [vmem:[#allocation20 + $0x608] sm:$0xff]
    %v10443 = vld [vmem:[#allocation20 + $0x610] sm:$0xff]
    %v10444 = vld [vmem:[#allocation20 + $0x618] sm:$0xff]
    %v10445 = vld [vmem:[#allocation20 + $0x620] sm:$0xff]
    %v10446 = vld [vmem:[#allocation20 + $0x628] sm:$0xff]
    %v10447 = vld [vmem:[#allocation20 + $0x630] sm:$0xff]
    %v10448 = vld [vmem:[#allocation20 + $0x638] sm:$0xff]
    %v10449 = vld [vmem:[#allocation20 + $0x640] sm:$0xff]
    %v10450 = vld [vmem:[#allocation20 + $0x648] sm:$0xff]
    %v10451 = vld [vmem:[#allocation20 + $0x650] sm:$0xff]
    %v10452 = vld [vmem:[#allocation20 + $0x658] sm:$0xff]
    %v10453 = vld [vmem:[#allocation20 + $0x660] sm:$0xff]
    %v10454 = vld [vmem:[#allocation20 + $0x668] sm:$0xff]
    %v10455 = vld [vmem:[#allocation20 + $0x670] sm:$0xff]
    %v10456 = vld [vmem:[#allocation20 + $0x678] sm:$0xff]
    %v10457 = vld [vmem:[#allocation20 + $0x680] sm:$0xff]
    %v10458 = vld [vmem:[#allocation20 + $0x688] sm:$0xff]
    %v10459 = vld [vmem:[#allocation20 + $0x690] sm:$0xff]
    %v10460 = vld [vmem:[#allocation20 + $0x698] sm:$0xff]
    %v10461 = vld [vmem:[#allocation20 + $0x6a0] sm:$0xff]
    %v10462 = vld [vmem:[#allocation20 + $0x6a8] sm:$0xff]
    %v10463 = vld [vmem:[#allocation20 + $0x6b0] sm:$0xff]
    %v10464 = vld [vmem:[#allocation20 + $0x6b8] sm:$0xff]
    %v10465 = vld [vmem:[#allocation20 + $0x6c0] sm:$0xff]
    %v10466 = vld [vmem:[#allocation20 + $0x6c8] sm:$0xff]
    %v10467 = vld [vmem:[#allocation20 + $0x6d0] sm:$0xff]
    %v10468 = vld [vmem:[#allocation20 + $0x6d8] sm:$0xff]
    %v10469 = vld [vmem:[#allocation20 + $0x6e0] sm:$0xff]
    %v10470 = vld [vmem:[#allocation20 + $0x6e8] sm:$0xff]
    %v10471 = vld [vmem:[#allocation20 + $0x6f0] sm:$0xff]
    %v10472 = vld [vmem:[#allocation20 + $0x6f8] sm:$0xff]
    %v10473 = vld [vmem:[#allocation20 + $0x700] sm:$0xff]
    %v10474 = vld [vmem:[#allocation20 + $0x708] sm:$0xff]
    %v10475 = vld [vmem:[#allocation20 + $0x710] sm:$0xff]
    %v10476 = vld [vmem:[#allocation20 + $0x718] sm:$0xff]
    %v10477 = vld [vmem:[#allocation20 + $0x720] sm:$0xff]
    %v10478 = vld [vmem:[#allocation20 + $0x728] sm:$0xff]
    %v10479 = vld [vmem:[#allocation20 + $0x730] sm:$0xff]
    %v10480 = vld [vmem:[#allocation20 + $0x738] sm:$0xff]
    %v10481 = vld [vmem:[#allocation20 + $0x740] sm:$0xff]
    %v10482 = vld [vmem:[#allocation20 + $0x748] sm:$0xff]
    %v10483 = vld [vmem:[#allocation20 + $0x750] sm:$0xff]
    %v10484 = vld [vmem:[#allocation20 + $0x758] sm:$0xff]
    %v10485 = vld [vmem:[#allocation20 + $0x760] sm:$0xff]
    %v10486 = vld [vmem:[#allocation20 + $0x768] sm:$0xff]
    %v10487 = vld [vmem:[#allocation20 + $0x770] sm:$0xff]
    %v10488 = vld [vmem:[#allocation20 + $0x778] sm:$0xff]
    %v10489 = vld [vmem:[#allocation20 + $0x780] sm:$0xff]
    %v10490 = vld [vmem:[#allocation20 + $0x788] sm:$0xff]
    %v10491 = vld [vmem:[#allocation20 + $0x790] sm:$0xff]
    %v10492 = vld [vmem:[#allocation20 + $0x798] sm:$0xff]
    %v10493 = vld [vmem:[#allocation20 + $0x7a0] sm:$0xff]
    %v10494 = vld [vmem:[#allocation20 + $0x7a8] sm:$0xff]
    %v10495 = vld [vmem:[#allocation20 + $0x7b0] sm:$0xff]
    %v10496 = vld [vmem:[#allocation20 + $0x7b8] sm:$0xff]
    %v10497 = vld [vmem:[#allocation20 + $0x7c0] sm:$0xff]
    %v10498 = vld [vmem:[#allocation20 + $0x7c8] sm:$0xff]
    %v10499 = vld [vmem:[#allocation20 + $0x7d0] sm:$0xff]
    %v10500 = vld [vmem:[#allocation20 + $0x7d8] sm:$0xff]
    %v10501 = vld [vmem:[#allocation20 + $0x7e0] sm:$0xff]
    %v10502 = vld [vmem:[#allocation20 + $0x7e8] sm:$0xff]
    %v10503 = vld [vmem:[#allocation20 + $0x7f0] sm:$0xff]
    %v10504 = vld [vmem:[#allocation20 + $0x7f8] sm:$0xff]
    %v10505 = vld [vmem:[#allocation22] sm:$0x3]
    %v10507 = vlaneseq
    %v10508 = vshrl.u32 %v10507, 7
    %v10509 = vsub.s32 0, %v10508
    %v10510 = vrot.slane %v10505, %v10509
    %v10511 = vlaneseq
    %v10512 = vshrl.u32 %v10511, 7
    %v10513 = vsub.s32 1, %v10512
    %v10514 = vrot.slane %v10505, %v10513
    %v10773 = vunpack.c.l.b16 %v10249
    %v10774 = vunpack.c.h.b16 %v10249
    %v10775 = vunpack.c.l.b16 %v10250
    %v10776 = vunpack.c.h.b16 %v10250
    %v10777 = vunpack.c.l.b16 %v10251
    %v10778 = vunpack.c.h.b16 %v10251
    %v10779 = vunpack.c.l.b16 %v10252
    %v10780 = vunpack.c.h.b16 %v10252
    %v10781 = vunpack.c.l.b16 %v10253
    %v10782 = vunpack.c.h.b16 %v10253
    %v10783 = vunpack.c.l.b16 %v10254
    %v10784 = vunpack.c.h.b16 %v10254
    %v10785 = vunpack.c.l.b16 %v10255
    %v10786 = vunpack.c.h.b16 %v10255
    %v10787 = vunpack.c.l.b16 %v10256
    %v10788 = vunpack.c.h.b16 %v10256
    %v10789 = vunpack.c.l.b16 %v10257
    %v10790 = vunpack.c.h.b16 %v10257
    %v10791 = vunpack.c.l.b16 %v10258
    %v10792 = vunpack.c.h.b16 %v10258
    %v10793 = vunpack.c.l.b16 %v10259
    %v10794 = vunpack.c.h.b16 %v10259
    %v10795 = vunpack.c.l.b16 %v10260
    %v10796 = vunpack.c.h.b16 %v10260
    %v10797 = vunpack.c.l.b16 %v10261
    %v10798 = vunpack.c.h.b16 %v10261
    %v10799 = vunpack.c.l.b16 %v10262
    %v10800 = vunpack.c.h.b16 %v10262
    %v10801 = vunpack.c.l.b16 %v10263
    %v10802 = vunpack.c.h.b16 %v10263
    %v10803 = vunpack.c.l.b16 %v10264
    %v10804 = vunpack.c.h.b16 %v10264
    %v10805 = vunpack.c.l.b16 %v10265
    %v10806 = vunpack.c.h.b16 %v10265
    %v10807 = vunpack.c.l.b16 %v10266
    %v10808 = vunpack.c.h.b16 %v10266
    %v10809 = vunpack.c.l.b16 %v10267
    %v10810 = vunpack.c.h.b16 %v10267
    %v10811 = vunpack.c.l.b16 %v10268
    %v10812 = vunpack.c.h.b16 %v10268
    %v10813 = vunpack.c.l.b16 %v10269
    %v10814 = vunpack.c.h.b16 %v10269
    %v10815 = vunpack.c.l.b16 %v10270
    %v10816 = vunpack.c.h.b16 %v10270
    %v10817 = vunpack.c.l.b16 %v10271
    %v10818 = vunpack.c.h.b16 %v10271
    %v10819 = vunpack.c.l.b16 %v10272
    %v10820 = vunpack.c.h.b16 %v10272
    %v10821 = vunpack.c.l.b16 %v10273
    %v10822 = vunpack.c.h.b16 %v10273
    %v10823 = vunpack.c.l.b16 %v10274
    %v10824 = vunpack.c.h.b16 %v10274
    %v10825 = vunpack.c.l.b16 %v10275
    %v10826 = vunpack.c.h.b16 %v10275
    %v10827 = vunpack.c.l.b16 %v10276
    %v10828 = vunpack.c.h.b16 %v10276
    %v10829 = vunpack.c.l.b16 %v10277
    %v10830 = vunpack.c.h.b16 %v10277
    %v10831 = vunpack.c.l.b16 %v10278
    %v10832 = vunpack.c.h.b16 %v10278
    %v10833 = vunpack.c.l.b16 %v10279
    %v10834 = vunpack.c.h.b16 %v10279
    %v10835 = vunpack.c.l.b16 %v10280
    %v10836 = vunpack.c.h.b16 %v10280
    %v10837 = vunpack.c.l.b16 %v10281
    %v10838 = vunpack.c.h.b16 %v10281
    %v10839 = vunpack.c.l.b16 %v10282
    %v10840 = vunpack.c.h.b16 %v10282
    %v10841 = vunpack.c.l.b16 %v10283
    %v10842 = vunpack.c.h.b16 %v10283
    %v10843 = vunpack.c.l.b16 %v10284
    %v10844 = vunpack.c.h.b16 %v10284
    %v10845 = vunpack.c.l.b16 %v10285
    %v10846 = vunpack.c.h.b16 %v10285
    %v10847 = vunpack.c.l.b16 %v10286
    %v10848 = vunpack.c.h.b16 %v10286
    %v10849 = vunpack.c.l.b16 %v10287
    %v10850 = vunpack.c.h.b16 %v10287
    %v10851 = vunpack.c.l.b16 %v10288
    %v10852 = vunpack.c.h.b16 %v10288
    %v10853 = vunpack.c.l.b16 %v10289
    %v10854 = vunpack.c.h.b16 %v10289
    %v10855 = vunpack.c.l.b16 %v10290
    %v10856 = vunpack.c.h.b16 %v10290
    %v10857 = vunpack.c.l.b16 %v10291
    %v10858 = vunpack.c.h.b16 %v10291
    %v10859 = vunpack.c.l.b16 %v10292
    %v10860 = vunpack.c.h.b16 %v10292
    %v10861 = vunpack.c.l.b16 %v10293
    %v10862 = vunpack.c.h.b16 %v10293
    %v10863 = vunpack.c.l.b16 %v10294
    %v10864 = vunpack.c.h.b16 %v10294
    %v10865 = vunpack.c.l.b16 %v10295
    %v10866 = vunpack.c.h.b16 %v10295
    %v10867 = vunpack.c.l.b16 %v10296
    %v10868 = vunpack.c.h.b16 %v10296
    %v10869 = vunpack.c.l.b16 %v10297
    %v10870 = vunpack.c.h.b16 %v10297
    %v10871 = vunpack.c.l.b16 %v10298
    %v10872 = vunpack.c.h.b16 %v10298
    %v10873 = vunpack.c.l.b16 %v10299
    %v10874 = vunpack.c.h.b16 %v10299
    %v10875 = vunpack.c.l.b16 %v10300
    %v10876 = vunpack.c.h.b16 %v10300
    %v10877 = vunpack.c.l.b16 %v10301
    %v10878 = vunpack.c.h.b16 %v10301
    %v10879 = vunpack.c.l.b16 %v10302
    %v10880 = vunpack.c.h.b16 %v10302
    %v10881 = vunpack.c.l.b16 %v10303
    %v10882 = vunpack.c.h.b16 %v10303
    %v10883 = vunpack.c.l.b16 %v10304
    %v10884 = vunpack.c.h.b16 %v10304
    %v10885 = vunpack.c.l.b16 %v10305
    %v10886 = vunpack.c.h.b16 %v10305
    %v10887 = vunpack.c.l.b16 %v10306
    %v10888 = vunpack.c.h.b16 %v10306
    %v10889 = vunpack.c.l.b16 %v10307
    %v10890 = vunpack.c.h.b16 %v10307
    %v10891 = vunpack.c.l.b16 %v10308
    %v10892 = vunpack.c.h.b16 %v10308
    %v10893 = vunpack.c.l.b16 %v10309
    %v10894 = vunpack.c.h.b16 %v10309
    %v10895 = vunpack.c.l.b16 %v10310
    %v10896 = vunpack.c.h.b16 %v10310
    %v10897 = vunpack.c.l.b16 %v10311
    %v10898 = vunpack.c.h.b16 %v10311
    %v10899 = vunpack.c.l.b16 %v10312
    %v10900 = vunpack.c.h.b16 %v10312
    %v10901 = vunpack.c.l.b16 %v10313
    %v10902 = vunpack.c.h.b16 %v10313
    %v10903 = vunpack.c.l.b16 %v10314
    %v10904 = vunpack.c.h.b16 %v10314
    %v10905 = vunpack.c.l.b16 %v10315
    %v10906 = vunpack.c.h.b16 %v10315
    %v10907 = vunpack.c.l.b16 %v10316
    %v10908 = vunpack.c.h.b16 %v10316
    %v10909 = vunpack.c.l.b16 %v10317
    %v10910 = vunpack.c.h.b16 %v10317
    %v10911 = vunpack.c.l.b16 %v10318
    %v10912 = vunpack.c.h.b16 %v10318
    %v10913 = vunpack.c.l.b16 %v10319
    %v10914 = vunpack.c.h.b16 %v10319
    %v10915 = vunpack.c.l.b16 %v10320
    %v10916 = vunpack.c.h.b16 %v10320
    %v10917 = vunpack.c.l.b16 %v10321
    %v10918 = vunpack.c.h.b16 %v10321
    %v10919 = vunpack.c.l.b16 %v10322
    %v10920 = vunpack.c.h.b16 %v10322
    %v10921 = vunpack.c.l.b16 %v10323
    %v10922 = vunpack.c.h.b16 %v10323
    %v10923 = vunpack.c.l.b16 %v10324
    %v10924 = vunpack.c.h.b16 %v10324
    %v10925 = vunpack.c.l.b16 %v10325
    %v10926 = vunpack.c.h.b16 %v10325
    %v10927 = vunpack.c.l.b16 %v10326
    %v10928 = vunpack.c.h.b16 %v10326
    %v10929 = vunpack.c.l.b16 %v10327
    %v10930 = vunpack.c.h.b16 %v10327
    %v10931 = vunpack.c.l.b16 %v10328
    %v10932 = vunpack.c.h.b16 %v10328
    %v10933 = vunpack.c.l.b16 %v10329
    %v10934 = vunpack.c.h.b16 %v10329
    %v10935 = vunpack.c.l.b16 %v10330
    %v10936 = vunpack.c.h.b16 %v10330
    %v10937 = vunpack.c.l.b16 %v10331
    %v10938 = vunpack.c.h.b16 %v10331
    %v10939 = vunpack.c.l.b16 %v10332
    %v10940 = vunpack.c.h.b16 %v10332
    %v10941 = vunpack.c.l.b16 %v10333
    %v10942 = vunpack.c.h.b16 %v10333
    %v10943 = vunpack.c.l.b16 %v10334
    %v10944 = vunpack.c.h.b16 %v10334
    %v10945 = vunpack.c.l.b16 %v10335
    %v10946 = vunpack.c.h.b16 %v10335
    %v10947 = vunpack.c.l.b16 %v10336
    %v10948 = vunpack.c.h.b16 %v10336
    %v10949 = vunpack.c.l.b16 %v10337
    %v10950 = vunpack.c.h.b16 %v10337
    %v10951 = vunpack.c.l.b16 %v10338
    %v10952 = vunpack.c.h.b16 %v10338
    %v10953 = vunpack.c.l.b16 %v10339
    %v10954 = vunpack.c.h.b16 %v10339
    %v10955 = vunpack.c.l.b16 %v10340
    %v10956 = vunpack.c.h.b16 %v10340
    %v10957 = vunpack.c.l.b16 %v10341
    %v10958 = vunpack.c.h.b16 %v10341
    %v10959 = vunpack.c.l.b16 %v10342
    %v10960 = vunpack.c.h.b16 %v10342
    %v10961 = vunpack.c.l.b16 %v10343
    %v10962 = vunpack.c.h.b16 %v10343
    %v10963 = vunpack.c.l.b16 %v10344
    %v10964 = vunpack.c.h.b16 %v10344
    %v10965 = vunpack.c.l.b16 %v10345
    %v10966 = vunpack.c.h.b16 %v10345
    %v10967 = vunpack.c.l.b16 %v10346
    %v10968 = vunpack.c.h.b16 %v10346
    %v10969 = vunpack.c.l.b16 %v10347
    %v10970 = vunpack.c.h.b16 %v10347
    %v10971 = vunpack.c.l.b16 %v10348
    %v10972 = vunpack.c.h.b16 %v10348
    %v10973 = vunpack.c.l.b16 %v10349
    %v10974 = vunpack.c.h.b16 %v10349
    %v10975 = vunpack.c.l.b16 %v10350
    %v10976 = vunpack.c.h.b16 %v10350
    %v10977 = vunpack.c.l.b16 %v10351
    %v10978 = vunpack.c.h.b16 %v10351
    %v10979 = vunpack.c.l.b16 %v10352
    %v10980 = vunpack.c.h.b16 %v10352
    %v10981 = vunpack.c.l.b16 %v10353
    %v10982 = vunpack.c.h.b16 %v10353
    %v10983 = vunpack.c.l.b16 %v10354
    %v10984 = vunpack.c.h.b16 %v10354
    %v10985 = vunpack.c.l.b16 %v10355
    %v10986 = vunpack.c.h.b16 %v10355
    %v10987 = vunpack.c.l.b16 %v10356
    %v10988 = vunpack.c.h.b16 %v10356
    %v10989 = vunpack.c.l.b16 %v10357
    %v10990 = vunpack.c.h.b16 %v10357
    %v10991 = vunpack.c.l.b16 %v10358
    %v10992 = vunpack.c.h.b16 %v10358
    %v10993 = vunpack.c.l.b16 %v10359
    %v10994 = vunpack.c.h.b16 %v10359
    %v10995 = vunpack.c.l.b16 %v10360
    %v10996 = vunpack.c.h.b16 %v10360
    %v10997 = vunpack.c.l.b16 %v10361
    %v10998 = vunpack.c.h.b16 %v10361
    %v10999 = vunpack.c.l.b16 %v10362
    %v11000 = vunpack.c.h.b16 %v10362
    %v11001 = vunpack.c.l.b16 %v10363
    %v11002 = vunpack.c.h.b16 %v10363
    %v11003 = vunpack.c.l.b16 %v10364
    %v11004 = vunpack.c.h.b16 %v10364
    %v11005 = vunpack.c.l.b16 %v10365
    %v11006 = vunpack.c.h.b16 %v10365
    %v11007 = vunpack.c.l.b16 %v10366
    %v11008 = vunpack.c.h.b16 %v10366
    %v11009 = vunpack.c.l.b16 %v10367
    %v11010 = vunpack.c.h.b16 %v10367
    %v11011 = vunpack.c.l.b16 %v10368
    %v11012 = vunpack.c.h.b16 %v10368
    %v11013 = vunpack.c.l.b16 %v10369
    %v11014 = vunpack.c.h.b16 %v10369
    %v11015 = vunpack.c.l.b16 %v10370
    %v11016 = vunpack.c.h.b16 %v10370
    %v11017 = vunpack.c.l.b16 %v10371
    %v11018 = vunpack.c.h.b16 %v10371
    %v11019 = vunpack.c.l.b16 %v10372
    %v11020 = vunpack.c.h.b16 %v10372
    %v11021 = vunpack.c.l.b16 %v10373
    %v11022 = vunpack.c.h.b16 %v10373
    %v11023 = vunpack.c.l.b16 %v10374
    %v11024 = vunpack.c.h.b16 %v10374
    %v11025 = vunpack.c.l.b16 %v10375
    %v11026 = vunpack.c.h.b16 %v10375
    %v11027 = vunpack.c.l.b16 %v10376
    %v11028 = vunpack.c.h.b16 %v10376
    %v11029 = vunpack.c.l.b16 %v10377
    %v11030 = vunpack.c.h.b16 %v10377
    %v11031 = vunpack.c.l.b16 %v10378
    %v11032 = vunpack.c.h.b16 %v10378
    %v11033 = vunpack.c.l.b16 %v10379
    %v11034 = vunpack.c.h.b16 %v10379
    %v11035 = vunpack.c.l.b16 %v10380
    %v11036 = vunpack.c.h.b16 %v10380
    %v11037 = vunpack.c.l.b16 %v10381
    %v11038 = vunpack.c.h.b16 %v10381
    %v11039 = vunpack.c.l.b16 %v10382
    %v11040 = vunpack.c.h.b16 %v10382
    %v11041 = vunpack.c.l.b16 %v10383
    %v11042 = vunpack.c.h.b16 %v10383
    %v11043 = vunpack.c.l.b16 %v10384
    %v11044 = vunpack.c.h.b16 %v10384
    %v11045 = vunpack.c.l.b16 %v10385
    %v11046 = vunpack.c.h.b16 %v10385
    %v11047 = vunpack.c.l.b16 %v10386
    %v11048 = vunpack.c.h.b16 %v10386
    %v11049 = vunpack.c.l.b16 %v10387
    %v11050 = vunpack.c.h.b16 %v10387
    %v11051 = vunpack.c.l.b16 %v10388
    %v11052 = vunpack.c.h.b16 %v10388
    %v11053 = vunpack.c.l.b16 %v10389
    %v11054 = vunpack.c.h.b16 %v10389
    %v11055 = vunpack.c.l.b16 %v10390
    %v11056 = vunpack.c.h.b16 %v10390
    %v11057 = vunpack.c.l.b16 %v10391
    %v11058 = vunpack.c.h.b16 %v10391
    %v11059 = vunpack.c.l.b16 %v10392
    %v11060 = vunpack.c.h.b16 %v10392
    %v11061 = vunpack.c.l.b16 %v10393
    %v11062 = vunpack.c.h.b16 %v10393
    %v11063 = vunpack.c.l.b16 %v10394
    %v11064 = vunpack.c.h.b16 %v10394
    %v11065 = vunpack.c.l.b16 %v10395
    %v11066 = vunpack.c.h.b16 %v10395
    %v11067 = vunpack.c.l.b16 %v10396
    %v11068 = vunpack.c.h.b16 %v10396
    %v11069 = vunpack.c.l.b16 %v10397
    %v11070 = vunpack.c.h.b16 %v10397
    %v11071 = vunpack.c.l.b16 %v10398
    %v11072 = vunpack.c.h.b16 %v10398
    %v11073 = vunpack.c.l.b16 %v10399
    %v11074 = vunpack.c.h.b16 %v10399
    %v11075 = vunpack.c.l.b16 %v10400
    %v11076 = vunpack.c.h.b16 %v10400
    %v11077 = vunpack.c.l.b16 %v10401
    %v11078 = vunpack.c.h.b16 %v10401
    %v11079 = vunpack.c.l.b16 %v10402
    %v11080 = vunpack.c.h.b16 %v10402
    %v11081 = vunpack.c.l.b16 %v10403
    %v11082 = vunpack.c.h.b16 %v10403
    %v11083 = vunpack.c.l.b16 %v10404
    %v11084 = vunpack.c.h.b16 %v10404
    %v11085 = vunpack.c.l.b16 %v10405
    %v11086 = vunpack.c.h.b16 %v10405
    %v11087 = vunpack.c.l.b16 %v10406
    %v11088 = vunpack.c.h.b16 %v10406
    %v11089 = vunpack.c.l.b16 %v10407
    %v11090 = vunpack.c.h.b16 %v10407
    %v11091 = vunpack.c.l.b16 %v10408
    %v11092 = vunpack.c.h.b16 %v10408
    %v11093 = vunpack.c.l.b16 %v10409
    %v11094 = vunpack.c.h.b16 %v10409
    %v11095 = vunpack.c.l.b16 %v10410
    %v11096 = vunpack.c.h.b16 %v10410
    %v11097 = vunpack.c.l.b16 %v10411
    %v11098 = vunpack.c.h.b16 %v10411
    %v11099 = vunpack.c.l.b16 %v10412
    %v11100 = vunpack.c.h.b16 %v10412
    %v11101 = vunpack.c.l.b16 %v10413
    %v11102 = vunpack.c.h.b16 %v10413
    %v11103 = vunpack.c.l.b16 %v10414
    %v11104 = vunpack.c.h.b16 %v10414
    %v11105 = vunpack.c.l.b16 %v10415
    %v11106 = vunpack.c.h.b16 %v10415
    %v11107 = vunpack.c.l.b16 %v10416
    %v11108 = vunpack.c.h.b16 %v10416
    %v11109 = vunpack.c.l.b16 %v10417
    %v11110 = vunpack.c.h.b16 %v10417
    %v11111 = vunpack.c.l.b16 %v10418
    %v11112 = vunpack.c.h.b16 %v10418
    %v11113 = vunpack.c.l.b16 %v10419
    %v11114 = vunpack.c.h.b16 %v10419
    %v11115 = vunpack.c.l.b16 %v10420
    %v11116 = vunpack.c.h.b16 %v10420
    %v11117 = vunpack.c.l.b16 %v10421
    %v11118 = vunpack.c.h.b16 %v10421
    %v11119 = vunpack.c.l.b16 %v10422
    %v11120 = vunpack.c.h.b16 %v10422
    %v11121 = vunpack.c.l.b16 %v10423
    %v11122 = vunpack.c.h.b16 %v10423
    %v11123 = vunpack.c.l.b16 %v10424
    %v11124 = vunpack.c.h.b16 %v10424
    %v11125 = vunpack.c.l.b16 %v10425
    %v11126 = vunpack.c.h.b16 %v10425
    %v11127 = vunpack.c.l.b16 %v10426
    %v11128 = vunpack.c.h.b16 %v10426
    %v11129 = vunpack.c.l.b16 %v10427
    %v11130 = vunpack.c.h.b16 %v10427
    %v11131 = vunpack.c.l.b16 %v10428
    %v11132 = vunpack.c.h.b16 %v10428
    %v11133 = vunpack.c.l.b16 %v10429
    %v11134 = vunpack.c.h.b16 %v10429
    %v11135 = vunpack.c.l.b16 %v10430
    %v11136 = vunpack.c.h.b16 %v10430
    %v11137 = vunpack.c.l.b16 %v10431
    %v11138 = vunpack.c.h.b16 %v10431
    %v11139 = vunpack.c.l.b16 %v10432
    %v11140 = vunpack.c.h.b16 %v10432
    %v11141 = vunpack.c.l.b16 %v10433
    %v11142 = vunpack.c.h.b16 %v10433
    %v11143 = vunpack.c.l.b16 %v10434
    %v11144 = vunpack.c.h.b16 %v10434
    %v11145 = vunpack.c.l.b16 %v10435
    %v11146 = vunpack.c.h.b16 %v10435
    %v11147 = vunpack.c.l.b16 %v10436
    %v11148 = vunpack.c.h.b16 %v10436
    %v11149 = vunpack.c.l.b16 %v10437
    %v11150 = vunpack.c.h.b16 %v10437
    %v11151 = vunpack.c.l.b16 %v10438
    %v11152 = vunpack.c.h.b16 %v10438
    %v11153 = vunpack.c.l.b16 %v10439
    %v11154 = vunpack.c.h.b16 %v10439
    %v11155 = vunpack.c.l.b16 %v10440
    %v11156 = vunpack.c.h.b16 %v10440
    %v11157 = vunpack.c.l.b16 %v10441
    %v11158 = vunpack.c.h.b16 %v10441
    %v11159 = vunpack.c.l.b16 %v10442
    %v11160 = vunpack.c.h.b16 %v10442
    %v11161 = vunpack.c.l.b16 %v10443
    %v11162 = vunpack.c.h.b16 %v10443
    %v11163 = vunpack.c.l.b16 %v10444
    %v11164 = vunpack.c.h.b16 %v10444
    %v11165 = vunpack.c.l.b16 %v10445
    %v11166 = vunpack.c.h.b16 %v10445
    %v11167 = vunpack.c.l.b16 %v10446
    %v11168 = vunpack.c.h.b16 %v10446
    %v11169 = vunpack.c.l.b16 %v10447
    %v11170 = vunpack.c.h.b16 %v10447
    %v11171 = vunpack.c.l.b16 %v10448
    %v11172 = vunpack.c.h.b16 %v10448
    %v11173 = vunpack.c.l.b16 %v10449
    %v11174 = vunpack.c.h.b16 %v10449
    %v11175 = vunpack.c.l.b16 %v10450
    %v11176 = vunpack.c.h.b16 %v10450
    %v11177 = vunpack.c.l.b16 %v10451
    %v11178 = vunpack.c.h.b16 %v10451
    %v11179 = vunpack.c.l.b16 %v10452
    %v11180 = vunpack.c.h.b16 %v10452
    %v11181 = vunpack.c.l.b16 %v10453
    %v11182 = vunpack.c.h.b16 %v10453
    %v11183 = vunpack.c.l.b16 %v10454
    %v11184 = vunpack.c.h.b16 %v10454
    %v11185 = vunpack.c.l.b16 %v10455
    %v11186 = vunpack.c.h.b16 %v10455
    %v11187 = vunpack.c.l.b16 %v10456
    %v11188 = vunpack.c.h.b16 %v10456
    %v11189 = vunpack.c.l.b16 %v10457
    %v11190 = vunpack.c.h.b16 %v10457
    %v11191 = vunpack.c.l.b16 %v10458
    %v11192 = vunpack.c.h.b16 %v10458
    %v11193 = vunpack.c.l.b16 %v10459
    %v11194 = vunpack.c.h.b16 %v10459
    %v11195 = vunpack.c.l.b16 %v10460
    %v11196 = vunpack.c.h.b16 %v10460
    %v11197 = vunpack.c.l.b16 %v10461
    %v11198 = vunpack.c.h.b16 %v10461
    %v11199 = vunpack.c.l.b16 %v10462
    %v11200 = vunpack.c.h.b16 %v10462
    %v11201 = vunpack.c.l.b16 %v10463
    %v11202 = vunpack.c.h.b16 %v10463
    %v11203 = vunpack.c.l.b16 %v10464
    %v11204 = vunpack.c.h.b16 %v10464
    %v11205 = vunpack.c.l.b16 %v10465
    %v11206 = vunpack.c.h.b16 %v10465
    %v11207 = vunpack.c.l.b16 %v10466
    %v11208 = vunpack.c.h.b16 %v10466
    %v11209 = vunpack.c.l.b16 %v10467
    %v11210 = vunpack.c.h.b16 %v10467
    %v11211 = vunpack.c.l.b16 %v10468
    %v11212 = vunpack.c.h.b16 %v10468
    %v11213 = vunpack.c.l.b16 %v10469
    %v11214 = vunpack.c.h.b16 %v10469
    %v11215 = vunpack.c.l.b16 %v10470
    %v11216 = vunpack.c.h.b16 %v10470
    %v11217 = vunpack.c.l.b16 %v10471
    %v11218 = vunpack.c.h.b16 %v10471
    %v11219 = vunpack.c.l.b16 %v10472
    %v11220 = vunpack.c.h.b16 %v10472
    %v11221 = vunpack.c.l.b16 %v10473
    %v11222 = vunpack.c.h.b16 %v10473
    %v11223 = vunpack.c.l.b16 %v10474
    %v11224 = vunpack.c.h.b16 %v10474
    %v11225 = vunpack.c.l.b16 %v10475
    %v11226 = vunpack.c.h.b16 %v10475
    %v11227 = vunpack.c.l.b16 %v10476
    %v11228 = vunpack.c.h.b16 %v10476
    %v11229 = vunpack.c.l.b16 %v10477
    %v11230 = vunpack.c.h.b16 %v10477
    %v11231 = vunpack.c.l.b16 %v10478
    %v11232 = vunpack.c.h.b16 %v10478
    %v11233 = vunpack.c.l.b16 %v10479
    %v11234 = vunpack.c.h.b16 %v10479
    %v11235 = vunpack.c.l.b16 %v10480
    %v11236 = vunpack.c.h.b16 %v10480
    %v11237 = vunpack.c.l.b16 %v10481
    %v11238 = vunpack.c.h.b16 %v10481
    %v11239 = vunpack.c.l.b16 %v10482
    %v11240 = vunpack.c.h.b16 %v10482
    %v11241 = vunpack.c.l.b16 %v10483
    %v11242 = vunpack.c.h.b16 %v10483
    %v11243 = vunpack.c.l.b16 %v10484
    %v11244 = vunpack.c.h.b16 %v10484
    %v11245 = vunpack.c.l.b16 %v10485
    %v11246 = vunpack.c.h.b16 %v10485
    %v11247 = vunpack.c.l.b16 %v10486
    %v11248 = vunpack.c.h.b16 %v10486
    %v11249 = vunpack.c.l.b16 %v10487
    %v11250 = vunpack.c.h.b16 %v10487
    %v11251 = vunpack.c.l.b16 %v10488
    %v11252 = vunpack.c.h.b16 %v10488
    %v11253 = vunpack.c.l.b16 %v10489
    %v11254 = vunpack.c.h.b16 %v10489
    %v11255 = vunpack.c.l.b16 %v10490
    %v11256 = vunpack.c.h.b16 %v10490
    %v11257 = vunpack.c.l.b16 %v10491
    %v11258 = vunpack.c.h.b16 %v10491
    %v11259 = vunpack.c.l.b16 %v10492
    %v11260 = vunpack.c.h.b16 %v10492
    %v11261 = vunpack.c.l.b16 %v10493
    %v11262 = vunpack.c.h.b16 %v10493
    %v11263 = vunpack.c.l.b16 %v10494
    %v11264 = vunpack.c.h.b16 %v10494
    %v11265 = vunpack.c.l.b16 %v10495
    %v11266 = vunpack.c.h.b16 %v10495
    %v11267 = vunpack.c.l.b16 %v10496
    %v11268 = vunpack.c.h.b16 %v10496
    %v11269 = vunpack.c.l.b16 %v10497
    %v11270 = vunpack.c.h.b16 %v10497
    %v11271 = vunpack.c.l.b16 %v10498
    %v11272 = vunpack.c.h.b16 %v10498
    %v11273 = vunpack.c.l.b16 %v10499
    %v11274 = vunpack.c.h.b16 %v10499
    %v11275 = vunpack.c.l.b16 %v10500
    %v11276 = vunpack.c.h.b16 %v10500
    %v11277 = vunpack.c.l.b16 %v10501
    %v11278 = vunpack.c.h.b16 %v10501
    %v11279 = vunpack.c.l.b16 %v10502
    %v11280 = vunpack.c.h.b16 %v10502
    %v11281 = vunpack.c.l.b16 %v10503
    %v11282 = vunpack.c.h.b16 %v10503
    %v11283 = vunpack.c.l.b16 %v10504
    %v11284 = vunpack.c.h.b16 %v10504
    %v11285 = vpack.c.b16 %v10775, %v10773
    %v11286 = vpack.c.b16 %v10776, %v10774
    %v11287 = vpack.c.b16 %v10779, %v10777
    %v11288 = vpack.c.b16 %v10780, %v10778
    %v11289 = vpack.c.b16 %v10783, %v10781
    %v11290 = vpack.c.b16 %v10784, %v10782
    %v11291 = vpack.c.b16 %v10787, %v10785
    %v11292 = vpack.c.b16 %v10788, %v10786
    %v11293 = vpack.c.b16 %v10791, %v10789
    %v11294 = vpack.c.b16 %v10792, %v10790
    %v11295 = vpack.c.b16 %v10795, %v10793
    %v11296 = vpack.c.b16 %v10796, %v10794
    %v11297 = vpack.c.b16 %v10799, %v10797
    %v11298 = vpack.c.b16 %v10800, %v10798
    %v11299 = vpack.c.b16 %v10803, %v10801
    %v11300 = vpack.c.b16 %v10804, %v10802
    %v11301 = vpack.c.b16 %v10807, %v10805
    %v11302 = vpack.c.b16 %v10808, %v10806
    %v11303 = vpack.c.b16 %v10811, %v10809
    %v11304 = vpack.c.b16 %v10812, %v10810
    %v11305 = vpack.c.b16 %v10815, %v10813
    %v11306 = vpack.c.b16 %v10816, %v10814
    %v11307 = vpack.c.b16 %v10819, %v10817
    %v11308 = vpack.c.b16 %v10820, %v10818
    %v11309 = vpack.c.b16 %v10823, %v10821
    %v11310 = vpack.c.b16 %v10824, %v10822
    %v11311 = vpack.c.b16 %v10827, %v10825
    %v11312 = vpack.c.b16 %v10828, %v10826
    %v11313 = vpack.c.b16 %v10831, %v10829
    %v11314 = vpack.c.b16 %v10832, %v10830
    %v11315 = vpack.c.b16 %v10835, %v10833
    %v11316 = vpack.c.b16 %v10836, %v10834
    %v11317 = vpack.c.b16 %v10839, %v10837
    %v11318 = vpack.c.b16 %v10840, %v10838
    %v11319 = vpack.c.b16 %v10843, %v10841
    %v11320 = vpack.c.b16 %v10844, %v10842
    %v11321 = vpack.c.b16 %v10847, %v10845
    %v11322 = vpack.c.b16 %v10848, %v10846
    %v11323 = vpack.c.b16 %v10851, %v10849
    %v11324 = vpack.c.b16 %v10852, %v10850
    %v11325 = vpack.c.b16 %v10855, %v10853
    %v11326 = vpack.c.b16 %v10856, %v10854
    %v11327 = vpack.c.b16 %v10859, %v10857
    %v11328 = vpack.c.b16 %v10860, %v10858
    %v11329 = vpack.c.b16 %v10863, %v10861
    %v11330 = vpack.c.b16 %v10864, %v10862
    %v11331 = vpack.c.b16 %v10867, %v10865
    %v11332 = vpack.c.b16 %v10868, %v10866
    %v11333 = vpack.c.b16 %v10871, %v10869
    %v11334 = vpack.c.b16 %v10872, %v10870
    %v11335 = vpack.c.b16 %v10875, %v10873
    %v11336 = vpack.c.b16 %v10876, %v10874
    %v11337 = vpack.c.b16 %v10879, %v10877
    %v11338 = vpack.c.b16 %v10880, %v10878
    %v11339 = vpack.c.b16 %v10883, %v10881
    %v11340 = vpack.c.b16 %v10884, %v10882
    %v11341 = vpack.c.b16 %v10887, %v10885
    %v11342 = vpack.c.b16 %v10888, %v10886
    %v11343 = vpack.c.b16 %v10891, %v10889
    %v11344 = vpack.c.b16 %v10892, %v10890
    %v11345 = vpack.c.b16 %v10895, %v10893
    %v11346 = vpack.c.b16 %v10896, %v10894
    %v11347 = vpack.c.b16 %v10899, %v10897
    %v11348 = vpack.c.b16 %v10900, %v10898
    %v11349 = vpack.c.b16 %v10903, %v10901
    %v11350 = vpack.c.b16 %v10904, %v10902
    %v11351 = vpack.c.b16 %v10907, %v10905
    %v11352 = vpack.c.b16 %v10908, %v10906
    %v11353 = vpack.c.b16 %v10911, %v10909
    %v11354 = vpack.c.b16 %v10912, %v10910
    %v11355 = vpack.c.b16 %v10915, %v10913
    %v11356 = vpack.c.b16 %v10916, %v10914
    %v11357 = vpack.c.b16 %v10919, %v10917
    %v11358 = vpack.c.b16 %v10920, %v10918
    %v11359 = vpack.c.b16 %v10923, %v10921
    %v11360 = vpack.c.b16 %v10924, %v10922
    %v11361 = vpack.c.b16 %v10927, %v10925
    %v11362 = vpack.c.b16 %v10928, %v10926
    %v11363 = vpack.c.b16 %v10931, %v10929
    %v11364 = vpack.c.b16 %v10932, %v10930
    %v11365 = vpack.c.b16 %v10935, %v10933
    %v11366 = vpack.c.b16 %v10936, %v10934
    %v11367 = vpack.c.b16 %v10939, %v10937
    %v11368 = vpack.c.b16 %v10940, %v10938
    %v11369 = vpack.c.b16 %v10943, %v10941
    %v11370 = vpack.c.b16 %v10944, %v10942
    %v11371 = vpack.c.b16 %v10947, %v10945
    %v11372 = vpack.c.b16 %v10948, %v10946
    %v11373 = vpack.c.b16 %v10951, %v10949
    %v11374 = vpack.c.b16 %v10952, %v10950
    %v11375 = vpack.c.b16 %v10955, %v10953
    %v11376 = vpack.c.b16 %v10956, %v10954
    %v11377 = vpack.c.b16 %v10959, %v10957
    %v11378 = vpack.c.b16 %v10960, %v10958
    %v11379 = vpack.c.b16 %v10963, %v10961
    %v11380 = vpack.c.b16 %v10964, %v10962
    %v11381 = vpack.c.b16 %v10967, %v10965
    %v11382 = vpack.c.b16 %v10968, %v10966
    %v11383 = vpack.c.b16 %v10971, %v10969
    %v11384 = vpack.c.b16 %v10972, %v10970
    %v11385 = vpack.c.b16 %v10975, %v10973
    %v11386 = vpack.c.b16 %v10976, %v10974
    %v11387 = vpack.c.b16 %v10979, %v10977
    %v11388 = vpack.c.b16 %v10980, %v10978
    %v11389 = vpack.c.b16 %v10983, %v10981
    %v11390 = vpack.c.b16 %v10984, %v10982
    %v11391 = vpack.c.b16 %v10987, %v10985
    %v11392 = vpack.c.b16 %v10988, %v10986
    %v11393 = vpack.c.b16 %v10991, %v10989
    %v11394 = vpack.c.b16 %v10992, %v10990
    %v11395 = vpack.c.b16 %v10995, %v10993
    %v11396 = vpack.c.b16 %v10996, %v10994
    %v11397 = vpack.c.b16 %v10999, %v10997
    %v11398 = vpack.c.b16 %v11000, %v10998
    %v11399 = vpack.c.b16 %v11003, %v11001
    %v11400 = vpack.c.b16 %v11004, %v11002
    %v11401 = vpack.c.b16 %v11007, %v11005
    %v11402 = vpack.c.b16 %v11008, %v11006
    %v11403 = vpack.c.b16 %v11011, %v11009
    %v11404 = vpack.c.b16 %v11012, %v11010
    %v11405 = vpack.c.b16 %v11015, %v11013
    %v11406 = vpack.c.b16 %v11016, %v11014
    %v11407 = vpack.c.b16 %v11019, %v11017
    %v11408 = vpack.c.b16 %v11020, %v11018
    %v11409 = vpack.c.b16 %v11023, %v11021
    %v11410 = vpack.c.b16 %v11024, %v11022
    %v11411 = vpack.c.b16 %v11027, %v11025
    %v11412 = vpack.c.b16 %v11028, %v11026
    %v11413 = vpack.c.b16 %v11031, %v11029
    %v11414 = vpack.c.b16 %v11032, %v11030
    %v11415 = vpack.c.b16 %v11035, %v11033
    %v11416 = vpack.c.b16 %v11036, %v11034
    %v11417 = vpack.c.b16 %v11039, %v11037
    %v11418 = vpack.c.b16 %v11040, %v11038
    %v11419 = vpack.c.b16 %v11043, %v11041
    %v11420 = vpack.c.b16 %v11044, %v11042
    %v11421 = vpack.c.b16 %v11047, %v11045
    %v11422 = vpack.c.b16 %v11048, %v11046
    %v11423 = vpack.c.b16 %v11051, %v11049
    %v11424 = vpack.c.b16 %v11052, %v11050
    %v11425 = vpack.c.b16 %v11055, %v11053
    %v11426 = vpack.c.b16 %v11056, %v11054
    %v11427 = vpack.c.b16 %v11059, %v11057
    %v11428 = vpack.c.b16 %v11060, %v11058
    %v11429 = vpack.c.b16 %v11063, %v11061
    %v11430 = vpack.c.b16 %v11064, %v11062
    %v11431 = vpack.c.b16 %v11067, %v11065
    %v11432 = vpack.c.b16 %v11068, %v11066
    %v11433 = vpack.c.b16 %v11071, %v11069
    %v11434 = vpack.c.b16 %v11072, %v11070
    %v11435 = vpack.c.b16 %v11075, %v11073
    %v11436 = vpack.c.b16 %v11076, %v11074
    %v11437 = vpack.c.b16 %v11079, %v11077
    %v11438 = vpack.c.b16 %v11080, %v11078
    %v11439 = vpack.c.b16 %v11083, %v11081
    %v11440 = vpack.c.b16 %v11084, %v11082
    %v11441 = vpack.c.b16 %v11087, %v11085
    %v11442 = vpack.c.b16 %v11088, %v11086
    %v11443 = vpack.c.b16 %v11091, %v11089
    %v11444 = vpack.c.b16 %v11092, %v11090
    %v11445 = vpack.c.b16 %v11095, %v11093
    %v11446 = vpack.c.b16 %v11096, %v11094
    %v11447 = vpack.c.b16 %v11099, %v11097
    %v11448 = vpack.c.b16 %v11100, %v11098
    %v11449 = vpack.c.b16 %v11103, %v11101
    %v11450 = vpack.c.b16 %v11104, %v11102
    %v11451 = vpack.c.b16 %v11107, %v11105
    %v11452 = vpack.c.b16 %v11108, %v11106
    %v11453 = vpack.c.b16 %v11111, %v11109
    %v11454 = vpack.c.b16 %v11112, %v11110
    %v11455 = vpack.c.b16 %v11115, %v11113
    %v11456 = vpack.c.b16 %v11116, %v11114
    %v11457 = vpack.c.b16 %v11119, %v11117
    %v11458 = vpack.c.b16 %v11120, %v11118
    %v11459 = vpack.c.b16 %v11123, %v11121
    %v11460 = vpack.c.b16 %v11124, %v11122
    %v11461 = vpack.c.b16 %v11127, %v11125
    %v11462 = vpack.c.b16 %v11128, %v11126
    %v11463 = vpack.c.b16 %v11131, %v11129
    %v11464 = vpack.c.b16 %v11132, %v11130
    %v11465 = vpack.c.b16 %v11135, %v11133
    %v11466 = vpack.c.b16 %v11136, %v11134
    %v11467 = vpack.c.b16 %v11139, %v11137
    %v11468 = vpack.c.b16 %v11140, %v11138
    %v11469 = vpack.c.b16 %v11143, %v11141
    %v11470 = vpack.c.b16 %v11144, %v11142
    %v11471 = vpack.c.b16 %v11147, %v11145
    %v11472 = vpack.c.b16 %v11148, %v11146
    %v11473 = vpack.c.b16 %v11151, %v11149
    %v11474 = vpack.c.b16 %v11152, %v11150
    %v11475 = vpack.c.b16 %v11155, %v11153
    %v11476 = vpack.c.b16 %v11156, %v11154
    %v11477 = vpack.c.b16 %v11159, %v11157
    %v11478 = vpack.c.b16 %v11160, %v11158
    %v11479 = vpack.c.b16 %v11163, %v11161
    %v11480 = vpack.c.b16 %v11164, %v11162
    %v11481 = vpack.c.b16 %v11167, %v11165
    %v11482 = vpack.c.b16 %v11168, %v11166
    %v11483 = vpack.c.b16 %v11171, %v11169
    %v11484 = vpack.c.b16 %v11172, %v11170
    %v11485 = vpack.c.b16 %v11175, %v11173
    %v11486 = vpack.c.b16 %v11176, %v11174
    %v11487 = vpack.c.b16 %v11179, %v11177
    %v11488 = vpack.c.b16 %v11180, %v11178
    %v11489 = vpack.c.b16 %v11183, %v11181
    %v11490 = vpack.c.b16 %v11184, %v11182
    %v11491 = vpack.c.b16 %v11187, %v11185
    %v11492 = vpack.c.b16 %v11188, %v11186
    %v11493 = vpack.c.b16 %v11191, %v11189
    %v11494 = vpack.c.b16 %v11192, %v11190
    %v11495 = vpack.c.b16 %v11195, %v11193
    %v11496 = vpack.c.b16 %v11196, %v11194
    %v11497 = vpack.c.b16 %v11199, %v11197
    %v11498 = vpack.c.b16 %v11200, %v11198
    %v11499 = vpack.c.b16 %v11203, %v11201
    %v11500 = vpack.c.b16 %v11204, %v11202
    %v11501 = vpack.c.b16 %v11207, %v11205
    %v11502 = vpack.c.b16 %v11208, %v11206
    %v11503 = vpack.c.b16 %v11211, %v11209
    %v11504 = vpack.c.b16 %v11212, %v11210
    %v11505 = vpack.c.b16 %v11215, %v11213
    %v11506 = vpack.c.b16 %v11216, %v11214
    %v11507 = vpack.c.b16 %v11219, %v11217
    %v11508 = vpack.c.b16 %v11220, %v11218
    %v11509 = vpack.c.b16 %v11223, %v11221
    %v11510 = vpack.c.b16 %v11224, %v11222
    %v11511 = vpack.c.b16 %v11227, %v11225
    %v11512 = vpack.c.b16 %v11228, %v11226
    %v11513 = vpack.c.b16 %v11231, %v11229
    %v11514 = vpack.c.b16 %v11232, %v11230
    %v11515 = vpack.c.b16 %v11235, %v11233
    %v11516 = vpack.c.b16 %v11236, %v11234
    %v11517 = vpack.c.b16 %v11239, %v11237
    %v11518 = vpack.c.b16 %v11240, %v11238
    %v11519 = vpack.c.b16 %v11243, %v11241
    %v11520 = vpack.c.b16 %v11244, %v11242
    %v11521 = vpack.c.b16 %v11247, %v11245
    %v11522 = vpack.c.b16 %v11248, %v11246
    %v11523 = vpack.c.b16 %v11251, %v11249
    %v11524 = vpack.c.b16 %v11252, %v11250
    %v11525 = vpack.c.b16 %v11255, %v11253
    %v11526 = vpack.c.b16 %v11256, %v11254
    %v11527 = vpack.c.b16 %v11259, %v11257
    %v11528 = vpack.c.b16 %v11260, %v11258
    %v11529 = vpack.c.b16 %v11263, %v11261
    %v11530 = vpack.c.b16 %v11264, %v11262
    %v11531 = vpack.c.b16 %v11267, %v11265
    %v11532 = vpack.c.b16 %v11268, %v11266
    %v11533 = vpack.c.b16 %v11271, %v11269
    %v11534 = vpack.c.b16 %v11272, %v11270
    %v11535 = vpack.c.b16 %v11275, %v11273
    %v11536 = vpack.c.b16 %v11276, %v11274
    %v11537 = vpack.c.b16 %v11279, %v11277
    %v11538 = vpack.c.b16 %v11280, %v11278
    %v11539 = vpack.c.b16 %v11283, %v11281
    %v11540 = vpack.c.b16 %v11284, %v11282
    %11797 = vmatprep.subr.bf16.mxu0 %v11286
    %11798 = vmatpush1.bf16.msra.mxu0 %v11285
    %11799 = vmatprep.subr.bf16.mxu0 %v11288
    %11800 = vmatpush1.bf16.msra.mxu0 %v11287
    %11801 = vmatprep.subr.bf16.mxu0 %v11290
    %11802 = vmatpush1.bf16.msra.mxu0 %v11289
    %11803 = vmatprep.subr.bf16.mxu0 %v11292
    %11804 = vmatpush1.bf16.msra.mxu0 %v11291
    %11805 = vmatprep.subr.bf16.mxu0 %v11294
    %11806 = vmatpush1.bf16.msra.mxu0 %v11293
    %11807 = vmatprep.subr.bf16.mxu0 %v11296
    %11808 = vmatpush1.bf16.msra.mxu0 %v11295
    %11809 = vmatprep.subr.bf16.mxu0 %v11298
    %11810 = vmatpush1.bf16.msra.mxu0 %v11297
    %11811 = vmatprep.subr.bf16.mxu0 %v11300
    %11812 = vmatpush1.bf16.msra.mxu0 %v11299
    %11813 = vmatprep.subr.bf16.mxu0 %v11302
    %11814 = vmatpush1.bf16.msra.mxu0 %v11301
    %11815 = vmatprep.subr.bf16.mxu0 %v11304
    %11816 = vmatpush1.bf16.msra.mxu0 %v11303
    %11817 = vmatprep.subr.bf16.mxu0 %v11306
    %11818 = vmatpush1.bf16.msra.mxu0 %v11305
    %11819 = vmatprep.subr.bf16.mxu0 %v11308
    %11820 = vmatpush1.bf16.msra.mxu0 %v11307
    %11821 = vmatprep.subr.bf16.mxu0 %v11310
    %11822 = vmatpush1.bf16.msra.mxu0 %v11309
    %11823 = vmatprep.subr.bf16.mxu0 %v11312
    %11824 = vmatpush1.bf16.msra.mxu0 %v11311
    %11825 = vmatprep.subr.bf16.mxu0 %v11314
    %11826 = vmatpush1.bf16.msra.mxu0 %v11313
    %11827 = vmatprep.subr.bf16.mxu0 %v11316
    %11828 = vmatpush1.bf16.msra.mxu0 %v11315
    %11829 = vmatprep.mubr.bf16.mxu0 %v10234
    %11830 = vmatmul.mubr.bf16.gmra.mrb[0].mxu0 %v10233
    %v11831 = vpop.f32.mrb[0].mxu0
    %v11832 = vadd.f32 %v10510, %v11831
    %v11833 = vpop.f32.mrb[0].mxu0
    %v11834 = vadd.f32 %v10514, %v11833
    %v11835 = vpop.f32.mrb[0].mxu0
    %v11836 = vadd.f32 %v10510, %v11835
    %v11837 = vpop.f32.mrb[0].mxu0
    %v11838 = vadd.f32 %v10514, %v11837
    %11839 = vdwg.mxu0
    %11840 = vmatprep.subr.bf16.mxu0 %v11318
    %11841 = vmatpush1.bf16.msra.mxu0 %v11317
    %11842 = vmatprep.subr.bf16.mxu0 %v11320
    %11843 = vmatpush1.bf16.msra.mxu0 %v11319
    %11844 = vmatprep.subr.bf16.mxu0 %v11322
    %11845 = vmatpush1.bf16.msra.mxu0 %v11321
    %11846 = vmatprep.subr.bf16.mxu0 %v11324
    %11847 = vmatpush1.bf16.msra.mxu0 %v11323
    %11848 = vmatprep.subr.bf16.mxu0 %v11326
    %11849 = vmatpush1.bf16.msra.mxu0 %v11325
    %11850 = vmatprep.subr.bf16.mxu0 %v11328
    %11851 = vmatpush1.bf16.msra.mxu0 %v11327
    %11852 = vmatprep.subr.bf16.mxu0 %v11330
    %11853 = vmatpush1.bf16.msra.mxu0 %v11329
    %11854 = vmatprep.subr.bf16.mxu0 %v11332
    %11855 = vmatpush1.bf16.msra.mxu0 %v11331
    %11856 = vmatprep.subr.bf16.mxu0 %v11334
    %11857 = vmatpush1.bf16.msra.mxu0 %v11333
    %11858 = vmatprep.subr.bf16.mxu0 %v11336
    %11859 = vmatpush1.bf16.msra.mxu0 %v11335
    %11860 = vmatprep.subr.bf16.mxu0 %v11338
    %11861 = vmatpush1.bf16.msra.mxu0 %v11337
    %11862 = vmatprep.subr.bf16.mxu0 %v11340
    %11863 = vmatpush1.bf16.msra.mxu0 %v11339
    %11864 = vmatprep.subr.bf16.mxu0 %v11342
    %11865 = vmatpush1.bf16.msra.mxu0 %v11341
    %11866 = vmatprep.subr.bf16.mxu0 %v11344
    %11867 = vmatpush1.bf16.msra.mxu0 %v11343
    %11868 = vmatprep.subr.bf16.mxu0 %v11346
    %11869 = vmatpush1.bf16.msra.mxu0 %v11345
    %11870 = vmatprep.subr.bf16.mxu0 %v11348
    %11871 = vmatpush1.bf16.msra.mxu0 %v11347
    %11872 = vmatprep.mubr.bf16.mxu0 %v10236
    %11873 = vmatmul.mubr.bf16.gmra.mrb[0].mxu0 %v10235
    %v11874 = vpop.f32.mrb[0].mxu0
    %v11875 = vadd.f32 %v11832, %v11874
    %v11876 = vpop.f32.mrb[0].mxu0
    %v11877 = vadd.f32 %v11834, %v11876
    %v11878 = vpop.f32.mrb[0].mxu0
    %v11879 = vadd.f32 %v11836, %v11878
    %v11880 = vpop.f32.mrb[0].mxu0
    %v11881 = vadd.f32 %v11838, %v11880
    %11882 = vdwg.mxu0
    %11883 = vmatprep.subr.bf16.mxu0 %v11350
    %11884 = vmatpush1.bf16.msra.mxu0 %v11349
    %11885 = vmatprep.subr.bf16.mxu0 %v11352
    %11886 = vmatpush1.bf16.msra.mxu0 %v11351
    %11887 = vmatprep.subr.bf16.mxu0 %v11354
    %11888 = vmatpush1.bf16.msra.mxu0 %v11353
    %11889 = vmatprep.subr.bf16.mxu0 %v11356
    %11890 = vmatpush1.bf16.msra.mxu0 %v11355
    %11891 = vmatprep.subr.bf16.mxu0 %v11358
    %11892 = vmatpush1.bf16.msra.mxu0 %v11357
    %11893 = vmatprep.subr.bf16.mxu0 %v11360
    %11894 = vmatpush1.bf16.msra.mxu0 %v11359
    %11895 = vmatprep.subr.bf16.mxu0 %v11362
    %11896 = vmatpush1.bf16.msra.mxu0 %v11361
    %11897 = vmatprep.subr.bf16.mxu0 %v11364
    %11898 = vmatpush1.bf16.msra.mxu0 %v11363
    %11899 = vmatprep.subr.bf16.mxu0 %v11366
    %11900 = vmatpush1.bf16.msra.mxu0 %v11365
    %11901 = vmatprep.subr.bf16.mxu0 %v11368
    %11902 = vmatpush1.bf16.msra.mxu0 %v11367
    %11903 = vmatprep.subr.bf16.mxu0 %v11370
    %11904 = vmatpush1.bf16.msra.mxu0 %v11369
    %11905 = vmatprep.subr.bf16.mxu0 %v11372
    %11906 = vmatpush1.bf16.msra.mxu0 %v11371
    %11907 = vmatprep.subr.bf16.mxu0 %v11374
    %11908 = vmatpush1.bf16.msra.mxu0 %v11373
    %11909 = vmatprep.subr.bf16.mxu0 %v11376
    %11910 = vmatpush1.bf16.msra.mxu0 %v11375
    %11911 = vmatprep.subr.bf16.mxu0 %v11378
    %11912 = vmatpush1.bf16.msra.mxu0 %v11377
    %11913 = vmatprep.subr.bf16.mxu0 %v11380
    %11914 = vmatpush1.bf16.msra.mxu0 %v11379
    %11915 = vmatprep.mubr.bf16.mxu0 %v10238
    %11916 = vmatmul.mubr.bf16.gmra.mrb[0].mxu0 %v10237
    %v11917 = vpop.f32.mrb[0].mxu0
    %v11918 = vadd.f32 %v11875, %v11917
    %v11919 = vpop.f32.mrb[0].mxu0
    %v11920 = vadd.f32 %v11877, %v11919
    %v11921 = vpop.f32.mrb[0].mxu0
    %v11922 = vadd.f32 %v11879, %v11921
    %v11923 = vpop.f32.mrb[0].mxu0
    %v11924 = vadd.f32 %v11881, %v11923
    %11925 = vdwg.mxu0
    %11926 = vmatprep.subr.bf16.mxu0 %v11382
    %11927 = vmatpush1.bf16.msra.mxu0 %v11381
    %11928 = vmatprep.subr.bf16.mxu0 %v11384
    %11929 = vmatpush1.bf16.msra.mxu0 %v11383
    %11930 = vmatprep.subr.bf16.mxu0 %v11386
    %11931 = vmatpush1.bf16.msra.mxu0 %v11385
    %11932 = vmatprep.subr.bf16.mxu0 %v11388
    %11933 = vmatpush1.bf16.msra.mxu0 %v11387
    %11934 = vmatprep.subr.bf16.mxu0 %v11390
    %11935 = vmatpush1.bf16.msra.mxu0 %v11389
    %11936 = vmatprep.subr.bf16.mxu0 %v11392
    %11937 = vmatpush1.bf16.msra.mxu0 %v11391
    %11938 = vmatprep.subr.bf16.mxu0 %v11394
    %11939 = vmatpush1.bf16.msra.mxu0 %v11393
    %11940 = vmatprep.subr.bf16.mxu0 %v11396
    %11941 = vmatpush1.bf16.msra.mxu0 %v11395
    %11942 = vmatprep.subr.bf16.mxu0 %v11398
    %11943 = vmatpush1.bf16.msra.mxu0 %v11397
    %11944 = vmatprep.subr.bf16.mxu0 %v11400
    %11945 = vmatpush1.bf16.msra.mxu0 %v11399
    %11946 = vmatprep.subr.bf16.mxu0 %v11402
    %11947 = vmatpush1.bf16.msra.mxu0 %v11401
    %11948 = vmatprep.subr.bf16.mxu0 %v11404
    %11949 = vmatpush1.bf16.msra.mxu0 %v11403
    %11950 = vmatprep.subr.bf16.mxu0 %v11406
    %11951 = vmatpush1.bf16.msra.mxu0 %v11405
    %11952 = vmatprep.subr.bf16.mxu0 %v11408
    %11953 = vmatpush1.bf16.msra.mxu0 %v11407
    %11954 = vmatprep.subr.bf16.mxu0 %v11410
    %11955 = vmatpush1.bf16.msra.mxu0 %v11409
    %11956 = vmatprep.subr.bf16.mxu0 %v11412
    %11957 = vmatpush1.bf16.msra.mxu0 %v11411
    %11958 = vmatprep.mubr.bf16.mxu0 %v10240
    %11959 = vmatmul.mubr.bf16.gmra.mrb[0].mxu0 %v10239
    %v11960 = vpop.f32.mrb[0].mxu0
    %v11961 = vadd.f32 %v11918, %v11960
    %v11962 = vpop.f32.mrb[0].mxu0
    %v11963 = vadd.f32 %v11920, %v11962
    %v11964 = vpop.f32.mrb[0].mxu0
    %v11965 = vadd.f32 %v11922, %v11964
    %v11966 = vpop.f32.mrb[0].mxu0
    %v11967 = vadd.f32 %v11924, %v11966
    %11968 = vdwg.mxu0
    %11969 = vmatprep.subr.bf16.mxu0 %v11414
    %11970 = vmatpush1.bf16.msra.mxu0 %v11413
    %11971 = vmatprep.subr.bf16.mxu0 %v11416
    %11972 = vmatpush1.bf16.msra.mxu0 %v11415
    %11973 = vmatprep.subr.bf16.mxu0 %v11418
    %11974 = vmatpush1.bf16.msra.mxu0 %v11417
    %11975 = vmatprep.subr.bf16.mxu0 %v11420
    %11976 = vmatpush1.bf16.msra.mxu0 %v11419
    %11977 = vmatprep.subr.bf16.mxu0 %v11422
    %11978 = vmatpush1.bf16.msra.mxu0 %v11421
    %11979 = vmatprep.subr.bf16.mxu0 %v11424
    %11980 = vmatpush1.bf16.msra.mxu0 %v11423
    %11981 = vmatprep.subr.bf16.mxu0 %v11426
    %11982 = vmatpush1.bf16.msra.mxu0 %v11425
    %11983 = vmatprep.subr.bf16.mxu0 %v11428
    %11984 = vmatpush1.bf16.msra.mxu0 %v11427
    %11985 = vmatprep.subr.bf16.mxu0 %v11430
    %11986 = vmatpush1.bf16.msra.mxu0 %v11429
    %11987 = vmatprep.subr.bf16.mxu0 %v11432
    %11988 = vmatpush1.bf16.msra.mxu0 %v11431
    %11989 = vmatprep.subr.bf16.mxu0 %v11434
    %11990 = vmatpush1.bf16.msra.mxu0 %v11433
    %11991 = vmatprep.subr.bf16.mxu0 %v11436
    %11992 = vmatpush1.bf16.msra.mxu0 %v11435
    %11993 = vmatprep.subr.bf16.mxu0 %v11438
    %11994 = vmatpush1.bf16.msra.mxu0 %v11437
    %11995 = vmatprep.subr.bf16.mxu0 %v11440
    %11996 = vmatpush1.bf16.msra.mxu0 %v11439
    %11997 = vmatprep.subr.bf16.mxu0 %v11442
    %11998 = vmatpush1.bf16.msra.mxu0 %v11441
    %11999 = vmatprep.subr.bf16.mxu0 %v11444
    %12000 = vmatpush1.bf16.msra.mxu0 %v11443
    %12001 = vmatprep.mubr.bf16.mxu0 %v10242
    %12002 = vmatmul.mubr.bf16.gmra.mrb[0].mxu0 %v10241
    %v12003 = vpop.f32.mrb[0].mxu0
    %v12004 = vadd.f32 %v11961, %v12003
    %v12005 = vpop.f32.mrb[0].mxu0
    %v12006 = vadd.f32 %v11963, %v12005
    %v12007 = vpop.f32.mrb[0].mxu0
    %v12008 = vadd.f32 %v11965, %v12007
    %v12009 = vpop.f32.mrb[0].mxu0
    %v12010 = vadd.f32 %v11967, %v12009
    %12011 = vdwg.mxu0
    %12012 = vmatprep.subr.bf16.mxu0 %v11446
    %12013 = vmatpush1.bf16.msra.mxu0 %v11445
    %12014 = vmatprep.subr.bf16.mxu0 %v11448
    %12015 = vmatpush1.bf16.msra.mxu0 %v11447
    %12016 = vmatprep.subr.bf16.mxu0 %v11450
    %12017 = vmatpush1.bf16.msra.mxu0 %v11449
    %12018 = vmatprep.subr.bf16.mxu0 %v11452
    %12019 = vmatpush1.bf16.msra.mxu0 %v11451
    %12020 = vmatprep.subr.bf16.mxu0 %v11454
    %12021 = vmatpush1.bf16.msra.mxu0 %v11453
    %12022 = vmatprep.subr.bf16.mxu0 %v11456
    %12023 = vmatpush1.bf16.msra.mxu0 %v11455
    %12024 = vmatprep.subr.bf16.mxu0 %v11458
    %12025 = vmatpush1.bf16.msra.mxu0 %v11457
    %12026 = vmatprep.subr.bf16.mxu0 %v11460
    %12027 = vmatpush1.bf16.msra.mxu0 %v11459
    %12028 = vmatprep.subr.bf16.mxu0 %v11462
    %12029 = vmatpush1.bf16.msra.mxu0 %v11461
    %12030 = vmatprep.subr.bf16.mxu0 %v11464
    %12031 = vmatpush1.bf16.msra.mxu0 %v11463
    %12032 = vmatprep.subr.bf16.mxu0 %v11466
    %12033 = vmatpush1.bf16.msra.mxu0 %v11465
    %12034 = vmatprep.subr.bf16.mxu0 %v11468
    %12035 = vmatpush1.bf16.msra.mxu0 %v11467
    %12036 = vmatprep.subr.bf16.mxu0 %v11470
    %12037 = vmatpush1.bf16.msra.mxu0 %v11469
    %12038 = vmatprep.subr.bf16.mxu0 %v11472
    %12039 = vmatpush1.bf16.msra.mxu0 %v11471
    %12040 = vmatprep.subr.bf16.mxu0 %v11474
    %12041 = vmatpush1.bf16.msra.mxu0 %v11473
    %12042 = vmatprep.subr.bf16.mxu0 %v11476
    %12043 = vmatpush1.bf16.msra.mxu0 %v11475
    %12044 = vmatprep.mubr.bf16.mxu0 %v10244
    %12045 = vmatmul.mubr.bf16.gmra.mrb[0].mxu0 %v10243
    %v12046 = vpop.f32.mrb[0].mxu0
    %v12047 = vadd.f32 %v12004, %v12046
    %v12048 = vpop.f32.mrb[0].mxu0
    %v12049 = vadd.f32 %v12006, %v12048
    %v12050 = vpop.f32.mrb[0].mxu0
    %v12051 = vadd.f32 %v12008, %v12050
    %v12052 = vpop.f32.mrb[0].mxu0
    %v12053 = vadd.f32 %v12010, %v12052
    %12054 = vdwg.mxu0
    %12055 = vmatprep.subr.bf16.mxu0 %v11478
    %12056 = vmatpush1.bf16.msra.mxu0 %v11477
    %12057 = vmatprep.subr.bf16.mxu0 %v11480
    %12058 = vmatpush1.bf16.msra.mxu0 %v11479
    %12059 = vmatprep.subr.bf16.mxu0 %v11482
    %12060 = vmatpush1.bf16.msra.mxu0 %v11481
    %12061 = vmatprep.subr.bf16.mxu0 %v11484
    %12062 = vmatpush1.bf16.msra.mxu0 %v11483
    %12063 = vmatprep.subr.bf16.mxu0 %v11486
    %12064 = vmatpush1.bf16.msra.mxu0 %v11485
    %12065 = vmatprep.subr.bf16.mxu0 %v11488
    %12066 = vmatpush1.bf16.msra.mxu0 %v11487
    %12067 = vmatprep.subr.bf16.mxu0 %v11490
    %12068 = vmatpush1.bf16.msra.mxu0 %v11489
    %12069 = vmatprep.subr.bf16.mxu0 %v11492
    %12070 = vmatpush1.bf16.msra.mxu0 %v11491
    %12071 = vmatprep.subr.bf16.mxu0 %v11494
    %12072 = vmatpush1.bf16.msra.mxu0 %v11493
    %12073 = vmatprep.subr.bf16.mxu0 %v11496
    %12074 = vmatpush1.bf16.msra.mxu0 %v11495
    %12075 = vmatprep.subr.bf16.mxu0 %v11498
    %12076 = vmatpush1.bf16.msra.mxu0 %v11497
    %12077 = vmatprep.subr.bf16.mxu0 %v11500
    %12078 = vmatpush1.bf16.msra.mxu0 %v11499
    %12079 = vmatprep.subr.bf16.mxu0 %v11502
    %12080 = vmatpush1.bf16.msra.mxu0 %v11501
    %12081 = vmatprep.subr.bf16.mxu0 %v11504
    %12082 = vmatpush1.bf16.msra.mxu0 %v11503
    %12083 = vmatprep.subr.bf16.mxu0 %v11506
    %12084 = vmatpush1.bf16.msra.mxu0 %v11505
    %12085 = vmatprep.subr.bf16.mxu0 %v11508
    %12086 = vmatpush1.bf16.msra.mxu0 %v11507
    %12087 = vmatprep.mubr.bf16.mxu0 %v10246
    %12088 = vmatmul.mubr.bf16.gmra.mrb[0].mxu0 %v10245
    %v12089 = vpop.f32.mrb[0].mxu0
    %v12090 = vadd.f32 %v12047, %v12089
    %v12091 = vpop.f32.mrb[0].mxu0
    %v12092 = vadd.f32 %v12049, %v12091
    %v12093 = vpop.f32.mrb[0].mxu0
    %v12094 = vadd.f32 %v12051, %v12093
    %v12095 = vpop.f32.mrb[0].mxu0
    %v12096 = vadd.f32 %v12053, %v12095
    %12097 = vdwg.mxu0
    %12098 = vmatprep.subr.bf16.mxu0 %v11510
    %12099 = vmatpush1.bf16.msra.mxu0 %v11509
    %12100 = vmatprep.subr.bf16.mxu0 %v11512
    %12101 = vmatpush1.bf16.msra.mxu0 %v11511
    %12102 = vmatprep.subr.bf16.mxu0 %v11514
    %12103 = vmatpush1.bf16.msra.mxu0 %v11513
    %12104 = vmatprep.subr.bf16.mxu0 %v11516
    %12105 = vmatpush1.bf16.msra.mxu0 %v11515
    %12106 = vmatprep.subr.bf16.mxu0 %v11518
    %12107 = vmatpush1.bf16.msra.mxu0 %v11517
    %12108 = vmatprep.subr.bf16.mxu0 %v11520
    %12109 = vmatpush1.bf16.msra.mxu0 %v11519
    %12110 = vmatprep.subr.bf16.mxu0 %v11522
    %12111 = vmatpush1.bf16.msra.mxu0 %v11521
    %12112 = vmatprep.subr.bf16.mxu0 %v11524
    %12113 = vmatpush1.bf16.msra.mxu0 %v11523
    %12114 = vmatprep.subr.bf16.mxu0 %v11526
    %12115 = vmatpush1.bf16.msra.mxu0 %v11525
    %12116 = vmatprep.subr.bf16.mxu0 %v11528
    %12117 = vmatpush1.bf16.msra.mxu0 %v11527
    %12118 = vmatprep.subr.bf16.mxu0 %v11530
    %12119 = vmatpush1.bf16.msra.mxu0 %v11529
    %12120 = vmatprep.subr.bf16.mxu0 %v11532
    %12121 = vmatpush1.bf16.msra.mxu0 %v11531
    %12122 = vmatprep.subr.bf16.mxu0 %v11534
    %12123 = vmatpush1.bf16.msra.mxu0 %v11533
    %12124 = vmatprep.subr.bf16.mxu0 %v11536
    %12125 = vmatpush1.bf16.msra.mxu0 %v11535
    %12126 = vmatprep.subr.bf16.mxu0 %v11538
    %12127 = vmatpush1.bf16.msra.mxu0 %v11537
    %12128 = vmatprep.subr.bf16.mxu0 %v11540
    %12129 = vmatpush1.bf16.msra.mxu0 %v11539
    %12130 = vmatprep.mubr.bf16.mxu0 %v10248
    %12131 = vmatmul.mubr.bf16.gmra.mrb[0].mxu0 %v10247
    %v12132 = vpop.f32.mrb[0].mxu0
    %v12133 = vadd.f32 %v12090, %v12132
    %v12134 = vpop.f32.mrb[0].mxu0
    %v12135 = vadd.f32 %v12092, %v12134
    %v12136 = vpop.f32.mrb[0].mxu0
    %v12137 = vadd.f32 %v12094, %v12136
    %v12138 = vpop.f32.mrb[0].mxu0
    %v12139 = vadd.f32 %v12096, %v12138
    %12140 = vdwg.mxu0
    %12141 = vst [vmem:[#allocation23] sm:$0xff] %v12133
    %12142 = vst [vmem:[#allocation23 + $0x8] sm:$0xff] %v12135
    %12143 = vst [vmem:[#allocation23 + $0x10] sm:$0xff] %v12137
    %12144 = vst [vmem:[#allocation23 + $0x18] sm:$0xff] %v12139
    // Predicated region
    $region106: #{tpu_custom_call.1} parent=1 // pred_check
      _
    $region107: #{tpu_custom_call.1} parent=1 // pred_check_branch
      %12146 = sbr.rel (0) target = $region109
    $region108: #{tpu_custom_call.1} parent=1 // pred_region
      %s12148 = ssub.s32 512, 512
      %12149 = vsyncadd [#allocation4], %s12148
      %s12150 = sshll.u32 [#allocation23], 4
      %s12151 = int_to_ptr.vmem [resolvable:$true] %s12150
      %12156 = dma.vmem_to_hbm [thread:$0]  %s12151, 512, %s13, [#allocation4], 256, 256, 16
    $region109: #{tpu_custom_call.1} parent=1 // pred_fallthru
      _
    // Predicated region
    $region110: #{tpu_custom_call.1} parent=1 // pred_check
      _
    $region111: #{tpu_custom_call.1} parent=1 // pred_check_branch
      %12158 = sbr.rel (0) target = $region113
    $region112: #{tpu_custom_call.1} parent=1 // pred_region
      %12159 = dma.done [#allocation4], 512
    $region113: #{tpu_custom_call.1} parent=1 // pred_fallthru
      _
    %12160 = vsyncpa [#allocation3], 1
    %12161 = vsyncpa [#allocation6], 1
    %12162 = vsyncpa [#allocation9], 1
    %12163 = vsyncpa [#allocation12], 1
    %12164 = vsyncpa [#allocation15], 1
    %12165 = vsyncpa [#allocation18], 1
    %12166 = vsyncpa [#allocation21], 1
    %12167 = vsyncpa [#allocation4], 1

</llo_original>
